<compile_context>
chip_gen: v6e
topology: v6e:2x2x1
jax: 0.10.0
libtpu: 0.0.40
codegen_flags: <defaults>
</compile_context>

<pallas_src>
import jax
import jax.numpy as jnp
from jax.experimental import pallas as pl
from jax.experimental.pallas import tpu as pltpu  # noqa: F401  (kept for clarity)

# --- hyperparameters (small, forward-consistent) ------------------------------
N_CLASSES  = 8
LATENT_DIM = 32
IMG_SIZE   = 16
CHANNELS   = 1
IMG_FLAT   = CHANNELS * IMG_SIZE * IMG_SIZE      # 256
BN_EPS     = 0.8                                 # nn.BatchNorm1d(out_feat, 0.8) -> eps
LEAK       = 0.2
BATCH      = 128                                 # feeds >= one full MXU tile of rows

HID = (128, 256, 512, 1024)


def _leaky(x):
    return jnp.where(x > 0, x, LEAK * x)


def _bn_train(x, gamma, beta):
    """PyTorch BatchNorm1d training-mode semantics (biased var, eps=BN_EPS), fused:
    one pass for sum / sum-of-squares, then a single FMA per element."""
    inv_n = 1.0 / x.shape[0]
    mean = jnp.sum(x, axis=0, keepdims=True) * inv_n
    mean_sq = jnp.sum(x * x, axis=0, keepdims=True) * inv_n
    var = mean_sq - mean * mean
    scale = gamma * jax.lax.rsqrt(var + BN_EPS)
    shift = beta - mean * scale
    return x * scale + shift


def _dot(a, b):
    """bf16 MXU inputs, f32 accumulation (elementwise path stays f32)."""
    return jnp.dot(a.astype(jnp.bfloat16), b, preferred_element_type=jnp.float32)


def generator_kernel(labels_ref, noise_ref, emb_ref,
                     w1e_ref, w1n_ref, b1_ref,
                     w2_ref, b2_ref, g2_ref, be2_ref,
                     w3_ref, b3_ref, g3_ref, be3_ref,
                     w4_ref, b4_ref, g4_ref, be4_ref,
                     w5_ref, b5_ref,
                     out_ref):
    """Whole generator forward in one kernel invocation (all operands fit VMEM)."""
    b = noise_ref.shape[0]

    # Embedding(n_classes, n_classes)(labels), fused as one-hot @ table.
    lbl = labels_ref[...]                                             # (B, 1) int32
    classes = jax.lax.broadcasted_iota(jnp.int32, (b, N_CLASSES), 1)  # (B, NC)
    onehot = (classes == lbl).astype(jnp.bfloat16)
    emb_rows = jnp.dot(onehot, emb_ref[...],
                       preferred_element_type=jnp.float32)            # exact row select

    # block(latent + n_classes, 128, normalize=False)
    # W1 is split at row N_CLASSES so cat(emb, noise) never has to be built:
    #   cat(e, z) @ W1 == e @ W1[:NC] + z @ W1[NC:]
    h = _dot(emb_rows, w1e_ref[...]) + _dot(noise_ref[...], w1n_ref[...]) + b1_ref[...]
    h = _leaky(h)

    # block(128, 256)
    h = _dot(h, w2_ref[...]) + b2_ref[...]
    h = _leaky(_bn_train(h, g2_ref[...], be2_ref[...]))

    # block(256, 512)
    h = _dot(h, w3_ref[...]) + b3_ref[...]
    h = _leaky(_bn_train(h, g3_ref[...], be3_ref[...]))

    # block(512, 1024)
    h = _dot(h, w4_ref[...]) + b4_ref[...]
    h = _leaky(_bn_train(h, g4_ref[...], be4_ref[...]))

    # Linear(1024, C*H*W) + Tanh
    h = _dot(h, w5_ref[...]) + b5_ref[...]
    out_ref[...] = jnp.tanh(h)


def init_params(key):
    """Deterministic synthetic parameters with the module's shapes.
    Linear weights are stored pre-transposed (in, out), cast to bf16 for storage;
    biases / BN affine params stay f32 (added / applied on the f32 path)."""
    dims_in  = (LATENT_DIM + N_CLASSES,) + HID
    dims_out = HID + (IMG_FLAT,)
    keys = jax.random.split(key, 2 * len(dims_in) + 1)

    params = {}
    # Embedding(n_classes, n_classes) ~ N(0, 1) as in PyTorch default.
    params["emb"] = jax.random.normal(
        keys[0], (N_CLASSES, N_CLASSES), jnp.float32).astype(jnp.bfloat16)

    for i, (din, dout) in enumerate(zip(dims_in, dims_out)):
        bound = 1.0 / float(din) ** 0.5
        w = jax.random.uniform(keys[1 + 2 * i], (din, dout), jnp.float32, -bound, bound)
        b = jax.random.uniform(keys[2 + 2 * i], (1, dout), jnp.float32, -bound, bound)
        if i == 0:
            # split Linear(latent+n_classes, 128) at row N_CLASSES
            params["w1e"] = w[:N_CLASSES].astype(jnp.bfloat16)
            params["w1n"] = w[N_CLASSES:].astype(jnp.bfloat16)
        else:
            params[f"w{i+1}"] = w.astype(jnp.bfloat16)
        params[f"b{i+1}"] = b

    # BatchNorm affine params (default init: gamma=1, beta=0) for layers 2..4.
    for i, d in enumerate(HID[1:], start=2):
        params[f"g{i}"]  = jnp.ones((1, d), jnp.float32)
        params[f"be{i}"] = jnp.zeros((1, d), jnp.float32)
    return params


def _cost_estimate(batch):
    mm_elems = ((LATENT_DIM + N_CLASSES) * HID[0] + HID[0] * HID[1]
                + HID[1] * HID[2] + HID[2] * HID[3] + HID[3] * IMG_FLAT
                + N_CLASSES * N_CLASSES)
    weight_elems = (N_CLASSES * N_CLASSES + (LATENT_DIM + N_CLASSES) * HID[0]
                    + HID[0] * HID[1] + HID[1] * HID[2] + HID[2] * HID[3]
                    + HID[3] * IMG_FLAT)
    f32_side_elems = sum(HID) + IMG_FLAT + 2 * sum(HID[1:])   # biases + gamma/beta
    return pl.CostEstimate(
        flops=2 * batch * mm_elems,
        transcendentals=batch * IMG_FLAT + sum(HID[1:]),       # tanh + BN rsqrt
        bytes_accessed=(2 * weight_elems + 4 * f32_side_elems
                        + batch * (4 * LATENT_DIM + 4)          # noise + labels
                        + batch * 4 * IMG_FLAT),                # output
    )


@jax.jit
def generator_forward(noise, labels, params):
    b = noise.shape[0]
    labels2d = labels.reshape(b, 1).astype(jnp.int32)

    flat = pl.pallas_call(
        generator_kernel,
        out_shape=jax.ShapeDtypeStruct((b, IMG_FLAT), jnp.float32),
        # No grid: ~2 MiB bf16 weights + <1 MiB activations fit comfortably in
        # default scoped VMEM, and keeping the whole batch in one invocation
        # keeps BatchNorm statistics exact.
        cost_estimate=_cost_estimate(b),
    )(
        labels2d, noise, params["emb"],
        params["w1e"], params["w1n"], params["b1"],
        params["w2"], params["b2"], params["g2"], params["be2"],
        params["w3"], params["b3"], params["g3"], params["be3"],
        params["w4"], params["b4"], params["g4"], params["be4"],
        params["w5"], params["b5"],
    )
    # img.view(B, *img_shape) -> NCHW
    return flat.reshape(b, CHANNELS, IMG_SIZE, IMG_SIZE)


def reference_forward(noise, labels, params):
    """Pure-JAX reference mirroring the kernel's bf16-at-MXU / f32-elementwise math."""
    emb_rows = jnp.take(params["emb"], labels, axis=0).astype(jnp.float32)
    h = _dot(emb_rows, params["w1e"]) + _dot(noise, params["w1n"]) + params["b1"]
    h = _leaky(h)
    h = _leaky(_bn_train(_dot(h, params["w2"]) + params["b2"], params["g2"], params["be2"]))
    h = _leaky(_bn_train(_dot(h, params["w3"]) + params["b3"], params["g3"], params["be3"]))
    h = _leaky(_bn_train(_dot(h, params["w4"]) + params["b4"], params["g4"], params["be4"]))
    h = jnp.tanh(_dot(h, params["w5"]) + params["b5"])
    return h.reshape(noise.shape[0], CHANNELS, IMG_SIZE, IMG_SIZE)


if __name__ == "__main__":
    key = jax.random.PRNGKey(0)
    k_noise, k_labels, k_params = jax.random.split(key, 3)

    noise = jax.random.normal(k_noise, (BATCH, LATENT_DIM), jnp.float32)
    labels = jax.random.randint(k_labels, (BATCH,), 0, N_CLASSES, jnp.int32)
    params = init_params(k_params)

    img = generator_forward(noise, labels, params)
    jax.block_until_ready(img)

    assert img.shape == (BATCH, CHANNELS, IMG_SIZE, IMG_SIZE), img.shape

    ref = reference_forward(noise, labels, params)
    max_err = float(jnp.max(jnp.abs(img - ref)))
    assert jnp.allclose(img, ref, atol=1e-2, rtol=1e-2), f"mismatch vs reference: {max_err}"

    print("KERNEL_OK")
</pallas_src>

<mosaic_0001>
module attributes {stable_mosaic.version = 11 : i64} {
  func.func @generator_kernel(%arg0: memref<128x1xi32, #tpu.memory_space<vmem>>, %arg1: memref<128x32xf32, #tpu.memory_space<vmem>>, %arg2: memref<8x8xbf16, #tpu.memory_space<vmem>>, %arg3: memref<8x128xbf16, #tpu.memory_space<vmem>>, %arg4: memref<32x128xbf16, #tpu.memory_space<vmem>>, %arg5: memref<1x128xf32, #tpu.memory_space<vmem>>, %arg6: memref<128x256xbf16, #tpu.memory_space<vmem>>, %arg7: memref<1x256xf32, #tpu.memory_space<vmem>>, %arg8: memref<1x256xf32, #tpu.memory_space<vmem>>, %arg9: memref<1x256xf32, #tpu.memory_space<vmem>>, %arg10: memref<256x512xbf16, #tpu.memory_space<vmem>>, %arg11: memref<1x512xf32, #tpu.memory_space<vmem>>, %arg12: memref<1x512xf32, #tpu.memory_space<vmem>>, %arg13: memref<1x512xf32, #tpu.memory_space<vmem>>, %arg14: memref<512x1024xbf16, #tpu.memory_space<vmem>>, %arg15: memref<1x1024xf32, #tpu.memory_space<vmem>>, %arg16: memref<1x1024xf32, #tpu.memory_space<vmem>>, %arg17: memref<1x1024xf32, #tpu.memory_space<vmem>>, %arg18: memref<1024x256xbf16, #tpu.memory_space<vmem>>, %arg19: memref<1x256xf32, #tpu.memory_space<vmem>>, %arg20: memref<128x256xf32, #tpu.memory_space<vmem>>) attributes {dimension_semantics = [], scalar_prefetch = 0 : i64, scratch_operands = 0 : i64, tpu.core_type = #tpu.core_type<tc>} {
    %c0 = arith.constant 0 : index
    %c0_0 = arith.constant 0 : index
    %0 = vector.load %arg0[%c0, %c0_0] : memref<128x1xi32, #tpu.memory_space<vmem>>, vector<128x1xi32>
    %1 = tpu.iota {dimensions = array<i32: 1>} : vector<128x8xi32>
    %2 = vector.broadcast %0 : vector<128x1xi32> to vector<128x8xi32>
    %3 = arith.cmpi eq, %1, %2 : vector<128x8xi32>
    %4 = arith.extui %3 : vector<128x8xi1> to vector<128x8xi32>
    %5 = arith.sitofp %4 : vector<128x8xi32> to vector<128x8xf32>
    %6 = arith.truncf %5 : vector<128x8xf32> to vector<128x8xbf16>
    %c0_1 = arith.constant 0 : index
    %c0_2 = arith.constant 0 : index
    %7 = vector.load %arg2[%c0_1, %c0_2] : memref<8x8xbf16, #tpu.memory_space<vmem>>, vector<8x8xbf16>
    %cst = arith.constant dense<0.000000e+00> : vector<128x8xf32>
    %8 = tpu.matmul %6, %7, %cst {dimension_numbers = #tpu.dot_dimension_numbers<[1], [0], [0], [1], [0, 0, 1, 1], [], []>} : vector<128x8xbf16>, vector<8x8xbf16>, vector<128x8xf32> -> vector<128x8xf32>
    %c0_3 = arith.constant 0 : index
    %c0_4 = arith.constant 0 : index
    %9 = vector.load %arg3[%c0_3, %c0_4] : memref<8x128xbf16, #tpu.memory_space<vmem>>, vector<8x128xbf16>
    %10 = arith.truncf %8 : vector<128x8xf32> to vector<128x8xbf16>
    %cst_5 = arith.constant dense<0.000000e+00> : vector<128x128xf32>
    %11 = tpu.matmul %10, %9, %cst_5 {dimension_numbers = #tpu.dot_dimension_numbers<[1], [0], [0], [1], [0, 0, 1, 1], [], []>} : vector<128x8xbf16>, vector<8x128xbf16>, vector<128x128xf32> -> vector<128x128xf32>
    %c0_6 = arith.constant 0 : index
    %c0_7 = arith.constant 0 : index
    %12 = vector.load %arg1[%c0_6, %c0_7] : memref<128x32xf32, #tpu.memory_space<vmem>>, vector<128x32xf32>
    %c0_8 = arith.constant 0 : index
    %c0_9 = arith.constant 0 : index
    %13 = vector.load %arg4[%c0_8, %c0_9] : memref<32x128xbf16, #tpu.memory_space<vmem>>, vector<32x128xbf16>
    %14 = arith.truncf %12 : vector<128x32xf32> to vector<128x32xbf16>
    %cst_10 = arith.constant dense<0.000000e+00> : vector<128x128xf32>
    %15 = tpu.matmul %14, %13, %cst_10 {dimension_numbers = #tpu.dot_dimension_numbers<[1], [0], [0], [1], [0, 0, 1, 1], [], []>} : vector<128x32xbf16>, vector<32x128xbf16>, vector<128x128xf32> -> vector<128x128xf32>
    %16 = arith.addf %11, %15 : vector<128x128xf32>
    %c0_11 = arith.constant 0 : index
    %c0_12 = arith.constant 0 : index
    %17 = vector.load %arg5[%c0_11, %c0_12] : memref<1x128xf32, #tpu.memory_space<vmem>>, vector<1x128xf32>
    %18 = vector.broadcast %17 : vector<1x128xf32> to vector<128x128xf32>
    %19 = arith.addf %16, %18 : vector<128x128xf32>
    %cst_13 = arith.constant 0.000000e+00 : f32
    %20 = vector.broadcast %cst_13 : f32 to vector<128x128xf32>
    %21 = arith.cmpf ogt, %19, %20 : vector<128x128xf32>
    %cst_14 = arith.constant 2.000000e-01 : f32
    %22 = vector.broadcast %cst_14 : f32 to vector<128x128xf32>
    %23 = arith.mulf %22, %19 : vector<128x128xf32>
    %24 = arith.select %21, %19, %23 : vector<128x128xi1>, vector<128x128xf32>
    %c0_15 = arith.constant 0 : index
    %c0_16 = arith.constant 0 : index
    %25 = vector.load %arg6[%c0_15, %c0_16] : memref<128x256xbf16, #tpu.memory_space<vmem>>, vector<128x256xbf16>
    %26 = arith.truncf %24 : vector<128x128xf32> to vector<128x128xbf16>
    %cst_17 = arith.constant dense<0.000000e+00> : vector<128x256xf32>
    %27 = tpu.matmul %26, %25, %cst_17 {dimension_numbers = #tpu.dot_dimension_numbers<[1], [0], [0], [1], [0, 0, 1, 1], [], []>} : vector<128x128xbf16>, vector<128x256xbf16>, vector<128x256xf32> -> vector<128x256xf32>
    %c0_18 = arith.constant 0 : index
    %c0_19 = arith.constant 0 : index
    %28 = vector.load %arg7[%c0_18, %c0_19] : memref<1x256xf32, #tpu.memory_space<vmem>>, vector<1x256xf32>
    %29 = vector.broadcast %28 : vector<1x256xf32> to vector<128x256xf32>
    %30 = arith.addf %27, %29 : vector<128x256xf32>
    %c0_20 = arith.constant 0 : index
    %c0_21 = arith.constant 0 : index
    %31 = vector.load %arg8[%c0_20, %c0_21] : memref<1x256xf32, #tpu.memory_space<vmem>>, vector<1x256xf32>
    %c0_22 = arith.constant 0 : index
    %c0_23 = arith.constant 0 : index
    %32 = vector.load %arg9[%c0_22, %c0_23] : memref<1x256xf32, #tpu.memory_space<vmem>>, vector<1x256xf32>
    %cst_24 = arith.constant dense<0.000000e+00> : vector<256xf32>
    %33 = vector.multi_reduction <add>, %30, %cst_24 [0] : vector<128x256xf32> to vector<256xf32>
    %34 = vector.shape_cast %33 : vector<256xf32> to vector<1x256xf32>
    %cst_25 = arith.constant 7.812500e-03 : f32
    %35 = vector.broadcast %cst_25 : f32 to vector<1x256xf32>
    %36 = arith.mulf %34, %35 : vector<1x256xf32>
    %37 = arith.mulf %30, %30 : vector<128x256xf32>
    %cst_26 = arith.constant dense<0.000000e+00> : vector<256xf32>
    %38 = vector.multi_reduction <add>, %37, %cst_26 [0] : vector<128x256xf32> to vector<256xf32>
    %39 = vector.shape_cast %38 : vector<256xf32> to vector<1x256xf32>
    %cst_27 = arith.constant 7.812500e-03 : f32
    %40 = vector.broadcast %cst_27 : f32 to vector<1x256xf32>
    %41 = arith.mulf %39, %40 : vector<1x256xf32>
    %42 = arith.mulf %36, %36 : vector<1x256xf32>
    %43 = arith.subf %41, %42 : vector<1x256xf32>
    %cst_28 = arith.constant 8.000000e-01 : f32
    %44 = vector.broadcast %cst_28 : f32 to vector<1x256xf32>
    %45 = arith.addf %43, %44 : vector<1x256xf32>
    %46 = math.rsqrt %45 : vector<1x256xf32>
    %47 = arith.mulf %31, %46 : vector<1x256xf32>
    %48 = arith.mulf %36, %47 : vector<1x256xf32>
    %49 = arith.subf %32, %48 : vector<1x256xf32>
    %50 = vector.broadcast %47 : vector<1x256xf32> to vector<128x256xf32>
    %51 = arith.mulf %30, %50 : vector<128x256xf32>
    %52 = vector.broadcast %49 : vector<1x256xf32> to vector<128x256xf32>
    %53 = arith.addf %51, %52 : vector<128x256xf32>
    %cst_29 = arith.constant 0.000000e+00 : f32
    %54 = vector.broadcast %cst_29 : f32 to vector<128x256xf32>
    %55 = arith.cmpf ogt, %53, %54 : vector<128x256xf32>
    %cst_30 = arith.constant 2.000000e-01 : f32
    %56 = vector.broadcast %cst_30 : f32 to vector<128x256xf32>
    %57 = arith.mulf %56, %53 : vector<128x256xf32>
    %58 = arith.select %55, %53, %57 : vector<128x256xi1>, vector<128x256xf32>
    %c0_31 = arith.constant 0 : index
    %c0_32 = arith.constant 0 : index
    %59 = vector.load %arg10[%c0_31, %c0_32] : memref<256x512xbf16, #tpu.memory_space<vmem>>, vector<256x512xbf16>
    %60 = arith.truncf %58 : vector<128x256xf32> to vector<128x256xbf16>
    %cst_33 = arith.constant dense<0.000000e+00> : vector<128x512xf32>
    %61 = tpu.matmul %60, %59, %cst_33 {dimension_numbers = #tpu.dot_dimension_numbers<[1], [0], [0], [1], [0, 0, 1, 1], [], []>} : vector<128x256xbf16>, vector<256x512xbf16>, vector<128x512xf32> -> vector<128x512xf32>
    %c0_34 = arith.constant 0 : index
    %c0_35 = arith.constant 0 : index
    %62 = vector.load %arg11[%c0_34, %c0_35] : memref<1x512xf32, #tpu.memory_space<vmem>>, vector<1x512xf32>
    %63 = vector.broadcast %62 : vector<1x512xf32> to vector<128x512xf32>
    %64 = arith.addf %61, %63 : vector<128x512xf32>
    %c0_36 = arith.constant 0 : index
    %c0_37 = arith.constant 0 : index
    %65 = vector.load %arg12[%c0_36, %c0_37] : memref<1x512xf32, #tpu.memory_space<vmem>>, vector<1x512xf32>
    %c0_38 = arith.constant 0 : index
    %c0_39 = arith.constant 0 : index
    %66 = vector.load %arg13[%c0_38, %c0_39] : memref<1x512xf32, #tpu.memory_space<vmem>>, vector<1x512xf32>
    %cst_40 = arith.constant dense<0.000000e+00> : vector<512xf32>
    %67 = vector.multi_reduction <add>, %64, %cst_40 [0] : vector<128x512xf32> to vector<512xf32>
    %68 = vector.shape_cast %67 : vector<512xf32> to vector<1x512xf32>
    %cst_41 = arith.constant 7.812500e-03 : f32
    %69 = vector.broadcast %cst_41 : f32 to vector<1x512xf32>
    %70 = arith.mulf %68, %69 : vector<1x512xf32>
    %71 = arith.mulf %64, %64 : vector<128x512xf32>
    %cst_42 = arith.constant dense<0.000000e+00> : vector<512xf32>
    %72 = vector.multi_reduction <add>, %71, %cst_42 [0] : vector<128x512xf32> to vector<512xf32>
    %73 = vector.shape_cast %72 : vector<512xf32> to vector<1x512xf32>
    %cst_43 = arith.constant 7.812500e-03 : f32
    %74 = vector.broadcast %cst_43 : f32 to vector<1x512xf32>
    %75 = arith.mulf %73, %74 : vector<1x512xf32>
    %76 = arith.mulf %70, %70 : vector<1x512xf32>
    %77 = arith.subf %75, %76 : vector<1x512xf32>
    %cst_44 = arith.constant 8.000000e-01 : f32
    %78 = vector.broadcast %cst_44 : f32 to vector<1x512xf32>
    %79 = arith.addf %77, %78 : vector<1x512xf32>
    %80 = math.rsqrt %79 : vector<1x512xf32>
    %81 = arith.mulf %65, %80 : vector<1x512xf32>
    %82 = arith.mulf %70, %81 : vector<1x512xf32>
    %83 = arith.subf %66, %82 : vector<1x512xf32>
    %84 = vector.broadcast %81 : vector<1x512xf32> to vector<128x512xf32>
    %85 = arith.mulf %64, %84 : vector<128x512xf32>
    %86 = vector.broadcast %83 : vector<1x512xf32> to vector<128x512xf32>
    %87 = arith.addf %85, %86 : vector<128x512xf32>
    %cst_45 = arith.constant 0.000000e+00 : f32
    %88 = vector.broadcast %cst_45 : f32 to vector<128x512xf32>
    %89 = arith.cmpf ogt, %87, %88 : vector<128x512xf32>
    %cst_46 = arith.constant 2.000000e-01 : f32
    %90 = vector.broadcast %cst_46 : f32 to vector<128x512xf32>
    %91 = arith.mulf %90, %87 : vector<128x512xf32>
    %92 = arith.select %89, %87, %91 : vector<128x512xi1>, vector<128x512xf32>
    %c0_47 = arith.constant 0 : index
    %c0_48 = arith.constant 0 : index
    %93 = vector.load %arg14[%c0_47, %c0_48] : memref<512x1024xbf16, #tpu.memory_space<vmem>>, vector<512x1024xbf16>
    %94 = arith.truncf %92 : vector<128x512xf32> to vector<128x512xbf16>
    %cst_49 = arith.constant dense<0.000000e+00> : vector<128x1024xf32>
    %95 = tpu.matmul %94, %93, %cst_49 {dimension_numbers = #tpu.dot_dimension_numbers<[1], [0], [0], [1], [0, 0, 1, 1], [], []>} : vector<128x512xbf16>, vector<512x1024xbf16>, vector<128x1024xf32> -> vector<128x1024xf32>
    %c0_50 = arith.constant 0 : index
    %c0_51 = arith.constant 0 : index
    %96 = vector.load %arg15[%c0_50, %c0_51] : memref<1x1024xf32, #tpu.memory_space<vmem>>, vector<1x1024xf32>
    %97 = vector.broadcast %96 : vector<1x1024xf32> to vector<128x1024xf32>
    %98 = arith.addf %95, %97 : vector<128x1024xf32>
    %c0_52 = arith.constant 0 : index
    %c0_53 = arith.constant 0 : index
    %99 = vector.load %arg16[%c0_52, %c0_53] : memref<1x1024xf32, #tpu.memory_space<vmem>>, vector<1x1024xf32>
    %c0_54 = arith.constant 0 : index
    %c0_55 = arith.constant 0 : index
    %100 = vector.load %arg17[%c0_54, %c0_55] : memref<1x1024xf32, #tpu.memory_space<vmem>>, vector<1x1024xf32>
    %cst_56 = arith.constant dense<0.000000e+00> : vector<1024xf32>
    %101 = vector.multi_reduction <add>, %98, %cst_56 [0] : vector<128x1024xf32> to vector<1024xf32>
    %102 = vector.shape_cast %101 : vector<1024xf32> to vector<1x1024xf32>
    %cst_57 = arith.constant 7.812500e-03 : f32
    %103 = vector.broadcast %cst_57 : f32 to vector<1x1024xf32>
    %104 = arith.mulf %102, %103 : vector<1x1024xf32>
    %105 = arith.mulf %98, %98 : vector<128x1024xf32>
    %cst_58 = arith.constant dense<0.000000e+00> : vector<1024xf32>
    %106 = vector.multi_reduction <add>, %105, %cst_58 [0] : vector<128x1024xf32> to vector<1024xf32>
    %107 = vector.shape_cast %106 : vector<1024xf32> to vector<1x1024xf32>
    %cst_59 = arith.constant 7.812500e-03 : f32
    %108 = vector.broadcast %cst_59 : f32 to vector<1x1024xf32>
    %109 = arith.mulf %107, %108 : vector<1x1024xf32>
    %110 = arith.mulf %104, %104 : vector<1x1024xf32>
    %111 = arith.subf %109, %110 : vector<1x1024xf32>
    %cst_60 = arith.constant 8.000000e-01 : f32
    %112 = vector.broadcast %cst_60 : f32 to vector<1x1024xf32>
    %113 = arith.addf %111, %112 : vector<1x1024xf32>
    %114 = math.rsqrt %113 : vector<1x1024xf32>
    %115 = arith.mulf %99, %114 : vector<1x1024xf32>
    %116 = arith.mulf %104, %115 : vector<1x1024xf32>
    %117 = arith.subf %100, %116 : vector<1x1024xf32>
    %118 = vector.broadcast %115 : vector<1x1024xf32> to vector<128x1024xf32>
    %119 = arith.mulf %98, %118 : vector<128x1024xf32>
    %120 = vector.broadcast %117 : vector<1x1024xf32> to vector<128x1024xf32>
    %121 = arith.addf %119, %120 : vector<128x1024xf32>
    %cst_61 = arith.constant 0.000000e+00 : f32
    %122 = vector.broadcast %cst_61 : f32 to vector<128x1024xf32>
    %123 = arith.cmpf ogt, %121, %122 : vector<128x1024xf32>
    %cst_62 = arith.constant 2.000000e-01 : f32
    %124 = vector.broadcast %cst_62 : f32 to vector<128x1024xf32>
    %125 = arith.mulf %124, %121 : vector<128x1024xf32>
    %126 = arith.select %123, %121, %125 : vector<128x1024xi1>, vector<128x1024xf32>
    %c0_63 = arith.constant 0 : index
    %c0_64 = arith.constant 0 : index
    %127 = vector.load %arg18[%c0_63, %c0_64] : memref<1024x256xbf16, #tpu.memory_space<vmem>>, vector<1024x256xbf16>
    %128 = arith.truncf %126 : vector<128x1024xf32> to vector<128x1024xbf16>
    %cst_65 = arith.constant dense<0.000000e+00> : vector<128x256xf32>
    %129 = tpu.matmul %128, %127, %cst_65 {dimension_numbers = #tpu.dot_dimension_numbers<[1], [0], [0], [1], [0, 0, 1, 1], [], []>} : vector<128x1024xbf16>, vector<1024x256xbf16>, vector<128x256xf32> -> vector<128x256xf32>
    %c0_66 = arith.constant 0 : index
    %c0_67 = arith.constant 0 : index
    %130 = vector.load %arg19[%c0_66, %c0_67] : memref<1x256xf32, #tpu.memory_space<vmem>>, vector<1x256xf32>
    %131 = vector.broadcast %130 : vector<1x256xf32> to vector<128x256xf32>
    %132 = arith.addf %129, %131 : vector<128x256xf32>
    %133 = math.tanh %132 : vector<128x256xf32>
    %c0_68 = arith.constant 0 : index
    %c0_69 = arith.constant 0 : index
    %134 = vector.load %arg20[%c0_68, %c0_69] : memref<128x256xf32, #tpu.memory_space<vmem>>, vector<128x256xf32>
    tpu.vector_store %arg20[%c0_68, %c0_69], %133 {strides = array<i32>} : memref<128x256xf32, #tpu.memory_space<vmem>>, vector<128x256xf32>,
    return
  }
}

</mosaic_0001>

<llo_original>
// kernel: generator_forward.1
$region0: #{generator_forward.1}
  #allocation0 [shape = 'u32[]', space=smem, size = 0x4, offset = 0x4, fixed_abs, tag = 'smem constant byte address 0x4 - core index']
  #allocation1 [shape = 'u32[144,128]{1,0:T(1,128)}', space=vmem, size = 0x12000, scoped, tag = 'internal scratch']
  %s0 = inlined_call_operand.vmem [shape: s32[128,1], index: 0, kind: input, shape index: {}]
  %s1 = inlined_call_operand.vmem [shape: f32[128,32], index: 1, kind: input, shape index: {}]
  %s2 = inlined_call_operand.vmem [shape: bf16[8,8], index: 2, kind: input, shape index: {}]
  %s3 = inlined_call_operand.vmem [shape: bf16[8,128], index: 3, kind: input, shape index: {}]
  %s4 = inlined_call_operand.vmem [shape: bf16[32,128], index: 4, kind: input, shape index: {}]
  %s5 = inlined_call_operand.vmem [shape: f32[1,128], index: 5, kind: input, shape index: {}]
  %s6 = inlined_call_operand.vmem [shape: bf16[128,256], index: 6, kind: input, shape index: {}]
  %s7 = inlined_call_operand.vmem [shape: f32[1,256], index: 7, kind: input, shape index: {}]
  %s8 = inlined_call_operand.vmem [shape: f32[1,256], index: 8, kind: input, shape index: {}]
  %s9 = inlined_call_operand.vmem [shape: f32[1,256], index: 9, kind: input, shape index: {}]
  %s10 = inlined_call_operand.hbm [shape: bf16[256,512], index: 10, kind: input, shape index: {}]
  %s11 = inlined_call_operand.vmem [shape: f32[1,512], index: 11, kind: input, shape index: {}]
  %s12 = inlined_call_operand.vmem [shape: f32[1,512], index: 12, kind: input, shape index: {}]
  %s13 = inlined_call_operand.vmem [shape: f32[1,512], index: 13, kind: input, shape index: {}]
  %s14 = inlined_call_operand.hbm [shape: bf16[512,1024], index: 14, kind: input, shape index: {}]
  %s15 = inlined_call_operand.vmem [shape: f32[1,1024], index: 15, kind: input, shape index: {}]
  %s16 = inlined_call_operand.vmem [shape: f32[1,1024], index: 16, kind: input, shape index: {}]
  %s17 = inlined_call_operand.vmem [shape: f32[1,1024], index: 17, kind: input, shape index: {}]
  %s18 = inlined_call_operand.hbm [shape: bf16[1024,256], index: 18, kind: input, shape index: {}]
  %s19 = inlined_call_operand.vmem [shape: f32[1,256], index: 19, kind: input, shape index: {}]
  %s20 = inlined_call_operand.vmem [shape: f32[128,256], index: 20, kind: output, shape index: {}]
  %s21 = sld [smem:[#allocation0]]
  $region102: #{generator_forward.1} parent=0
    _
  %s23 = ssub.s32 1, %s21
  %s24 = scalar_select 0, %s23, %s21
  $region1: #{generator_forward.1} parent=0
    #allocation2 [shape = 'u8[262144]{0}', space=vmem, size = 0x40000, scoped, tag = 'input window, operand 10, single buffered']
    #allocation3 [shape = 's32[1]{0}', space=sflag, size = 0x4, scoped, tag = 'scoped memory for generator_forward.1']
    #allocation4 [shape = 'u8[1048576]{0}', space=vmem, size = 0x100000, scoped, tag = 'input window, operand 14, single buffered']
    #allocation5 [shape = 's32[1]{0}', space=sflag, size = 0x4, scoped, tag = 'scoped memory for generator_forward.1']
    #allocation6 [shape = 'u8[524288]{0}', space=vmem, size = 0x80000, scoped, tag = 'input window, operand 18, single buffered']
    %25 = vsyncpa [#allocation3], 0
    %26 = vsyncpa [#allocation5], 0
    // Predicated region
    $region2: #{generator_forward.1} parent=1 // pred_check
      _
    $region3: #{generator_forward.1} parent=1 // pred_check_branch
      %28 = sbr.rel (0) target = $region5
    $region4: #{generator_forward.1} parent=1 // pred_region
      _
    $region5: #{generator_forward.1} parent=1 // pred_fallthru
      _
    // Predicated region
    $region6: #{generator_forward.1} parent=1 // pred_check
      _
    $region7: #{generator_forward.1} parent=1 // pred_check_branch
      %30 = sbr.rel (0) target = $region9
    $region8: #{generator_forward.1} parent=1 // pred_region
      _
    $region9: #{generator_forward.1} parent=1 // pred_fallthru
      _
    // Predicated region
    $region10: #{generator_forward.1} parent=1 // pred_check
      _
    $region11: #{generator_forward.1} parent=1 // pred_check_branch
      %32 = sbr.rel (0) target = $region13
    $region12: #{generator_forward.1} parent=1 // pred_region
      _
    $region13: #{generator_forward.1} parent=1 // pred_fallthru
      _
    // Predicated region
    $region14: #{generator_forward.1} parent=1 // pred_check
      _
    $region15: #{generator_forward.1} parent=1 // pred_check_branch
      %34 = sbr.rel (0) target = $region17
    $region16: #{generator_forward.1} parent=1 // pred_region
      _
    $region17: #{generator_forward.1} parent=1 // pred_fallthru
      _
    // Predicated region
    $region18: #{generator_forward.1} parent=1 // pred_check
      _
    $region19: #{generator_forward.1} parent=1 // pred_check_branch
      %36 = sbr.rel (0) target = $region21
    $region20: #{generator_forward.1} parent=1 // pred_region
      _
    $region21: #{generator_forward.1} parent=1 // pred_fallthru
      _
    // Predicated region
    $region22: #{generator_forward.1} parent=1 // pred_check
      _
    $region23: #{generator_forward.1} parent=1 // pred_check_branch
      %38 = sbr.rel (0) target = $region25
    $region24: #{generator_forward.1} parent=1 // pred_region
      _
    $region25: #{generator_forward.1} parent=1 // pred_fallthru
      _
    // Predicated region
    $region26: #{generator_forward.1} parent=1 // pred_check
      _
    $region27: #{generator_forward.1} parent=1 // pred_check_branch
      %40 = sbr.rel (0) target = $region29
    $region28: #{generator_forward.1} parent=1 // pred_region
      _
    $region29: #{generator_forward.1} parent=1 // pred_fallthru
      _
    // Predicated region
    $region30: #{generator_forward.1} parent=1 // pred_check
      _
    $region31: #{generator_forward.1} parent=1 // pred_check_branch
      %42 = sbr.rel (0) target = $region33
    $region32: #{generator_forward.1} parent=1 // pred_region
      _
    $region33: #{generator_forward.1} parent=1 // pred_fallthru
      _
    // Predicated region
    $region34: #{generator_forward.1} parent=1 // pred_check
      _
    $region35: #{generator_forward.1} parent=1 // pred_check_branch
      %44 = sbr.rel (0) target = $region37
    $region36: #{generator_forward.1} parent=1 // pred_region
      _
    $region37: #{generator_forward.1} parent=1 // pred_fallthru
      _
    // Predicated region
    $region38: #{generator_forward.1} parent=1 // pred_check
      _
    $region39: #{generator_forward.1} parent=1 // pred_check_branch
      %46 = sbr.rel (0) target = $region41
    $region40: #{generator_forward.1} parent=1 // pred_region
      _
    $region41: #{generator_forward.1} parent=1 // pred_fallthru
      _
    // Predicated region
    $region42: #{generator_forward.1} parent=1 // pred_check
      _
    $region43: #{generator_forward.1} parent=1 // pred_check_branch
      %48 = sbr.rel (0) target = $region45
    $region44: #{generator_forward.1} parent=1 // pred_region
      %s50 = ssub.s32 8192, 8192
      %51 = vsyncadd [#allocation3], %s50
      %s52 = sshll.u32 [#allocation2], 4
      %s53 = int_to_ptr.vmem [resolvable:$true] %s52
      %58 = dma.hbm_to_vmem [thread:$0]  %s10, 8192, %s53, [#allocation3], 256, 256, 16
    $region45: #{generator_forward.1} parent=1 // pred_fallthru
      _
    // Predicated region
    $region46: #{generator_forward.1} parent=1 // pred_check
      _
    $region47: #{generator_forward.1} parent=1 // pred_check_branch
      %60 = sbr.rel (0) target = $region49
    $region48: #{generator_forward.1} parent=1 // pred_region
      _
    $region49: #{generator_forward.1} parent=1 // pred_fallthru
      _
    // Predicated region
    $region50: #{generator_forward.1} parent=1 // pred_check
      _
    $region51: #{generator_forward.1} parent=1 // pred_check_branch
      %62 = sbr.rel (0) target = $region53
    $region52: #{generator_forward.1} parent=1 // pred_region
      _
    $region53: #{generator_forward.1} parent=1 // pred_fallthru
      _
    // Predicated region
    $region54: #{generator_forward.1} parent=1 // pred_check
      _
    $region55: #{generator_forward.1} parent=1 // pred_check_branch
      %64 = sbr.rel (0) target = $region57
    $region56: #{generator_forward.1} parent=1 // pred_region
      _
    $region57: #{generator_forward.1} parent=1 // pred_fallthru
      _
    // Predicated region
    $region58: #{generator_forward.1} parent=1 // pred_check
      _
    $region59: #{generator_forward.1} parent=1 // pred_check_branch
      %66 = sbr.rel (0) target = $region61
    $region60: #{generator_forward.1} parent=1 // pred_region
      %s68 = ssub.s32 32768, 32768
      %69 = vsyncadd [#allocation5], %s68
      %s70 = sshll.u32 [#allocation4], 4
      %s71 = int_to_ptr.vmem [resolvable:$true] %s70
      %76 = dma.hbm_to_vmem [thread:$0]  %s14, 32768, %s71, [#allocation5], 512, 512, 32
    $region61: #{generator_forward.1} parent=1 // pred_fallthru
      _
    // Predicated region
    $region62: #{generator_forward.1} parent=1 // pred_check
      _
    $region63: #{generator_forward.1} parent=1 // pred_check_branch
      %78 = sbr.rel (0) target = $region65
    $region64: #{generator_forward.1} parent=1 // pred_region
      _
    $region65: #{generator_forward.1} parent=1 // pred_fallthru
      _
    // Predicated region
    $region66: #{generator_forward.1} parent=1 // pred_check
      _
    $region67: #{generator_forward.1} parent=1 // pred_check_branch
      %80 = sbr.rel (0) target = $region69
    $region68: #{generator_forward.1} parent=1 // pred_region
      _
    $region69: #{generator_forward.1} parent=1 // pred_fallthru
      _
    // Predicated region
    $region70: #{generator_forward.1} parent=1 // pred_check
      _
    $region71: #{generator_forward.1} parent=1 // pred_check_branch
      %82 = sbr.rel (0) target = $region73
    $region72: #{generator_forward.1} parent=1 // pred_region
      _
    $region73: #{generator_forward.1} parent=1 // pred_fallthru
      _
    // Predicated region
    $region74: #{generator_forward.1} parent=1 // pred_check
      _
    $region75: #{generator_forward.1} parent=1 // pred_check_branch
      %84 = sbr.rel (0) target = $region77
    $region76: #{generator_forward.1} parent=1 // pred_region
      %s86 = ssub.s32 16384, 16384
      %87 = vsyncadd [#allocation5], %s86
      %s88 = sshll.u32 [#allocation6], 4
      %s89 = int_to_ptr.vmem [resolvable:$true] %s88
      %94 = dma.hbm_to_vmem [thread:$0]  %s18, 16384, %s89, [#allocation5], 128, 128, 8
    $region77: #{generator_forward.1} parent=1 // pred_fallthru
      _
    // Predicated region
    $region78: #{generator_forward.1} parent=1 // pred_check
      _
    $region79: #{generator_forward.1} parent=1 // pred_check_branch
      %96 = sbr.rel (0) target = $region81
    $region80: #{generator_forward.1} parent=1 // pred_region
      _
    $region81: #{generator_forward.1} parent=1 // pred_fallthru
      _
    // Predicated region
    $region82: #{generator_forward.1} parent=1 // pred_check
      _
    $region83: #{generator_forward.1} parent=1 // pred_check_branch
      %98 = sbr.rel (0) target = $region85
    $region84: #{generator_forward.1} parent=1 // pred_region
      %99 = dma.done [#allocation3], 8192
    $region85: #{generator_forward.1} parent=1 // pred_fallthru
      _
    // Predicated region
    $region86: #{generator_forward.1} parent=1 // pred_check
      _
    $region87: #{generator_forward.1} parent=1 // pred_check_branch
      %101 = sbr.rel (0) target = $region89
    $region88: #{generator_forward.1} parent=1 // pred_region
      %102 = dma.done [#allocation5], 32768
    $region89: #{generator_forward.1} parent=1 // pred_fallthru
      _
    // Predicated region
    $region90: #{generator_forward.1} parent=1 // pred_check
      _
    $region91: #{generator_forward.1} parent=1 // pred_check_branch
      %104 = sbr.rel (0) target = $region93
    $region92: #{generator_forward.1} parent=1 // pred_region
      %105 = dma.done [#allocation5], 16384
    $region93: #{generator_forward.1} parent=1 // pred_fallthru
      _
    %v107 = vld [vmem:[%s0] sm:$0xff]
    %v108 = vld [vmem:[%s0 + $0x8] sm:$0xff]
    %v109 = vld [vmem:[%s0 + $0x10] sm:$0xff]
    %v110 = vld [vmem:[%s0 + $0x18] sm:$0xff]
    %v111 = vld [vmem:[%s0 + $0x20] sm:$0xff]
    %v112 = vld [vmem:[%s0 + $0x28] sm:$0xff]
    %v113 = vld [vmem:[%s0 + $0x30] sm:$0xff]
    %v114 = vld [vmem:[%s0 + $0x38] sm:$0xff]
    %v115 = vld [vmem:[%s0 + $0x40] sm:$0xff]
    %v116 = vld [vmem:[%s0 + $0x48] sm:$0xff]
    %v117 = vld [vmem:[%s0 + $0x50] sm:$0xff]
    %v118 = vld [vmem:[%s0 + $0x58] sm:$0xff]
    %v119 = vld [vmem:[%s0 + $0x60] sm:$0xff]
    %v120 = vld [vmem:[%s0 + $0x68] sm:$0xff]
    %v121 = vld [vmem:[%s0 + $0x70] sm:$0xff]
    %v122 = vld [vmem:[%s0 + $0x78] sm:$0xff]
    %v123 = vlaneseq
    %v124 = vand.u32 %v123, 127
    %125 = vset.pattern.permute.xlu0 0
    %126 = vperm.xlu0 %125, %v107
    %v127 = vpop.permute.xlu0 %126
    %128 = vset.pattern.permute.xlu0 0
    %129 = vperm.xlu0 %128, %v108
    %v130 = vpop.permute.xlu0 %129
    %131 = vset.pattern.permute.xlu0 0
    %132 = vperm.xlu0 %131, %v109
    %v133 = vpop.permute.xlu0 %132
    %134 = vset.pattern.permute.xlu0 0
    %135 = vperm.xlu0 %134, %v110
    %v136 = vpop.permute.xlu0 %135
    %137 = vset.pattern.permute.xlu0 0
    %138 = vperm.xlu0 %137, %v111
    %v139 = vpop.permute.xlu0 %138
    %140 = vset.pattern.permute.xlu0 0
    %141 = vperm.xlu0 %140, %v112
    %v142 = vpop.permute.xlu0 %141
    %143 = vset.pattern.permute.xlu0 0
    %144 = vperm.xlu0 %143, %v113
    %v145 = vpop.permute.xlu0 %144
    %146 = vset.pattern.permute.xlu0 0
    %147 = vperm.xlu0 %146, %v114
    %v148 = vpop.permute.xlu0 %147
    %149 = vset.pattern.permute.xlu0 0
    %150 = vperm.xlu0 %149, %v115
    %v151 = vpop.permute.xlu0 %150
    %152 = vset.pattern.permute.xlu0 0
    %153 = vperm.xlu0 %152, %v116
    %v154 = vpop.permute.xlu0 %153
    %155 = vset.pattern.permute.xlu0 0
    %156 = vperm.xlu0 %155, %v117
    %v157 = vpop.permute.xlu0 %156
    %158 = vset.pattern.permute.xlu0 0
    %159 = vperm.xlu0 %158, %v118
    %v160 = vpop.permute.xlu0 %159
    %161 = vset.pattern.permute.xlu0 0
    %162 = vperm.xlu0 %161, %v119
    %v163 = vpop.permute.xlu0 %162
    %164 = vset.pattern.permute.xlu0 0
    %165 = vperm.xlu0 %164, %v120
    %v166 = vpop.permute.xlu0 %165
    %167 = vset.pattern.permute.xlu0 0
    %168 = vperm.xlu0 %167, %v121
    %v169 = vpop.permute.xlu0 %168
    %170 = vset.pattern.permute.xlu0 0
    %171 = vperm.xlu0 %170, %v122
    %v172 = vpop.permute.xlu0 %171
    %vm173 = vcmp.eq.s32.totalorder %v124, %v127
    %vm174 = vcmp.eq.s32.totalorder %v124, %v130
    %vm175 = vcmp.eq.s32.totalorder %v124, %v133
    %vm176 = vcmp.eq.s32.totalorder %v124, %v136
    %vm177 = vcmp.eq.s32.totalorder %v124, %v139
    %vm178 = vcmp.eq.s32.totalorder %v124, %v142
    %vm179 = vcmp.eq.s32.totalorder %v124, %v145
    %vm180 = vcmp.eq.s32.totalorder %v124, %v148
    %vm181 = vcmp.eq.s32.totalorder %v124, %v151
    %vm182 = vcmp.eq.s32.totalorder %v124, %v154
    %vm183 = vcmp.eq.s32.totalorder %v124, %v157
    %vm184 = vcmp.eq.s32.totalorder %v124, %v160
    %vm185 = vcmp.eq.s32.totalorder %v124, %v163
    %vm186 = vcmp.eq.s32.totalorder %v124, %v166
    %vm187 = vcmp.eq.s32.totalorder %v124, %v169
    %vm188 = vcmp.eq.s32.totalorder %v124, %v172
    %v189 = vsel %vm173, 1, 0
    %v190 = vsel %vm174, 1, 0
    %v191 = vsel %vm175, 1, 0
    %v192 = vsel %vm176, 1, 0
    %v193 = vsel %vm177, 1, 0
    %v194 = vsel %vm178, 1, 0
    %v195 = vsel %vm179, 1, 0
    %v196 = vsel %vm180, 1, 0
    %v197 = vsel %vm181, 1, 0
    %v198 = vsel %vm182, 1, 0
    %v199 = vsel %vm183, 1, 0
    %v200 = vsel %vm184, 1, 0
    %v201 = vsel %vm185, 1, 0
    %v202 = vsel %vm186, 1, 0
    %v203 = vsel %vm187, 1, 0
    %v204 = vsel %vm188, 1, 0
    %v205 = vcvt.s32.f32 %v189
    %v206 = vcvt.s32.f32 %v190
    %v207 = vcvt.s32.f32 %v191
    %v208 = vcvt.s32.f32 %v192
    %v209 = vcvt.s32.f32 %v193
    %v210 = vcvt.s32.f32 %v194
    %v211 = vcvt.s32.f32 %v195
    %v212 = vcvt.s32.f32 %v196
    %v213 = vcvt.s32.f32 %v197
    %v214 = vcvt.s32.f32 %v198
    %v215 = vcvt.s32.f32 %v199
    %v216 = vcvt.s32.f32 %v200
    %v217 = vcvt.s32.f32 %v201
    %v218 = vcvt.s32.f32 %v202
    %v219 = vcvt.s32.f32 %v203
    %v220 = vcvt.s32.f32 %v204
    %v221 = vpack.c.bf16 %v206, %v205
    %v222 = vpack.c.bf16 %v208, %v207
    %v223 = vpack.c.bf16 %v210, %v209
    %v224 = vpack.c.bf16 %v212, %v211
    %v225 = vpack.c.bf16 %v214, %v213
    %v226 = vpack.c.bf16 %v216, %v215
    %v227 = vpack.c.bf16 %v218, %v217
    %v228 = vpack.c.bf16 %v220, %v219
    %v229 = vld [vmem:[%s2] sm:$0xf]
    %vm230 = vcmask 64512
    %v232 = vsel %vm230, %v221, 0
    %v235 = vsel %vm230, %v222, 0
    %v238 = vsel %vm230, %v223, 0
    %v241 = vsel %vm230, %v224, 0
    %v244 = vsel %vm230, %v225, 0
    %v247 = vsel %vm230, %v226, 0
    %v250 = vsel %vm230, %v227, 0
    %v253 = vsel %vm230, %v228, 0
    %vm255 = vcmask 1043456
    %v257 = vsel %vm255, %v229, 0
    %259 = vmatprep.subr.bf16.mxu0 0
    %260 = vmatpush1.bf16.msra.mxu0 0
    %261 = vmatprep.subr.bf16.mxu0 0
    %262 = vmatpush1.bf16.msra.mxu0 0
    %263 = vmatprep.subr.bf16.mxu0 0
    %264 = vmatpush1.bf16.msra.mxu0 0
    %265 = vmatprep.subr.bf16.mxu0 0
    %266 = vmatpush1.bf16.msra.mxu0 0
    %267 = vmatprep.subr.bf16.mxu0 0
    %268 = vmatpush1.bf16.msra.mxu0 0
    %269 = vmatprep.subr.bf16.mxu0 0
    %270 = vmatpush1.bf16.msra.mxu0 0
    %271 = vmatprep.subr.bf16.mxu0 0
    %272 = vmatpush1.bf16.msra.mxu0 0
    %273 = vmatprep.subr.bf16.mxu0 0
    %274 = vmatpush1.bf16.msra.mxu0 %v257
    %275 = vmatprep.subr.bf16.mxu0 0
    %276 = vmatpush2.bf16.msra.mxu0 0
    %277 = vmatprep.subr.bf16.mxu0 0
    %278 = vmatpush2.bf16.msra.mxu0 0
    %279 = vmatprep.subr.bf16.mxu0 0
    %280 = vmatpush2.bf16.msra.mxu0 0
    %281 = vmatprep.subr.bf16.mxu0 0
    %282 = vmatpush2.bf16.msra.mxu0 0
    %283 = vmatprep.subr.bf16.mxu0 0
    %284 = vmatpush2.bf16.msra.mxu0 0
    %285 = vmatprep.subr.bf16.mxu0 0
    %286 = vmatpush2.bf16.msra.mxu0 0
    %287 = vmatprep.subr.bf16.mxu0 0
    %288 = vmatpush2.bf16.msra.mxu0 0
    %289 = vmatprep.subr.bf16.mxu0 0
    %290 = vmatpush2.bf16.msra.mxu0 0
    %291 = vmatprep.mubr.bf16.mxu0 0
    %292 = vmatmul.mubr.bf16.gmra.mxu0 %v232
    %v293 = vpop.f32.mrf.mxu0
    %v294 = vadd.f32 0.0, %v293
    %v295 = vpop.f32.mrf.mxu0
    %v296 = vpop.f32.mrf.mxu0
    %v297 = vadd.f32 0.0, %v296
    %v298 = vpop.f32.mrf.mxu0
    %299 = vmatprep.mubr.bf16.mxu0 0
    %300 = vmatmul.mubr.bf16.gmra.mxu0 %v235
    %v301 = vpop.f32.mrf.mxu0
    %v302 = vadd.f32 0.0, %v301
    %v303 = vpop.f32.mrf.mxu0
    %v304 = vpop.f32.mrf.mxu0
    %v305 = vadd.f32 0.0, %v304
    %v306 = vpop.f32.mrf.mxu0
    %307 = vmatprep.mubr.bf16.mxu0 0
    %308 = vmatmul.mubr.bf16.gmra.mxu0 %v238
    %v309 = vpop.f32.mrf.mxu0
    %v310 = vadd.f32 0.0, %v309
    %v311 = vpop.f32.mrf.mxu0
    %v312 = vpop.f32.mrf.mxu0
    %v313 = vadd.f32 0.0, %v312
    %v314 = vpop.f32.mrf.mxu0
    %315 = vmatprep.mubr.bf16.mxu0 0
    %316 = vmatmul.mubr.bf16.gmra.mxu0 %v241
    %v317 = vpop.f32.mrf.mxu0
    %v318 = vadd.f32 0.0, %v317
    %v319 = vpop.f32.mrf.mxu0
    %v320 = vpop.f32.mrf.mxu0
    %v321 = vadd.f32 0.0, %v320
    %v322 = vpop.f32.mrf.mxu0
    %323 = vmatprep.mubr.bf16.mxu0 0
    %324 = vmatmul.mubr.bf16.gmra.mxu0 %v244
    %v325 = vpop.f32.mrf.mxu0
    %v326 = vadd.f32 0.0, %v325
    %v327 = vpop.f32.mrf.mxu0
    %v328 = vpop.f32.mrf.mxu0
    %v329 = vadd.f32 0.0, %v328
    %v330 = vpop.f32.mrf.mxu0
    %331 = vmatprep.mubr.bf16.mxu0 0
    %332 = vmatmul.mubr.bf16.gmra.mxu0 %v247
    %v333 = vpop.f32.mrf.mxu0
    %v334 = vadd.f32 0.0, %v333
    %v335 = vpop.f32.mrf.mxu0
    %v336 = vpop.f32.mrf.mxu0
    %v337 = vadd.f32 0.0, %v336
    %v338 = vpop.f32.mrf.mxu0
    %339 = vmatprep.mubr.bf16.mxu0 0
    %340 = vmatmul.mubr.bf16.gmra.mxu0 %v250
    %v341 = vpop.f32.mrf.mxu0
    %v342 = vadd.f32 0.0, %v341
    %v343 = vpop.f32.mrf.mxu0
    %v344 = vpop.f32.mrf.mxu0
    %v345 = vadd.f32 0.0, %v344
    %v346 = vpop.f32.mrf.mxu0
    %347 = vmatprep.mubr.bf16.mxu0 0
    %348 = vmatmul.mubr.bf16.gmra.mxu0 %v253
    %v349 = vpop.f32.mrf.mxu0
    %v350 = vadd.f32 0.0, %v349
    %v351 = vpop.f32.mrf.mxu0
    %v352 = vpop.f32.mrf.mxu0
    %v353 = vadd.f32 0.0, %v352
    %v354 = vpop.f32.mrf.mxu0
    %355 = vdwg.mxu0
    %v356 = vld [vmem:[%s3] sm:$0xf]
    %v357 = vpack.c.bf16 %v297, %v294
    %v358 = vpack.c.bf16 %v305, %v302
    %v359 = vpack.c.bf16 %v313, %v310
    %v360 = vpack.c.bf16 %v321, %v318
    %v361 = vpack.c.bf16 %v329, %v326
    %v362 = vpack.c.bf16 %v337, %v334
    %v363 = vpack.c.bf16 %v345, %v342
    %v364 = vpack.c.bf16 %v353, %v350
    %v365 = vld [vmem:[%s1] sm:$0xff]
    %v366 = vld [vmem:[%s1 + $0x8] sm:$0xff]
    %v367 = vld [vmem:[%s1 + $0x10] sm:$0xff]
    %v368 = vld [vmem:[%s1 + $0x18] sm:$0xff]
    %v369 = vld [vmem:[%s1 + $0x20] sm:$0xff]
    %v370 = vld [vmem:[%s1 + $0x28] sm:$0xff]
    %v371 = vld [vmem:[%s1 + $0x30] sm:$0xff]
    %v372 = vld [vmem:[%s1 + $0x38] sm:$0xff]
    %v373 = vld [vmem:[%s1 + $0x40] sm:$0xff]
    %v374 = vld [vmem:[%s1 + $0x48] sm:$0xff]
    %v375 = vld [vmem:[%s1 + $0x50] sm:$0xff]
    %v376 = vld [vmem:[%s1 + $0x58] sm:$0xff]
    %v377 = vld [vmem:[%s1 + $0x60] sm:$0xff]
    %v378 = vld [vmem:[%s1 + $0x68] sm:$0xff]
    %v379 = vld [vmem:[%s1 + $0x70] sm:$0xff]
    %v380 = vld [vmem:[%s1 + $0x78] sm:$0xff]
    %v381 = vld [vmem:[%s4] sm:$0xf]
    %v382 = vld [vmem:[%s4 + $0x4] sm:$0xf]
    %v383 = vld [vmem:[%s4 + $0x8] sm:$0xf]
    %v384 = vld [vmem:[%s4 + $0xc] sm:$0xf]
    %v385 = vpack.c.bf16 %v366, %v365
    %v386 = vpack.c.bf16 %v368, %v367
    %v387 = vpack.c.bf16 %v370, %v369
    %v388 = vpack.c.bf16 %v372, %v371
    %v389 = vpack.c.bf16 %v374, %v373
    %v390 = vpack.c.bf16 %v376, %v375
    %v391 = vpack.c.bf16 %v378, %v377
    %v392 = vpack.c.bf16 %v380, %v379
    %v397 = vunpack.c.l.b16 %v381
    %v398 = vunpack.c.l.b16 %v382
    %v399 = vunpack.c.l.b16 %v383
    %v400 = vunpack.c.l.b16 %v384
    %v401 = vpack.c.b16 %v398, %v397
    %v402 = vpack.c.b16 %v400, %v399
    %vm405 = vcmask 261120
    %v407 = vsel %vm405, %v385, 0
    %v410 = vsel %vm405, %v386, 0
    %v413 = vsel %vm405, %v387, 0
    %v416 = vsel %vm405, %v388, 0
    %v419 = vsel %vm405, %v389, 0
    %v422 = vsel %vm405, %v390, 0
    %v425 = vsel %vm405, %v391, 0
    %v428 = vsel %vm405, %v392, 0
    %430 = vmatprep.subr.bf16.mxu0 0
    %431 = vmatpush1.bf16.msra.mxu0 0
    %432 = vmatprep.subr.bf16.mxu0 0
    %433 = vmatpush1.bf16.msra.mxu0 0
    %434 = vmatprep.subr.bf16.mxu0 0
    %435 = vmatpush1.bf16.msra.mxu0 0
    %436 = vmatprep.subr.bf16.mxu0 0
    %437 = vmatpush1.bf16.msra.mxu0 0
    %438 = vmatprep.subr.bf16.mxu0 0
    %439 = vmatpush1.bf16.msra.mxu0 0
    %440 = vmatprep.subr.bf16.mxu0 0
    %441 = vmatpush1.bf16.msra.mxu0 0
    %442 = vmatprep.subr.bf16.mxu0 0
    %443 = vmatpush1.bf16.msra.mxu0 %v402
    %444 = vmatprep.subr.bf16.mxu0 0
    %445 = vmatpush1.bf16.msra.mxu0 %v401
    %446 = vmatprep.subr.bf16.mxu0 0
    %447 = vmatpush2.bf16.msra.mxu0 0
    %448 = vmatprep.subr.bf16.mxu0 0
    %449 = vmatpush2.bf16.msra.mxu0 0
    %450 = vmatprep.subr.bf16.mxu0 0
    %451 = vmatpush2.bf16.msra.mxu0 0
    %452 = vmatprep.subr.bf16.mxu0 0
    %453 = vmatpush2.bf16.msra.mxu0 0
    %454 = vmatprep.subr.bf16.mxu0 0
    %455 = vmatpush2.bf16.msra.mxu0 0
    %456 = vmatprep.subr.bf16.mxu0 0
    %457 = vmatpush2.bf16.msra.mxu0 0
    %458 = vmatprep.subr.bf16.mxu0 0
    %459 = vmatpush2.bf16.msra.mxu0 0
    %460 = vmatprep.subr.bf16.mxu0 0
    %461 = vmatpush2.bf16.msra.mxu0 0
    %462 = vmatprep.mubr.bf16.mxu0 0
    %463 = vmatmul.mubr.bf16.gmra.mxu0 %v407
    %v464 = vpop.f32.mrf.mxu0
    %v465 = vadd.f32 0.0, %v464
    %v466 = vpop.f32.mrf.mxu0
    %v467 = vpop.f32.mrf.mxu0
    %v468 = vadd.f32 0.0, %v467
    %v469 = vpop.f32.mrf.mxu0
    %470 = vmatprep.mubr.bf16.mxu0 0
    %471 = vmatmul.mubr.bf16.gmra.mxu0 %v410
    %v472 = vpop.f32.mrf.mxu0
    %v473 = vadd.f32 0.0, %v472
    %v474 = vpop.f32.mrf.mxu0
    %v475 = vpop.f32.mrf.mxu0
    %v476 = vadd.f32 0.0, %v475
    %v477 = vpop.f32.mrf.mxu0
    %478 = vmatprep.mubr.bf16.mxu0 0
    %479 = vmatmul.mubr.bf16.gmra.mxu0 %v413
    %v480 = vpop.f32.mrf.mxu0
    %v481 = vadd.f32 0.0, %v480
    %v482 = vpop.f32.mrf.mxu0
    %v483 = vpop.f32.mrf.mxu0
    %v484 = vadd.f32 0.0, %v483
    %v485 = vpop.f32.mrf.mxu0
    %486 = vmatprep.mubr.bf16.mxu0 0
    %487 = vmatmul.mubr.bf16.gmra.mxu0 %v416
    %v488 = vpop.f32.mrf.mxu0
    %v489 = vadd.f32 0.0, %v488
    %v490 = vpop.f32.mrf.mxu0
    %v491 = vpop.f32.mrf.mxu0
    %v492 = vadd.f32 0.0, %v491
    %v493 = vpop.f32.mrf.mxu0
    %494 = vmatprep.mubr.bf16.mxu0 0
    %495 = vmatmul.mubr.bf16.gmra.mxu0 %v419
    %v496 = vpop.f32.mrf.mxu0
    %v497 = vadd.f32 0.0, %v496
    %v498 = vpop.f32.mrf.mxu0
    %v499 = vpop.f32.mrf.mxu0
    %v500 = vadd.f32 0.0, %v499
    %v501 = vpop.f32.mrf.mxu0
    %502 = vmatprep.mubr.bf16.mxu0 0
    %503 = vmatmul.mubr.bf16.gmra.mxu0 %v422
    %v504 = vpop.f32.mrf.mxu0
    %v505 = vadd.f32 0.0, %v504
    %v506 = vpop.f32.mrf.mxu0
    %v507 = vpop.f32.mrf.mxu0
    %v508 = vadd.f32 0.0, %v507
    %v509 = vpop.f32.mrf.mxu0
    %510 = vmatprep.mubr.bf16.mxu0 0
    %511 = vmatmul.mubr.bf16.gmra.mxu0 %v425
    %v512 = vpop.f32.mrf.mxu0
    %v513 = vadd.f32 0.0, %v512
    %v514 = vpop.f32.mrf.mxu0
    %v515 = vpop.f32.mrf.mxu0
    %v516 = vadd.f32 0.0, %v515
    %v517 = vpop.f32.mrf.mxu0
    %518 = vmatprep.mubr.bf16.mxu0 0
    %519 = vmatmul.mubr.bf16.gmra.mxu0 %v428
    %v520 = vpop.f32.mrf.mxu0
    %v521 = vadd.f32 0.0, %v520
    %v522 = vpop.f32.mrf.mxu0
    %v523 = vpop.f32.mrf.mxu0
    %v524 = vadd.f32 0.0, %v523
    %v525 = vpop.f32.mrf.mxu0
    %526 = vdwg.mxu0
    %v528 = vsel %vm230, %v357, 0
    %v531 = vsel %vm230, %v358, 0
    %v534 = vsel %vm230, %v359, 0
    %v537 = vsel %vm230, %v360, 0
    %v540 = vsel %vm230, %v361, 0
    %v543 = vsel %vm230, %v362, 0
    %v546 = vsel %vm230, %v363, 0
    %v549 = vsel %vm230, %v364, 0
    %v552 = vsel %vm255, %v356, 0
    %554 = vmatprep.subr.bf16.mxu0 0
    %555 = vmatpush1.bf16.msra.mxu0 0
    %556 = vmatprep.subr.bf16.mxu0 0
    %557 = vmatpush1.bf16.msra.mxu0 0
    %558 = vmatprep.subr.bf16.mxu0 0
    %559 = vmatpush1.bf16.msra.mxu0 0
    %560 = vmatprep.subr.bf16.mxu0 0
    %561 = vmatpush1.bf16.msra.mxu0 0
    %562 = vmatprep.subr.bf16.mxu0 0
    %563 = vmatpush1.bf16.msra.mxu0 0
    %564 = vmatprep.subr.bf16.mxu0 0
    %565 = vmatpush1.bf16.msra.mxu0 0
    %566 = vmatprep.subr.bf16.mxu0 0
    %567 = vmatpush1.bf16.msra.mxu0 0
    %568 = vmatprep.subr.bf16.mxu0 0
    %569 = vmatpush1.bf16.msra.mxu0 %v552
    %570 = vmatprep.subr.bf16.mxu0 0
    %571 = vmatpush2.bf16.msra.mxu0 0
    %572 = vmatprep.subr.bf16.mxu0 0
    %573 = vmatpush2.bf16.msra.mxu0 0
    %574 = vmatprep.subr.bf16.mxu0 0
    %575 = vmatpush2.bf16.msra.mxu0 0
    %576 = vmatprep.subr.bf16.mxu0 0
    %577 = vmatpush2.bf16.msra.mxu0 0
    %578 = vmatprep.subr.bf16.mxu0 0
    %579 = vmatpush2.bf16.msra.mxu0 0
    %580 = vmatprep.subr.bf16.mxu0 0
    %581 = vmatpush2.bf16.msra.mxu0 0
    %582 = vmatprep.subr.bf16.mxu0 0
    %583 = vmatpush2.bf16.msra.mxu0 0
    %584 = vmatprep.subr.bf16.mxu0 0
    %585 = vmatpush2.bf16.msra.mxu0 0
    %586 = vmatprep.mubr.bf16.mxu0 0
    %587 = vmatmul.mubr.bf16.gmra.mxu0 %v528
    %v588 = vpop.f32.mrf.mxu0
    %v589 = vadd.f32 %v465, %v588
    %v590 = vpop.f32.mrf.mxu0
    %v591 = vpop.f32.mrf.mxu0
    %v592 = vadd.f32 %v468, %v591
    %v593 = vpop.f32.mrf.mxu0
    %594 = vmatprep.mubr.bf16.mxu0 0
    %595 = vmatmul.mubr.bf16.gmra.mxu0 %v531
    %v596 = vpop.f32.mrf.mxu0
    %v597 = vadd.f32 %v473, %v596
    %v598 = vpop.f32.mrf.mxu0
    %v599 = vpop.f32.mrf.mxu0
    %v600 = vadd.f32 %v476, %v599
    %v601 = vpop.f32.mrf.mxu0
    %602 = vmatprep.mubr.bf16.mxu0 0
    %603 = vmatmul.mubr.bf16.gmra.mxu0 %v534
    %v604 = vpop.f32.mrf.mxu0
    %v605 = vadd.f32 %v481, %v604
    %v606 = vpop.f32.mrf.mxu0
    %v607 = vpop.f32.mrf.mxu0
    %v608 = vadd.f32 %v484, %v607
    %v609 = vpop.f32.mrf.mxu0
    %610 = vmatprep.mubr.bf16.mxu0 0
    %611 = vmatmul.mubr.bf16.gmra.mxu0 %v537
    %v612 = vpop.f32.mrf.mxu0
    %v613 = vadd.f32 %v489, %v612
    %v614 = vpop.f32.mrf.mxu0
    %v615 = vpop.f32.mrf.mxu0
    %v616 = vadd.f32 %v492, %v615
    %v617 = vpop.f32.mrf.mxu0
    %618 = vmatprep.mubr.bf16.mxu0 0
    %619 = vmatmul.mubr.bf16.gmra.mxu0 %v540
    %v620 = vpop.f32.mrf.mxu0
    %v621 = vadd.f32 %v497, %v620
    %v622 = vpop.f32.mrf.mxu0
    %v623 = vpop.f32.mrf.mxu0
    %v624 = vadd.f32 %v500, %v623
    %v625 = vpop.f32.mrf.mxu0
    %626 = vmatprep.mubr.bf16.mxu0 0
    %627 = vmatmul.mubr.bf16.gmra.mxu0 %v543
    %v628 = vpop.f32.mrf.mxu0
    %v629 = vadd.f32 %v505, %v628
    %v630 = vpop.f32.mrf.mxu0
    %v631 = vpop.f32.mrf.mxu0
    %v632 = vadd.f32 %v508, %v631
    %v633 = vpop.f32.mrf.mxu0
    %634 = vmatprep.mubr.bf16.mxu0 0
    %635 = vmatmul.mubr.bf16.gmra.mxu0 %v546
    %v636 = vpop.f32.mrf.mxu0
    %v637 = vadd.f32 %v513, %v636
    %v638 = vpop.f32.mrf.mxu0
    %v639 = vpop.f32.mrf.mxu0
    %v640 = vadd.f32 %v516, %v639
    %v641 = vpop.f32.mrf.mxu0
    %642 = vmatprep.mubr.bf16.mxu0 0
    %643 = vmatmul.mubr.bf16.gmra.mxu0 %v549
    %v644 = vpop.f32.mrf.mxu0
    %v645 = vadd.f32 %v521, %v644
    %v646 = vpop.f32.mrf.mxu0
    %v647 = vpop.f32.mrf.mxu0
    %v648 = vadd.f32 %v524, %v647
    %v649 = vpop.f32.mrf.mxu0
    %650 = vdwg.mxu0
    %v651 = vld [vmem:[%s5] sm:$0x1]
    %v653 = vlaneseq
    %v654 = vshrl.u32 %v653, 7
    %v655 = vsub.s32 0, %v654
    %v656 = vrot.slane %v651, %v655
    %v658 = vadd.f32 %v589, %v656
    %v659 = vadd.f32 %v592, %v656
    %v660 = vadd.f32 %v597, %v656
    %v661 = vadd.f32 %v600, %v656
    %v662 = vadd.f32 %v605, %v656
    %v663 = vadd.f32 %v608, %v656
    %v664 = vadd.f32 %v613, %v656
    %v665 = vadd.f32 %v616, %v656
    %v666 = vadd.f32 %v621, %v656
    %v667 = vadd.f32 %v624, %v656
    %v668 = vadd.f32 %v629, %v656
    %v669 = vadd.f32 %v632, %v656
    %v670 = vadd.f32 %v637, %v656
    %v671 = vadd.f32 %v640, %v656
    %v672 = vadd.f32 %v645, %v656
    %v673 = vadd.f32 %v648, %v656
    %vm674 = vcmp.gt.f32.partialorder %v658, 0.0
    %vm675 = vcmp.gt.f32.partialorder %v659, 0.0
    %vm676 = vcmp.gt.f32.partialorder %v660, 0.0
    %vm677 = vcmp.gt.f32.partialorder %v661, 0.0
    %vm678 = vcmp.gt.f32.partialorder %v662, 0.0
    %vm679 = vcmp.gt.f32.partialorder %v663, 0.0
    %vm680 = vcmp.gt.f32.partialorder %v664, 0.0
    %vm681 = vcmp.gt.f32.partialorder %v665, 0.0
    %vm682 = vcmp.gt.f32.partialorder %v666, 0.0
    %vm683 = vcmp.gt.f32.partialorder %v667, 0.0
    %vm684 = vcmp.gt.f32.partialorder %v668, 0.0
    %vm685 = vcmp.gt.f32.partialorder %v669, 0.0
    %vm686 = vcmp.gt.f32.partialorder %v670, 0.0
    %vm687 = vcmp.gt.f32.partialorder %v671, 0.0
    %vm688 = vcmp.gt.f32.partialorder %v672, 0.0
    %vm689 = vcmp.gt.f32.partialorder %v673, 0.0
    %v690 = vmul.f32 %v658, 0.2
    %v691 = vmul.f32 %v659, 0.2
    %v692 = vmul.f32 %v660, 0.2
    %v693 = vmul.f32 %v661, 0.2
    %v694 = vmul.f32 %v662, 0.2
    %v695 = vmul.f32 %v663, 0.2
    %v696 = vmul.f32 %v664, 0.2
    %v697 = vmul.f32 %v665, 0.2
    %v698 = vmul.f32 %v666, 0.2
    %v699 = vmul.f32 %v667, 0.2
    %v700 = vmul.f32 %v668, 0.2
    %v701 = vmul.f32 %v669, 0.2
    %v702 = vmul.f32 %v670, 0.2
    %v703 = vmul.f32 %v671, 0.2
    %v704 = vmul.f32 %v672, 0.2
    %v705 = vmul.f32 %v673, 0.2
    %v706 = vsel %vm674, %v658, %v690
    %v707 = vsel %vm675, %v659, %v691
    %v708 = vsel %vm676, %v660, %v692
    %v709 = vsel %vm677, %v661, %v693
    %v710 = vsel %vm678, %v662, %v694
    %v711 = vsel %vm679, %v663, %v695
    %v712 = vsel %vm680, %v664, %v696
    %v713 = vsel %vm681, %v665, %v697
    %v714 = vsel %vm682, %v666, %v698
    %v715 = vsel %vm683, %v667, %v699
    %v716 = vsel %vm684, %v668, %v700
    %v717 = vsel %vm685, %v669, %v701
    %v718 = vsel %vm686, %v670, %v702
    %v719 = vsel %vm687, %v671, %v703
    %v720 = vsel %vm688, %v672, %v704
    %v721 = vsel %vm689, %v673, %v705
    %v722 = vld [vmem:[%s6] sm:$0xff]
    %v723 = vld [vmem:[%s6 + $0x8] sm:$0xff]
    %v724 = vld [vmem:[%s6 + $0x10] sm:$0xff]
    %v725 = vld [vmem:[%s6 + $0x18] sm:$0xff]
    %v726 = vld [vmem:[%s6 + $0x20] sm:$0xff]
    %v727 = vld [vmem:[%s6 + $0x28] sm:$0xff]
    %v728 = vld [vmem:[%s6 + $0x30] sm:$0xff]
    %v729 = vld [vmem:[%s6 + $0x38] sm:$0xff]
    %v730 = vld [vmem:[%s6 + $0x40] sm:$0xff]
    %v731 = vld [vmem:[%s6 + $0x48] sm:$0xff]
    %v732 = vld [vmem:[%s6 + $0x50] sm:$0xff]
    %v733 = vld [vmem:[%s6 + $0x58] sm:$0xff]
    %v734 = vld [vmem:[%s6 + $0x60] sm:$0xff]
    %v735 = vld [vmem:[%s6 + $0x68] sm:$0xff]
    %v736 = vld [vmem:[%s6 + $0x70] sm:$0xff]
    %v737 = vld [vmem:[%s6 + $0x78] sm:$0xff]
    %v738 = vpack.c.bf16 %v707, %v706
    %v739 = vpack.c.bf16 %v709, %v708
    %v740 = vpack.c.bf16 %v711, %v710
    %v741 = vpack.c.bf16 %v713, %v712
    %v742 = vpack.c.bf16 %v715, %v714
    %v743 = vpack.c.bf16 %v717, %v716
    %v744 = vpack.c.bf16 %v719, %v718
    %v745 = vpack.c.bf16 %v721, %v720
    %v746 = vld [vmem:[%s7] sm:$0x3]
    %v748 = vlaneseq
    %v749 = vshrl.u32 %v748, 7
    %v750 = vsub.s32 0, %v749
    %v751 = vrot.slane %v746, %v750
    %v752 = vlaneseq
    %v753 = vshrl.u32 %v752, 7
    %v754 = vsub.s32 1, %v753
    %v755 = vrot.slane %v746, %v754
    %v774 = vunpack.c.l.b16 %v722
    %v775 = vunpack.c.h.b16 %v722
    %v776 = vunpack.c.l.b16 %v723
    %v777 = vunpack.c.h.b16 %v723
    %v778 = vunpack.c.l.b16 %v724
    %v779 = vunpack.c.h.b16 %v724
    %v780 = vunpack.c.l.b16 %v725
    %v781 = vunpack.c.h.b16 %v725
    %v782 = vunpack.c.l.b16 %v726
    %v783 = vunpack.c.h.b16 %v726
    %v784 = vunpack.c.l.b16 %v727
    %v785 = vunpack.c.h.b16 %v727
    %v786 = vunpack.c.l.b16 %v728
    %v787 = vunpack.c.h.b16 %v728
    %v788 = vunpack.c.l.b16 %v729
    %v789 = vunpack.c.h.b16 %v729
    %v790 = vunpack.c.l.b16 %v730
    %v791 = vunpack.c.h.b16 %v730
    %v792 = vunpack.c.l.b16 %v731
    %v793 = vunpack.c.h.b16 %v731
    %v794 = vunpack.c.l.b16 %v732
    %v795 = vunpack.c.h.b16 %v732
    %v796 = vunpack.c.l.b16 %v733
    %v797 = vunpack.c.h.b16 %v733
    %v798 = vunpack.c.l.b16 %v734
    %v799 = vunpack.c.h.b16 %v734
    %v800 = vunpack.c.l.b16 %v735
    %v801 = vunpack.c.h.b16 %v735
    %v802 = vunpack.c.l.b16 %v736
    %v803 = vunpack.c.h.b16 %v736
    %v804 = vunpack.c.l.b16 %v737
    %v805 = vunpack.c.h.b16 %v737
    %v806 = vpack.c.b16 %v776, %v774
    %v807 = vpack.c.b16 %v777, %v775
    %v808 = vpack.c.b16 %v780, %v778
    %v809 = vpack.c.b16 %v781, %v779
    %v810 = vpack.c.b16 %v784, %v782
    %v811 = vpack.c.b16 %v785, %v783
    %v812 = vpack.c.b16 %v788, %v786
    %v813 = vpack.c.b16 %v789, %v787
    %v814 = vpack.c.b16 %v792, %v790
    %v815 = vpack.c.b16 %v793, %v791
    %v816 = vpack.c.b16 %v796, %v794
    %v817 = vpack.c.b16 %v797, %v795
    %v818 = vpack.c.b16 %v800, %v798
    %v819 = vpack.c.b16 %v801, %v799
    %v820 = vpack.c.b16 %v804, %v802
    %v821 = vpack.c.b16 %v805, %v803
    %838 = vmatprep.subr.bf16.mxu0 %v821
    %839 = vmatpush1.bf16.msra.mxu0 %v820
    %840 = vmatprep.subr.bf16.mxu0 %v819
    %841 = vmatpush1.bf16.msra.mxu0 %v818
    %842 = vmatprep.subr.bf16.mxu0 %v817
    %843 = vmatpush1.bf16.msra.mxu0 %v816
    %844 = vmatprep.subr.bf16.mxu0 %v815
    %845 = vmatpush1.bf16.msra.mxu0 %v814
    %846 = vmatprep.subr.bf16.mxu0 %v813
    %847 = vmatpush1.bf16.msra.mxu0 %v812
    %848 = vmatprep.subr.bf16.mxu0 %v811
    %849 = vmatpush1.bf16.msra.mxu0 %v810
    %850 = vmatprep.subr.bf16.mxu0 %v809
    %851 = vmatpush1.bf16.msra.mxu0 %v808
    %852 = vmatprep.subr.bf16.mxu0 %v807
    %853 = vmatpush1.bf16.msra.mxu0 %v806
    %854 = vmatprep.subr.bf16.mxu0 0
    %855 = vmatpush2.bf16.msra.mxu0 0
    %856 = vmatprep.subr.bf16.mxu0 0
    %857 = vmatpush2.bf16.msra.mxu0 0
    %858 = vmatprep.subr.bf16.mxu0 0
    %859 = vmatpush2.bf16.msra.mxu0 0
    %860 = vmatprep.subr.bf16.mxu0 0
    %861 = vmatpush2.bf16.msra.mxu0 0
    %862 = vmatprep.subr.bf16.mxu0 0
    %863 = vmatpush2.bf16.msra.mxu0 0
    %864 = vmatprep.subr.bf16.mxu0 0
    %865 = vmatpush2.bf16.msra.mxu0 0
    %866 = vmatprep.subr.bf16.mxu0 0
    %867 = vmatpush2.bf16.msra.mxu0 0
    %868 = vmatprep.subr.bf16.mxu0 0
    %869 = vmatpush2.bf16.msra.mxu0 0
    %870 = vmatprep.mubr.bf16.mxu0 0
    %871 = vmatmul.mubr.bf16.gmra.mxu0 %v738
    %v872 = vpop.f32.mrf.mxu0
    %v873 = vadd.f32 %v751, %v872
    %v874 = vpop.f32.mrf.mxu0
    %v875 = vadd.f32 %v755, %v874
    %v876 = vpop.f32.mrf.mxu0
    %v877 = vadd.f32 %v751, %v876
    %v878 = vpop.f32.mrf.mxu0
    %v879 = vadd.f32 %v755, %v878
    %880 = vmatprep.mubr.bf16.mxu0 0
    %881 = vmatmul.mubr.bf16.gmra.mxu0 %v739
    %v882 = vpop.f32.mrf.mxu0
    %v883 = vadd.f32 %v751, %v882
    %v884 = vpop.f32.mrf.mxu0
    %v885 = vadd.f32 %v755, %v884
    %v886 = vpop.f32.mrf.mxu0
    %v887 = vadd.f32 %v751, %v886
    %v888 = vpop.f32.mrf.mxu0
    %v889 = vadd.f32 %v755, %v888
    %890 = vmatprep.mubr.bf16.mxu0 0
    %891 = vmatmul.mubr.bf16.gmra.mxu0 %v740
    %v892 = vpop.f32.mrf.mxu0
    %v893 = vadd.f32 %v751, %v892
    %v894 = vpop.f32.mrf.mxu0
    %v895 = vadd.f32 %v755, %v894
    %v896 = vpop.f32.mrf.mxu0
    %v897 = vadd.f32 %v751, %v896
    %v898 = vpop.f32.mrf.mxu0
    %v899 = vadd.f32 %v755, %v898
    %900 = vmatprep.mubr.bf16.mxu0 0
    %901 = vmatmul.mubr.bf16.gmra.mxu0 %v741
    %v902 = vpop.f32.mrf.mxu0
    %v903 = vadd.f32 %v751, %v902
    %v904 = vpop.f32.mrf.mxu0
    %v905 = vadd.f32 %v755, %v904
    %v906 = vpop.f32.mrf.mxu0
    %v907 = vadd.f32 %v751, %v906
    %v908 = vpop.f32.mrf.mxu0
    %v909 = vadd.f32 %v755, %v908
    %910 = vmatprep.mubr.bf16.mxu0 0
    %911 = vmatmul.mubr.bf16.gmra.mxu0 %v742
    %v912 = vpop.f32.mrf.mxu0
    %v913 = vadd.f32 %v751, %v912
    %v914 = vpop.f32.mrf.mxu0
    %v915 = vadd.f32 %v755, %v914
    %v916 = vpop.f32.mrf.mxu0
    %v917 = vadd.f32 %v751, %v916
    %v918 = vpop.f32.mrf.mxu0
    %v919 = vadd.f32 %v755, %v918
    %920 = vmatprep.mubr.bf16.mxu0 0
    %921 = vmatmul.mubr.bf16.gmra.mxu0 %v743
    %v922 = vpop.f32.mrf.mxu0
    %v923 = vadd.f32 %v751, %v922
    %v924 = vpop.f32.mrf.mxu0
    %v925 = vadd.f32 %v755, %v924
    %v926 = vpop.f32.mrf.mxu0
    %v927 = vadd.f32 %v751, %v926
    %v928 = vpop.f32.mrf.mxu0
    %v929 = vadd.f32 %v755, %v928
    %930 = vmatprep.mubr.bf16.mxu0 0
    %931 = vmatmul.mubr.bf16.gmra.mxu0 %v744
    %v932 = vpop.f32.mrf.mxu0
    %v933 = vadd.f32 %v751, %v932
    %v934 = vpop.f32.mrf.mxu0
    %v935 = vadd.f32 %v755, %v934
    %v936 = vpop.f32.mrf.mxu0
    %v937 = vadd.f32 %v751, %v936
    %v938 = vpop.f32.mrf.mxu0
    %v939 = vadd.f32 %v755, %v938
    %940 = vmatprep.mubr.bf16.mxu0 0
    %941 = vmatmul.mubr.bf16.gmra.mxu0 %v745
    %v942 = vpop.f32.mrf.mxu0
    %v943 = vadd.f32 %v751, %v942
    %v944 = vpop.f32.mrf.mxu0
    %v945 = vadd.f32 %v755, %v944
    %v946 = vpop.f32.mrf.mxu0
    %v947 = vadd.f32 %v751, %v946
    %v948 = vpop.f32.mrf.mxu0
    %v949 = vadd.f32 %v755, %v948
    %950 = vdwg.mxu0
    %v951 = vld [vmem:[%s8] sm:$0x3]
    %v952 = vld [vmem:[%s9] sm:$0x3]
    %v953 = vadd.f32 %v873, %v877
    %v954 = vadd.f32 %v953, %v883
    %v955 = vadd.f32 %v954, %v887
    %v956 = vadd.f32 %v955, %v893
    %v957 = vadd.f32 %v956, %v897
    %v958 = vadd.f32 %v957, %v903
    %v959 = vadd.f32 %v958, %v907
    %v960 = vadd.f32 %v959, %v913
    %v961 = vadd.f32 %v960, %v917
    %v962 = vadd.f32 %v961, %v923
    %v963 = vadd.f32 %v962, %v927
    %v964 = vadd.f32 %v963, %v933
    %v965 = vadd.f32 %v964, %v937
    %v966 = vadd.f32 %v965, %v943
    %v967 = vadd.f32 %v966, %v947
    %v968 = vrot.slane %v967, 4
    %v969 = vadd.f32 %v967, %v968
    %v970 = vrot.slane %v969, 2
    %v971 = vadd.f32 %v969, %v970
    %v972 = vrot.slane %v971, 1
    %v973 = vadd.f32 %v971, %v972
    %v974 = vadd.f32 %v875, %v879
    %v975 = vadd.f32 %v974, %v885
    %v976 = vadd.f32 %v975, %v889
    %v977 = vadd.f32 %v976, %v895
    %v978 = vadd.f32 %v977, %v899
    %v979 = vadd.f32 %v978, %v905
    %v980 = vadd.f32 %v979, %v909
    %v981 = vadd.f32 %v980, %v915
    %v982 = vadd.f32 %v981, %v919
    %v983 = vadd.f32 %v982, %v925
    %v984 = vadd.f32 %v983, %v929
    %v985 = vadd.f32 %v984, %v935
    %v986 = vadd.f32 %v985, %v939
    %v987 = vadd.f32 %v986, %v945
    %v988 = vadd.f32 %v987, %v949
    %v989 = vrot.slane %v988, 4
    %v990 = vadd.f32 %v988, %v989
    %v991 = vrot.slane %v990, 2
    %v992 = vadd.f32 %v990, %v991
    %v993 = vrot.slane %v992, 1
    %v994 = vadd.f32 %v992, %v993
    %v995 = vmul.f32 %v973, 0.0078125
    %v996 = vmul.f32 %v994, 0.0078125
    %v997 = vmul.f32 %v873, %v873
    %v998 = vmul.f32 %v875, %v875
    %v999 = vmul.f32 %v877, %v877
    %v1000 = vmul.f32 %v879, %v879
    %v1001 = vmul.f32 %v883, %v883
    %v1002 = vmul.f32 %v885, %v885
    %v1003 = vmul.f32 %v887, %v887
    %v1004 = vmul.f32 %v889, %v889
    %v1005 = vmul.f32 %v893, %v893
    %v1006 = vmul.f32 %v895, %v895
    %v1007 = vmul.f32 %v897, %v897
    %v1008 = vmul.f32 %v899, %v899
    %v1009 = vmul.f32 %v903, %v903
    %v1010 = vmul.f32 %v905, %v905
    %v1011 = vmul.f32 %v907, %v907
    %v1012 = vmul.f32 %v909, %v909
    %v1013 = vmul.f32 %v913, %v913
    %v1014 = vmul.f32 %v915, %v915
    %v1015 = vmul.f32 %v917, %v917
    %v1016 = vmul.f32 %v919, %v919
    %v1017 = vmul.f32 %v923, %v923
    %v1018 = vmul.f32 %v925, %v925
    %v1019 = vmul.f32 %v927, %v927
    %v1020 = vmul.f32 %v929, %v929
    %v1021 = vmul.f32 %v933, %v933
    %v1022 = vmul.f32 %v935, %v935
    %v1023 = vmul.f32 %v937, %v937
    %v1024 = vmul.f32 %v939, %v939
    %v1025 = vmul.f32 %v943, %v943
    %v1026 = vmul.f32 %v945, %v945
    %v1027 = vmul.f32 %v947, %v947
    %v1028 = vmul.f32 %v949, %v949
    %v1029 = vadd.f32 %v997, %v999
    %v1030 = vadd.f32 %v1029, %v1001
    %v1031 = vadd.f32 %v1030, %v1003
    %v1032 = vadd.f32 %v1031, %v1005
    %v1033 = vadd.f32 %v1032, %v1007
    %v1034 = vadd.f32 %v1033, %v1009
    %v1035 = vadd.f32 %v1034, %v1011
    %v1036 = vadd.f32 %v1035, %v1013
    %v1037 = vadd.f32 %v1036, %v1015
    %v1038 = vadd.f32 %v1037, %v1017
    %v1039 = vadd.f32 %v1038, %v1019
    %v1040 = vadd.f32 %v1039, %v1021
    %v1041 = vadd.f32 %v1040, %v1023
    %v1042 = vadd.f32 %v1041, %v1025
    %v1043 = vadd.f32 %v1042, %v1027
    %v1044 = vrot.slane %v1043, 4
    %v1045 = vadd.f32 %v1043, %v1044
    %v1046 = vrot.slane %v1045, 2
    %v1047 = vadd.f32 %v1045, %v1046
    %v1048 = vrot.slane %v1047, 1
    %v1049 = vadd.f32 %v1047, %v1048
    %v1050 = vadd.f32 %v998, %v1000
    %v1051 = vadd.f32 %v1050, %v1002
    %v1052 = vadd.f32 %v1051, %v1004
    %v1053 = vadd.f32 %v1052, %v1006
    %v1054 = vadd.f32 %v1053, %v1008
    %v1055 = vadd.f32 %v1054, %v1010
    %v1056 = vadd.f32 %v1055, %v1012
    %v1057 = vadd.f32 %v1056, %v1014
    %v1058 = vadd.f32 %v1057, %v1016
    %v1059 = vadd.f32 %v1058, %v1018
    %v1060 = vadd.f32 %v1059, %v1020
    %v1061 = vadd.f32 %v1060, %v1022
    %v1062 = vadd.f32 %v1061, %v1024
    %v1063 = vadd.f32 %v1062, %v1026
    %v1064 = vadd.f32 %v1063, %v1028
    %v1065 = vrot.slane %v1064, 4
    %v1066 = vadd.f32 %v1064, %v1065
    %v1067 = vrot.slane %v1066, 2
    %v1068 = vadd.f32 %v1066, %v1067
    %v1069 = vrot.slane %v1068, 1
    %v1070 = vadd.f32 %v1068, %v1069
    %v1071 = vmul.f32 %v1049, 0.0078125
    %v1072 = vmul.f32 %v1070, 0.0078125
    %v1073 = vmul.f32 %v995, %v995
    %v1074 = vmul.f32 %v996, %v996
    %v1075 = vsub.f32 %v1071, %v1073
    %v1076 = vsub.f32 %v1072, %v1074
    %v1077 = vadd.f32 %v1075, 0.8
    %v1078 = vadd.f32 %v1076, 0.8
    %v1079 = vrsqrt.pop %v1077
    %v1080 = vrsqrt.pop %v1078
    %v1083 = vcombine.low %v1079, %v1080
    %v1085 = vunpack.c.l.s4 1966171168
    %v1086 = vunpack.c.0.s8 %v1085
    %v1087 = vlaneseq
    %v1088 = vshrl.u32 %v1087, 7
    %v1089 = vsub.s32 %v1086, %v1088
    %v1090 = vrot.slane %v1083, %v1089
    %v1092 = vunpack.c.l.s4 1966171168
    %v1093 = vunpack.c.0.s8 %v1092
    %v1094 = vlaneseq
    %v1095 = vshrl.u32 %v1094, 7
    %v1096 = vsub.s32 %v1093, %v1095
    %v1097 = vrot.slane %v1090, %v1096
    %v1099 = vmul.f32 %v951, %v1097
    %v1101 = vlaneseq
    %v1102 = vshrl.u32 %v1101, 7
    %v1103 = vsub.s32 0, %v1102
    %v1104 = vrot.slane %v1099, %v1103
    %v1105 = vlaneseq
    %v1106 = vshrl.u32 %v1105, 7
    %v1107 = vsub.s32 1, %v1106
    %v1108 = vrot.slane %v1099, %v1107
    %v1111 = vmul.f32 %v995, %v1104
    %v1112 = vmul.f32 %v996, %v1108
    %v1115 = vcombine.low %v1111, %v1112
    %v1117 = vunpack.c.l.s4 1966171168
    %v1118 = vunpack.c.0.s8 %v1117
    %v1119 = vlaneseq
    %v1120 = vshrl.u32 %v1119, 7
    %v1121 = vsub.s32 %v1118, %v1120
    %v1122 = vrot.slane %v1115, %v1121
    %v1124 = vunpack.c.l.s4 1966171168
    %v1125 = vunpack.c.0.s8 %v1124
    %v1126 = vlaneseq
    %v1127 = vshrl.u32 %v1126, 7
    %v1128 = vsub.s32 %v1125, %v1127
    %v1129 = vrot.slane %v1122, %v1128
    %v1131 = vsub.f32 %v952, %v1129
    %v1132 = vmul.f32 %v873, %v1104
    %v1133 = vmul.f32 %v875, %v1108
    %v1134 = vmul.f32 %v877, %v1104
    %v1135 = vmul.f32 %v879, %v1108
    %v1136 = vmul.f32 %v883, %v1104
    %v1137 = vmul.f32 %v885, %v1108
    %v1138 = vmul.f32 %v887, %v1104
    %v1139 = vmul.f32 %v889, %v1108
    %v1140 = vmul.f32 %v893, %v1104
    %v1141 = vmul.f32 %v895, %v1108
    %v1142 = vmul.f32 %v897, %v1104
    %v1143 = vmul.f32 %v899, %v1108
    %v1144 = vmul.f32 %v903, %v1104
    %v1145 = vmul.f32 %v905, %v1108
    %v1146 = vmul.f32 %v907, %v1104
    %v1147 = vmul.f32 %v909, %v1108
    %v1148 = vmul.f32 %v913, %v1104
    %v1149 = vmul.f32 %v915, %v1108
    %v1150 = vmul.f32 %v917, %v1104
    %v1151 = vmul.f32 %v919, %v1108
    %v1152 = vmul.f32 %v923, %v1104
    %v1153 = vmul.f32 %v925, %v1108
    %v1154 = vmul.f32 %v927, %v1104
    %v1155 = vmul.f32 %v929, %v1108
    %v1156 = vmul.f32 %v933, %v1104
    %v1157 = vmul.f32 %v935, %v1108
    %v1158 = vmul.f32 %v937, %v1104
    %v1159 = vmul.f32 %v939, %v1108
    %v1160 = vmul.f32 %v943, %v1104
    %v1161 = vmul.f32 %v945, %v1108
    %v1162 = vmul.f32 %v947, %v1104
    %v1163 = vmul.f32 %v949, %v1108
    %v1165 = vlaneseq
    %v1166 = vshrl.u32 %v1165, 7
    %v1167 = vsub.s32 0, %v1166
    %v1168 = vrot.slane %v1131, %v1167
    %v1169 = vlaneseq
    %v1170 = vshrl.u32 %v1169, 7
    %v1171 = vsub.s32 1, %v1170
    %v1172 = vrot.slane %v1131, %v1171
    %v1175 = vadd.f32 %v1132, %v1168
    %v1176 = vadd.f32 %v1133, %v1172
    %v1177 = vadd.f32 %v1134, %v1168
    %v1178 = vadd.f32 %v1135, %v1172
    %v1179 = vadd.f32 %v1136, %v1168
    %v1180 = vadd.f32 %v1137, %v1172
    %v1181 = vadd.f32 %v1138, %v1168
    %v1182 = vadd.f32 %v1139, %v1172
    %v1183 = vadd.f32 %v1140, %v1168
    %v1184 = vadd.f32 %v1141, %v1172
    %v1185 = vadd.f32 %v1142, %v1168
    %v1186 = vadd.f32 %v1143, %v1172
    %v1187 = vadd.f32 %v1144, %v1168
    %v1188 = vadd.f32 %v1145, %v1172
    %v1189 = vadd.f32 %v1146, %v1168
    %v1190 = vadd.f32 %v1147, %v1172
    %v1191 = vadd.f32 %v1148, %v1168
    %v1192 = vadd.f32 %v1149, %v1172
    %v1193 = vadd.f32 %v1150, %v1168
    %v1194 = vadd.f32 %v1151, %v1172
    %v1195 = vadd.f32 %v1152, %v1168
    %v1196 = vadd.f32 %v1153, %v1172
    %v1197 = vadd.f32 %v1154, %v1168
    %v1198 = vadd.f32 %v1155, %v1172
    %v1199 = vadd.f32 %v1156, %v1168
    %v1200 = vadd.f32 %v1157, %v1172
    %v1201 = vadd.f32 %v1158, %v1168
    %v1202 = vadd.f32 %v1159, %v1172
    %v1203 = vadd.f32 %v1160, %v1168
    %v1204 = vadd.f32 %v1161, %v1172
    %v1205 = vadd.f32 %v1162, %v1168
    %v1206 = vadd.f32 %v1163, %v1172
    %vm1207 = vcmp.gt.f32.partialorder %v1175, 0.0
    %vm1208 = vcmp.gt.f32.partialorder %v1176, 0.0
    %vm1209 = vcmp.gt.f32.partialorder %v1177, 0.0
    %vm1210 = vcmp.gt.f32.partialorder %v1178, 0.0
    %vm1211 = vcmp.gt.f32.partialorder %v1179, 0.0
    %vm1212 = vcmp.gt.f32.partialorder %v1180, 0.0
    %vm1213 = vcmp.gt.f32.partialorder %v1181, 0.0
    %vm1214 = vcmp.gt.f32.partialorder %v1182, 0.0
    %vm1215 = vcmp.gt.f32.partialorder %v1183, 0.0
    %vm1216 = vcmp.gt.f32.partialorder %v1184, 0.0
    %vm1217 = vcmp.gt.f32.partialorder %v1185, 0.0
    %vm1218 = vcmp.gt.f32.partialorder %v1186, 0.0
    %vm1219 = vcmp.gt.f32.partialorder %v1187, 0.0
    %vm1220 = vcmp.gt.f32.partialorder %v1188, 0.0
    %vm1221 = vcmp.gt.f32.partialorder %v1189, 0.0
    %vm1222 = vcmp.gt.f32.partialorder %v1190, 0.0
    %vm1223 = vcmp.gt.f32.partialorder %v1191, 0.0
    %vm1224 = vcmp.gt.f32.partialorder %v1192, 0.0
    %vm1225 = vcmp.gt.f32.partialorder %v1193, 0.0
    %vm1226 = vcmp.gt.f32.partialorder %v1194, 0.0
    %vm1227 = vcmp.gt.f32.partialorder %v1195, 0.0
    %vm1228 = vcmp.gt.f32.partialorder %v1196, 0.0
    %vm1229 = vcmp.gt.f32.partialorder %v1197, 0.0
    %vm1230 = vcmp.gt.f32.partialorder %v1198, 0.0
    %vm1231 = vcmp.gt.f32.partialorder %v1199, 0.0
    %vm1232 = vcmp.gt.f32.partialorder %v1200, 0.0
    %vm1233 = vcmp.gt.f32.partialorder %v1201, 0.0
    %vm1234 = vcmp.gt.f32.partialorder %v1202, 0.0
    %vm1235 = vcmp.gt.f32.partialorder %v1203, 0.0
    %vm1236 = vcmp.gt.f32.partialorder %v1204, 0.0
    %vm1237 = vcmp.gt.f32.partialorder %v1205, 0.0
    %vm1238 = vcmp.gt.f32.partialorder %v1206, 0.0
    %v1239 = vmul.f32 %v1175, 0.2
    %v1240 = vmul.f32 %v1176, 0.2
    %v1241 = vmul.f32 %v1177, 0.2
    %v1242 = vmul.f32 %v1178, 0.2
    %v1243 = vmul.f32 %v1179, 0.2
    %v1244 = vmul.f32 %v1180, 0.2
    %v1245 = vmul.f32 %v1181, 0.2
    %v1246 = vmul.f32 %v1182, 0.2
    %v1247 = vmul.f32 %v1183, 0.2
    %v1248 = vmul.f32 %v1184, 0.2
    %v1249 = vmul.f32 %v1185, 0.2
    %v1250 = vmul.f32 %v1186, 0.2
    %v1251 = vmul.f32 %v1187, 0.2
    %v1252 = vmul.f32 %v1188, 0.2
    %v1253 = vmul.f32 %v1189, 0.2
    %v1254 = vmul.f32 %v1190, 0.2
    %v1255 = vmul.f32 %v1191, 0.2
    %v1256 = vmul.f32 %v1192, 0.2
    %v1257 = vmul.f32 %v1193, 0.2
    %v1258 = vmul.f32 %v1194, 0.2
    %v1259 = vmul.f32 %v1195, 0.2
    %v1260 = vmul.f32 %v1196, 0.2
    %v1261 = vmul.f32 %v1197, 0.2
    %v1262 = vmul.f32 %v1198, 0.2
    %v1263 = vmul.f32 %v1199, 0.2
    %v1264 = vmul.f32 %v1200, 0.2
    %v1265 = vmul.f32 %v1201, 0.2
    %v1266 = vmul.f32 %v1202, 0.2
    %v1267 = vmul.f32 %v1203, 0.2
    %v1268 = vmul.f32 %v1204, 0.2
    %v1269 = vmul.f32 %v1205, 0.2
    %v1270 = vmul.f32 %v1206, 0.2
    %v1271 = vsel %vm1207, %v1175, %v1239
    %v1272 = vsel %vm1208, %v1176, %v1240
    %v1273 = vsel %vm1209, %v1177, %v1241
    %v1274 = vsel %vm1210, %v1178, %v1242
    %v1275 = vsel %vm1211, %v1179, %v1243
    %v1276 = vsel %vm1212, %v1180, %v1244
    %v1277 = vsel %vm1213, %v1181, %v1245
    %v1278 = vsel %vm1214, %v1182, %v1246
    %v1279 = vsel %vm1215, %v1183, %v1247
    %v1280 = vsel %vm1216, %v1184, %v1248
    %v1281 = vsel %vm1217, %v1185, %v1249
    %v1282 = vsel %vm1218, %v1186, %v1250
    %v1283 = vsel %vm1219, %v1187, %v1251
    %v1284 = vsel %vm1220, %v1188, %v1252
    %v1285 = vsel %vm1221, %v1189, %v1253
    %v1286 = vsel %vm1222, %v1190, %v1254
    %v1287 = vsel %vm1223, %v1191, %v1255
    %v1288 = vsel %vm1224, %v1192, %v1256
    %v1289 = vsel %vm1225, %v1193, %v1257
    %v1290 = vsel %vm1226, %v1194, %v1258
    %v1291 = vsel %vm1227, %v1195, %v1259
    %v1292 = vsel %vm1228, %v1196, %v1260
    %v1293 = vsel %vm1229, %v1197, %v1261
    %v1294 = vsel %vm1230, %v1198, %v1262
    %v1295 = vsel %vm1231, %v1199, %v1263
    %v1296 = vsel %vm1232, %v1200, %v1264
    %v1297 = vsel %vm1233, %v1201, %v1265
    %v1298 = vsel %vm1234, %v1202, %v1266
    %v1299 = vsel %vm1235, %v1203, %v1267
    %v1300 = vsel %vm1236, %v1204, %v1268
    %v1301 = vsel %vm1237, %v1205, %v1269
    %v1302 = vsel %vm1238, %v1206, %v1270
    %v1303 = vld [vmem:[#allocation2] sm:$0xff]
    %v1304 = vld [vmem:[#allocation2 + $0x8] sm:$0xff]
    %v1305 = vld [vmem:[#allocation2 + $0x10] sm:$0xff]
    %v1306 = vld [vmem:[#allocation2 + $0x18] sm:$0xff]
    %v1307 = vld [vmem:[#allocation2 + $0x20] sm:$0xff]
    %v1308 = vld [vmem:[#allocation2 + $0x28] sm:$0xff]
    %v1309 = vld [vmem:[#allocation2 + $0x30] sm:$0xff]
    %v1310 = vld [vmem:[#allocation2 + $0x38] sm:$0xff]
    %v1311 = vld [vmem:[#allocation2 + $0x40] sm:$0xff]
    %v1312 = vld [vmem:[#allocation2 + $0x48] sm:$0xff]
    %v1313 = vld [vmem:[#allocation2 + $0x50] sm:$0xff]
    %v1314 = vld [vmem:[#allocation2 + $0x58] sm:$0xff]
    %v1315 = vld [vmem:[#allocation2 + $0x60] sm:$0xff]
    %v1316 = vld [vmem:[#allocation2 + $0x68] sm:$0xff]
    %v1317 = vld [vmem:[#allocation2 + $0x70] sm:$0xff]
    %v1318 = vld [vmem:[#allocation2 + $0x78] sm:$0xff]
    %v1319 = vld [vmem:[#allocation2 + $0x80] sm:$0xff]
    %v1320 = vld [vmem:[#allocation2 + $0x88] sm:$0xff]
    %v1321 = vld [vmem:[#allocation2 + $0x90] sm:$0xff]
    %v1322 = vld [vmem:[#allocation2 + $0x98] sm:$0xff]
    %v1323 = vld [vmem:[#allocation2 + $0xa0] sm:$0xff]
    %v1324 = vld [vmem:[#allocation2 + $0xa8] sm:$0xff]
    %v1325 = vld [vmem:[#allocation2 + $0xb0] sm:$0xff]
    %v1326 = vld [vmem:[#allocation2 + $0xb8] sm:$0xff]
    %v1327 = vld [vmem:[#allocation2 + $0xc0] sm:$0xff]
    %v1328 = vld [vmem:[#allocation2 + $0xc8] sm:$0xff]
    %v1329 = vld [vmem:[#allocation2 + $0xd0] sm:$0xff]
    %v1330 = vld [vmem:[#allocation2 + $0xd8] sm:$0xff]
    %v1331 = vld [vmem:[#allocation2 + $0xe0] sm:$0xff]
    %v1332 = vld [vmem:[#allocation2 + $0xe8] sm:$0xff]
    %v1333 = vld [vmem:[#allocation2 + $0xf0] sm:$0xff]
    %v1334 = vld [vmem:[#allocation2 + $0xf8] sm:$0xff]
    %v1335 = vld [vmem:[#allocation2 + $0x100] sm:$0xff]
    %v1336 = vld [vmem:[#allocation2 + $0x108] sm:$0xff]
    %v1337 = vld [vmem:[#allocation2 + $0x110] sm:$0xff]
    %v1338 = vld [vmem:[#allocation2 + $0x118] sm:$0xff]
    %v1339 = vld [vmem:[#allocation2 + $0x120] sm:$0xff]
    %v1340 = vld [vmem:[#allocation2 + $0x128] sm:$0xff]
    %v1341 = vld [vmem:[#allocation2 + $0x130] sm:$0xff]
    %v1342 = vld [vmem:[#allocation2 + $0x138] sm:$0xff]
    %v1343 = vld [vmem:[#allocation2 + $0x140] sm:$0xff]
    %v1344 = vld [vmem:[#allocation2 + $0x148] sm:$0xff]
    %v1345 = vld [vmem:[#allocation2 + $0x150] sm:$0xff]
    %v1346 = vld [vmem:[#allocation2 + $0x158] sm:$0xff]
    %v1347 = vld [vmem:[#allocation2 + $0x160] sm:$0xff]
    %v1348 = vld [vmem:[#allocation2 + $0x168] sm:$0xff]
    %v1349 = vld [vmem:[#allocation2 + $0x170] sm:$0xff]
    %v1350 = vld [vmem:[#allocation2 + $0x178] sm:$0xff]
    %v1351 = vld [vmem:[#allocation2 + $0x180] sm:$0xff]
    %v1352 = vld [vmem:[#allocation2 + $0x188] sm:$0xff]
    %v1353 = vld [vmem:[#allocation2 + $0x190] sm:$0xff]
    %v1354 = vld [vmem:[#allocation2 + $0x198] sm:$0xff]
    %v1355 = vld [vmem:[#allocation2 + $0x1a0] sm:$0xff]
    %v1356 = vld [vmem:[#allocation2 + $0x1a8] sm:$0xff]
    %v1357 = vld [vmem:[#allocation2 + $0x1b0] sm:$0xff]
    %v1358 = vld [vmem:[#allocation2 + $0x1b8] sm:$0xff]
    %v1359 = vld [vmem:[#allocation2 + $0x1c0] sm:$0xff]
    %v1360 = vld [vmem:[#allocation2 + $0x1c8] sm:$0xff]
    %v1361 = vld [vmem:[#allocation2 + $0x1d0] sm:$0xff]
    %v1362 = vld [vmem:[#allocation2 + $0x1d8] sm:$0xff]
    %v1363 = vld [vmem:[#allocation2 + $0x1e0] sm:$0xff]
    %v1364 = vld [vmem:[#allocation2 + $0x1e8] sm:$0xff]
    %v1365 = vld [vmem:[#allocation2 + $0x1f0] sm:$0xff]
    %v1366 = vld [vmem:[#allocation2 + $0x1f8] sm:$0xff]
    %v1367 = vpack.c.bf16 %v1273, %v1271
    %v1368 = vpack.c.bf16 %v1274, %v1272
    %v1369 = vpack.c.bf16 %v1277, %v1275
    %v1370 = vpack.c.bf16 %v1278, %v1276
    %v1371 = vpack.c.bf16 %v1281, %v1279
    %v1372 = vpack.c.bf16 %v1282, %v1280
    %v1373 = vpack.c.bf16 %v1285, %v1283
    %v1374 = vpack.c.bf16 %v1286, %v1284
    %v1375 = vpack.c.bf16 %v1289, %v1287
    %v1376 = vpack.c.bf16 %v1290, %v1288
    %v1377 = vpack.c.bf16 %v1293, %v1291
    %v1378 = vpack.c.bf16 %v1294, %v1292
    %v1379 = vpack.c.bf16 %v1297, %v1295
    %v1380 = vpack.c.bf16 %v1298, %v1296
    %v1381 = vpack.c.bf16 %v1301, %v1299
    %v1382 = vpack.c.bf16 %v1302, %v1300
    %v1383 = vld [vmem:[%s11] sm:$0xf]
    %v1385 = vlaneseq
    %v1386 = vshrl.u32 %v1385, 7
    %v1387 = vsub.s32 0, %v1386
    %v1388 = vrot.slane %v1383, %v1387
    %v1389 = vlaneseq
    %v1390 = vshrl.u32 %v1389, 7
    %v1391 = vsub.s32 1, %v1390
    %v1392 = vrot.slane %v1383, %v1391
    %v1393 = vlaneseq
    %v1394 = vshrl.u32 %v1393, 7
    %v1395 = vsub.s32 2, %v1394
    %v1396 = vrot.slane %v1383, %v1395
    %v1397 = vlaneseq
    %v1398 = vshrl.u32 %v1397, 7
    %v1399 = vsub.s32 3, %v1398
    %v1400 = vrot.slane %v1383, %v1399
    %v1469 = vunpack.c.l.b16 %v1303
    %v1470 = vunpack.c.h.b16 %v1303
    %v1471 = vunpack.c.l.b16 %v1304
    %v1472 = vunpack.c.h.b16 %v1304
    %v1473 = vunpack.c.l.b16 %v1305
    %v1474 = vunpack.c.h.b16 %v1305
    %v1475 = vunpack.c.l.b16 %v1306
    %v1476 = vunpack.c.h.b16 %v1306
    %v1477 = vunpack.c.l.b16 %v1307
    %v1478 = vunpack.c.h.b16 %v1307
    %v1479 = vunpack.c.l.b16 %v1308
    %v1480 = vunpack.c.h.b16 %v1308
    %v1481 = vunpack.c.l.b16 %v1309
    %v1482 = vunpack.c.h.b16 %v1309
    %v1483 = vunpack.c.l.b16 %v1310
    %v1484 = vunpack.c.h.b16 %v1310
    %v1485 = vunpack.c.l.b16 %v1311
    %v1486 = vunpack.c.h.b16 %v1311
    %v1487 = vunpack.c.l.b16 %v1312
    %v1488 = vunpack.c.h.b16 %v1312
    %v1489 = vunpack.c.l.b16 %v1313
    %v1490 = vunpack.c.h.b16 %v1313
    %v1491 = vunpack.c.l.b16 %v1314
    %v1492 = vunpack.c.h.b16 %v1314
    %v1493 = vunpack.c.l.b16 %v1315
    %v1494 = vunpack.c.h.b16 %v1315
    %v1495 = vunpack.c.l.b16 %v1316
    %v1496 = vunpack.c.h.b16 %v1316
    %v1497 = vunpack.c.l.b16 %v1317
    %v1498 = vunpack.c.h.b16 %v1317
    %v1499 = vunpack.c.l.b16 %v1318
    %v1500 = vunpack.c.h.b16 %v1318
    %v1501 = vunpack.c.l.b16 %v1319
    %v1502 = vunpack.c.h.b16 %v1319
    %v1503 = vunpack.c.l.b16 %v1320
    %v1504 = vunpack.c.h.b16 %v1320
    %v1505 = vunpack.c.l.b16 %v1321
    %v1506 = vunpack.c.h.b16 %v1321
    %v1507 = vunpack.c.l.b16 %v1322
    %v1508 = vunpack.c.h.b16 %v1322
    %v1509 = vunpack.c.l.b16 %v1323
    %v1510 = vunpack.c.h.b16 %v1323
    %v1511 = vunpack.c.l.b16 %v1324
    %v1512 = vunpack.c.h.b16 %v1324
    %v1513 = vunpack.c.l.b16 %v1325
    %v1514 = vunpack.c.h.b16 %v1325
    %v1515 = vunpack.c.l.b16 %v1326
    %v1516 = vunpack.c.h.b16 %v1326
    %v1517 = vunpack.c.l.b16 %v1327
    %v1518 = vunpack.c.h.b16 %v1327
    %v1519 = vunpack.c.l.b16 %v1328
    %v1520 = vunpack.c.h.b16 %v1328
    %v1521 = vunpack.c.l.b16 %v1329
    %v1522 = vunpack.c.h.b16 %v1329
    %v1523 = vunpack.c.l.b16 %v1330
    %v1524 = vunpack.c.h.b16 %v1330
    %v1525 = vunpack.c.l.b16 %v1331
    %v1526 = vunpack.c.h.b16 %v1331
    %v1527 = vunpack.c.l.b16 %v1332
    %v1528 = vunpack.c.h.b16 %v1332
    %v1529 = vunpack.c.l.b16 %v1333
    %v1530 = vunpack.c.h.b16 %v1333
    %v1531 = vunpack.c.l.b16 %v1334
    %v1532 = vunpack.c.h.b16 %v1334
    %v1533 = vunpack.c.l.b16 %v1335
    %v1534 = vunpack.c.h.b16 %v1335
    %v1535 = vunpack.c.l.b16 %v1336
    %v1536 = vunpack.c.h.b16 %v1336
    %v1537 = vunpack.c.l.b16 %v1337
    %v1538 = vunpack.c.h.b16 %v1337
    %v1539 = vunpack.c.l.b16 %v1338
    %v1540 = vunpack.c.h.b16 %v1338
    %v1541 = vunpack.c.l.b16 %v1339
    %v1542 = vunpack.c.h.b16 %v1339
    %v1543 = vunpack.c.l.b16 %v1340
    %v1544 = vunpack.c.h.b16 %v1340
    %v1545 = vunpack.c.l.b16 %v1341
    %v1546 = vunpack.c.h.b16 %v1341
    %v1547 = vunpack.c.l.b16 %v1342
    %v1548 = vunpack.c.h.b16 %v1342
    %v1549 = vunpack.c.l.b16 %v1343
    %v1550 = vunpack.c.h.b16 %v1343
    %v1551 = vunpack.c.l.b16 %v1344
    %v1552 = vunpack.c.h.b16 %v1344
    %v1553 = vunpack.c.l.b16 %v1345
    %v1554 = vunpack.c.h.b16 %v1345
    %v1555 = vunpack.c.l.b16 %v1346
    %v1556 = vunpack.c.h.b16 %v1346
    %v1557 = vunpack.c.l.b16 %v1347
    %v1558 = vunpack.c.h.b16 %v1347
    %v1559 = vunpack.c.l.b16 %v1348
    %v1560 = vunpack.c.h.b16 %v1348
    %v1561 = vunpack.c.l.b16 %v1349
    %v1562 = vunpack.c.h.b16 %v1349
    %v1563 = vunpack.c.l.b16 %v1350
    %v1564 = vunpack.c.h.b16 %v1350
    %v1565 = vunpack.c.l.b16 %v1351
    %v1566 = vunpack.c.h.b16 %v1351
    %v1567 = vunpack.c.l.b16 %v1352
    %v1568 = vunpack.c.h.b16 %v1352
    %v1569 = vunpack.c.l.b16 %v1353
    %v1570 = vunpack.c.h.b16 %v1353
    %v1571 = vunpack.c.l.b16 %v1354
    %v1572 = vunpack.c.h.b16 %v1354
    %v1573 = vunpack.c.l.b16 %v1355
    %v1574 = vunpack.c.h.b16 %v1355
    %v1575 = vunpack.c.l.b16 %v1356
    %v1576 = vunpack.c.h.b16 %v1356
    %v1577 = vunpack.c.l.b16 %v1357
    %v1578 = vunpack.c.h.b16 %v1357
    %v1579 = vunpack.c.l.b16 %v1358
    %v1580 = vunpack.c.h.b16 %v1358
    %v1581 = vunpack.c.l.b16 %v1359
    %v1582 = vunpack.c.h.b16 %v1359
    %v1583 = vunpack.c.l.b16 %v1360
    %v1584 = vunpack.c.h.b16 %v1360
    %v1585 = vunpack.c.l.b16 %v1361
    %v1586 = vunpack.c.h.b16 %v1361
    %v1587 = vunpack.c.l.b16 %v1362
    %v1588 = vunpack.c.h.b16 %v1362
    %v1589 = vunpack.c.l.b16 %v1363
    %v1590 = vunpack.c.h.b16 %v1363
    %v1591 = vunpack.c.l.b16 %v1364
    %v1592 = vunpack.c.h.b16 %v1364
    %v1593 = vunpack.c.l.b16 %v1365
    %v1594 = vunpack.c.h.b16 %v1365
    %v1595 = vunpack.c.l.b16 %v1366
    %v1596 = vunpack.c.h.b16 %v1366
    %v1597 = vpack.c.b16 %v1473, %v1469
    %v1598 = vpack.c.b16 %v1474, %v1470
    %v1599 = vpack.c.b16 %v1475, %v1471
    %v1600 = vpack.c.b16 %v1476, %v1472
    %v1601 = vpack.c.b16 %v1481, %v1477
    %v1602 = vpack.c.b16 %v1482, %v1478
    %v1603 = vpack.c.b16 %v1483, %v1479
    %v1604 = vpack.c.b16 %v1484, %v1480
    %v1605 = vpack.c.b16 %v1489, %v1485
    %v1606 = vpack.c.b16 %v1490, %v1486
    %v1607 = vpack.c.b16 %v1491, %v1487
    %v1608 = vpack.c.b16 %v1492, %v1488
    %v1609 = vpack.c.b16 %v1497, %v1493
    %v1610 = vpack.c.b16 %v1498, %v1494
    %v1611 = vpack.c.b16 %v1499, %v1495
    %v1612 = vpack.c.b16 %v1500, %v1496
    %v1613 = vpack.c.b16 %v1505, %v1501
    %v1614 = vpack.c.b16 %v1506, %v1502
    %v1615 = vpack.c.b16 %v1507, %v1503
    %v1616 = vpack.c.b16 %v1508, %v1504
    %v1617 = vpack.c.b16 %v1513, %v1509
    %v1618 = vpack.c.b16 %v1514, %v1510
    %v1619 = vpack.c.b16 %v1515, %v1511
    %v1620 = vpack.c.b16 %v1516, %v1512
    %v1621 = vpack.c.b16 %v1521, %v1517
    %v1622 = vpack.c.b16 %v1522, %v1518
    %v1623 = vpack.c.b16 %v1523, %v1519
    %v1624 = vpack.c.b16 %v1524, %v1520
    %v1625 = vpack.c.b16 %v1529, %v1525
    %v1626 = vpack.c.b16 %v1530, %v1526
    %v1627 = vpack.c.b16 %v1531, %v1527
    %v1628 = vpack.c.b16 %v1532, %v1528
    %v1629 = vpack.c.b16 %v1537, %v1533
    %v1630 = vpack.c.b16 %v1538, %v1534
    %v1631 = vpack.c.b16 %v1539, %v1535
    %v1632 = vpack.c.b16 %v1540, %v1536
    %v1633 = vpack.c.b16 %v1545, %v1541
    %v1634 = vpack.c.b16 %v1546, %v1542
    %v1635 = vpack.c.b16 %v1547, %v1543
    %v1636 = vpack.c.b16 %v1548, %v1544
    %v1637 = vpack.c.b16 %v1553, %v1549
    %v1638 = vpack.c.b16 %v1554, %v1550
    %v1639 = vpack.c.b16 %v1555, %v1551
    %v1640 = vpack.c.b16 %v1556, %v1552
    %v1641 = vpack.c.b16 %v1561, %v1557
    %v1642 = vpack.c.b16 %v1562, %v1558
    %v1643 = vpack.c.b16 %v1563, %v1559
    %v1644 = vpack.c.b16 %v1564, %v1560
    %v1645 = vpack.c.b16 %v1569, %v1565
    %v1646 = vpack.c.b16 %v1570, %v1566
    %v1647 = vpack.c.b16 %v1571, %v1567
    %v1648 = vpack.c.b16 %v1572, %v1568
    %v1649 = vpack.c.b16 %v1577, %v1573
    %v1650 = vpack.c.b16 %v1578, %v1574
    %v1651 = vpack.c.b16 %v1579, %v1575
    %v1652 = vpack.c.b16 %v1580, %v1576
    %v1653 = vpack.c.b16 %v1585, %v1581
    %v1654 = vpack.c.b16 %v1586, %v1582
    %v1655 = vpack.c.b16 %v1587, %v1583
    %v1656 = vpack.c.b16 %v1588, %v1584
    %v1657 = vpack.c.b16 %v1593, %v1589
    %v1658 = vpack.c.b16 %v1594, %v1590
    %v1659 = vpack.c.b16 %v1595, %v1591
    %v1660 = vpack.c.b16 %v1596, %v1592
    %1725 = vmatprep.subr.bf16.mxu0 %v1626
    %1726 = vmatpush1.bf16.msra.mxu0 %v1625
    %1727 = vmatprep.subr.bf16.mxu0 %v1622
    %1728 = vmatpush1.bf16.msra.mxu0 %v1621
    %1729 = vmatprep.subr.bf16.mxu0 %v1618
    %1730 = vmatpush1.bf16.msra.mxu0 %v1617
    %1731 = vmatprep.subr.bf16.mxu0 %v1614
    %1732 = vmatpush1.bf16.msra.mxu0 %v1613
    %1733 = vmatprep.subr.bf16.mxu0 %v1610
    %1734 = vmatpush1.bf16.msra.mxu0 %v1609
    %1735 = vmatprep.subr.bf16.mxu0 %v1606
    %1736 = vmatpush1.bf16.msra.mxu0 %v1605
    %1737 = vmatprep.subr.bf16.mxu0 %v1602
    %1738 = vmatpush1.bf16.msra.mxu0 %v1601
    %1739 = vmatprep.subr.bf16.mxu0 %v1598
    %1740 = vmatpush1.bf16.msra.mxu0 %v1597
    %1741 = vmatprep.subr.bf16.mxu0 %v1658
    %1742 = vmatpush2.bf16.msra.mxu0 %v1657
    %1743 = vmatprep.subr.bf16.mxu0 %v1654
    %1744 = vmatpush2.bf16.msra.mxu0 %v1653
    %1745 = vmatprep.subr.bf16.mxu0 %v1650
    %1746 = vmatpush2.bf16.msra.mxu0 %v1649
    %1747 = vmatprep.subr.bf16.mxu0 %v1646
    %1748 = vmatpush2.bf16.msra.mxu0 %v1645
    %1749 = vmatprep.subr.bf16.mxu0 %v1642
    %1750 = vmatpush2.bf16.msra.mxu0 %v1641
    %1751 = vmatprep.subr.bf16.mxu0 %v1638
    %1752 = vmatpush2.bf16.msra.mxu0 %v1637
    %1753 = vmatprep.subr.bf16.mxu0 %v1634
    %1754 = vmatpush2.bf16.msra.mxu0 %v1633
    %1755 = vmatprep.subr.bf16.mxu0 %v1630
    %1756 = vmatpush2.bf16.msra.mxu0 %v1629
    %1757 = vmatprep.mubr.bf16.mxu0 %v1368
    %1758 = vmatmul.mubr.bf16.gmra.mxu0 %v1367
    %v1759 = vpop.f32.mrf.mxu0
    %v1760 = vadd.f32 %v1388, %v1759
    %v1761 = vpop.f32.mrf.mxu0
    %v1762 = vadd.f32 %v1392, %v1761
    %v1763 = vpop.f32.mrf.mxu0
    %v1764 = vadd.f32 %v1388, %v1763
    %v1765 = vpop.f32.mrf.mxu0
    %v1766 = vadd.f32 %v1392, %v1765
    %1767 = vmatprep.mubr.bf16.mxu0 %v1370
    %1768 = vmatmul.mubr.bf16.gmra.mxu0 %v1369
    %v1769 = vpop.f32.mrf.mxu0
    %v1770 = vadd.f32 %v1388, %v1769
    %v1771 = vpop.f32.mrf.mxu0
    %v1772 = vadd.f32 %v1392, %v1771
    %v1773 = vpop.f32.mrf.mxu0
    %v1774 = vadd.f32 %v1388, %v1773
    %v1775 = vpop.f32.mrf.mxu0
    %v1776 = vadd.f32 %v1392, %v1775
    %1777 = vmatprep.mubr.bf16.mxu0 %v1372
    %1778 = vmatmul.mubr.bf16.gmra.mxu0 %v1371
    %v1779 = vpop.f32.mrf.mxu0
    %v1780 = vadd.f32 %v1388, %v1779
    %v1781 = vpop.f32.mrf.mxu0
    %v1782 = vadd.f32 %v1392, %v1781
    %v1783 = vpop.f32.mrf.mxu0
    %v1784 = vadd.f32 %v1388, %v1783
    %v1785 = vpop.f32.mrf.mxu0
    %v1786 = vadd.f32 %v1392, %v1785
    %1787 = vmatprep.mubr.bf16.mxu0 %v1374
    %1788 = vmatmul.mubr.bf16.gmra.mxu0 %v1373
    %v1789 = vpop.f32.mrf.mxu0
    %v1790 = vadd.f32 %v1388, %v1789
    %v1791 = vpop.f32.mrf.mxu0
    %v1792 = vadd.f32 %v1392, %v1791
    %v1793 = vpop.f32.mrf.mxu0
    %v1794 = vadd.f32 %v1388, %v1793
    %v1795 = vpop.f32.mrf.mxu0
    %v1796 = vadd.f32 %v1392, %v1795
    %1797 = vmatprep.mubr.bf16.mxu0 %v1376
    %1798 = vmatmul.mubr.bf16.gmra.mxu0 %v1375
    %v1799 = vpop.f32.mrf.mxu0
    %v1800 = vadd.f32 %v1388, %v1799
    %v1801 = vpop.f32.mrf.mxu0
    %v1802 = vadd.f32 %v1392, %v1801
    %v1803 = vpop.f32.mrf.mxu0
    %v1804 = vadd.f32 %v1388, %v1803
    %v1805 = vpop.f32.mrf.mxu0
    %v1806 = vadd.f32 %v1392, %v1805
    %1807 = vmatprep.mubr.bf16.mxu0 %v1378
    %1808 = vmatmul.mubr.bf16.gmra.mxu0 %v1377
    %v1809 = vpop.f32.mrf.mxu0
    %v1810 = vadd.f32 %v1388, %v1809
    %v1811 = vpop.f32.mrf.mxu0
    %v1812 = vadd.f32 %v1392, %v1811
    %v1813 = vpop.f32.mrf.mxu0
    %v1814 = vadd.f32 %v1388, %v1813
    %v1815 = vpop.f32.mrf.mxu0
    %v1816 = vadd.f32 %v1392, %v1815
    %1817 = vmatprep.mubr.bf16.mxu0 %v1380
    %1818 = vmatmul.mubr.bf16.gmra.mxu0 %v1379
    %v1819 = vpop.f32.mrf.mxu0
    %v1820 = vadd.f32 %v1388, %v1819
    %v1821 = vpop.f32.mrf.mxu0
    %v1822 = vadd.f32 %v1392, %v1821
    %v1823 = vpop.f32.mrf.mxu0
    %v1824 = vadd.f32 %v1388, %v1823
    %v1825 = vpop.f32.mrf.mxu0
    %v1826 = vadd.f32 %v1392, %v1825
    %1827 = vmatprep.mubr.bf16.mxu0 %v1382
    %1828 = vmatmul.mubr.bf16.gmra.mxu0 %v1381
    %v1829 = vpop.f32.mrf.mxu0
    %v1830 = vadd.f32 %v1388, %v1829
    %v1831 = vpop.f32.mrf.mxu0
    %v1832 = vadd.f32 %v1392, %v1831
    %v1833 = vpop.f32.mrf.mxu0
    %v1834 = vadd.f32 %v1388, %v1833
    %v1835 = vpop.f32.mrf.mxu0
    %v1836 = vadd.f32 %v1392, %v1835
    %1837 = vdwg.mxu0
    %1838 = vmatprep.subr.bf16.mxu0 %v1628
    %1839 = vmatpush1.bf16.msra.mxu0 %v1627
    %1840 = vmatprep.subr.bf16.mxu0 %v1624
    %1841 = vmatpush1.bf16.msra.mxu0 %v1623
    %1842 = vmatprep.subr.bf16.mxu0 %v1620
    %1843 = vmatpush1.bf16.msra.mxu0 %v1619
    %1844 = vmatprep.subr.bf16.mxu0 %v1616
    %1845 = vmatpush1.bf16.msra.mxu0 %v1615
    %1846 = vmatprep.subr.bf16.mxu0 %v1612
    %1847 = vmatpush1.bf16.msra.mxu0 %v1611
    %1848 = vmatprep.subr.bf16.mxu0 %v1608
    %1849 = vmatpush1.bf16.msra.mxu0 %v1607
    %1850 = vmatprep.subr.bf16.mxu0 %v1604
    %1851 = vmatpush1.bf16.msra.mxu0 %v1603
    %1852 = vmatprep.subr.bf16.mxu0 %v1600
    %1853 = vmatpush1.bf16.msra.mxu0 %v1599
    %1854 = vmatprep.subr.bf16.mxu0 %v1660
    %1855 = vmatpush2.bf16.msra.mxu0 %v1659
    %1856 = vmatprep.subr.bf16.mxu0 %v1656
    %1857 = vmatpush2.bf16.msra.mxu0 %v1655
    %1858 = vmatprep.subr.bf16.mxu0 %v1652
    %1859 = vmatpush2.bf16.msra.mxu0 %v1651
    %1860 = vmatprep.subr.bf16.mxu0 %v1648
    %1861 = vmatpush2.bf16.msra.mxu0 %v1647
    %1862 = vmatprep.subr.bf16.mxu0 %v1644
    %1863 = vmatpush2.bf16.msra.mxu0 %v1643
    %1864 = vmatprep.subr.bf16.mxu0 %v1640
    %1865 = vmatpush2.bf16.msra.mxu0 %v1639
    %1866 = vmatprep.subr.bf16.mxu0 %v1636
    %1867 = vmatpush2.bf16.msra.mxu0 %v1635
    %1868 = vmatprep.subr.bf16.mxu0 %v1632
    %1869 = vmatpush2.bf16.msra.mxu0 %v1631
    %1870 = vmatprep.mubr.bf16.mxu0 %v1368
    %1871 = vmatmul.mubr.bf16.gmra.mxu0 %v1367
    %v1872 = vpop.f32.mrf.mxu0
    %v1873 = vadd.f32 %v1396, %v1872
    %v1874 = vpop.f32.mrf.mxu0
    %v1875 = vadd.f32 %v1400, %v1874
    %v1876 = vpop.f32.mrf.mxu0
    %v1877 = vadd.f32 %v1396, %v1876
    %v1878 = vpop.f32.mrf.mxu0
    %v1879 = vadd.f32 %v1400, %v1878
    %1880 = vmatprep.mubr.bf16.mxu0 %v1370
    %1881 = vmatmul.mubr.bf16.gmra.mxu0 %v1369
    %v1882 = vpop.f32.mrf.mxu0
    %v1883 = vadd.f32 %v1396, %v1882
    %v1884 = vpop.f32.mrf.mxu0
    %v1885 = vadd.f32 %v1400, %v1884
    %v1886 = vpop.f32.mrf.mxu0
    %v1887 = vadd.f32 %v1396, %v1886
    %v1888 = vpop.f32.mrf.mxu0
    %v1889 = vadd.f32 %v1400, %v1888
    %1890 = vmatprep.mubr.bf16.mxu0 %v1372
    %1891 = vmatmul.mubr.bf16.gmra.mxu0 %v1371
    %v1892 = vpop.f32.mrf.mxu0
    %v1893 = vadd.f32 %v1396, %v1892
    %v1894 = vpop.f32.mrf.mxu0
    %v1895 = vadd.f32 %v1400, %v1894
    %v1896 = vpop.f32.mrf.mxu0
    %v1897 = vadd.f32 %v1396, %v1896
    %v1898 = vpop.f32.mrf.mxu0
    %v1899 = vadd.f32 %v1400, %v1898
    %1900 = vmatprep.mubr.bf16.mxu0 %v1374
    %1901 = vmatmul.mubr.bf16.gmra.mxu0 %v1373
    %v1902 = vpop.f32.mrf.mxu0
    %v1903 = vadd.f32 %v1396, %v1902
    %v1904 = vpop.f32.mrf.mxu0
    %v1905 = vadd.f32 %v1400, %v1904
    %v1906 = vpop.f32.mrf.mxu0
    %v1907 = vadd.f32 %v1396, %v1906
    %v1908 = vpop.f32.mrf.mxu0
    %v1909 = vadd.f32 %v1400, %v1908
    %1910 = vmatprep.mubr.bf16.mxu0 %v1376
    %1911 = vmatmul.mubr.bf16.gmra.mxu0 %v1375
    %v1912 = vpop.f32.mrf.mxu0
    %v1913 = vadd.f32 %v1396, %v1912
    %v1914 = vpop.f32.mrf.mxu0
    %v1915 = vadd.f32 %v1400, %v1914
    %v1916 = vpop.f32.mrf.mxu0
    %v1917 = vadd.f32 %v1396, %v1916
    %v1918 = vpop.f32.mrf.mxu0
    %v1919 = vadd.f32 %v1400, %v1918
    %1920 = vmatprep.mubr.bf16.mxu0 %v1378
    %1921 = vmatmul.mubr.bf16.gmra.mxu0 %v1377
    %v1922 = vpop.f32.mrf.mxu0
    %v1923 = vadd.f32 %v1396, %v1922
    %v1924 = vpop.f32.mrf.mxu0
    %v1925 = vadd.f32 %v1400, %v1924
    %v1926 = vpop.f32.mrf.mxu0
    %v1927 = vadd.f32 %v1396, %v1926
    %v1928 = vpop.f32.mrf.mxu0
    %v1929 = vadd.f32 %v1400, %v1928
    %1930 = vmatprep.mubr.bf16.mxu0 %v1380
    %1931 = vmatmul.mubr.bf16.gmra.mxu0 %v1379
    %v1932 = vpop.f32.mrf.mxu0
    %v1933 = vadd.f32 %v1396, %v1932
    %v1934 = vpop.f32.mrf.mxu0
    %v1935 = vadd.f32 %v1400, %v1934
    %v1936 = vpop.f32.mrf.mxu0
    %v1937 = vadd.f32 %v1396, %v1936
    %v1938 = vpop.f32.mrf.mxu0
    %v1939 = vadd.f32 %v1400, %v1938
    %1940 = vmatprep.mubr.bf16.mxu0 %v1382
    %1941 = vmatmul.mubr.bf16.gmra.mxu0 %v1381
    %v1942 = vpop.f32.mrf.mxu0
    %v1943 = vadd.f32 %v1396, %v1942
    %v1944 = vpop.f32.mrf.mxu0
    %v1945 = vadd.f32 %v1400, %v1944
    %v1946 = vpop.f32.mrf.mxu0
    %v1947 = vadd.f32 %v1396, %v1946
    %v1948 = vpop.f32.mrf.mxu0
    %v1949 = vadd.f32 %v1400, %v1948
    %1950 = vdwg.mxu0
    %v1951 = vld [vmem:[%s12] sm:$0xf]
    %v1952 = vld [vmem:[%s13] sm:$0xf]
    %v1953 = vadd.f32 %v1760, %v1764
    %v1954 = vadd.f32 %v1953, %v1770
    %v1955 = vadd.f32 %v1954, %v1774
    %v1956 = vadd.f32 %v1955, %v1780
    %v1957 = vadd.f32 %v1956, %v1784
    %v1958 = vadd.f32 %v1957, %v1790
    %v1959 = vadd.f32 %v1958, %v1794
    %v1960 = vadd.f32 %v1959, %v1800
    %v1961 = vadd.f32 %v1960, %v1804
    %v1962 = vadd.f32 %v1961, %v1810
    %v1963 = vadd.f32 %v1962, %v1814
    %v1964 = vadd.f32 %v1963, %v1820
    %v1965 = vadd.f32 %v1964, %v1824
    %v1966 = vadd.f32 %v1965, %v1830
    %v1967 = vadd.f32 %v1966, %v1834
    %v1968 = vrot.slane %v1967, 4
    %v1969 = vadd.f32 %v1967, %v1968
    %v1970 = vrot.slane %v1969, 2
    %v1971 = vadd.f32 %v1969, %v1970
    %v1972 = vrot.slane %v1971, 1
    %v1973 = vadd.f32 %v1971, %v1972
    %v1974 = vadd.f32 %v1762, %v1766
    %v1975 = vadd.f32 %v1974, %v1772
    %v1976 = vadd.f32 %v1975, %v1776
    %v1977 = vadd.f32 %v1976, %v1782
    %v1978 = vadd.f32 %v1977, %v1786
    %v1979 = vadd.f32 %v1978, %v1792
    %v1980 = vadd.f32 %v1979, %v1796
    %v1981 = vadd.f32 %v1980, %v1802
    %v1982 = vadd.f32 %v1981, %v1806
    %v1983 = vadd.f32 %v1982, %v1812
    %v1984 = vadd.f32 %v1983, %v1816
    %v1985 = vadd.f32 %v1984, %v1822
    %v1986 = vadd.f32 %v1985, %v1826
    %v1987 = vadd.f32 %v1986, %v1832
    %v1988 = vadd.f32 %v1987, %v1836
    %v1989 = vrot.slane %v1988, 4
    %v1990 = vadd.f32 %v1988, %v1989
    %v1991 = vrot.slane %v1990, 2
    %v1992 = vadd.f32 %v1990, %v1991
    %v1993 = vrot.slane %v1992, 1
    %v1994 = vadd.f32 %v1992, %v1993
    %v1995 = vadd.f32 %v1873, %v1877
    %v1996 = vadd.f32 %v1995, %v1883
    %v1997 = vadd.f32 %v1996, %v1887
    %v1998 = vadd.f32 %v1997, %v1893
    %v1999 = vadd.f32 %v1998, %v1897
    %v2000 = vadd.f32 %v1999, %v1903
    %v2001 = vadd.f32 %v2000, %v1907
    %v2002 = vadd.f32 %v2001, %v1913
    %v2003 = vadd.f32 %v2002, %v1917
    %v2004 = vadd.f32 %v2003, %v1923
    %v2005 = vadd.f32 %v2004, %v1927
    %v2006 = vadd.f32 %v2005, %v1933
    %v2007 = vadd.f32 %v2006, %v1937
    %v2008 = vadd.f32 %v2007, %v1943
    %v2009 = vadd.f32 %v2008, %v1947
    %v2010 = vrot.slane %v2009, 4
    %v2011 = vadd.f32 %v2009, %v2010
    %v2012 = vrot.slane %v2011, 2
    %v2013 = vadd.f32 %v2011, %v2012
    %v2014 = vrot.slane %v2013, 1
    %v2015 = vadd.f32 %v2013, %v2014
    %v2016 = vadd.f32 %v1875, %v1879
    %v2017 = vadd.f32 %v2016, %v1885
    %v2018 = vadd.f32 %v2017, %v1889
    %v2019 = vadd.f32 %v2018, %v1895
    %v2020 = vadd.f32 %v2019, %v1899
    %v2021 = vadd.f32 %v2020, %v1905
    %v2022 = vadd.f32 %v2021, %v1909
    %v2023 = vadd.f32 %v2022, %v1915
    %v2024 = vadd.f32 %v2023, %v1919
    %v2025 = vadd.f32 %v2024, %v1925
    %v2026 = vadd.f32 %v2025, %v1929
    %v2027 = vadd.f32 %v2026, %v1935
    %v2028 = vadd.f32 %v2027, %v1939
    %v2029 = vadd.f32 %v2028, %v1945
    %v2030 = vadd.f32 %v2029, %v1949
    %v2031 = vrot.slane %v2030, 4
    %v2032 = vadd.f32 %v2030, %v2031
    %v2033 = vrot.slane %v2032, 2
    %v2034 = vadd.f32 %v2032, %v2033
    %v2035 = vrot.slane %v2034, 1
    %v2036 = vadd.f32 %v2034, %v2035
    %v2037 = vmul.f32 %v1973, 0.0078125
    %v2038 = vmul.f32 %v1994, 0.0078125
    %v2039 = vmul.f32 %v2015, 0.0078125
    %v2040 = vmul.f32 %v2036, 0.0078125
    %v2041 = vmul.f32 %v1760, %v1760
    %v2042 = vmul.f32 %v1762, %v1762
    %v2043 = vmul.f32 %v1873, %v1873
    %v2044 = vmul.f32 %v1875, %v1875
    %v2045 = vmul.f32 %v1764, %v1764
    %v2046 = vmul.f32 %v1766, %v1766
    %v2047 = vmul.f32 %v1877, %v1877
    %v2048 = vmul.f32 %v1879, %v1879
    %v2049 = vmul.f32 %v1770, %v1770
    %v2050 = vmul.f32 %v1772, %v1772
    %v2051 = vmul.f32 %v1883, %v1883
    %v2052 = vmul.f32 %v1885, %v1885
    %v2053 = vmul.f32 %v1774, %v1774
    %v2054 = vmul.f32 %v1776, %v1776
    %v2055 = vmul.f32 %v1887, %v1887
    %v2056 = vmul.f32 %v1889, %v1889
    %v2057 = vmul.f32 %v1780, %v1780
    %v2058 = vmul.f32 %v1782, %v1782
    %v2059 = vmul.f32 %v1893, %v1893
    %v2060 = vmul.f32 %v1895, %v1895
    %v2061 = vmul.f32 %v1784, %v1784
    %v2062 = vmul.f32 %v1786, %v1786
    %v2063 = vmul.f32 %v1897, %v1897
    %v2064 = vmul.f32 %v1899, %v1899
    %v2065 = vmul.f32 %v1790, %v1790
    %v2066 = vmul.f32 %v1792, %v1792
    %v2067 = vmul.f32 %v1903, %v1903
    %v2068 = vmul.f32 %v1905, %v1905
    %v2069 = vmul.f32 %v1794, %v1794
    %v2070 = vmul.f32 %v1796, %v1796
    %v2071 = vmul.f32 %v1907, %v1907
    %v2072 = vmul.f32 %v1909, %v1909
    %v2073 = vmul.f32 %v1800, %v1800
    %v2074 = vmul.f32 %v1802, %v1802
    %v2075 = vmul.f32 %v1913, %v1913
    %v2076 = vmul.f32 %v1915, %v1915
    %v2077 = vmul.f32 %v1804, %v1804
    %v2078 = vmul.f32 %v1806, %v1806
    %v2079 = vmul.f32 %v1917, %v1917
    %v2080 = vmul.f32 %v1919, %v1919
    %v2081 = vmul.f32 %v1810, %v1810
    %v2082 = vmul.f32 %v1812, %v1812
    %v2083 = vmul.f32 %v1923, %v1923
    %v2084 = vmul.f32 %v1925, %v1925
    %v2085 = vmul.f32 %v1814, %v1814
    %v2086 = vmul.f32 %v1816, %v1816
    %v2087 = vmul.f32 %v1927, %v1927
    %v2088 = vmul.f32 %v1929, %v1929
    %v2089 = vmul.f32 %v1820, %v1820
    %v2090 = vmul.f32 %v1822, %v1822
    %v2091 = vmul.f32 %v1933, %v1933
    %v2092 = vmul.f32 %v1935, %v1935
    %v2093 = vmul.f32 %v1824, %v1824
    %v2094 = vmul.f32 %v1826, %v1826
    %v2095 = vmul.f32 %v1937, %v1937
    %v2096 = vmul.f32 %v1939, %v1939
    %v2097 = vmul.f32 %v1830, %v1830
    %v2098 = vmul.f32 %v1832, %v1832
    %v2099 = vmul.f32 %v1943, %v1943
    %v2100 = vmul.f32 %v1945, %v1945
    %v2101 = vmul.f32 %v1834, %v1834
    %v2102 = vmul.f32 %v1836, %v1836
    %v2103 = vmul.f32 %v1947, %v1947
    %v2104 = vmul.f32 %v1949, %v1949
    %v2105 = vadd.f32 %v2041, %v2045
    %v2106 = vadd.f32 %v2105, %v2049
    %v2107 = vadd.f32 %v2106, %v2053
    %v2108 = vadd.f32 %v2107, %v2057
    %v2109 = vadd.f32 %v2108, %v2061
    %v2110 = vadd.f32 %v2109, %v2065
    %v2111 = vadd.f32 %v2110, %v2069
    %v2112 = vadd.f32 %v2111, %v2073
    %v2113 = vadd.f32 %v2112, %v2077
    %v2114 = vadd.f32 %v2113, %v2081
    %v2115 = vadd.f32 %v2114, %v2085
    %v2116 = vadd.f32 %v2115, %v2089
    %v2117 = vadd.f32 %v2116, %v2093
    %v2118 = vadd.f32 %v2117, %v2097
    %v2119 = vadd.f32 %v2118, %v2101
    %v2120 = vrot.slane %v2119, 4
    %v2121 = vadd.f32 %v2119, %v2120
    %v2122 = vrot.slane %v2121, 2
    %v2123 = vadd.f32 %v2121, %v2122
    %v2124 = vrot.slane %v2123, 1
    %v2125 = vadd.f32 %v2123, %v2124
    %v2126 = vadd.f32 %v2042, %v2046
    %v2127 = vadd.f32 %v2126, %v2050
    %v2128 = vadd.f32 %v2127, %v2054
    %v2129 = vadd.f32 %v2128, %v2058
    %v2130 = vadd.f32 %v2129, %v2062
    %v2131 = vadd.f32 %v2130, %v2066
    %v2132 = vadd.f32 %v2131, %v2070
    %v2133 = vadd.f32 %v2132, %v2074
    %v2134 = vadd.f32 %v2133, %v2078
    %v2135 = vadd.f32 %v2134, %v2082
    %v2136 = vadd.f32 %v2135, %v2086
    %v2137 = vadd.f32 %v2136, %v2090
    %v2138 = vadd.f32 %v2137, %v2094
    %v2139 = vadd.f32 %v2138, %v2098
    %v2140 = vadd.f32 %v2139, %v2102
    %v2141 = vrot.slane %v2140, 4
    %v2142 = vadd.f32 %v2140, %v2141
    %v2143 = vrot.slane %v2142, 2
    %v2144 = vadd.f32 %v2142, %v2143
    %v2145 = vrot.slane %v2144, 1
    %v2146 = vadd.f32 %v2144, %v2145
    %v2147 = vadd.f32 %v2043, %v2047
    %v2148 = vadd.f32 %v2147, %v2051
    %v2149 = vadd.f32 %v2148, %v2055
    %v2150 = vadd.f32 %v2149, %v2059
    %v2151 = vadd.f32 %v2150, %v2063
    %v2152 = vadd.f32 %v2151, %v2067
    %v2153 = vadd.f32 %v2152, %v2071
    %v2154 = vadd.f32 %v2153, %v2075
    %v2155 = vadd.f32 %v2154, %v2079
    %v2156 = vadd.f32 %v2155, %v2083
    %v2157 = vadd.f32 %v2156, %v2087
    %v2158 = vadd.f32 %v2157, %v2091
    %v2159 = vadd.f32 %v2158, %v2095
    %v2160 = vadd.f32 %v2159, %v2099
    %v2161 = vadd.f32 %v2160, %v2103
    %v2162 = vrot.slane %v2161, 4
    %v2163 = vadd.f32 %v2161, %v2162
    %v2164 = vrot.slane %v2163, 2
    %v2165 = vadd.f32 %v2163, %v2164
    %v2166 = vrot.slane %v2165, 1
    %v2167 = vadd.f32 %v2165, %v2166
    %v2168 = vadd.f32 %v2044, %v2048
    %v2169 = vadd.f32 %v2168, %v2052
    %v2170 = vadd.f32 %v2169, %v2056
    %v2171 = vadd.f32 %v2170, %v2060
    %v2172 = vadd.f32 %v2171, %v2064
    %v2173 = vadd.f32 %v2172, %v2068
    %v2174 = vadd.f32 %v2173, %v2072
    %v2175 = vadd.f32 %v2174, %v2076
    %v2176 = vadd.f32 %v2175, %v2080
    %v2177 = vadd.f32 %v2176, %v2084
    %v2178 = vadd.f32 %v2177, %v2088
    %v2179 = vadd.f32 %v2178, %v2092
    %v2180 = vadd.f32 %v2179, %v2096
    %v2181 = vadd.f32 %v2180, %v2100
    %v2182 = vadd.f32 %v2181, %v2104
    %v2183 = vrot.slane %v2182, 4
    %v2184 = vadd.f32 %v2182, %v2183
    %v2185 = vrot.slane %v2184, 2
    %v2186 = vadd.f32 %v2184, %v2185
    %v2187 = vrot.slane %v2186, 1
    %v2188 = vadd.f32 %v2186, %v2187
    %v2189 = vmul.f32 %v2125, 0.0078125
    %v2190 = vmul.f32 %v2146, 0.0078125
    %v2191 = vmul.f32 %v2167, 0.0078125
    %v2192 = vmul.f32 %v2188, 0.0078125
    %v2193 = vmul.f32 %v2037, %v2037
    %v2194 = vmul.f32 %v2038, %v2038
    %v2195 = vmul.f32 %v2039, %v2039
    %v2196 = vmul.f32 %v2040, %v2040
    %v2197 = vsub.f32 %v2189, %v2193
    %v2198 = vsub.f32 %v2190, %v2194
    %v2199 = vsub.f32 %v2191, %v2195
    %v2200 = vsub.f32 %v2192, %v2196
    %v2201 = vadd.f32 %v2197, 0.8
    %v2202 = vadd.f32 %v2198, 0.8
    %v2203 = vadd.f32 %v2199, 0.8
    %v2204 = vadd.f32 %v2200, 0.8
    %v2205 = vrsqrt.pop %v2201
    %v2206 = vrsqrt.pop %v2202
    %v2207 = vrsqrt.pop %v2203
    %v2208 = vrsqrt.pop %v2204
    %v2213 = vcombine.low %v2205, %v2206
    %v2214 = vcombine.low %v2207, %v2208
    %v2216 = vunpack.c.l.s4 1966171168
    %v2217 = vunpack.c.0.s8 %v2216
    %v2218 = vlaneseq
    %v2219 = vshrl.u32 %v2218, 7
    %v2220 = vsub.s32 %v2217, %v2219
    %v2221 = vrot.slane %v2213, %v2220
    %v2223 = vunpack.c.l.s4 1966171168
    %v2224 = vunpack.c.0.s8 %v2223
    %v2225 = vlaneseq
    %v2226 = vshrl.u32 %v2225, 7
    %v2227 = vsub.s32 %v2224, %v2226
    %v2228 = vrot.slane %v2214, %v2227
    %v2229 = vcombine.low %v2221, %v2228
    %v2231 = vunpack.c.l.s4 1966171168
    %v2232 = vunpack.c.0.s8 %v2231
    %v2233 = vlaneseq
    %v2234 = vshrl.u32 %v2233, 7
    %v2235 = vsub.s32 %v2232, %v2234
    %v2236 = vrot.slane %v2229, %v2235
    %v2238 = vmul.f32 %v1951, %v2236
    %v2240 = vlaneseq
    %v2241 = vshrl.u32 %v2240, 7
    %v2242 = vsub.s32 0, %v2241
    %v2243 = vrot.slane %v2238, %v2242
    %v2244 = vlaneseq
    %v2245 = vshrl.u32 %v2244, 7
    %v2246 = vsub.s32 1, %v2245
    %v2247 = vrot.slane %v2238, %v2246
    %v2248 = vlaneseq
    %v2249 = vshrl.u32 %v2248, 7
    %v2250 = vsub.s32 2, %v2249
    %v2251 = vrot.slane %v2238, %v2250
    %v2252 = vlaneseq
    %v2253 = vshrl.u32 %v2252, 7
    %v2254 = vsub.s32 3, %v2253
    %v2255 = vrot.slane %v2238, %v2254
    %v2260 = vmul.f32 %v2037, %v2243
    %v2261 = vmul.f32 %v2038, %v2247
    %v2262 = vmul.f32 %v2039, %v2251
    %v2263 = vmul.f32 %v2040, %v2255
    %v2268 = vcombine.low %v2260, %v2261
    %v2269 = vcombine.low %v2262, %v2263
    %v2271 = vunpack.c.l.s4 1966171168
    %v2272 = vunpack.c.0.s8 %v2271
    %v2273 = vlaneseq
    %v2274 = vshrl.u32 %v2273, 7
    %v2275 = vsub.s32 %v2272, %v2274
    %v2276 = vrot.slane %v2268, %v2275
    %v2278 = vunpack.c.l.s4 1966171168
    %v2279 = vunpack.c.0.s8 %v2278
    %v2280 = vlaneseq
    %v2281 = vshrl.u32 %v2280, 7
    %v2282 = vsub.s32 %v2279, %v2281
    %v2283 = vrot.slane %v2269, %v2282
    %v2284 = vcombine.low %v2276, %v2283
    %v2286 = vunpack.c.l.s4 1966171168
    %v2287 = vunpack.c.0.s8 %v2286
    %v2288 = vlaneseq
    %v2289 = vshrl.u32 %v2288, 7
    %v2290 = vsub.s32 %v2287, %v2289
    %v2291 = vrot.slane %v2284, %v2290
    %v2293 = vsub.f32 %v1952, %v2291
    %v2294 = vmul.f32 %v1760, %v2243
    %v2295 = vmul.f32 %v1762, %v2247
    %v2296 = vmul.f32 %v1873, %v2251
    %v2297 = vmul.f32 %v1875, %v2255
    %v2298 = vmul.f32 %v1764, %v2243
    %v2299 = vmul.f32 %v1766, %v2247
    %v2300 = vmul.f32 %v1877, %v2251
    %v2301 = vmul.f32 %v1879, %v2255
    %v2302 = vmul.f32 %v1770, %v2243
    %v2303 = vmul.f32 %v1772, %v2247
    %v2304 = vmul.f32 %v1883, %v2251
    %v2305 = vmul.f32 %v1885, %v2255
    %v2306 = vmul.f32 %v1774, %v2243
    %v2307 = vmul.f32 %v1776, %v2247
    %v2308 = vmul.f32 %v1887, %v2251
    %v2309 = vmul.f32 %v1889, %v2255
    %v2310 = vmul.f32 %v1780, %v2243
    %v2311 = vmul.f32 %v1782, %v2247
    %v2312 = vmul.f32 %v1893, %v2251
    %v2313 = vmul.f32 %v1895, %v2255
    %v2314 = vmul.f32 %v1784, %v2243
    %v2315 = vmul.f32 %v1786, %v2247
    %v2316 = vmul.f32 %v1897, %v2251
    %v2317 = vmul.f32 %v1899, %v2255
    %v2318 = vmul.f32 %v1790, %v2243
    %v2319 = vmul.f32 %v1792, %v2247
    %v2320 = vmul.f32 %v1903, %v2251
    %v2321 = vmul.f32 %v1905, %v2255
    %v2322 = vmul.f32 %v1794, %v2243
    %v2323 = vmul.f32 %v1796, %v2247
    %v2324 = vmul.f32 %v1907, %v2251
    %v2325 = vmul.f32 %v1909, %v2255
    %v2326 = vmul.f32 %v1800, %v2243
    %v2327 = vmul.f32 %v1802, %v2247
    %v2328 = vmul.f32 %v1913, %v2251
    %v2329 = vmul.f32 %v1915, %v2255
    %v2330 = vmul.f32 %v1804, %v2243
    %v2331 = vmul.f32 %v1806, %v2247
    %v2332 = vmul.f32 %v1917, %v2251
    %v2333 = vmul.f32 %v1919, %v2255
    %v2334 = vmul.f32 %v1810, %v2243
    %v2335 = vmul.f32 %v1812, %v2247
    %v2336 = vmul.f32 %v1923, %v2251
    %v2337 = vmul.f32 %v1925, %v2255
    %v2338 = vmul.f32 %v1814, %v2243
    %v2339 = vmul.f32 %v1816, %v2247
    %v2340 = vmul.f32 %v1927, %v2251
    %v2341 = vmul.f32 %v1929, %v2255
    %v2342 = vmul.f32 %v1820, %v2243
    %v2343 = vmul.f32 %v1822, %v2247
    %v2344 = vmul.f32 %v1933, %v2251
    %v2345 = vmul.f32 %v1935, %v2255
    %v2346 = vmul.f32 %v1824, %v2243
    %v2347 = vmul.f32 %v1826, %v2247
    %v2348 = vmul.f32 %v1937, %v2251
    %v2349 = vmul.f32 %v1939, %v2255
    %v2350 = vmul.f32 %v1830, %v2243
    %v2351 = vmul.f32 %v1832, %v2247
    %v2352 = vmul.f32 %v1943, %v2251
    %v2353 = vmul.f32 %v1945, %v2255
    %v2354 = vmul.f32 %v1834, %v2243
    %v2355 = vmul.f32 %v1836, %v2247
    %v2356 = vmul.f32 %v1947, %v2251
    %v2357 = vmul.f32 %v1949, %v2255
    %v2359 = vlaneseq
    %v2360 = vshrl.u32 %v2359, 7
    %v2361 = vsub.s32 0, %v2360
    %v2362 = vrot.slane %v2293, %v2361
    %v2363 = vlaneseq
    %v2364 = vshrl.u32 %v2363, 7
    %v2365 = vsub.s32 1, %v2364
    %v2366 = vrot.slane %v2293, %v2365
    %v2367 = vlaneseq
    %v2368 = vshrl.u32 %v2367, 7
    %v2369 = vsub.s32 2, %v2368
    %v2370 = vrot.slane %v2293, %v2369
    %v2371 = vlaneseq
    %v2372 = vshrl.u32 %v2371, 7
    %v2373 = vsub.s32 3, %v2372
    %v2374 = vrot.slane %v2293, %v2373
    %v2379 = vadd.f32 %v2294, %v2362
    %v2380 = vadd.f32 %v2295, %v2366
    %v2381 = vadd.f32 %v2296, %v2370
    %v2382 = vadd.f32 %v2297, %v2374
    %v2383 = vadd.f32 %v2298, %v2362
    %v2384 = vadd.f32 %v2299, %v2366
    %v2385 = vadd.f32 %v2300, %v2370
    %v2386 = vadd.f32 %v2301, %v2374
    %v2387 = vadd.f32 %v2302, %v2362
    %v2388 = vadd.f32 %v2303, %v2366
    %v2389 = vadd.f32 %v2304, %v2370
    %v2390 = vadd.f32 %v2305, %v2374
    %v2391 = vadd.f32 %v2306, %v2362
    %v2392 = vadd.f32 %v2307, %v2366
    %v2393 = vadd.f32 %v2308, %v2370
    %v2394 = vadd.f32 %v2309, %v2374
    %v2395 = vadd.f32 %v2310, %v2362
    %v2396 = vadd.f32 %v2311, %v2366
    %v2397 = vadd.f32 %v2312, %v2370
    %v2398 = vadd.f32 %v2313, %v2374
    %v2399 = vadd.f32 %v2314, %v2362
    %v2400 = vadd.f32 %v2315, %v2366
    %v2401 = vadd.f32 %v2316, %v2370
    %v2402 = vadd.f32 %v2317, %v2374
    %v2403 = vadd.f32 %v2318, %v2362
    %v2404 = vadd.f32 %v2319, %v2366
    %v2405 = vadd.f32 %v2320, %v2370
    %v2406 = vadd.f32 %v2321, %v2374
    %v2407 = vadd.f32 %v2322, %v2362
    %v2408 = vadd.f32 %v2323, %v2366
    %v2409 = vadd.f32 %v2324, %v2370
    %v2410 = vadd.f32 %v2325, %v2374
    %v2411 = vadd.f32 %v2326, %v2362
    %v2412 = vadd.f32 %v2327, %v2366
    %v2413 = vadd.f32 %v2328, %v2370
    %v2414 = vadd.f32 %v2329, %v2374
    %v2415 = vadd.f32 %v2330, %v2362
    %v2416 = vadd.f32 %v2331, %v2366
    %v2417 = vadd.f32 %v2332, %v2370
    %v2418 = vadd.f32 %v2333, %v2374
    %v2419 = vadd.f32 %v2334, %v2362
    %v2420 = vadd.f32 %v2335, %v2366
    %v2421 = vadd.f32 %v2336, %v2370
    %v2422 = vadd.f32 %v2337, %v2374
    %v2423 = vadd.f32 %v2338, %v2362
    %v2424 = vadd.f32 %v2339, %v2366
    %v2425 = vadd.f32 %v2340, %v2370
    %v2426 = vadd.f32 %v2341, %v2374
    %v2427 = vadd.f32 %v2342, %v2362
    %v2428 = vadd.f32 %v2343, %v2366
    %v2429 = vadd.f32 %v2344, %v2370
    %v2430 = vadd.f32 %v2345, %v2374
    %v2431 = vadd.f32 %v2346, %v2362
    %v2432 = vadd.f32 %v2347, %v2366
    %v2433 = vadd.f32 %v2348, %v2370
    %v2434 = vadd.f32 %v2349, %v2374
    %v2435 = vadd.f32 %v2350, %v2362
    %v2436 = vadd.f32 %v2351, %v2366
    %v2437 = vadd.f32 %v2352, %v2370
    %v2438 = vadd.f32 %v2353, %v2374
    %v2439 = vadd.f32 %v2354, %v2362
    %v2440 = vadd.f32 %v2355, %v2366
    %v2441 = vadd.f32 %v2356, %v2370
    %v2442 = vadd.f32 %v2357, %v2374
    %vm2443 = vcmp.gt.f32.partialorder %v2379, 0.0
    %vm2444 = vcmp.gt.f32.partialorder %v2380, 0.0
    %vm2445 = vcmp.gt.f32.partialorder %v2381, 0.0
    %vm2446 = vcmp.gt.f32.partialorder %v2382, 0.0
    %vm2447 = vcmp.gt.f32.partialorder %v2383, 0.0
    %vm2448 = vcmp.gt.f32.partialorder %v2384, 0.0
    %vm2449 = vcmp.gt.f32.partialorder %v2385, 0.0
    %vm2450 = vcmp.gt.f32.partialorder %v2386, 0.0
    %vm2451 = vcmp.gt.f32.partialorder %v2387, 0.0
    %vm2452 = vcmp.gt.f32.partialorder %v2388, 0.0
    %vm2453 = vcmp.gt.f32.partialorder %v2389, 0.0
    %vm2454 = vcmp.gt.f32.partialorder %v2390, 0.0
    %vm2455 = vcmp.gt.f32.partialorder %v2391, 0.0
    %vm2456 = vcmp.gt.f32.partialorder %v2392, 0.0
    %vm2457 = vcmp.gt.f32.partialorder %v2393, 0.0
    %vm2458 = vcmp.gt.f32.partialorder %v2394, 0.0
    %vm2459 = vcmp.gt.f32.partialorder %v2395, 0.0
    %vm2460 = vcmp.gt.f32.partialorder %v2396, 0.0
    %vm2461 = vcmp.gt.f32.partialorder %v2397, 0.0
    %vm2462 = vcmp.gt.f32.partialorder %v2398, 0.0
    %vm2463 = vcmp.gt.f32.partialorder %v2399, 0.0
    %vm2464 = vcmp.gt.f32.partialorder %v2400, 0.0
    %vm2465 = vcmp.gt.f32.partialorder %v2401, 0.0
    %vm2466 = vcmp.gt.f32.partialorder %v2402, 0.0
    %vm2467 = vcmp.gt.f32.partialorder %v2403, 0.0
    %vm2468 = vcmp.gt.f32.partialorder %v2404, 0.0
    %vm2469 = vcmp.gt.f32.partialorder %v2405, 0.0
    %vm2470 = vcmp.gt.f32.partialorder %v2406, 0.0
    %vm2471 = vcmp.gt.f32.partialorder %v2407, 0.0
    %vm2472 = vcmp.gt.f32.partialorder %v2408, 0.0
    %vm2473 = vcmp.gt.f32.partialorder %v2409, 0.0
    %vm2474 = vcmp.gt.f32.partialorder %v2410, 0.0
    %vm2475 = vcmp.gt.f32.partialorder %v2411, 0.0
    %vm2476 = vcmp.gt.f32.partialorder %v2412, 0.0
    %vm2477 = vcmp.gt.f32.partialorder %v2413, 0.0
    %vm2478 = vcmp.gt.f32.partialorder %v2414, 0.0
    %vm2479 = vcmp.gt.f32.partialorder %v2415, 0.0
    %vm2480 = vcmp.gt.f32.partialorder %v2416, 0.0
    %vm2481 = vcmp.gt.f32.partialorder %v2417, 0.0
    %vm2482 = vcmp.gt.f32.partialorder %v2418, 0.0
    %vm2483 = vcmp.gt.f32.partialorder %v2419, 0.0
    %vm2484 = vcmp.gt.f32.partialorder %v2420, 0.0
    %vm2485 = vcmp.gt.f32.partialorder %v2421, 0.0
    %vm2486 = vcmp.gt.f32.partialorder %v2422, 0.0
    %vm2487 = vcmp.gt.f32.partialorder %v2423, 0.0
    %vm2488 = vcmp.gt.f32.partialorder %v2424, 0.0
    %vm2489 = vcmp.gt.f32.partialorder %v2425, 0.0
    %vm2490 = vcmp.gt.f32.partialorder %v2426, 0.0
    %vm2491 = vcmp.gt.f32.partialorder %v2427, 0.0
    %vm2492 = vcmp.gt.f32.partialorder %v2428, 0.0
    %vm2493 = vcmp.gt.f32.partialorder %v2429, 0.0
    %vm2494 = vcmp.gt.f32.partialorder %v2430, 0.0
    %vm2495 = vcmp.gt.f32.partialorder %v2431, 0.0
    %vm2496 = vcmp.gt.f32.partialorder %v2432, 0.0
    %vm2497 = vcmp.gt.f32.partialorder %v2433, 0.0
    %vm2498 = vcmp.gt.f32.partialorder %v2434, 0.0
    %vm2499 = vcmp.gt.f32.partialorder %v2435, 0.0
    %vm2500 = vcmp.gt.f32.partialorder %v2436, 0.0
    %vm2501 = vcmp.gt.f32.partialorder %v2437, 0.0
    %vm2502 = vcmp.gt.f32.partialorder %v2438, 0.0
    %vm2503 = vcmp.gt.f32.partialorder %v2439, 0.0
    %vm2504 = vcmp.gt.f32.partialorder %v2440, 0.0
    %vm2505 = vcmp.gt.f32.partialorder %v2441, 0.0
    %vm2506 = vcmp.gt.f32.partialorder %v2442, 0.0
    %v2507 = vmul.f32 %v2379, 0.2
    %v2508 = vmul.f32 %v2380, 0.2
    %v2509 = vmul.f32 %v2381, 0.2
    %v2510 = vmul.f32 %v2382, 0.2
    %v2511 = vmul.f32 %v2383, 0.2
    %v2512 = vmul.f32 %v2384, 0.2
    %v2513 = vmul.f32 %v2385, 0.2
    %v2514 = vmul.f32 %v2386, 0.2
    %v2515 = vmul.f32 %v2387, 0.2
    %v2516 = vmul.f32 %v2388, 0.2
    %v2517 = vmul.f32 %v2389, 0.2
    %v2518 = vmul.f32 %v2390, 0.2
    %v2519 = vmul.f32 %v2391, 0.2
    %v2520 = vmul.f32 %v2392, 0.2
    %v2521 = vmul.f32 %v2393, 0.2
    %v2522 = vmul.f32 %v2394, 0.2
    %v2523 = vmul.f32 %v2395, 0.2
    %v2524 = vmul.f32 %v2396, 0.2
    %v2525 = vmul.f32 %v2397, 0.2
    %v2526 = vmul.f32 %v2398, 0.2
    %v2527 = vmul.f32 %v2399, 0.2
    %v2528 = vmul.f32 %v2400, 0.2
    %v2529 = vmul.f32 %v2401, 0.2
    %v2530 = vmul.f32 %v2402, 0.2
    %v2531 = vmul.f32 %v2403, 0.2
    %v2532 = vmul.f32 %v2404, 0.2
    %v2533 = vmul.f32 %v2405, 0.2
    %v2534 = vmul.f32 %v2406, 0.2
    %v2535 = vmul.f32 %v2407, 0.2
    %v2536 = vmul.f32 %v2408, 0.2
    %v2537 = vmul.f32 %v2409, 0.2
    %v2538 = vmul.f32 %v2410, 0.2
    %v2539 = vmul.f32 %v2411, 0.2
    %v2540 = vmul.f32 %v2412, 0.2
    %v2541 = vmul.f32 %v2413, 0.2
    %v2542 = vmul.f32 %v2414, 0.2
    %v2543 = vmul.f32 %v2415, 0.2
    %v2544 = vmul.f32 %v2416, 0.2
    %v2545 = vmul.f32 %v2417, 0.2
    %v2546 = vmul.f32 %v2418, 0.2
    %v2547 = vmul.f32 %v2419, 0.2
    %v2548 = vmul.f32 %v2420, 0.2
    %v2549 = vmul.f32 %v2421, 0.2
    %v2550 = vmul.f32 %v2422, 0.2
    %v2551 = vmul.f32 %v2423, 0.2
    %v2552 = vmul.f32 %v2424, 0.2
    %v2553 = vmul.f32 %v2425, 0.2
    %v2554 = vmul.f32 %v2426, 0.2
    %v2555 = vmul.f32 %v2427, 0.2
    %v2556 = vmul.f32 %v2428, 0.2
    %v2557 = vmul.f32 %v2429, 0.2
    %v2558 = vmul.f32 %v2430, 0.2
    %v2559 = vmul.f32 %v2431, 0.2
    %v2560 = vmul.f32 %v2432, 0.2
    %v2561 = vmul.f32 %v2433, 0.2
    %v2562 = vmul.f32 %v2434, 0.2
    %v2563 = vmul.f32 %v2435, 0.2
    %v2564 = vmul.f32 %v2436, 0.2
    %v2565 = vmul.f32 %v2437, 0.2
    %v2566 = vmul.f32 %v2438, 0.2
    %v2567 = vmul.f32 %v2439, 0.2
    %v2568 = vmul.f32 %v2440, 0.2
    %v2569 = vmul.f32 %v2441, 0.2
    %v2570 = vmul.f32 %v2442, 0.2
    %v2571 = vsel %vm2443, %v2379, %v2507
    %v2572 = vsel %vm2444, %v2380, %v2508
    %v2573 = vsel %vm2445, %v2381, %v2509
    %v2574 = vsel %vm2446, %v2382, %v2510
    %v2575 = vsel %vm2447, %v2383, %v2511
    %v2576 = vsel %vm2448, %v2384, %v2512
    %v2577 = vsel %vm2449, %v2385, %v2513
    %v2578 = vsel %vm2450, %v2386, %v2514
    %v2579 = vsel %vm2451, %v2387, %v2515
    %v2580 = vsel %vm2452, %v2388, %v2516
    %v2581 = vsel %vm2453, %v2389, %v2517
    %v2582 = vsel %vm2454, %v2390, %v2518
    %v2583 = vsel %vm2455, %v2391, %v2519
    %v2584 = vsel %vm2456, %v2392, %v2520
    %v2585 = vsel %vm2457, %v2393, %v2521
    %v2586 = vsel %vm2458, %v2394, %v2522
    %v2587 = vsel %vm2459, %v2395, %v2523
    %v2588 = vsel %vm2460, %v2396, %v2524
    %v2589 = vsel %vm2461, %v2397, %v2525
    %v2590 = vsel %vm2462, %v2398, %v2526
    %v2591 = vsel %vm2463, %v2399, %v2527
    %v2592 = vsel %vm2464, %v2400, %v2528
    %v2593 = vsel %vm2465, %v2401, %v2529
    %v2594 = vsel %vm2466, %v2402, %v2530
    %v2595 = vsel %vm2467, %v2403, %v2531
    %v2596 = vsel %vm2468, %v2404, %v2532
    %v2597 = vsel %vm2469, %v2405, %v2533
    %v2598 = vsel %vm2470, %v2406, %v2534
    %v2599 = vsel %vm2471, %v2407, %v2535
    %v2600 = vsel %vm2472, %v2408, %v2536
    %v2601 = vsel %vm2473, %v2409, %v2537
    %v2602 = vsel %vm2474, %v2410, %v2538
    %v2603 = vsel %vm2475, %v2411, %v2539
    %v2604 = vsel %vm2476, %v2412, %v2540
    %v2605 = vsel %vm2477, %v2413, %v2541
    %v2606 = vsel %vm2478, %v2414, %v2542
    %v2607 = vsel %vm2479, %v2415, %v2543
    %v2608 = vsel %vm2480, %v2416, %v2544
    %v2609 = vsel %vm2481, %v2417, %v2545
    %v2610 = vsel %vm2482, %v2418, %v2546
    %v2611 = vsel %vm2483, %v2419, %v2547
    %v2612 = vsel %vm2484, %v2420, %v2548
    %v2613 = vsel %vm2485, %v2421, %v2549
    %v2614 = vsel %vm2486, %v2422, %v2550
    %v2615 = vsel %vm2487, %v2423, %v2551
    %v2616 = vsel %vm2488, %v2424, %v2552
    %v2617 = vsel %vm2489, %v2425, %v2553
    %v2618 = vsel %vm2490, %v2426, %v2554
    %v2619 = vsel %vm2491, %v2427, %v2555
    %v2620 = vsel %vm2492, %v2428, %v2556
    %v2621 = vsel %vm2493, %v2429, %v2557
    %v2622 = vsel %vm2494, %v2430, %v2558
    %v2623 = vsel %vm2495, %v2431, %v2559
    %v2624 = vsel %vm2496, %v2432, %v2560
    %v2625 = vsel %vm2497, %v2433, %v2561
    %v2626 = vsel %vm2498, %v2434, %v2562
    %v2627 = vsel %vm2499, %v2435, %v2563
    %v2628 = vsel %vm2500, %v2436, %v2564
    %v2629 = vsel %vm2501, %v2437, %v2565
    %v2630 = vsel %vm2502, %v2438, %v2566
    %v2631 = vsel %vm2503, %v2439, %v2567
    %v2632 = vsel %vm2504, %v2440, %v2568
    %v2633 = vsel %vm2505, %v2441, %v2569
    %v2634 = vsel %vm2506, %v2442, %v2570
    %v2635 = vld [vmem:[#allocation4] sm:$0xff]
    %v2636 = vld [vmem:[#allocation4 + $0x8] sm:$0xff]
    %v2637 = vld [vmem:[#allocation4 + $0x10] sm:$0xff]
    %v2638 = vld [vmem:[#allocation4 + $0x18] sm:$0xff]
    %v2639 = vld [vmem:[#allocation4 + $0x20] sm:$0xff]
    %v2640 = vld [vmem:[#allocation4 + $0x28] sm:$0xff]
    %v2641 = vld [vmem:[#allocation4 + $0x30] sm:$0xff]
    %v2642 = vld [vmem:[#allocation4 + $0x38] sm:$0xff]
    %v2643 = vld [vmem:[#allocation4 + $0x40] sm:$0xff]
    %v2644 = vld [vmem:[#allocation4 + $0x48] sm:$0xff]
    %v2645 = vld [vmem:[#allocation4 + $0x50] sm:$0xff]
    %v2646 = vld [vmem:[#allocation4 + $0x58] sm:$0xff]
    %v2647 = vld [vmem:[#allocation4 + $0x60] sm:$0xff]
    %v2648 = vld [vmem:[#allocation4 + $0x68] sm:$0xff]
    %v2649 = vld [vmem:[#allocation4 + $0x70] sm:$0xff]
    %v2650 = vld [vmem:[#allocation4 + $0x78] sm:$0xff]
    %v2651 = vld [vmem:[#allocation4 + $0x80] sm:$0xff]
    %v2652 = vld [vmem:[#allocation4 + $0x88] sm:$0xff]
    %v2653 = vld [vmem:[#allocation4 + $0x90] sm:$0xff]
    %v2654 = vld [vmem:[#allocation4 + $0x98] sm:$0xff]
    %v2655 = vld [vmem:[#allocation4 + $0xa0] sm:$0xff]
    %v2656 = vld [vmem:[#allocation4 + $0xa8] sm:$0xff]
    %v2657 = vld [vmem:[#allocation4 + $0xb0] sm:$0xff]
    %v2658 = vld [vmem:[#allocation4 + $0xb8] sm:$0xff]
    %v2659 = vld [vmem:[#allocation4 + $0xc0] sm:$0xff]
    %v2660 = vld [vmem:[#allocation4 + $0xc8] sm:$0xff]
    %v2661 = vld [vmem:[#allocation4 + $0xd0] sm:$0xff]
    %v2662 = vld [vmem:[#allocation4 + $0xd8] sm:$0xff]
    %v2663 = vld [vmem:[#allocation4 + $0xe0] sm:$0xff]
    %v2664 = vld [vmem:[#allocation4 + $0xe8] sm:$0xff]
    %v2665 = vld [vmem:[#allocation4 + $0xf0] sm:$0xff]
    %v2666 = vld [vmem:[#allocation4 + $0xf8] sm:$0xff]
    %v2667 = vld [vmem:[#allocation4 + $0x100] sm:$0xff]
    %v2668 = vld [vmem:[#allocation4 + $0x108] sm:$0xff]
    %v2669 = vld [vmem:[#allocation4 + $0x110] sm:$0xff]
    %v2670 = vld [vmem:[#allocation4 + $0x118] sm:$0xff]
    %v2671 = vld [vmem:[#allocation4 + $0x120] sm:$0xff]
    %v2672 = vld [vmem:[#allocation4 + $0x128] sm:$0xff]
    %v2673 = vld [vmem:[#allocation4 + $0x130] sm:$0xff]
    %v2674 = vld [vmem:[#allocation4 + $0x138] sm:$0xff]
    %v2675 = vld [vmem:[#allocation4 + $0x140] sm:$0xff]
    %v2676 = vld [vmem:[#allocation4 + $0x148] sm:$0xff]
    %v2677 = vld [vmem:[#allocation4 + $0x150] sm:$0xff]
    %v2678 = vld [vmem:[#allocation4 + $0x158] sm:$0xff]
    %v2679 = vld [vmem:[#allocation4 + $0x160] sm:$0xff]
    %v2680 = vld [vmem:[#allocation4 + $0x168] sm:$0xff]
    %v2681 = vld [vmem:[#allocation4 + $0x170] sm:$0xff]
    %v2682 = vld [vmem:[#allocation4 + $0x178] sm:$0xff]
    %v2683 = vld [vmem:[#allocation4 + $0x180] sm:$0xff]
    %v2684 = vld [vmem:[#allocation4 + $0x188] sm:$0xff]
    %v2685 = vld [vmem:[#allocation4 + $0x190] sm:$0xff]
    %v2686 = vld [vmem:[#allocation4 + $0x198] sm:$0xff]
    %v2687 = vld [vmem:[#allocation4 + $0x1a0] sm:$0xff]
    %v2688 = vld [vmem:[#allocation4 + $0x1a8] sm:$0xff]
    %v2689 = vld [vmem:[#allocation4 + $0x1b0] sm:$0xff]
    %v2690 = vld [vmem:[#allocation4 + $0x1b8] sm:$0xff]
    %v2691 = vld [vmem:[#allocation4 + $0x1c0] sm:$0xff]
    %v2692 = vld [vmem:[#allocation4 + $0x1c8] sm:$0xff]
    %v2693 = vld [vmem:[#allocation4 + $0x1d0] sm:$0xff]
    %v2694 = vld [vmem:[#allocation4 + $0x1d8] sm:$0xff]
    %v2695 = vld [vmem:[#allocation4 + $0x1e0] sm:$0xff]
    %v2696 = vld [vmem:[#allocation4 + $0x1e8] sm:$0xff]
    %v2697 = vld [vmem:[#allocation4 + $0x1f0] sm:$0xff]
    %v2698 = vld [vmem:[#allocation4 + $0x1f8] sm:$0xff]
    %v2699 = vld [vmem:[#allocation4 + $0x200] sm:$0xff]
    %v2700 = vld [vmem:[#allocation4 + $0x208] sm:$0xff]
    %v2701 = vld [vmem:[#allocation4 + $0x210] sm:$0xff]
    %v2702 = vld [vmem:[#allocation4 + $0x218] sm:$0xff]
    %v2703 = vld [vmem:[#allocation4 + $0x220] sm:$0xff]
    %v2704 = vld [vmem:[#allocation4 + $0x228] sm:$0xff]
    %v2705 = vld [vmem:[#allocation4 + $0x230] sm:$0xff]
    %v2706 = vld [vmem:[#allocation4 + $0x238] sm:$0xff]
    %v2707 = vld [vmem:[#allocation4 + $0x240] sm:$0xff]
    %v2708 = vld [vmem:[#allocation4 + $0x248] sm:$0xff]
    %v2709 = vld [vmem:[#allocation4 + $0x250] sm:$0xff]
    %v2710 = vld [vmem:[#allocation4 + $0x258] sm:$0xff]
    %v2711 = vld [vmem:[#allocation4 + $0x260] sm:$0xff]
    %v2712 = vld [vmem:[#allocation4 + $0x268] sm:$0xff]
    %v2713 = vld [vmem:[#allocation4 + $0x270] sm:$0xff]
    %v2714 = vld [vmem:[#allocation4 + $0x278] sm:$0xff]
    %v2715 = vld [vmem:[#allocation4 + $0x280] sm:$0xff]
    %v2716 = vld [vmem:[#allocation4 + $0x288] sm:$0xff]
    %v2717 = vld [vmem:[#allocation4 + $0x290] sm:$0xff]
    %v2718 = vld [vmem:[#allocation4 + $0x298] sm:$0xff]
    %v2719 = vld [vmem:[#allocation4 + $0x2a0] sm:$0xff]
    %v2720 = vld [vmem:[#allocation4 + $0x2a8] sm:$0xff]
    %v2721 = vld [vmem:[#allocation4 + $0x2b0] sm:$0xff]
    %v2722 = vld [vmem:[#allocation4 + $0x2b8] sm:$0xff]
    %v2723 = vld [vmem:[#allocation4 + $0x2c0] sm:$0xff]
    %v2724 = vld [vmem:[#allocation4 + $0x2c8] sm:$0xff]
    %v2725 = vld [vmem:[#allocation4 + $0x2d0] sm:$0xff]
    %v2726 = vld [vmem:[#allocation4 + $0x2d8] sm:$0xff]
    %v2727 = vld [vmem:[#allocation4 + $0x2e0] sm:$0xff]
    %v2728 = vld [vmem:[#allocation4 + $0x2e8] sm:$0xff]
    %v2729 = vld [vmem:[#allocation4 + $0x2f0] sm:$0xff]
    %v2730 = vld [vmem:[#allocation4 + $0x2f8] sm:$0xff]
    %v2731 = vld [vmem:[#allocation4 + $0x300] sm:$0xff]
    %v2732 = vld [vmem:[#allocation4 + $0x308] sm:$0xff]
    %v2733 = vld [vmem:[#allocation4 + $0x310] sm:$0xff]
    %v2734 = vld [vmem:[#allocation4 + $0x318] sm:$0xff]
    %v2735 = vld [vmem:[#allocation4 + $0x320] sm:$0xff]
    %v2736 = vld [vmem:[#allocation4 + $0x328] sm:$0xff]
    %v2737 = vld [vmem:[#allocation4 + $0x330] sm:$0xff]
    %v2738 = vld [vmem:[#allocation4 + $0x338] sm:$0xff]
    %v2739 = vld [vmem:[#allocation4 + $0x340] sm:$0xff]
    %v2740 = vld [vmem:[#allocation4 + $0x348] sm:$0xff]
    %v2741 = vld [vmem:[#allocation4 + $0x350] sm:$0xff]
    %v2742 = vld [vmem:[#allocation4 + $0x358] sm:$0xff]
    %v2743 = vld [vmem:[#allocation4 + $0x360] sm:$0xff]
    %v2744 = vld [vmem:[#allocation4 + $0x368] sm:$0xff]
    %v2745 = vld [vmem:[#allocation4 + $0x370] sm:$0xff]
    %v2746 = vld [vmem:[#allocation4 + $0x378] sm:$0xff]
    %v2747 = vld [vmem:[#allocation4 + $0x380] sm:$0xff]
    %v2748 = vld [vmem:[#allocation4 + $0x388] sm:$0xff]
    %v2749 = vld [vmem:[#allocation4 + $0x390] sm:$0xff]
    %v2750 = vld [vmem:[#allocation4 + $0x398] sm:$0xff]
    %v2751 = vld [vmem:[#allocation4 + $0x3a0] sm:$0xff]
    %v2752 = vld [vmem:[#allocation4 + $0x3a8] sm:$0xff]
    %v2753 = vld [vmem:[#allocation4 + $0x3b0] sm:$0xff]
    %v2754 = vld [vmem:[#allocation4 + $0x3b8] sm:$0xff]
    %v2755 = vld [vmem:[#allocation4 + $0x3c0] sm:$0xff]
    %v2756 = vld [vmem:[#allocation4 + $0x3c8] sm:$0xff]
    %v2757 = vld [vmem:[#allocation4 + $0x3d0] sm:$0xff]
    %v2758 = vld [vmem:[#allocation4 + $0x3d8] sm:$0xff]
    %v2759 = vld [vmem:[#allocation4 + $0x3e0] sm:$0xff]
    %v2760 = vld [vmem:[#allocation4 + $0x3e8] sm:$0xff]
    %v2761 = vld [vmem:[#allocation4 + $0x3f0] sm:$0xff]
    %v2762 = vld [vmem:[#allocation4 + $0x3f8] sm:$0xff]
    %v2763 = vld [vmem:[#allocation4 + $0x400] sm:$0xff]
    %v2764 = vld [vmem:[#allocation4 + $0x408] sm:$0xff]
    %v2765 = vld [vmem:[#allocation4 + $0x410] sm:$0xff]
    %v2766 = vld [vmem:[#allocation4 + $0x418] sm:$0xff]
    %v2767 = vld [vmem:[#allocation4 + $0x420] sm:$0xff]
    %v2768 = vld [vmem:[#allocation4 + $0x428] sm:$0xff]
    %v2769 = vld [vmem:[#allocation4 + $0x430] sm:$0xff]
    %v2770 = vld [vmem:[#allocation4 + $0x438] sm:$0xff]
    %v2771 = vld [vmem:[#allocation4 + $0x440] sm:$0xff]
    %v2772 = vld [vmem:[#allocation4 + $0x448] sm:$0xff]
    %v2773 = vld [vmem:[#allocation4 + $0x450] sm:$0xff]
    %v2774 = vld [vmem:[#allocation4 + $0x458] sm:$0xff]
    %v2775 = vld [vmem:[#allocation4 + $0x460] sm:$0xff]
    %v2776 = vld [vmem:[#allocation4 + $0x468] sm:$0xff]
    %v2777 = vld [vmem:[#allocation4 + $0x470] sm:$0xff]
    %v2778 = vld [vmem:[#allocation4 + $0x478] sm:$0xff]
    %v2779 = vld [vmem:[#allocation4 + $0x480] sm:$0xff]
    %v2780 = vld [vmem:[#allocation4 + $0x488] sm:$0xff]
    %v2781 = vld [vmem:[#allocation4 + $0x490] sm:$0xff]
    %v2782 = vld [vmem:[#allocation4 + $0x498] sm:$0xff]
    %v2783 = vld [vmem:[#allocation4 + $0x4a0] sm:$0xff]
    %v2784 = vld [vmem:[#allocation4 + $0x4a8] sm:$0xff]
    %v2785 = vld [vmem:[#allocation4 + $0x4b0] sm:$0xff]
    %v2786 = vld [vmem:[#allocation4 + $0x4b8] sm:$0xff]
    %v2787 = vld [vmem:[#allocation4 + $0x4c0] sm:$0xff]
    %v2788 = vld [vmem:[#allocation4 + $0x4c8] sm:$0xff]
    %v2789 = vld [vmem:[#allocation4 + $0x4d0] sm:$0xff]
    %v2790 = vld [vmem:[#allocation4 + $0x4d8] sm:$0xff]
    %v2791 = vld [vmem:[#allocation4 + $0x4e0] sm:$0xff]
    %v2792 = vld [vmem:[#allocation4 + $0x4e8] sm:$0xff]
    %v2793 = vld [vmem:[#allocation4 + $0x4f0] sm:$0xff]
    %v2794 = vld [vmem:[#allocation4 + $0x4f8] sm:$0xff]
    %v2795 = vld [vmem:[#allocation4 + $0x500] sm:$0xff]
    %v2796 = vld [vmem:[#allocation4 + $0x508] sm:$0xff]
    %v2797 = vld [vmem:[#allocation4 + $0x510] sm:$0xff]
    %v2798 = vld [vmem:[#allocation4 + $0x518] sm:$0xff]
    %v2799 = vld [vmem:[#allocation4 + $0x520] sm:$0xff]
    %v2800 = vld [vmem:[#allocation4 + $0x528] sm:$0xff]
    %v2801 = vld [vmem:[#allocation4 + $0x530] sm:$0xff]
    %v2802 = vld [vmem:[#allocation4 + $0x538] sm:$0xff]
    %v2803 = vld [vmem:[#allocation4 + $0x540] sm:$0xff]
    %v2804 = vld [vmem:[#allocation4 + $0x548] sm:$0xff]
    %v2805 = vld [vmem:[#allocation4 + $0x550] sm:$0xff]
    %v2806 = vld [vmem:[#allocation4 + $0x558] sm:$0xff]
    %v2807 = vld [vmem:[#allocation4 + $0x560] sm:$0xff]
    %v2808 = vld [vmem:[#allocation4 + $0x568] sm:$0xff]
    %v2809 = vld [vmem:[#allocation4 + $0x570] sm:$0xff]
    %v2810 = vld [vmem:[#allocation4 + $0x578] sm:$0xff]
    %v2811 = vld [vmem:[#allocation4 + $0x580] sm:$0xff]
    %v2812 = vld [vmem:[#allocation4 + $0x588] sm:$0xff]
    %v2813 = vld [vmem:[#allocation4 + $0x590] sm:$0xff]
    %v2814 = vld [vmem:[#allocation4 + $0x598] sm:$0xff]
    %v2815 = vld [vmem:[#allocation4 + $0x5a0] sm:$0xff]
    %v2816 = vld [vmem:[#allocation4 + $0x5a8] sm:$0xff]
    %v2817 = vld [vmem:[#allocation4 + $0x5b0] sm:$0xff]
    %v2818 = vld [vmem:[#allocation4 + $0x5b8] sm:$0xff]
    %v2819 = vld [vmem:[#allocation4 + $0x5c0] sm:$0xff]
    %v2820 = vld [vmem:[#allocation4 + $0x5c8] sm:$0xff]
    %v2821 = vld [vmem:[#allocation4 + $0x5d0] sm:$0xff]
    %v2822 = vld [vmem:[#allocation4 + $0x5d8] sm:$0xff]
    %v2823 = vld [vmem:[#allocation4 + $0x5e0] sm:$0xff]
    %v2824 = vld [vmem:[#allocation4 + $0x5e8] sm:$0xff]
    %v2825 = vld [vmem:[#allocation4 + $0x5f0] sm:$0xff]
    %v2826 = vld [vmem:[#allocation4 + $0x5f8] sm:$0xff]
    %v2827 = vld [vmem:[#allocation4 + $0x600] sm:$0xff]
    %v2828 = vld [vmem:[#allocation4 + $0x608] sm:$0xff]
    %v2829 = vld [vmem:[#allocation4 + $0x610] sm:$0xff]
    %v2830 = vld [vmem:[#allocation4 + $0x618] sm:$0xff]
    %v2831 = vld [vmem:[#allocation4 + $0x620] sm:$0xff]
    %v2832 = vld [vmem:[#allocation4 + $0x628] sm:$0xff]
    %v2833 = vld [vmem:[#allocation4 + $0x630] sm:$0xff]
    %v2834 = vld [vmem:[#allocation4 + $0x638] sm:$0xff]
    %v2835 = vld [vmem:[#allocation4 + $0x640] sm:$0xff]
    %v2836 = vld [vmem:[#allocation4 + $0x648] sm:$0xff]
    %v2837 = vld [vmem:[#allocation4 + $0x650] sm:$0xff]
    %v2838 = vld [vmem:[#allocation4 + $0x658] sm:$0xff]
    %v2839 = vld [vmem:[#allocation4 + $0x660] sm:$0xff]
    %v2840 = vld [vmem:[#allocation4 + $0x668] sm:$0xff]
    %v2841 = vld [vmem:[#allocation4 + $0x670] sm:$0xff]
    %v2842 = vld [vmem:[#allocation4 + $0x678] sm:$0xff]
    %v2843 = vld [vmem:[#allocation4 + $0x680] sm:$0xff]
    %v2844 = vld [vmem:[#allocation4 + $0x688] sm:$0xff]
    %v2845 = vld [vmem:[#allocation4 + $0x690] sm:$0xff]
    %v2846 = vld [vmem:[#allocation4 + $0x698] sm:$0xff]
    %v2847 = vld [vmem:[#allocation4 + $0x6a0] sm:$0xff]
    %v2848 = vld [vmem:[#allocation4 + $0x6a8] sm:$0xff]
    %v2849 = vld [vmem:[#allocation4 + $0x6b0] sm:$0xff]
    %v2850 = vld [vmem:[#allocation4 + $0x6b8] sm:$0xff]
    %v2851 = vld [vmem:[#allocation4 + $0x6c0] sm:$0xff]
    %v2852 = vld [vmem:[#allocation4 + $0x6c8] sm:$0xff]
    %v2853 = vld [vmem:[#allocation4 + $0x6d0] sm:$0xff]
    %v2854 = vld [vmem:[#allocation4 + $0x6d8] sm:$0xff]
    %v2855 = vld [vmem:[#allocation4 + $0x6e0] sm:$0xff]
    %v2856 = vld [vmem:[#allocation4 + $0x6e8] sm:$0xff]
    %v2857 = vld [vmem:[#allocation4 + $0x6f0] sm:$0xff]
    %v2858 = vld [vmem:[#allocation4 + $0x6f8] sm:$0xff]
    %v2859 = vld [vmem:[#allocation4 + $0x700] sm:$0xff]
    %v2860 = vld [vmem:[#allocation4 + $0x708] sm:$0xff]
    %v2861 = vld [vmem:[#allocation4 + $0x710] sm:$0xff]
    %v2862 = vld [vmem:[#allocation4 + $0x718] sm:$0xff]
    %v2863 = vld [vmem:[#allocation4 + $0x720] sm:$0xff]
    %v2864 = vld [vmem:[#allocation4 + $0x728] sm:$0xff]
    %v2865 = vld [vmem:[#allocation4 + $0x730] sm:$0xff]
    %v2866 = vld [vmem:[#allocation4 + $0x738] sm:$0xff]
    %v2867 = vld [vmem:[#allocation4 + $0x740] sm:$0xff]
    %v2868 = vld [vmem:[#allocation4 + $0x748] sm:$0xff]
    %v2869 = vld [vmem:[#allocation4 + $0x750] sm:$0xff]
    %v2870 = vld [vmem:[#allocation4 + $0x758] sm:$0xff]
    %v2871 = vld [vmem:[#allocation4 + $0x760] sm:$0xff]
    %v2872 = vld [vmem:[#allocation4 + $0x768] sm:$0xff]
    %v2873 = vld [vmem:[#allocation4 + $0x770] sm:$0xff]
    %v2874 = vld [vmem:[#allocation4 + $0x778] sm:$0xff]
    %v2875 = vld [vmem:[#allocation4 + $0x780] sm:$0xff]
    %v2876 = vld [vmem:[#allocation4 + $0x788] sm:$0xff]
    %v2877 = vld [vmem:[#allocation4 + $0x790] sm:$0xff]
    %v2878 = vld [vmem:[#allocation4 + $0x798] sm:$0xff]
    %v2879 = vld [vmem:[#allocation4 + $0x7a0] sm:$0xff]
    %v2880 = vld [vmem:[#allocation4 + $0x7a8] sm:$0xff]
    %v2881 = vld [vmem:[#allocation4 + $0x7b0] sm:$0xff]
    %v2882 = vld [vmem:[#allocation4 + $0x7b8] sm:$0xff]
    %v2883 = vld [vmem:[#allocation4 + $0x7c0] sm:$0xff]
    %v2884 = vld [vmem:[#allocation4 + $0x7c8] sm:$0xff]
    %v2885 = vld [vmem:[#allocation4 + $0x7d0] sm:$0xff]
    %v2886 = vld [vmem:[#allocation4 + $0x7d8] sm:$0xff]
    %v2887 = vld [vmem:[#allocation4 + $0x7e0] sm:$0xff]
    %v2888 = vld [vmem:[#allocation4 + $0x7e8] sm:$0xff]
    %v2889 = vld [vmem:[#allocation4 + $0x7f0] sm:$0xff]
    %v2890 = vld [vmem:[#allocation4 + $0x7f8] sm:$0xff]
    %v2891 = vpack.c.bf16 %v2575, %v2571
    %v2892 = vpack.c.bf16 %v2576, %v2572
    %v2893 = vpack.c.bf16 %v2577, %v2573
    %v2894 = vpack.c.bf16 %v2578, %v2574
    %v2895 = vpack.c.bf16 %v2583, %v2579
    %v2896 = vpack.c.bf16 %v2584, %v2580
    %v2897 = vpack.c.bf16 %v2585, %v2581
    %v2898 = vpack.c.bf16 %v2586, %v2582
    %v2899 = vpack.c.bf16 %v2591, %v2587
    %v2900 = vpack.c.bf16 %v2592, %v2588
    %v2901 = vpack.c.bf16 %v2593, %v2589
    %v2902 = vpack.c.bf16 %v2594, %v2590
    %v2903 = vpack.c.bf16 %v2599, %v2595
    %v2904 = vpack.c.bf16 %v2600, %v2596
    %v2905 = vpack.c.bf16 %v2601, %v2597
    %v2906 = vpack.c.bf16 %v2602, %v2598
    %v2907 = vpack.c.bf16 %v2607, %v2603
    %v2908 = vpack.c.bf16 %v2608, %v2604
    %v2909 = vpack.c.bf16 %v2609, %v2605
    %v2910 = vpack.c.bf16 %v2610, %v2606
    %v2911 = vpack.c.bf16 %v2615, %v2611
    %v2912 = vpack.c.bf16 %v2616, %v2612
    %v2913 = vpack.c.bf16 %v2617, %v2613
    %v2914 = vpack.c.bf16 %v2618, %v2614
    %v2915 = vpack.c.bf16 %v2623, %v2619
    %v2916 = vpack.c.bf16 %v2624, %v2620
    %v2917 = vpack.c.bf16 %v2625, %v2621
    %v2918 = vpack.c.bf16 %v2626, %v2622
    %v2919 = vpack.c.bf16 %v2631, %v2627
    %v2920 = vpack.c.bf16 %v2632, %v2628
    %v2921 = vpack.c.bf16 %v2633, %v2629
    %v2922 = vpack.c.bf16 %v2634, %v2630
    %v2923 = vld [vmem:[%s15] sm:$0xff]
    %v2925 = vlaneseq
    %v2926 = vshrl.u32 %v2925, 7
    %v2927 = vsub.s32 0, %v2926
    %v2928 = vrot.slane %v2923, %v2927
    %v2929 = vlaneseq
    %v2930 = vshrl.u32 %v2929, 7
    %v2931 = vsub.s32 1, %v2930
    %v2932 = vrot.slane %v2923, %v2931
    %v2933 = vlaneseq
    %v2934 = vshrl.u32 %v2933, 7
    %v2935 = vsub.s32 2, %v2934
    %v2936 = vrot.slane %v2923, %v2935
    %v2937 = vlaneseq
    %v2938 = vshrl.u32 %v2937, 7
    %v2939 = vsub.s32 3, %v2938
    %v2940 = vrot.slane %v2923, %v2939
    %v2941 = vlaneseq
    %v2942 = vshrl.u32 %v2941, 7
    %v2943 = vsub.s32 4, %v2942
    %v2944 = vrot.slane %v2923, %v2943
    %v2945 = vlaneseq
    %v2946 = vshrl.u32 %v2945, 7
    %v2947 = vsub.s32 5, %v2946
    %v2948 = vrot.slane %v2923, %v2947
    %v2949 = vlaneseq
    %v2950 = vshrl.u32 %v2949, 7
    %v2951 = vsub.s32 6, %v2950
    %v2952 = vrot.slane %v2923, %v2951
    %v2953 = vlaneseq
    %v2954 = vshrl.u32 %v2953, 7
    %v2955 = vsub.s32 7, %v2954
    %v2956 = vrot.slane %v2923, %v2955
    %v3221 = vunpack.c.l.b16 %v2635
    %v3222 = vunpack.c.h.b16 %v2635
    %v3223 = vunpack.c.l.b16 %v2636
    %v3224 = vunpack.c.h.b16 %v2636
    %v3225 = vunpack.c.l.b16 %v2637
    %v3226 = vunpack.c.h.b16 %v2637
    %v3227 = vunpack.c.l.b16 %v2638
    %v3228 = vunpack.c.h.b16 %v2638
    %v3229 = vunpack.c.l.b16 %v2639
    %v3230 = vunpack.c.h.b16 %v2639
    %v3231 = vunpack.c.l.b16 %v2640
    %v3232 = vunpack.c.h.b16 %v2640
    %v3233 = vunpack.c.l.b16 %v2641
    %v3234 = vunpack.c.h.b16 %v2641
    %v3235 = vunpack.c.l.b16 %v2642
    %v3236 = vunpack.c.h.b16 %v2642
    %v3237 = vunpack.c.l.b16 %v2643
    %v3238 = vunpack.c.h.b16 %v2643
    %v3239 = vunpack.c.l.b16 %v2644
    %v3240 = vunpack.c.h.b16 %v2644
    %v3241 = vunpack.c.l.b16 %v2645
    %v3242 = vunpack.c.h.b16 %v2645
    %v3243 = vunpack.c.l.b16 %v2646
    %v3244 = vunpack.c.h.b16 %v2646
    %v3245 = vunpack.c.l.b16 %v2647
    %v3246 = vunpack.c.h.b16 %v2647
    %v3247 = vunpack.c.l.b16 %v2648
    %v3248 = vunpack.c.h.b16 %v2648
    %v3249 = vunpack.c.l.b16 %v2649
    %v3250 = vunpack.c.h.b16 %v2649
    %v3251 = vunpack.c.l.b16 %v2650
    %v3252 = vunpack.c.h.b16 %v2650
    %v3253 = vunpack.c.l.b16 %v2651
    %v3254 = vunpack.c.h.b16 %v2651
    %v3255 = vunpack.c.l.b16 %v2652
    %v3256 = vunpack.c.h.b16 %v2652
    %v3257 = vunpack.c.l.b16 %v2653
    %v3258 = vunpack.c.h.b16 %v2653
    %v3259 = vunpack.c.l.b16 %v2654
    %v3260 = vunpack.c.h.b16 %v2654
    %v3261 = vunpack.c.l.b16 %v2655
    %v3262 = vunpack.c.h.b16 %v2655
    %v3263 = vunpack.c.l.b16 %v2656
    %v3264 = vunpack.c.h.b16 %v2656
    %v3265 = vunpack.c.l.b16 %v2657
    %v3266 = vunpack.c.h.b16 %v2657
    %v3267 = vunpack.c.l.b16 %v2658
    %v3268 = vunpack.c.h.b16 %v2658
    %v3269 = vunpack.c.l.b16 %v2659
    %v3270 = vunpack.c.h.b16 %v2659
    %v3271 = vunpack.c.l.b16 %v2660
    %v3272 = vunpack.c.h.b16 %v2660
    %v3273 = vunpack.c.l.b16 %v2661
    %v3274 = vunpack.c.h.b16 %v2661
    %v3275 = vunpack.c.l.b16 %v2662
    %v3276 = vunpack.c.h.b16 %v2662
    %v3277 = vunpack.c.l.b16 %v2663
    %v3278 = vunpack.c.h.b16 %v2663
    %v3279 = vunpack.c.l.b16 %v2664
    %v3280 = vunpack.c.h.b16 %v2664
    %v3281 = vunpack.c.l.b16 %v2665
    %v3282 = vunpack.c.h.b16 %v2665
    %v3283 = vunpack.c.l.b16 %v2666
    %v3284 = vunpack.c.h.b16 %v2666
    %v3285 = vunpack.c.l.b16 %v2667
    %v3286 = vunpack.c.h.b16 %v2667
    %v3287 = vunpack.c.l.b16 %v2668
    %v3288 = vunpack.c.h.b16 %v2668
    %v3289 = vunpack.c.l.b16 %v2669
    %v3290 = vunpack.c.h.b16 %v2669
    %v3291 = vunpack.c.l.b16 %v2670
    %v3292 = vunpack.c.h.b16 %v2670
    %v3293 = vunpack.c.l.b16 %v2671
    %v3294 = vunpack.c.h.b16 %v2671
    %v3295 = vunpack.c.l.b16 %v2672
    %v3296 = vunpack.c.h.b16 %v2672
    %v3297 = vunpack.c.l.b16 %v2673
    %v3298 = vunpack.c.h.b16 %v2673
    %v3299 = vunpack.c.l.b16 %v2674
    %v3300 = vunpack.c.h.b16 %v2674
    %v3301 = vunpack.c.l.b16 %v2675
    %v3302 = vunpack.c.h.b16 %v2675
    %v3303 = vunpack.c.l.b16 %v2676
    %v3304 = vunpack.c.h.b16 %v2676
    %v3305 = vunpack.c.l.b16 %v2677
    %v3306 = vunpack.c.h.b16 %v2677
    %v3307 = vunpack.c.l.b16 %v2678
    %v3308 = vunpack.c.h.b16 %v2678
    %v3309 = vunpack.c.l.b16 %v2679
    %v3310 = vunpack.c.h.b16 %v2679
    %v3311 = vunpack.c.l.b16 %v2680
    %v3312 = vunpack.c.h.b16 %v2680
    %v3313 = vunpack.c.l.b16 %v2681
    %v3314 = vunpack.c.h.b16 %v2681
    %v3315 = vunpack.c.l.b16 %v2682
    %v3316 = vunpack.c.h.b16 %v2682
    %v3317 = vunpack.c.l.b16 %v2683
    %v3318 = vunpack.c.h.b16 %v2683
    %v3319 = vunpack.c.l.b16 %v2684
    %v3320 = vunpack.c.h.b16 %v2684
    %v3321 = vunpack.c.l.b16 %v2685
    %v3322 = vunpack.c.h.b16 %v2685
    %v3323 = vunpack.c.l.b16 %v2686
    %v3324 = vunpack.c.h.b16 %v2686
    %v3325 = vunpack.c.l.b16 %v2687
    %v3326 = vunpack.c.h.b16 %v2687
    %v3327 = vunpack.c.l.b16 %v2688
    %v3328 = vunpack.c.h.b16 %v2688
    %v3329 = vunpack.c.l.b16 %v2689
    %v3330 = vunpack.c.h.b16 %v2689
    %v3331 = vunpack.c.l.b16 %v2690
    %v3332 = vunpack.c.h.b16 %v2690
    %v3333 = vunpack.c.l.b16 %v2691
    %v3334 = vunpack.c.h.b16 %v2691
    %v3335 = vunpack.c.l.b16 %v2692
    %v3336 = vunpack.c.h.b16 %v2692
    %v3337 = vunpack.c.l.b16 %v2693
    %v3338 = vunpack.c.h.b16 %v2693
    %v3339 = vunpack.c.l.b16 %v2694
    %v3340 = vunpack.c.h.b16 %v2694
    %v3341 = vunpack.c.l.b16 %v2695
    %v3342 = vunpack.c.h.b16 %v2695
    %v3343 = vunpack.c.l.b16 %v2696
    %v3344 = vunpack.c.h.b16 %v2696
    %v3345 = vunpack.c.l.b16 %v2697
    %v3346 = vunpack.c.h.b16 %v2697
    %v3347 = vunpack.c.l.b16 %v2698
    %v3348 = vunpack.c.h.b16 %v2698
    %v3349 = vunpack.c.l.b16 %v2699
    %v3350 = vunpack.c.h.b16 %v2699
    %v3351 = vunpack.c.l.b16 %v2700
    %v3352 = vunpack.c.h.b16 %v2700
    %v3353 = vunpack.c.l.b16 %v2701
    %v3354 = vunpack.c.h.b16 %v2701
    %v3355 = vunpack.c.l.b16 %v2702
    %v3356 = vunpack.c.h.b16 %v2702
    %v3357 = vunpack.c.l.b16 %v2703
    %v3358 = vunpack.c.h.b16 %v2703
    %v3359 = vunpack.c.l.b16 %v2704
    %v3360 = vunpack.c.h.b16 %v2704
    %v3361 = vunpack.c.l.b16 %v2705
    %v3362 = vunpack.c.h.b16 %v2705
    %v3363 = vunpack.c.l.b16 %v2706
    %v3364 = vunpack.c.h.b16 %v2706
    %v3365 = vunpack.c.l.b16 %v2707
    %v3366 = vunpack.c.h.b16 %v2707
    %v3367 = vunpack.c.l.b16 %v2708
    %v3368 = vunpack.c.h.b16 %v2708
    %v3369 = vunpack.c.l.b16 %v2709
    %v3370 = vunpack.c.h.b16 %v2709
    %v3371 = vunpack.c.l.b16 %v2710
    %v3372 = vunpack.c.h.b16 %v2710
    %v3373 = vunpack.c.l.b16 %v2711
    %v3374 = vunpack.c.h.b16 %v2711
    %v3375 = vunpack.c.l.b16 %v2712
    %v3376 = vunpack.c.h.b16 %v2712
    %v3377 = vunpack.c.l.b16 %v2713
    %v3378 = vunpack.c.h.b16 %v2713
    %v3379 = vunpack.c.l.b16 %v2714
    %v3380 = vunpack.c.h.b16 %v2714
    %v3381 = vunpack.c.l.b16 %v2715
    %v3382 = vunpack.c.h.b16 %v2715
    %v3383 = vunpack.c.l.b16 %v2716
    %v3384 = vunpack.c.h.b16 %v2716
    %v3385 = vunpack.c.l.b16 %v2717
    %v3386 = vunpack.c.h.b16 %v2717
    %v3387 = vunpack.c.l.b16 %v2718
    %v3388 = vunpack.c.h.b16 %v2718
    %v3389 = vunpack.c.l.b16 %v2719
    %v3390 = vunpack.c.h.b16 %v2719
    %v3391 = vunpack.c.l.b16 %v2720
    %v3392 = vunpack.c.h.b16 %v2720
    %v3393 = vunpack.c.l.b16 %v2721
    %v3394 = vunpack.c.h.b16 %v2721
    %v3395 = vunpack.c.l.b16 %v2722
    %v3396 = vunpack.c.h.b16 %v2722
    %v3397 = vunpack.c.l.b16 %v2723
    %v3398 = vunpack.c.h.b16 %v2723
    %v3399 = vunpack.c.l.b16 %v2724
    %v3400 = vunpack.c.h.b16 %v2724
    %v3401 = vunpack.c.l.b16 %v2725
    %v3402 = vunpack.c.h.b16 %v2725
    %v3403 = vunpack.c.l.b16 %v2726
    %v3404 = vunpack.c.h.b16 %v2726
    %v3405 = vunpack.c.l.b16 %v2727
    %v3406 = vunpack.c.h.b16 %v2727
    %v3407 = vunpack.c.l.b16 %v2728
    %v3408 = vunpack.c.h.b16 %v2728
    %v3409 = vunpack.c.l.b16 %v2729
    %v3410 = vunpack.c.h.b16 %v2729
    %v3411 = vunpack.c.l.b16 %v2730
    %v3412 = vunpack.c.h.b16 %v2730
    %v3413 = vunpack.c.l.b16 %v2731
    %v3414 = vunpack.c.h.b16 %v2731
    %v3415 = vunpack.c.l.b16 %v2732
    %v3416 = vunpack.c.h.b16 %v2732
    %v3417 = vunpack.c.l.b16 %v2733
    %v3418 = vunpack.c.h.b16 %v2733
    %v3419 = vunpack.c.l.b16 %v2734
    %v3420 = vunpack.c.h.b16 %v2734
    %v3421 = vunpack.c.l.b16 %v2735
    %v3422 = vunpack.c.h.b16 %v2735
    %v3423 = vunpack.c.l.b16 %v2736
    %v3424 = vunpack.c.h.b16 %v2736
    %v3425 = vunpack.c.l.b16 %v2737
    %v3426 = vunpack.c.h.b16 %v2737
    %v3427 = vunpack.c.l.b16 %v2738
    %v3428 = vunpack.c.h.b16 %v2738
    %v3429 = vunpack.c.l.b16 %v2739
    %v3430 = vunpack.c.h.b16 %v2739
    %v3431 = vunpack.c.l.b16 %v2740
    %v3432 = vunpack.c.h.b16 %v2740
    %v3433 = vunpack.c.l.b16 %v2741
    %v3434 = vunpack.c.h.b16 %v2741
    %v3435 = vunpack.c.l.b16 %v2742
    %v3436 = vunpack.c.h.b16 %v2742
    %v3437 = vunpack.c.l.b16 %v2743
    %v3438 = vunpack.c.h.b16 %v2743
    %v3439 = vunpack.c.l.b16 %v2744
    %v3440 = vunpack.c.h.b16 %v2744
    %v3441 = vunpack.c.l.b16 %v2745
    %v3442 = vunpack.c.h.b16 %v2745
    %v3443 = vunpack.c.l.b16 %v2746
    %v3444 = vunpack.c.h.b16 %v2746
    %v3445 = vunpack.c.l.b16 %v2747
    %v3446 = vunpack.c.h.b16 %v2747
    %v3447 = vunpack.c.l.b16 %v2748
    %v3448 = vunpack.c.h.b16 %v2748
    %v3449 = vunpack.c.l.b16 %v2749
    %v3450 = vunpack.c.h.b16 %v2749
    %v3451 = vunpack.c.l.b16 %v2750
    %v3452 = vunpack.c.h.b16 %v2750
    %v3453 = vunpack.c.l.b16 %v2751
    %v3454 = vunpack.c.h.b16 %v2751
    %v3455 = vunpack.c.l.b16 %v2752
    %v3456 = vunpack.c.h.b16 %v2752
    %v3457 = vunpack.c.l.b16 %v2753
    %v3458 = vunpack.c.h.b16 %v2753
    %v3459 = vunpack.c.l.b16 %v2754
    %v3460 = vunpack.c.h.b16 %v2754
    %v3461 = vunpack.c.l.b16 %v2755
    %v3462 = vunpack.c.h.b16 %v2755
    %v3463 = vunpack.c.l.b16 %v2756
    %v3464 = vunpack.c.h.b16 %v2756
    %v3465 = vunpack.c.l.b16 %v2757
    %v3466 = vunpack.c.h.b16 %v2757
    %v3467 = vunpack.c.l.b16 %v2758
    %v3468 = vunpack.c.h.b16 %v2758
    %v3469 = vunpack.c.l.b16 %v2759
    %v3470 = vunpack.c.h.b16 %v2759
    %v3471 = vunpack.c.l.b16 %v2760
    %v3472 = vunpack.c.h.b16 %v2760
    %v3473 = vunpack.c.l.b16 %v2761
    %v3474 = vunpack.c.h.b16 %v2761
    %v3475 = vunpack.c.l.b16 %v2762
    %v3476 = vunpack.c.h.b16 %v2762
    %v3477 = vunpack.c.l.b16 %v2763
    %v3478 = vunpack.c.h.b16 %v2763
    %v3479 = vunpack.c.l.b16 %v2764
    %v3480 = vunpack.c.h.b16 %v2764
    %v3481 = vunpack.c.l.b16 %v2765
    %v3482 = vunpack.c.h.b16 %v2765
    %v3483 = vunpack.c.l.b16 %v2766
    %v3484 = vunpack.c.h.b16 %v2766
    %v3485 = vunpack.c.l.b16 %v2767
    %v3486 = vunpack.c.h.b16 %v2767
    %v3487 = vunpack.c.l.b16 %v2768
    %v3488 = vunpack.c.h.b16 %v2768
    %v3489 = vunpack.c.l.b16 %v2769
    %v3490 = vunpack.c.h.b16 %v2769
    %v3491 = vunpack.c.l.b16 %v2770
    %v3492 = vunpack.c.h.b16 %v2770
    %v3493 = vunpack.c.l.b16 %v2771
    %v3494 = vunpack.c.h.b16 %v2771
    %v3495 = vunpack.c.l.b16 %v2772
    %v3496 = vunpack.c.h.b16 %v2772
    %v3497 = vunpack.c.l.b16 %v2773
    %v3498 = vunpack.c.h.b16 %v2773
    %v3499 = vunpack.c.l.b16 %v2774
    %v3500 = vunpack.c.h.b16 %v2774
    %v3501 = vunpack.c.l.b16 %v2775
    %v3502 = vunpack.c.h.b16 %v2775
    %v3503 = vunpack.c.l.b16 %v2776
    %v3504 = vunpack.c.h.b16 %v2776
    %v3505 = vunpack.c.l.b16 %v2777
    %v3506 = vunpack.c.h.b16 %v2777
    %v3507 = vunpack.c.l.b16 %v2778
    %v3508 = vunpack.c.h.b16 %v2778
    %v3509 = vunpack.c.l.b16 %v2779
    %v3510 = vunpack.c.h.b16 %v2779
    %v3511 = vunpack.c.l.b16 %v2780
    %v3512 = vunpack.c.h.b16 %v2780
    %v3513 = vunpack.c.l.b16 %v2781
    %v3514 = vunpack.c.h.b16 %v2781
    %v3515 = vunpack.c.l.b16 %v2782
    %v3516 = vunpack.c.h.b16 %v2782
    %v3517 = vunpack.c.l.b16 %v2783
    %v3518 = vunpack.c.h.b16 %v2783
    %v3519 = vunpack.c.l.b16 %v2784
    %v3520 = vunpack.c.h.b16 %v2784
    %v3521 = vunpack.c.l.b16 %v2785
    %v3522 = vunpack.c.h.b16 %v2785
    %v3523 = vunpack.c.l.b16 %v2786
    %v3524 = vunpack.c.h.b16 %v2786
    %v3525 = vunpack.c.l.b16 %v2787
    %v3526 = vunpack.c.h.b16 %v2787
    %v3527 = vunpack.c.l.b16 %v2788
    %v3528 = vunpack.c.h.b16 %v2788
    %v3529 = vunpack.c.l.b16 %v2789
    %v3530 = vunpack.c.h.b16 %v2789
    %v3531 = vunpack.c.l.b16 %v2790
    %v3532 = vunpack.c.h.b16 %v2790
    %v3533 = vunpack.c.l.b16 %v2791
    %v3534 = vunpack.c.h.b16 %v2791
    %v3535 = vunpack.c.l.b16 %v2792
    %v3536 = vunpack.c.h.b16 %v2792
    %v3537 = vunpack.c.l.b16 %v2793
    %v3538 = vunpack.c.h.b16 %v2793
    %v3539 = vunpack.c.l.b16 %v2794
    %v3540 = vunpack.c.h.b16 %v2794
    %v3541 = vunpack.c.l.b16 %v2795
    %v3542 = vunpack.c.h.b16 %v2795
    %v3543 = vunpack.c.l.b16 %v2796
    %v3544 = vunpack.c.h.b16 %v2796
    %v3545 = vunpack.c.l.b16 %v2797
    %v3546 = vunpack.c.h.b16 %v2797
    %v3547 = vunpack.c.l.b16 %v2798
    %v3548 = vunpack.c.h.b16 %v2798
    %v3549 = vunpack.c.l.b16 %v2799
    %v3550 = vunpack.c.h.b16 %v2799
    %v3551 = vunpack.c.l.b16 %v2800
    %v3552 = vunpack.c.h.b16 %v2800
    %v3553 = vunpack.c.l.b16 %v2801
    %v3554 = vunpack.c.h.b16 %v2801
    %v3555 = vunpack.c.l.b16 %v2802
    %v3556 = vunpack.c.h.b16 %v2802
    %v3557 = vunpack.c.l.b16 %v2803
    %v3558 = vunpack.c.h.b16 %v2803
    %v3559 = vunpack.c.l.b16 %v2804
    %v3560 = vunpack.c.h.b16 %v2804
    %v3561 = vunpack.c.l.b16 %v2805
    %v3562 = vunpack.c.h.b16 %v2805
    %v3563 = vunpack.c.l.b16 %v2806
    %v3564 = vunpack.c.h.b16 %v2806
    %v3565 = vunpack.c.l.b16 %v2807
    %v3566 = vunpack.c.h.b16 %v2807
    %v3567 = vunpack.c.l.b16 %v2808
    %v3568 = vunpack.c.h.b16 %v2808
    %v3569 = vunpack.c.l.b16 %v2809
    %v3570 = vunpack.c.h.b16 %v2809
    %v3571 = vunpack.c.l.b16 %v2810
    %v3572 = vunpack.c.h.b16 %v2810
    %v3573 = vunpack.c.l.b16 %v2811
    %v3574 = vunpack.c.h.b16 %v2811
    %v3575 = vunpack.c.l.b16 %v2812
    %v3576 = vunpack.c.h.b16 %v2812
    %v3577 = vunpack.c.l.b16 %v2813
    %v3578 = vunpack.c.h.b16 %v2813
    %v3579 = vunpack.c.l.b16 %v2814
    %v3580 = vunpack.c.h.b16 %v2814
    %v3581 = vunpack.c.l.b16 %v2815
    %v3582 = vunpack.c.h.b16 %v2815
    %v3583 = vunpack.c.l.b16 %v2816
    %v3584 = vunpack.c.h.b16 %v2816
    %v3585 = vunpack.c.l.b16 %v2817
    %v3586 = vunpack.c.h.b16 %v2817
    %v3587 = vunpack.c.l.b16 %v2818
    %v3588 = vunpack.c.h.b16 %v2818
    %v3589 = vunpack.c.l.b16 %v2819
    %v3590 = vunpack.c.h.b16 %v2819
    %v3591 = vunpack.c.l.b16 %v2820
    %v3592 = vunpack.c.h.b16 %v2820
    %v3593 = vunpack.c.l.b16 %v2821
    %v3594 = vunpack.c.h.b16 %v2821
    %v3595 = vunpack.c.l.b16 %v2822
    %v3596 = vunpack.c.h.b16 %v2822
    %v3597 = vunpack.c.l.b16 %v2823
    %v3598 = vunpack.c.h.b16 %v2823
    %v3599 = vunpack.c.l.b16 %v2824
    %v3600 = vunpack.c.h.b16 %v2824
    %v3601 = vunpack.c.l.b16 %v2825
    %v3602 = vunpack.c.h.b16 %v2825
    %v3603 = vunpack.c.l.b16 %v2826
    %v3604 = vunpack.c.h.b16 %v2826
    %v3605 = vunpack.c.l.b16 %v2827
    %v3606 = vunpack.c.h.b16 %v2827
    %v3607 = vunpack.c.l.b16 %v2828
    %v3608 = vunpack.c.h.b16 %v2828
    %v3609 = vunpack.c.l.b16 %v2829
    %v3610 = vunpack.c.h.b16 %v2829
    %v3611 = vunpack.c.l.b16 %v2830
    %v3612 = vunpack.c.h.b16 %v2830
    %v3613 = vunpack.c.l.b16 %v2831
    %v3614 = vunpack.c.h.b16 %v2831
    %v3615 = vunpack.c.l.b16 %v2832
    %v3616 = vunpack.c.h.b16 %v2832
    %v3617 = vunpack.c.l.b16 %v2833
    %v3618 = vunpack.c.h.b16 %v2833
    %v3619 = vunpack.c.l.b16 %v2834
    %v3620 = vunpack.c.h.b16 %v2834
    %v3621 = vunpack.c.l.b16 %v2835
    %v3622 = vunpack.c.h.b16 %v2835
    %v3623 = vunpack.c.l.b16 %v2836
    %v3624 = vunpack.c.h.b16 %v2836
    %v3625 = vunpack.c.l.b16 %v2837
    %v3626 = vunpack.c.h.b16 %v2837
    %v3627 = vunpack.c.l.b16 %v2838
    %v3628 = vunpack.c.h.b16 %v2838
    %v3629 = vunpack.c.l.b16 %v2839
    %v3630 = vunpack.c.h.b16 %v2839
    %v3631 = vunpack.c.l.b16 %v2840
    %v3632 = vunpack.c.h.b16 %v2840
    %v3633 = vunpack.c.l.b16 %v2841
    %v3634 = vunpack.c.h.b16 %v2841
    %v3635 = vunpack.c.l.b16 %v2842
    %v3636 = vunpack.c.h.b16 %v2842
    %v3637 = vunpack.c.l.b16 %v2843
    %v3638 = vunpack.c.h.b16 %v2843
    %v3639 = vunpack.c.l.b16 %v2844
    %v3640 = vunpack.c.h.b16 %v2844
    %v3641 = vunpack.c.l.b16 %v2845
    %v3642 = vunpack.c.h.b16 %v2845
    %v3643 = vunpack.c.l.b16 %v2846
    %v3644 = vunpack.c.h.b16 %v2846
    %v3645 = vunpack.c.l.b16 %v2847
    %v3646 = vunpack.c.h.b16 %v2847
    %v3647 = vunpack.c.l.b16 %v2848
    %v3648 = vunpack.c.h.b16 %v2848
    %v3649 = vunpack.c.l.b16 %v2849
    %v3650 = vunpack.c.h.b16 %v2849
    %v3651 = vunpack.c.l.b16 %v2850
    %v3652 = vunpack.c.h.b16 %v2850
    %v3653 = vunpack.c.l.b16 %v2851
    %v3654 = vunpack.c.h.b16 %v2851
    %v3655 = vunpack.c.l.b16 %v2852
    %v3656 = vunpack.c.h.b16 %v2852
    %v3657 = vunpack.c.l.b16 %v2853
    %v3658 = vunpack.c.h.b16 %v2853
    %v3659 = vunpack.c.l.b16 %v2854
    %v3660 = vunpack.c.h.b16 %v2854
    %v3661 = vunpack.c.l.b16 %v2855
    %v3662 = vunpack.c.h.b16 %v2855
    %v3663 = vunpack.c.l.b16 %v2856
    %v3664 = vunpack.c.h.b16 %v2856
    %v3665 = vunpack.c.l.b16 %v2857
    %v3666 = vunpack.c.h.b16 %v2857
    %v3667 = vunpack.c.l.b16 %v2858
    %v3668 = vunpack.c.h.b16 %v2858
    %v3669 = vunpack.c.l.b16 %v2859
    %v3670 = vunpack.c.h.b16 %v2859
    %v3671 = vunpack.c.l.b16 %v2860
    %v3672 = vunpack.c.h.b16 %v2860
    %v3673 = vunpack.c.l.b16 %v2861
    %v3674 = vunpack.c.h.b16 %v2861
    %v3675 = vunpack.c.l.b16 %v2862
    %v3676 = vunpack.c.h.b16 %v2862
    %v3677 = vunpack.c.l.b16 %v2863
    %v3678 = vunpack.c.h.b16 %v2863
    %v3679 = vunpack.c.l.b16 %v2864
    %v3680 = vunpack.c.h.b16 %v2864
    %v3681 = vunpack.c.l.b16 %v2865
    %v3682 = vunpack.c.h.b16 %v2865
    %v3683 = vunpack.c.l.b16 %v2866
    %v3684 = vunpack.c.h.b16 %v2866
    %v3685 = vunpack.c.l.b16 %v2867
    %v3686 = vunpack.c.h.b16 %v2867
    %v3687 = vunpack.c.l.b16 %v2868
    %v3688 = vunpack.c.h.b16 %v2868
    %v3689 = vunpack.c.l.b16 %v2869
    %v3690 = vunpack.c.h.b16 %v2869
    %v3691 = vunpack.c.l.b16 %v2870
    %v3692 = vunpack.c.h.b16 %v2870
    %v3693 = vunpack.c.l.b16 %v2871
    %v3694 = vunpack.c.h.b16 %v2871
    %v3695 = vunpack.c.l.b16 %v2872
    %v3696 = vunpack.c.h.b16 %v2872
    %v3697 = vunpack.c.l.b16 %v2873
    %v3698 = vunpack.c.h.b16 %v2873
    %v3699 = vunpack.c.l.b16 %v2874
    %v3700 = vunpack.c.h.b16 %v2874
    %v3701 = vunpack.c.l.b16 %v2875
    %v3702 = vunpack.c.h.b16 %v2875
    %v3703 = vunpack.c.l.b16 %v2876
    %v3704 = vunpack.c.h.b16 %v2876
    %v3705 = vunpack.c.l.b16 %v2877
    %v3706 = vunpack.c.h.b16 %v2877
    %v3707 = vunpack.c.l.b16 %v2878
    %v3708 = vunpack.c.h.b16 %v2878
    %v3709 = vunpack.c.l.b16 %v2879
    %v3710 = vunpack.c.h.b16 %v2879
    %v3711 = vunpack.c.l.b16 %v2880
    %v3712 = vunpack.c.h.b16 %v2880
    %v3713 = vunpack.c.l.b16 %v2881
    %v3714 = vunpack.c.h.b16 %v2881
    %v3715 = vunpack.c.l.b16 %v2882
    %v3716 = vunpack.c.h.b16 %v2882
    %v3717 = vunpack.c.l.b16 %v2883
    %v3718 = vunpack.c.h.b16 %v2883
    %v3719 = vunpack.c.l.b16 %v2884
    %v3720 = vunpack.c.h.b16 %v2884
    %v3721 = vunpack.c.l.b16 %v2885
    %v3722 = vunpack.c.h.b16 %v2885
    %v3723 = vunpack.c.l.b16 %v2886
    %v3724 = vunpack.c.h.b16 %v2886
    %v3725 = vunpack.c.l.b16 %v2887
    %v3726 = vunpack.c.h.b16 %v2887
    %v3727 = vunpack.c.l.b16 %v2888
    %v3728 = vunpack.c.h.b16 %v2888
    %v3729 = vunpack.c.l.b16 %v2889
    %v3730 = vunpack.c.h.b16 %v2889
    %v3731 = vunpack.c.l.b16 %v2890
    %v3732 = vunpack.c.h.b16 %v2890
    %v3733 = vpack.c.b16 %v3229, %v3221
    %v3734 = vpack.c.b16 %v3230, %v3222
    %v3735 = vpack.c.b16 %v3231, %v3223
    %v3736 = vpack.c.b16 %v3232, %v3224
    %v3737 = vpack.c.b16 %v3233, %v3225
    %v3738 = vpack.c.b16 %v3234, %v3226
    %v3739 = vpack.c.b16 %v3235, %v3227
    %v3740 = vpack.c.b16 %v3236, %v3228
    %v3741 = vpack.c.b16 %v3245, %v3237
    %v3742 = vpack.c.b16 %v3246, %v3238
    %v3743 = vpack.c.b16 %v3247, %v3239
    %v3744 = vpack.c.b16 %v3248, %v3240
    %v3745 = vpack.c.b16 %v3249, %v3241
    %v3746 = vpack.c.b16 %v3250, %v3242
    %v3747 = vpack.c.b16 %v3251, %v3243
    %v3748 = vpack.c.b16 %v3252, %v3244
    %v3749 = vpack.c.b16 %v3261, %v3253
    %v3750 = vpack.c.b16 %v3262, %v3254
    %v3751 = vpack.c.b16 %v3263, %v3255
    %v3752 = vpack.c.b16 %v3264, %v3256
    %v3753 = vpack.c.b16 %v3265, %v3257
    %v3754 = vpack.c.b16 %v3266, %v3258
    %v3755 = vpack.c.b16 %v3267, %v3259
    %v3756 = vpack.c.b16 %v3268, %v3260
    %v3757 = vpack.c.b16 %v3277, %v3269
    %v3758 = vpack.c.b16 %v3278, %v3270
    %v3759 = vpack.c.b16 %v3279, %v3271
    %v3760 = vpack.c.b16 %v3280, %v3272
    %v3761 = vpack.c.b16 %v3281, %v3273
    %v3762 = vpack.c.b16 %v3282, %v3274
    %v3763 = vpack.c.b16 %v3283, %v3275
    %v3764 = vpack.c.b16 %v3284, %v3276
    %v3765 = vpack.c.b16 %v3293, %v3285
    %v3766 = vpack.c.b16 %v3294, %v3286
    %v3767 = vpack.c.b16 %v3295, %v3287
    %v3768 = vpack.c.b16 %v3296, %v3288
    %v3769 = vpack.c.b16 %v3297, %v3289
    %v3770 = vpack.c.b16 %v3298, %v3290
    %v3771 = vpack.c.b16 %v3299, %v3291
    %v3772 = vpack.c.b16 %v3300, %v3292
    %v3773 = vpack.c.b16 %v3309, %v3301
    %v3774 = vpack.c.b16 %v3310, %v3302
    %v3775 = vpack.c.b16 %v3311, %v3303
    %v3776 = vpack.c.b16 %v3312, %v3304
    %v3777 = vpack.c.b16 %v3313, %v3305
    %v3778 = vpack.c.b16 %v3314, %v3306
    %v3779 = vpack.c.b16 %v3315, %v3307
    %v3780 = vpack.c.b16 %v3316, %v3308
    %v3781 = vpack.c.b16 %v3325, %v3317
    %v3782 = vpack.c.b16 %v3326, %v3318
    %v3783 = vpack.c.b16 %v3327, %v3319
    %v3784 = vpack.c.b16 %v3328, %v3320
    %v3785 = vpack.c.b16 %v3329, %v3321
    %v3786 = vpack.c.b16 %v3330, %v3322
    %v3787 = vpack.c.b16 %v3331, %v3323
    %v3788 = vpack.c.b16 %v3332, %v3324
    %v3789 = vpack.c.b16 %v3341, %v3333
    %v3790 = vpack.c.b16 %v3342, %v3334
    %v3791 = vpack.c.b16 %v3343, %v3335
    %v3792 = vpack.c.b16 %v3344, %v3336
    %v3793 = vpack.c.b16 %v3345, %v3337
    %v3794 = vpack.c.b16 %v3346, %v3338
    %v3795 = vpack.c.b16 %v3347, %v3339
    %v3796 = vpack.c.b16 %v3348, %v3340
    %v3797 = vpack.c.b16 %v3357, %v3349
    %v3798 = vpack.c.b16 %v3358, %v3350
    %v3799 = vpack.c.b16 %v3359, %v3351
    %v3800 = vpack.c.b16 %v3360, %v3352
    %v3801 = vpack.c.b16 %v3361, %v3353
    %v3802 = vpack.c.b16 %v3362, %v3354
    %v3803 = vpack.c.b16 %v3363, %v3355
    %v3804 = vpack.c.b16 %v3364, %v3356
    %v3805 = vpack.c.b16 %v3373, %v3365
    %v3806 = vpack.c.b16 %v3374, %v3366
    %v3807 = vpack.c.b16 %v3375, %v3367
    %v3808 = vpack.c.b16 %v3376, %v3368
    %v3809 = vpack.c.b16 %v3377, %v3369
    %v3810 = vpack.c.b16 %v3378, %v3370
    %v3811 = vpack.c.b16 %v3379, %v3371
    %v3812 = vpack.c.b16 %v3380, %v3372
    %v3813 = vpack.c.b16 %v3389, %v3381
    %v3814 = vpack.c.b16 %v3390, %v3382
    %v3815 = vpack.c.b16 %v3391, %v3383
    %v3816 = vpack.c.b16 %v3392, %v3384
    %v3817 = vpack.c.b16 %v3393, %v3385
    %v3818 = vpack.c.b16 %v3394, %v3386
    %v3819 = vpack.c.b16 %v3395, %v3387
    %v3820 = vpack.c.b16 %v3396, %v3388
    %v3821 = vpack.c.b16 %v3405, %v3397
    %v3822 = vpack.c.b16 %v3406, %v3398
    %v3823 = vpack.c.b16 %v3407, %v3399
    %v3824 = vpack.c.b16 %v3408, %v3400
    %v3825 = vpack.c.b16 %v3409, %v3401
    %v3826 = vpack.c.b16 %v3410, %v3402
    %v3827 = vpack.c.b16 %v3411, %v3403
    %v3828 = vpack.c.b16 %v3412, %v3404
    %v3829 = vpack.c.b16 %v3421, %v3413
    %v3830 = vpack.c.b16 %v3422, %v3414
    %v3831 = vpack.c.b16 %v3423, %v3415
    %v3832 = vpack.c.b16 %v3424, %v3416
    %v3833 = vpack.c.b16 %v3425, %v3417
    %v3834 = vpack.c.b16 %v3426, %v3418
    %v3835 = vpack.c.b16 %v3427, %v3419
    %v3836 = vpack.c.b16 %v3428, %v3420
    %v3837 = vpack.c.b16 %v3437, %v3429
    %v3838 = vpack.c.b16 %v3438, %v3430
    %v3839 = vpack.c.b16 %v3439, %v3431
    %v3840 = vpack.c.b16 %v3440, %v3432
    %v3841 = vpack.c.b16 %v3441, %v3433
    %v3842 = vpack.c.b16 %v3442, %v3434
    %v3843 = vpack.c.b16 %v3443, %v3435
    %v3844 = vpack.c.b16 %v3444, %v3436
    %v3845 = vpack.c.b16 %v3453, %v3445
    %v3846 = vpack.c.b16 %v3454, %v3446
    %v3847 = vpack.c.b16 %v3455, %v3447
    %v3848 = vpack.c.b16 %v3456, %v3448
    %v3849 = vpack.c.b16 %v3457, %v3449
    %v3850 = vpack.c.b16 %v3458, %v3450
    %v3851 = vpack.c.b16 %v3459, %v3451
    %v3852 = vpack.c.b16 %v3460, %v3452
    %v3853 = vpack.c.b16 %v3469, %v3461
    %v3854 = vpack.c.b16 %v3470, %v3462
    %v3855 = vpack.c.b16 %v3471, %v3463
    %v3856 = vpack.c.b16 %v3472, %v3464
    %v3857 = vpack.c.b16 %v3473, %v3465
    %v3858 = vpack.c.b16 %v3474, %v3466
    %v3859 = vpack.c.b16 %v3475, %v3467
    %v3860 = vpack.c.b16 %v3476, %v3468
    %v3861 = vpack.c.b16 %v3485, %v3477
    %v3862 = vpack.c.b16 %v3486, %v3478
    %v3863 = vpack.c.b16 %v3487, %v3479
    %v3864 = vpack.c.b16 %v3488, %v3480
    %v3865 = vpack.c.b16 %v3489, %v3481
    %v3866 = vpack.c.b16 %v3490, %v3482
    %v3867 = vpack.c.b16 %v3491, %v3483
    %v3868 = vpack.c.b16 %v3492, %v3484
    %v3869 = vpack.c.b16 %v3501, %v3493
    %v3870 = vpack.c.b16 %v3502, %v3494
    %v3871 = vpack.c.b16 %v3503, %v3495
    %v3872 = vpack.c.b16 %v3504, %v3496
    %v3873 = vpack.c.b16 %v3505, %v3497
    %v3874 = vpack.c.b16 %v3506, %v3498
    %v3875 = vpack.c.b16 %v3507, %v3499
    %v3876 = vpack.c.b16 %v3508, %v3500
    %v3877 = vpack.c.b16 %v3517, %v3509
    %v3878 = vpack.c.b16 %v3518, %v3510
    %v3879 = vpack.c.b16 %v3519, %v3511
    %v3880 = vpack.c.b16 %v3520, %v3512
    %v3881 = vpack.c.b16 %v3521, %v3513
    %v3882 = vpack.c.b16 %v3522, %v3514
    %v3883 = vpack.c.b16 %v3523, %v3515
    %v3884 = vpack.c.b16 %v3524, %v3516
    %v3885 = vpack.c.b16 %v3533, %v3525
    %v3886 = vpack.c.b16 %v3534, %v3526
    %v3887 = vpack.c.b16 %v3535, %v3527
    %v3888 = vpack.c.b16 %v3536, %v3528
    %v3889 = vpack.c.b16 %v3537, %v3529
    %v3890 = vpack.c.b16 %v3538, %v3530
    %v3891 = vpack.c.b16 %v3539, %v3531
    %v3892 = vpack.c.b16 %v3540, %v3532
    %v3893 = vpack.c.b16 %v3549, %v3541
    %v3894 = vpack.c.b16 %v3550, %v3542
    %v3895 = vpack.c.b16 %v3551, %v3543
    %v3896 = vpack.c.b16 %v3552, %v3544
    %v3897 = vpack.c.b16 %v3553, %v3545
    %v3898 = vpack.c.b16 %v3554, %v3546
    %v3899 = vpack.c.b16 %v3555, %v3547
    %v3900 = vpack.c.b16 %v3556, %v3548
    %v3901 = vpack.c.b16 %v3565, %v3557
    %v3902 = vpack.c.b16 %v3566, %v3558
    %v3903 = vpack.c.b16 %v3567, %v3559
    %v3904 = vpack.c.b16 %v3568, %v3560
    %v3905 = vpack.c.b16 %v3569, %v3561
    %v3906 = vpack.c.b16 %v3570, %v3562
    %v3907 = vpack.c.b16 %v3571, %v3563
    %v3908 = vpack.c.b16 %v3572, %v3564
    %v3909 = vpack.c.b16 %v3581, %v3573
    %v3910 = vpack.c.b16 %v3582, %v3574
    %v3911 = vpack.c.b16 %v3583, %v3575
    %v3912 = vpack.c.b16 %v3584, %v3576
    %v3913 = vpack.c.b16 %v3585, %v3577
    %v3914 = vpack.c.b16 %v3586, %v3578
    %v3915 = vpack.c.b16 %v3587, %v3579
    %v3916 = vpack.c.b16 %v3588, %v3580
    %v3917 = vpack.c.b16 %v3597, %v3589
    %v3918 = vpack.c.b16 %v3598, %v3590
    %v3919 = vpack.c.b16 %v3599, %v3591
    %v3920 = vpack.c.b16 %v3600, %v3592
    %v3921 = vpack.c.b16 %v3601, %v3593
    %v3922 = vpack.c.b16 %v3602, %v3594
    %v3923 = vpack.c.b16 %v3603, %v3595
    %v3924 = vpack.c.b16 %v3604, %v3596
    %v3925 = vpack.c.b16 %v3613, %v3605
    %v3926 = vpack.c.b16 %v3614, %v3606
    %v3927 = vpack.c.b16 %v3615, %v3607
    %v3928 = vpack.c.b16 %v3616, %v3608
    %v3929 = vpack.c.b16 %v3617, %v3609
    %v3930 = vpack.c.b16 %v3618, %v3610
    %v3931 = vpack.c.b16 %v3619, %v3611
    %v3932 = vpack.c.b16 %v3620, %v3612
    %v3933 = vpack.c.b16 %v3629, %v3621
    %v3934 = vpack.c.b16 %v3630, %v3622
    %v3935 = vpack.c.b16 %v3631, %v3623
    %v3936 = vpack.c.b16 %v3632, %v3624
    %v3937 = vpack.c.b16 %v3633, %v3625
    %v3938 = vpack.c.b16 %v3634, %v3626
    %v3939 = vpack.c.b16 %v3635, %v3627
    %v3940 = vpack.c.b16 %v3636, %v3628
    %v3941 = vpack.c.b16 %v3645, %v3637
    %v3942 = vpack.c.b16 %v3646, %v3638
    %v3943 = vpack.c.b16 %v3647, %v3639
    %v3944 = vpack.c.b16 %v3648, %v3640
    %v3945 = vpack.c.b16 %v3649, %v3641
    %v3946 = vpack.c.b16 %v3650, %v3642
    %v3947 = vpack.c.b16 %v3651, %v3643
    %v3948 = vpack.c.b16 %v3652, %v3644
    %v3949 = vpack.c.b16 %v3661, %v3653
    %v3950 = vpack.c.b16 %v3662, %v3654
    %v3951 = vpack.c.b16 %v3663, %v3655
    %v3952 = vpack.c.b16 %v3664, %v3656
    %v3953 = vpack.c.b16 %v3665, %v3657
    %v3954 = vpack.c.b16 %v3666, %v3658
    %v3955 = vpack.c.b16 %v3667, %v3659
    %v3956 = vpack.c.b16 %v3668, %v3660
    %v3957 = vpack.c.b16 %v3677, %v3669
    %v3958 = vpack.c.b16 %v3678, %v3670
    %v3959 = vpack.c.b16 %v3679, %v3671
    %v3960 = vpack.c.b16 %v3680, %v3672
    %v3961 = vpack.c.b16 %v3681, %v3673
    %v3962 = vpack.c.b16 %v3682, %v3674
    %v3963 = vpack.c.b16 %v3683, %v3675
    %v3964 = vpack.c.b16 %v3684, %v3676
    %v3965 = vpack.c.b16 %v3693, %v3685
    %v3966 = vpack.c.b16 %v3694, %v3686
    %v3967 = vpack.c.b16 %v3695, %v3687
    %v3968 = vpack.c.b16 %v3696, %v3688
    %v3969 = vpack.c.b16 %v3697, %v3689
    %v3970 = vpack.c.b16 %v3698, %v3690
    %v3971 = vpack.c.b16 %v3699, %v3691
    %v3972 = vpack.c.b16 %v3700, %v3692
    %v3973 = vpack.c.b16 %v3709, %v3701
    %v3974 = vpack.c.b16 %v3710, %v3702
    %v3975 = vpack.c.b16 %v3711, %v3703
    %v3976 = vpack.c.b16 %v3712, %v3704
    %v3977 = vpack.c.b16 %v3713, %v3705
    %v3978 = vpack.c.b16 %v3714, %v3706
    %v3979 = vpack.c.b16 %v3715, %v3707
    %v3980 = vpack.c.b16 %v3716, %v3708
    %v3981 = vpack.c.b16 %v3725, %v3717
    %v3982 = vpack.c.b16 %v3726, %v3718
    %v3983 = vpack.c.b16 %v3727, %v3719
    %v3984 = vpack.c.b16 %v3728, %v3720
    %v3985 = vpack.c.b16 %v3729, %v3721
    %v3986 = vpack.c.b16 %v3730, %v3722
    %v3987 = vpack.c.b16 %v3731, %v3723
    %v3988 = vpack.c.b16 %v3732, %v3724
    %4245 = vmatprep.subr.bf16.mxu0 %v3790
    %4246 = vmatpush1.bf16.msra.mxu0 %v3789
    %4247 = vmatprep.subr.bf16.mxu0 %v3782
    %4248 = vmatpush1.bf16.msra.mxu0 %v3781
    %4249 = vmatprep.subr.bf16.mxu0 %v3774
    %4250 = vmatpush1.bf16.msra.mxu0 %v3773
    %4251 = vmatprep.subr.bf16.mxu0 %v3766
    %4252 = vmatpush1.bf16.msra.mxu0 %v3765
    %4253 = vmatprep.subr.bf16.mxu0 %v3758
    %4254 = vmatpush1.bf16.msra.mxu0 %v3757
    %4255 = vmatprep.subr.bf16.mxu0 %v3750
    %4256 = vmatpush1.bf16.msra.mxu0 %v3749
    %4257 = vmatprep.subr.bf16.mxu0 %v3742
    %4258 = vmatpush1.bf16.msra.mxu0 %v3741
    %4259 = vmatprep.subr.bf16.mxu0 %v3734
    %4260 = vmatpush1.bf16.msra.mxu0 %v3733
    %4261 = vmatprep.subr.bf16.mxu0 %v3854
    %4262 = vmatpush2.bf16.msra.mxu0 %v3853
    %4263 = vmatprep.subr.bf16.mxu0 %v3846
    %4264 = vmatpush2.bf16.msra.mxu0 %v3845
    %4265 = vmatprep.subr.bf16.mxu0 %v3838
    %4266 = vmatpush2.bf16.msra.mxu0 %v3837
    %4267 = vmatprep.subr.bf16.mxu0 %v3830
    %4268 = vmatpush2.bf16.msra.mxu0 %v3829
    %4269 = vmatprep.subr.bf16.mxu0 %v3822
    %4270 = vmatpush2.bf16.msra.mxu0 %v3821
    %4271 = vmatprep.subr.bf16.mxu0 %v3814
    %4272 = vmatpush2.bf16.msra.mxu0 %v3813
    %4273 = vmatprep.subr.bf16.mxu0 %v3806
    %4274 = vmatpush2.bf16.msra.mxu0 %v3805
    %4275 = vmatprep.subr.bf16.mxu0 %v3798
    %4276 = vmatpush2.bf16.msra.mxu0 %v3797
    %4277 = vmatprep.mubr.bf16.mxu0 %v2892
    %4278 = vmatmul.mubr.bf16.gmra.mxu0 %v2891
    %v4279 = vpop.f32.mrf.mxu0
    %v4280 = vadd.f32 %v2928, %v4279
    %v4281 = vpop.f32.mrf.mxu0
    %v4282 = vadd.f32 %v2932, %v4281
    %v4283 = vpop.f32.mrf.mxu0
    %v4284 = vadd.f32 %v2928, %v4283
    %v4285 = vpop.f32.mrf.mxu0
    %v4286 = vadd.f32 %v2932, %v4285
    %4287 = vmatprep.mubr.bf16.mxu0 %v2896
    %4288 = vmatmul.mubr.bf16.gmra.mxu0 %v2895
    %v4289 = vpop.f32.mrf.mxu0
    %v4290 = vadd.f32 %v2928, %v4289
    %v4291 = vpop.f32.mrf.mxu0
    %v4292 = vadd.f32 %v2932, %v4291
    %v4293 = vpop.f32.mrf.mxu0
    %v4294 = vadd.f32 %v2928, %v4293
    %v4295 = vpop.f32.mrf.mxu0
    %v4296 = vadd.f32 %v2932, %v4295
    %4297 = vmatprep.mubr.bf16.mxu0 %v2900
    %4298 = vmatmul.mubr.bf16.gmra.mxu0 %v2899
    %v4299 = vpop.f32.mrf.mxu0
    %v4300 = vadd.f32 %v2928, %v4299
    %v4301 = vpop.f32.mrf.mxu0
    %v4302 = vadd.f32 %v2932, %v4301
    %v4303 = vpop.f32.mrf.mxu0
    %v4304 = vadd.f32 %v2928, %v4303
    %v4305 = vpop.f32.mrf.mxu0
    %v4306 = vadd.f32 %v2932, %v4305
    %4307 = vmatprep.mubr.bf16.mxu0 %v2904
    %4308 = vmatmul.mubr.bf16.gmra.mxu0 %v2903
    %v4309 = vpop.f32.mrf.mxu0
    %v4310 = vadd.f32 %v2928, %v4309
    %v4311 = vpop.f32.mrf.mxu0
    %v4312 = vadd.f32 %v2932, %v4311
    %v4313 = vpop.f32.mrf.mxu0
    %v4314 = vadd.f32 %v2928, %v4313
    %v4315 = vpop.f32.mrf.mxu0
    %v4316 = vadd.f32 %v2932, %v4315
    %4317 = vmatprep.mubr.bf16.mxu0 %v2908
    %4318 = vmatmul.mubr.bf16.gmra.mxu0 %v2907
    %v4319 = vpop.f32.mrf.mxu0
    %v4320 = vadd.f32 %v2928, %v4319
    %v4321 = vpop.f32.mrf.mxu0
    %v4322 = vadd.f32 %v2932, %v4321
    %v4323 = vpop.f32.mrf.mxu0
    %v4324 = vadd.f32 %v2928, %v4323
    %v4325 = vpop.f32.mrf.mxu0
    %v4326 = vadd.f32 %v2932, %v4325
    %4327 = vmatprep.mubr.bf16.mxu0 %v2912
    %4328 = vmatmul.mubr.bf16.gmra.mxu0 %v2911
    %v4329 = vpop.f32.mrf.mxu0
    %v4330 = vadd.f32 %v2928, %v4329
    %v4331 = vpop.f32.mrf.mxu0
    %v4332 = vadd.f32 %v2932, %v4331
    %v4333 = vpop.f32.mrf.mxu0
    %v4334 = vadd.f32 %v2928, %v4333
    %v4335 = vpop.f32.mrf.mxu0
    %v4336 = vadd.f32 %v2932, %v4335
    %4337 = vmatprep.mubr.bf16.mxu0 %v2916
    %4338 = vmatmul.mubr.bf16.gmra.mxu0 %v2915
    %v4339 = vpop.f32.mrf.mxu0
    %v4340 = vadd.f32 %v2928, %v4339
    %v4341 = vpop.f32.mrf.mxu0
    %v4342 = vadd.f32 %v2932, %v4341
    %v4343 = vpop.f32.mrf.mxu0
    %v4344 = vadd.f32 %v2928, %v4343
    %v4345 = vpop.f32.mrf.mxu0
    %v4346 = vadd.f32 %v2932, %v4345
    %4347 = vmatprep.mubr.bf16.mxu0 %v2920
    %4348 = vmatmul.mubr.bf16.gmra.mxu0 %v2919
    %v4349 = vpop.f32.mrf.mxu0
    %v4350 = vadd.f32 %v2928, %v4349
    %v4351 = vpop.f32.mrf.mxu0
    %v4352 = vadd.f32 %v2932, %v4351
    %v4353 = vpop.f32.mrf.mxu0
    %v4354 = vadd.f32 %v2928, %v4353
    %v4355 = vpop.f32.mrf.mxu0
    %v4356 = vadd.f32 %v2932, %v4355
    %4357 = vdwg.mxu0
    %4358 = vmatprep.subr.bf16.mxu0 %v3918
    %4359 = vmatpush1.bf16.msra.mxu0 %v3917
    %4360 = vmatprep.subr.bf16.mxu0 %v3910
    %4361 = vmatpush1.bf16.msra.mxu0 %v3909
    %4362 = vmatprep.subr.bf16.mxu0 %v3902
    %4363 = vmatpush1.bf16.msra.mxu0 %v3901
    %4364 = vmatprep.subr.bf16.mxu0 %v3894
    %4365 = vmatpush1.bf16.msra.mxu0 %v3893
    %4366 = vmatprep.subr.bf16.mxu0 %v3886
    %4367 = vmatpush1.bf16.msra.mxu0 %v3885
    %4368 = vmatprep.subr.bf16.mxu0 %v3878
    %4369 = vmatpush1.bf16.msra.mxu0 %v3877
    %4370 = vmatprep.subr.bf16.mxu0 %v3870
    %4371 = vmatpush1.bf16.msra.mxu0 %v3869
    %4372 = vmatprep.subr.bf16.mxu0 %v3862
    %4373 = vmatpush1.bf16.msra.mxu0 %v3861
    %4374 = vmatprep.subr.bf16.mxu0 %v3982
    %4375 = vmatpush2.bf16.msra.mxu0 %v3981
    %4376 = vmatprep.subr.bf16.mxu0 %v3974
    %4377 = vmatpush2.bf16.msra.mxu0 %v3973
    %4378 = vmatprep.subr.bf16.mxu0 %v3966
    %4379 = vmatpush2.bf16.msra.mxu0 %v3965
    %4380 = vmatprep.subr.bf16.mxu0 %v3958
    %4381 = vmatpush2.bf16.msra.mxu0 %v3957
    %4382 = vmatprep.subr.bf16.mxu0 %v3950
    %4383 = vmatpush2.bf16.msra.mxu0 %v3949
    %4384 = vmatprep.subr.bf16.mxu0 %v3942
    %4385 = vmatpush2.bf16.msra.mxu0 %v3941
    %4386 = vmatprep.subr.bf16.mxu0 %v3934
    %4387 = vmatpush2.bf16.msra.mxu0 %v3933
    %4388 = vmatprep.subr.bf16.mxu0 %v3926
    %4389 = vmatpush2.bf16.msra.mxu0 %v3925
    %4390 = vmatprep.mubr.bf16.mxu0 %v2894
    %4391 = vmatmul.mubr.bf16.gmra.mxu0 %v2893
    %v4392 = vpop.f32.mrf.mxu0
    %v4393 = vadd.f32 %v4280, %v4392
    %v4394 = vpop.f32.mrf.mxu0
    %v4395 = vadd.f32 %v4282, %v4394
    %v4396 = vpop.f32.mrf.mxu0
    %v4397 = vadd.f32 %v4284, %v4396
    %v4398 = vpop.f32.mrf.mxu0
    %v4399 = vadd.f32 %v4286, %v4398
    %4400 = vmatprep.mubr.bf16.mxu0 %v2898
    %4401 = vmatmul.mubr.bf16.gmra.mxu0 %v2897
    %v4402 = vpop.f32.mrf.mxu0
    %v4403 = vadd.f32 %v4290, %v4402
    %v4404 = vpop.f32.mrf.mxu0
    %v4405 = vadd.f32 %v4292, %v4404
    %v4406 = vpop.f32.mrf.mxu0
    %v4407 = vadd.f32 %v4294, %v4406
    %v4408 = vpop.f32.mrf.mxu0
    %v4409 = vadd.f32 %v4296, %v4408
    %4410 = vmatprep.mubr.bf16.mxu0 %v2902
    %4411 = vmatmul.mubr.bf16.gmra.mxu0 %v2901
    %v4412 = vpop.f32.mrf.mxu0
    %v4413 = vadd.f32 %v4300, %v4412
    %v4414 = vpop.f32.mrf.mxu0
    %v4415 = vadd.f32 %v4302, %v4414
    %v4416 = vpop.f32.mrf.mxu0
    %v4417 = vadd.f32 %v4304, %v4416
    %v4418 = vpop.f32.mrf.mxu0
    %v4419 = vadd.f32 %v4306, %v4418
    %4420 = vmatprep.mubr.bf16.mxu0 %v2906
    %4421 = vmatmul.mubr.bf16.gmra.mxu0 %v2905
    %v4422 = vpop.f32.mrf.mxu0
    %v4423 = vadd.f32 %v4310, %v4422
    %v4424 = vpop.f32.mrf.mxu0
    %v4425 = vadd.f32 %v4312, %v4424
    %v4426 = vpop.f32.mrf.mxu0
    %v4427 = vadd.f32 %v4314, %v4426
    %v4428 = vpop.f32.mrf.mxu0
    %v4429 = vadd.f32 %v4316, %v4428
    %4430 = vmatprep.mubr.bf16.mxu0 %v2910
    %4431 = vmatmul.mubr.bf16.gmra.mxu0 %v2909
    %v4432 = vpop.f32.mrf.mxu0
    %v4433 = vadd.f32 %v4320, %v4432
    %v4434 = vpop.f32.mrf.mxu0
    %v4435 = vadd.f32 %v4322, %v4434
    %v4436 = vpop.f32.mrf.mxu0
    %v4437 = vadd.f32 %v4324, %v4436
    %v4438 = vpop.f32.mrf.mxu0
    %v4439 = vadd.f32 %v4326, %v4438
    %4440 = vmatprep.mubr.bf16.mxu0 %v2914
    %4441 = vmatmul.mubr.bf16.gmra.mxu0 %v2913
    %v4442 = vpop.f32.mrf.mxu0
    %v4443 = vadd.f32 %v4330, %v4442
    %v4444 = vpop.f32.mrf.mxu0
    %v4445 = vadd.f32 %v4332, %v4444
    %v4446 = vpop.f32.mrf.mxu0
    %v4447 = vadd.f32 %v4334, %v4446
    %v4448 = vpop.f32.mrf.mxu0
    %v4449 = vadd.f32 %v4336, %v4448
    %4450 = vmatprep.mubr.bf16.mxu0 %v2918
    %4451 = vmatmul.mubr.bf16.gmra.mxu0 %v2917
    %v4452 = vpop.f32.mrf.mxu0
    %v4453 = vadd.f32 %v4340, %v4452
    %v4454 = vpop.f32.mrf.mxu0
    %v4455 = vadd.f32 %v4342, %v4454
    %v4456 = vpop.f32.mrf.mxu0
    %v4457 = vadd.f32 %v4344, %v4456
    %v4458 = vpop.f32.mrf.mxu0
    %v4459 = vadd.f32 %v4346, %v4458
    %4460 = vmatprep.mubr.bf16.mxu0 %v2922
    %4461 = vmatmul.mubr.bf16.gmra.mxu0 %v2921
    %v4462 = vpop.f32.mrf.mxu0
    %v4463 = vadd.f32 %v4350, %v4462
    %v4464 = vpop.f32.mrf.mxu0
    %v4465 = vadd.f32 %v4352, %v4464
    %v4466 = vpop.f32.mrf.mxu0
    %v4467 = vadd.f32 %v4354, %v4466
    %v4468 = vpop.f32.mrf.mxu0
    %v4469 = vadd.f32 %v4356, %v4468
    %4470 = vdwg.mxu0
    %4471 = vmatprep.subr.bf16.mxu0 %v3792
    %4472 = vmatpush1.bf16.msra.mxu0 %v3791
    %4473 = vmatprep.subr.bf16.mxu0 %v3784
    %4474 = vmatpush1.bf16.msra.mxu0 %v3783
    %4475 = vmatprep.subr.bf16.mxu0 %v3776
    %4476 = vmatpush1.bf16.msra.mxu0 %v3775
    %4477 = vmatprep.subr.bf16.mxu0 %v3768
    %4478 = vmatpush1.bf16.msra.mxu0 %v3767
    %4479 = vmatprep.subr.bf16.mxu0 %v3760
    %4480 = vmatpush1.bf16.msra.mxu0 %v3759
    %4481 = vmatprep.subr.bf16.mxu0 %v3752
    %4482 = vmatpush1.bf16.msra.mxu0 %v3751
    %4483 = vmatprep.subr.bf16.mxu0 %v3744
    %4484 = vmatpush1.bf16.msra.mxu0 %v3743
    %4485 = vmatprep.subr.bf16.mxu0 %v3736
    %4486 = vmatpush1.bf16.msra.mxu0 %v3735
    %4487 = vmatprep.subr.bf16.mxu0 %v3856
    %4488 = vmatpush2.bf16.msra.mxu0 %v3855
    %4489 = vmatprep.subr.bf16.mxu0 %v3848
    %4490 = vmatpush2.bf16.msra.mxu0 %v3847
    %4491 = vmatprep.subr.bf16.mxu0 %v3840
    %4492 = vmatpush2.bf16.msra.mxu0 %v3839
    %4493 = vmatprep.subr.bf16.mxu0 %v3832
    %4494 = vmatpush2.bf16.msra.mxu0 %v3831
    %4495 = vmatprep.subr.bf16.mxu0 %v3824
    %4496 = vmatpush2.bf16.msra.mxu0 %v3823
    %4497 = vmatprep.subr.bf16.mxu0 %v3816
    %4498 = vmatpush2.bf16.msra.mxu0 %v3815
    %4499 = vmatprep.subr.bf16.mxu0 %v3808
    %4500 = vmatpush2.bf16.msra.mxu0 %v3807
    %4501 = vmatprep.subr.bf16.mxu0 %v3800
    %4502 = vmatpush2.bf16.msra.mxu0 %v3799
    %4503 = vmatprep.mubr.bf16.mxu0 %v2892
    %4504 = vmatmul.mubr.bf16.gmra.mxu0 %v2891
    %v4505 = vpop.f32.mrf.mxu0
    %v4506 = vadd.f32 %v2936, %v4505
    %v4507 = vpop.f32.mrf.mxu0
    %v4508 = vadd.f32 %v2940, %v4507
    %v4509 = vpop.f32.mrf.mxu0
    %v4510 = vadd.f32 %v2936, %v4509
    %v4511 = vpop.f32.mrf.mxu0
    %v4512 = vadd.f32 %v2940, %v4511
    %4513 = vmatprep.mubr.bf16.mxu0 %v2896
    %4514 = vmatmul.mubr.bf16.gmra.mxu0 %v2895
    %v4515 = vpop.f32.mrf.mxu0
    %v4516 = vadd.f32 %v2936, %v4515
    %v4517 = vpop.f32.mrf.mxu0
    %v4518 = vadd.f32 %v2940, %v4517
    %v4519 = vpop.f32.mrf.mxu0
    %v4520 = vadd.f32 %v2936, %v4519
    %v4521 = vpop.f32.mrf.mxu0
    %v4522 = vadd.f32 %v2940, %v4521
    %4523 = vmatprep.mubr.bf16.mxu0 %v2900
    %4524 = vmatmul.mubr.bf16.gmra.mxu0 %v2899
    %v4525 = vpop.f32.mrf.mxu0
    %v4526 = vadd.f32 %v2936, %v4525
    %v4527 = vpop.f32.mrf.mxu0
    %v4528 = vadd.f32 %v2940, %v4527
    %v4529 = vpop.f32.mrf.mxu0
    %v4530 = vadd.f32 %v2936, %v4529
    %v4531 = vpop.f32.mrf.mxu0
    %v4532 = vadd.f32 %v2940, %v4531
    %4533 = vmatprep.mubr.bf16.mxu0 %v2904
    %4534 = vmatmul.mubr.bf16.gmra.mxu0 %v2903
    %v4535 = vpop.f32.mrf.mxu0
    %v4536 = vadd.f32 %v2936, %v4535
    %v4537 = vpop.f32.mrf.mxu0
    %v4538 = vadd.f32 %v2940, %v4537
    %v4539 = vpop.f32.mrf.mxu0
    %v4540 = vadd.f32 %v2936, %v4539
    %v4541 = vpop.f32.mrf.mxu0
    %v4542 = vadd.f32 %v2940, %v4541
    %4543 = vmatprep.mubr.bf16.mxu0 %v2908
    %4544 = vmatmul.mubr.bf16.gmra.mxu0 %v2907
    %v4545 = vpop.f32.mrf.mxu0
    %v4546 = vadd.f32 %v2936, %v4545
    %v4547 = vpop.f32.mrf.mxu0
    %v4548 = vadd.f32 %v2940, %v4547
    %v4549 = vpop.f32.mrf.mxu0
    %v4550 = vadd.f32 %v2936, %v4549
    %v4551 = vpop.f32.mrf.mxu0
    %v4552 = vadd.f32 %v2940, %v4551
    %4553 = vmatprep.mubr.bf16.mxu0 %v2912
    %4554 = vmatmul.mubr.bf16.gmra.mxu0 %v2911
    %v4555 = vpop.f32.mrf.mxu0
    %v4556 = vadd.f32 %v2936, %v4555
    %v4557 = vpop.f32.mrf.mxu0
    %v4558 = vadd.f32 %v2940, %v4557
    %v4559 = vpop.f32.mrf.mxu0
    %v4560 = vadd.f32 %v2936, %v4559
    %v4561 = vpop.f32.mrf.mxu0
    %v4562 = vadd.f32 %v2940, %v4561
    %4563 = vmatprep.mubr.bf16.mxu0 %v2916
    %4564 = vmatmul.mubr.bf16.gmra.mxu0 %v2915
    %v4565 = vpop.f32.mrf.mxu0
    %v4566 = vadd.f32 %v2936, %v4565
    %v4567 = vpop.f32.mrf.mxu0
    %v4568 = vadd.f32 %v2940, %v4567
    %v4569 = vpop.f32.mrf.mxu0
    %v4570 = vadd.f32 %v2936, %v4569
    %v4571 = vpop.f32.mrf.mxu0
    %v4572 = vadd.f32 %v2940, %v4571
    %4573 = vmatprep.mubr.bf16.mxu0 %v2920
    %4574 = vmatmul.mubr.bf16.gmra.mxu0 %v2919
    %v4575 = vpop.f32.mrf.mxu0
    %v4576 = vadd.f32 %v2936, %v4575
    %v4577 = vpop.f32.mrf.mxu0
    %v4578 = vadd.f32 %v2940, %v4577
    %v4579 = vpop.f32.mrf.mxu0
    %v4580 = vadd.f32 %v2936, %v4579
    %v4581 = vpop.f32.mrf.mxu0
    %v4582 = vadd.f32 %v2940, %v4581
    %4583 = vdwg.mxu0
    %4584 = vmatprep.subr.bf16.mxu0 %v3920
    %4585 = vmatpush1.bf16.msra.mxu0 %v3919
    %4586 = vmatprep.subr.bf16.mxu0 %v3912
    %4587 = vmatpush1.bf16.msra.mxu0 %v3911
    %4588 = vmatprep.subr.bf16.mxu0 %v3904
    %4589 = vmatpush1.bf16.msra.mxu0 %v3903
    %4590 = vmatprep.subr.bf16.mxu0 %v3896
    %4591 = vmatpush1.bf16.msra.mxu0 %v3895
    %4592 = vmatprep.subr.bf16.mxu0 %v3888
    %4593 = vmatpush1.bf16.msra.mxu0 %v3887
    %4594 = vmatprep.subr.bf16.mxu0 %v3880
    %4595 = vmatpush1.bf16.msra.mxu0 %v3879
    %4596 = vmatprep.subr.bf16.mxu0 %v3872
    %4597 = vmatpush1.bf16.msra.mxu0 %v3871
    %4598 = vmatprep.subr.bf16.mxu0 %v3864
    %4599 = vmatpush1.bf16.msra.mxu0 %v3863
    %4600 = vmatprep.subr.bf16.mxu0 %v3984
    %4601 = vmatpush2.bf16.msra.mxu0 %v3983
    %4602 = vmatprep.subr.bf16.mxu0 %v3976
    %4603 = vmatpush2.bf16.msra.mxu0 %v3975
    %4604 = vmatprep.subr.bf16.mxu0 %v3968
    %4605 = vmatpush2.bf16.msra.mxu0 %v3967
    %4606 = vmatprep.subr.bf16.mxu0 %v3960
    %4607 = vmatpush2.bf16.msra.mxu0 %v3959
    %4608 = vmatprep.subr.bf16.mxu0 %v3952
    %4609 = vmatpush2.bf16.msra.mxu0 %v3951
    %4610 = vmatprep.subr.bf16.mxu0 %v3944
    %4611 = vmatpush2.bf16.msra.mxu0 %v3943
    %4612 = vmatprep.subr.bf16.mxu0 %v3936
    %4613 = vmatpush2.bf16.msra.mxu0 %v3935
    %4614 = vmatprep.subr.bf16.mxu0 %v3928
    %4615 = vmatpush2.bf16.msra.mxu0 %v3927
    %4616 = vmatprep.mubr.bf16.mxu0 %v2894
    %4617 = vmatmul.mubr.bf16.gmra.mxu0 %v2893
    %v4618 = vpop.f32.mrf.mxu0
    %v4619 = vadd.f32 %v4506, %v4618
    %v4620 = vpop.f32.mrf.mxu0
    %v4621 = vadd.f32 %v4508, %v4620
    %v4622 = vpop.f32.mrf.mxu0
    %v4623 = vadd.f32 %v4510, %v4622
    %v4624 = vpop.f32.mrf.mxu0
    %v4625 = vadd.f32 %v4512, %v4624
    %4626 = vmatprep.mubr.bf16.mxu0 %v2898
    %4627 = vmatmul.mubr.bf16.gmra.mxu0 %v2897
    %v4628 = vpop.f32.mrf.mxu0
    %v4629 = vadd.f32 %v4516, %v4628
    %v4630 = vpop.f32.mrf.mxu0
    %v4631 = vadd.f32 %v4518, %v4630
    %v4632 = vpop.f32.mrf.mxu0
    %v4633 = vadd.f32 %v4520, %v4632
    %v4634 = vpop.f32.mrf.mxu0
    %v4635 = vadd.f32 %v4522, %v4634
    %4636 = vmatprep.mubr.bf16.mxu0 %v2902
    %4637 = vmatmul.mubr.bf16.gmra.mxu0 %v2901
    %v4638 = vpop.f32.mrf.mxu0
    %v4639 = vadd.f32 %v4526, %v4638
    %v4640 = vpop.f32.mrf.mxu0
    %v4641 = vadd.f32 %v4528, %v4640
    %v4642 = vpop.f32.mrf.mxu0
    %v4643 = vadd.f32 %v4530, %v4642
    %v4644 = vpop.f32.mrf.mxu0
    %v4645 = vadd.f32 %v4532, %v4644
    %4646 = vmatprep.mubr.bf16.mxu0 %v2906
    %4647 = vmatmul.mubr.bf16.gmra.mxu0 %v2905
    %v4648 = vpop.f32.mrf.mxu0
    %v4649 = vadd.f32 %v4536, %v4648
    %v4650 = vpop.f32.mrf.mxu0
    %v4651 = vadd.f32 %v4538, %v4650
    %v4652 = vpop.f32.mrf.mxu0
    %v4653 = vadd.f32 %v4540, %v4652
    %v4654 = vpop.f32.mrf.mxu0
    %v4655 = vadd.f32 %v4542, %v4654
    %4656 = vmatprep.mubr.bf16.mxu0 %v2910
    %4657 = vmatmul.mubr.bf16.gmra.mxu0 %v2909
    %v4658 = vpop.f32.mrf.mxu0
    %v4659 = vadd.f32 %v4546, %v4658
    %v4660 = vpop.f32.mrf.mxu0
    %v4661 = vadd.f32 %v4548, %v4660
    %v4662 = vpop.f32.mrf.mxu0
    %v4663 = vadd.f32 %v4550, %v4662
    %v4664 = vpop.f32.mrf.mxu0
    %v4665 = vadd.f32 %v4552, %v4664
    %4666 = vmatprep.mubr.bf16.mxu0 %v2914
    %4667 = vmatmul.mubr.bf16.gmra.mxu0 %v2913
    %v4668 = vpop.f32.mrf.mxu0
    %v4669 = vadd.f32 %v4556, %v4668
    %v4670 = vpop.f32.mrf.mxu0
    %v4671 = vadd.f32 %v4558, %v4670
    %v4672 = vpop.f32.mrf.mxu0
    %v4673 = vadd.f32 %v4560, %v4672
    %v4674 = vpop.f32.mrf.mxu0
    %v4675 = vadd.f32 %v4562, %v4674
    %4676 = vmatprep.mubr.bf16.mxu0 %v2918
    %4677 = vmatmul.mubr.bf16.gmra.mxu0 %v2917
    %v4678 = vpop.f32.mrf.mxu0
    %v4679 = vadd.f32 %v4566, %v4678
    %v4680 = vpop.f32.mrf.mxu0
    %v4681 = vadd.f32 %v4568, %v4680
    %v4682 = vpop.f32.mrf.mxu0
    %v4683 = vadd.f32 %v4570, %v4682
    %v4684 = vpop.f32.mrf.mxu0
    %v4685 = vadd.f32 %v4572, %v4684
    %4686 = vmatprep.mubr.bf16.mxu0 %v2922
    %4687 = vmatmul.mubr.bf16.gmra.mxu0 %v2921
    %v4688 = vpop.f32.mrf.mxu0
    %v4689 = vadd.f32 %v4576, %v4688
    %v4690 = vpop.f32.mrf.mxu0
    %v4691 = vadd.f32 %v4578, %v4690
    %v4692 = vpop.f32.mrf.mxu0
    %v4693 = vadd.f32 %v4580, %v4692
    %v4694 = vpop.f32.mrf.mxu0
    %v4695 = vadd.f32 %v4582, %v4694
    %4696 = vdwg.mxu0
    %4697 = vmatprep.subr.bf16.mxu0 %v3794
    %4698 = vmatpush1.bf16.msra.mxu0 %v3793
    %4699 = vmatprep.subr.bf16.mxu0 %v3786
    %4700 = vmatpush1.bf16.msra.mxu0 %v3785
    %4701 = vmatprep.subr.bf16.mxu0 %v3778
    %4702 = vmatpush1.bf16.msra.mxu0 %v3777
    %4703 = vmatprep.subr.bf16.mxu0 %v3770
    %4704 = vmatpush1.bf16.msra.mxu0 %v3769
    %4705 = vmatprep.subr.bf16.mxu0 %v3762
    %4706 = vmatpush1.bf16.msra.mxu0 %v3761
    %4707 = vmatprep.subr.bf16.mxu0 %v3754
    %4708 = vmatpush1.bf16.msra.mxu0 %v3753
    %4709 = vmatprep.subr.bf16.mxu0 %v3746
    %4710 = vmatpush1.bf16.msra.mxu0 %v3745
    %4711 = vmatprep.subr.bf16.mxu0 %v3738
    %4712 = vmatpush1.bf16.msra.mxu0 %v3737
    %4713 = vmatprep.subr.bf16.mxu0 %v3858
    %4714 = vmatpush2.bf16.msra.mxu0 %v3857
    %4715 = vmatprep.subr.bf16.mxu0 %v3850
    %4716 = vmatpush2.bf16.msra.mxu0 %v3849
    %4717 = vmatprep.subr.bf16.mxu0 %v3842
    %4718 = vmatpush2.bf16.msra.mxu0 %v3841
    %4719 = vmatprep.subr.bf16.mxu0 %v3834
    %4720 = vmatpush2.bf16.msra.mxu0 %v3833
    %4721 = vmatprep.subr.bf16.mxu0 %v3826
    %4722 = vmatpush2.bf16.msra.mxu0 %v3825
    %4723 = vmatprep.subr.bf16.mxu0 %v3818
    %4724 = vmatpush2.bf16.msra.mxu0 %v3817
    %4725 = vmatprep.subr.bf16.mxu0 %v3810
    %4726 = vmatpush2.bf16.msra.mxu0 %v3809
    %4727 = vmatprep.subr.bf16.mxu0 %v3802
    %4728 = vmatpush2.bf16.msra.mxu0 %v3801
    %4729 = vmatprep.mubr.bf16.mxu0 %v2892
    %4730 = vmatmul.mubr.bf16.gmra.mxu0 %v2891
    %v4731 = vpop.f32.mrf.mxu0
    %v4732 = vadd.f32 %v2944, %v4731
    %v4733 = vpop.f32.mrf.mxu0
    %v4734 = vadd.f32 %v2948, %v4733
    %v4735 = vpop.f32.mrf.mxu0
    %v4736 = vadd.f32 %v2944, %v4735
    %v4737 = vpop.f32.mrf.mxu0
    %v4738 = vadd.f32 %v2948, %v4737
    %4739 = vmatprep.mubr.bf16.mxu0 %v2896
    %4740 = vmatmul.mubr.bf16.gmra.mxu0 %v2895
    %v4741 = vpop.f32.mrf.mxu0
    %v4742 = vadd.f32 %v2944, %v4741
    %v4743 = vpop.f32.mrf.mxu0
    %v4744 = vadd.f32 %v2948, %v4743
    %v4745 = vpop.f32.mrf.mxu0
    %v4746 = vadd.f32 %v2944, %v4745
    %v4747 = vpop.f32.mrf.mxu0
    %v4748 = vadd.f32 %v2948, %v4747
    %4749 = vmatprep.mubr.bf16.mxu0 %v2900
    %4750 = vmatmul.mubr.bf16.gmra.mxu0 %v2899
    %v4751 = vpop.f32.mrf.mxu0
    %v4752 = vadd.f32 %v2944, %v4751
    %v4753 = vpop.f32.mrf.mxu0
    %v4754 = vadd.f32 %v2948, %v4753
    %v4755 = vpop.f32.mrf.mxu0
    %v4756 = vadd.f32 %v2944, %v4755
    %v4757 = vpop.f32.mrf.mxu0
    %v4758 = vadd.f32 %v2948, %v4757
    %4759 = vmatprep.mubr.bf16.mxu0 %v2904
    %4760 = vmatmul.mubr.bf16.gmra.mxu0 %v2903
    %v4761 = vpop.f32.mrf.mxu0
    %v4762 = vadd.f32 %v2944, %v4761
    %v4763 = vpop.f32.mrf.mxu0
    %v4764 = vadd.f32 %v2948, %v4763
    %v4765 = vpop.f32.mrf.mxu0
    %v4766 = vadd.f32 %v2944, %v4765
    %v4767 = vpop.f32.mrf.mxu0
    %v4768 = vadd.f32 %v2948, %v4767
    %4769 = vmatprep.mubr.bf16.mxu0 %v2908
    %4770 = vmatmul.mubr.bf16.gmra.mxu0 %v2907
    %v4771 = vpop.f32.mrf.mxu0
    %v4772 = vadd.f32 %v2944, %v4771
    %v4773 = vpop.f32.mrf.mxu0
    %v4774 = vadd.f32 %v2948, %v4773
    %v4775 = vpop.f32.mrf.mxu0
    %v4776 = vadd.f32 %v2944, %v4775
    %v4777 = vpop.f32.mrf.mxu0
    %v4778 = vadd.f32 %v2948, %v4777
    %4779 = vmatprep.mubr.bf16.mxu0 %v2912
    %4780 = vmatmul.mubr.bf16.gmra.mxu0 %v2911
    %v4781 = vpop.f32.mrf.mxu0
    %v4782 = vadd.f32 %v2944, %v4781
    %v4783 = vpop.f32.mrf.mxu0
    %v4784 = vadd.f32 %v2948, %v4783
    %v4785 = vpop.f32.mrf.mxu0
    %v4786 = vadd.f32 %v2944, %v4785
    %v4787 = vpop.f32.mrf.mxu0
    %v4788 = vadd.f32 %v2948, %v4787
    %4789 = vmatprep.mubr.bf16.mxu0 %v2916
    %4790 = vmatmul.mubr.bf16.gmra.mxu0 %v2915
    %v4791 = vpop.f32.mrf.mxu0
    %v4792 = vadd.f32 %v2944, %v4791
    %v4793 = vpop.f32.mrf.mxu0
    %v4794 = vadd.f32 %v2948, %v4793
    %v4795 = vpop.f32.mrf.mxu0
    %v4796 = vadd.f32 %v2944, %v4795
    %v4797 = vpop.f32.mrf.mxu0
    %v4798 = vadd.f32 %v2948, %v4797
    %4799 = vmatprep.mubr.bf16.mxu0 %v2920
    %4800 = vmatmul.mubr.bf16.gmra.mxu0 %v2919
    %v4801 = vpop.f32.mrf.mxu0
    %v4802 = vadd.f32 %v2944, %v4801
    %v4803 = vpop.f32.mrf.mxu0
    %v4804 = vadd.f32 %v2948, %v4803
    %v4805 = vpop.f32.mrf.mxu0
    %v4806 = vadd.f32 %v2944, %v4805
    %v4807 = vpop.f32.mrf.mxu0
    %v4808 = vadd.f32 %v2948, %v4807
    %4809 = vdwg.mxu0
    %4810 = vmatprep.subr.bf16.mxu0 %v3922
    %4811 = vmatpush1.bf16.msra.mxu0 %v3921
    %4812 = vmatprep.subr.bf16.mxu0 %v3914
    %4813 = vmatpush1.bf16.msra.mxu0 %v3913
    %4814 = vmatprep.subr.bf16.mxu0 %v3906
    %4815 = vmatpush1.bf16.msra.mxu0 %v3905
    %4816 = vmatprep.subr.bf16.mxu0 %v3898
    %4817 = vmatpush1.bf16.msra.mxu0 %v3897
    %4818 = vmatprep.subr.bf16.mxu0 %v3890
    %4819 = vmatpush1.bf16.msra.mxu0 %v3889
    %4820 = vmatprep.subr.bf16.mxu0 %v3882
    %4821 = vmatpush1.bf16.msra.mxu0 %v3881
    %4822 = vmatprep.subr.bf16.mxu0 %v3874
    %4823 = vmatpush1.bf16.msra.mxu0 %v3873
    %4824 = vmatprep.subr.bf16.mxu0 %v3866
    %4825 = vmatpush1.bf16.msra.mxu0 %v3865
    %4826 = vmatprep.subr.bf16.mxu0 %v3986
    %4827 = vmatpush2.bf16.msra.mxu0 %v3985
    %4828 = vmatprep.subr.bf16.mxu0 %v3978
    %4829 = vmatpush2.bf16.msra.mxu0 %v3977
    %4830 = vmatprep.subr.bf16.mxu0 %v3970
    %4831 = vmatpush2.bf16.msra.mxu0 %v3969
    %4832 = vmatprep.subr.bf16.mxu0 %v3962
    %4833 = vmatpush2.bf16.msra.mxu0 %v3961
    %4834 = vmatprep.subr.bf16.mxu0 %v3954
    %4835 = vmatpush2.bf16.msra.mxu0 %v3953
    %4836 = vmatprep.subr.bf16.mxu0 %v3946
    %4837 = vmatpush2.bf16.msra.mxu0 %v3945
    %4838 = vmatprep.subr.bf16.mxu0 %v3938
    %4839 = vmatpush2.bf16.msra.mxu0 %v3937
    %4840 = vmatprep.subr.bf16.mxu0 %v3930
    %4841 = vmatpush2.bf16.msra.mxu0 %v3929
    %4842 = vmatprep.mubr.bf16.mxu0 %v2894
    %4843 = vmatmul.mubr.bf16.gmra.mxu0 %v2893
    %v4844 = vpop.f32.mrf.mxu0
    %v4845 = vadd.f32 %v4732, %v4844
    %v4846 = vpop.f32.mrf.mxu0
    %v4847 = vadd.f32 %v4734, %v4846
    %v4848 = vpop.f32.mrf.mxu0
    %v4849 = vadd.f32 %v4736, %v4848
    %v4850 = vpop.f32.mrf.mxu0
    %v4851 = vadd.f32 %v4738, %v4850
    %4852 = vmatprep.mubr.bf16.mxu0 %v2898
    %4853 = vmatmul.mubr.bf16.gmra.mxu0 %v2897
    %v4854 = vpop.f32.mrf.mxu0
    %v4855 = vadd.f32 %v4742, %v4854
    %v4856 = vpop.f32.mrf.mxu0
    %v4857 = vadd.f32 %v4744, %v4856
    %v4858 = vpop.f32.mrf.mxu0
    %v4859 = vadd.f32 %v4746, %v4858
    %v4860 = vpop.f32.mrf.mxu0
    %v4861 = vadd.f32 %v4748, %v4860
    %4862 = vmatprep.mubr.bf16.mxu0 %v2902
    %4863 = vmatmul.mubr.bf16.gmra.mxu0 %v2901
    %v4864 = vpop.f32.mrf.mxu0
    %v4865 = vadd.f32 %v4752, %v4864
    %v4866 = vpop.f32.mrf.mxu0
    %v4867 = vadd.f32 %v4754, %v4866
    %v4868 = vpop.f32.mrf.mxu0
    %v4869 = vadd.f32 %v4756, %v4868
    %v4870 = vpop.f32.mrf.mxu0
    %v4871 = vadd.f32 %v4758, %v4870
    %4872 = vmatprep.mubr.bf16.mxu0 %v2906
    %4873 = vmatmul.mubr.bf16.gmra.mxu0 %v2905
    %v4874 = vpop.f32.mrf.mxu0
    %v4875 = vadd.f32 %v4762, %v4874
    %v4876 = vpop.f32.mrf.mxu0
    %v4877 = vadd.f32 %v4764, %v4876
    %v4878 = vpop.f32.mrf.mxu0
    %v4879 = vadd.f32 %v4766, %v4878
    %v4880 = vpop.f32.mrf.mxu0
    %v4881 = vadd.f32 %v4768, %v4880
    %4882 = vmatprep.mubr.bf16.mxu0 %v2910
    %4883 = vmatmul.mubr.bf16.gmra.mxu0 %v2909
    %v4884 = vpop.f32.mrf.mxu0
    %v4885 = vadd.f32 %v4772, %v4884
    %v4886 = vpop.f32.mrf.mxu0
    %v4887 = vadd.f32 %v4774, %v4886
    %v4888 = vpop.f32.mrf.mxu0
    %v4889 = vadd.f32 %v4776, %v4888
    %v4890 = vpop.f32.mrf.mxu0
    %v4891 = vadd.f32 %v4778, %v4890
    %4892 = vmatprep.mubr.bf16.mxu0 %v2914
    %4893 = vmatmul.mubr.bf16.gmra.mxu0 %v2913
    %v4894 = vpop.f32.mrf.mxu0
    %v4895 = vadd.f32 %v4782, %v4894
    %v4896 = vpop.f32.mrf.mxu0
    %v4897 = vadd.f32 %v4784, %v4896
    %v4898 = vpop.f32.mrf.mxu0
    %v4899 = vadd.f32 %v4786, %v4898
    %v4900 = vpop.f32.mrf.mxu0
    %v4901 = vadd.f32 %v4788, %v4900
    %4902 = vmatprep.mubr.bf16.mxu0 %v2918
    %4903 = vmatmul.mubr.bf16.gmra.mxu0 %v2917
    %v4904 = vpop.f32.mrf.mxu0
    %v4905 = vadd.f32 %v4792, %v4904
    %v4906 = vpop.f32.mrf.mxu0
    %v4907 = vadd.f32 %v4794, %v4906
    %v4908 = vpop.f32.mrf.mxu0
    %v4909 = vadd.f32 %v4796, %v4908
    %v4910 = vpop.f32.mrf.mxu0
    %v4911 = vadd.f32 %v4798, %v4910
    %4912 = vmatprep.mubr.bf16.mxu0 %v2922
    %4913 = vmatmul.mubr.bf16.gmra.mxu0 %v2921
    %v4914 = vpop.f32.mrf.mxu0
    %v4915 = vadd.f32 %v4802, %v4914
    %v4916 = vpop.f32.mrf.mxu0
    %v4917 = vadd.f32 %v4804, %v4916
    %v4918 = vpop.f32.mrf.mxu0
    %v4919 = vadd.f32 %v4806, %v4918
    %v4920 = vpop.f32.mrf.mxu0
    %v4921 = vadd.f32 %v4808, %v4920
    %4922 = vdwg.mxu0
    %4923 = vmatprep.subr.bf16.mxu0 %v3796
    %4924 = vmatpush1.bf16.msra.mxu0 %v3795
    %4925 = vmatprep.subr.bf16.mxu0 %v3788
    %4926 = vmatpush1.bf16.msra.mxu0 %v3787
    %4927 = vmatprep.subr.bf16.mxu0 %v3780
    %4928 = vmatpush1.bf16.msra.mxu0 %v3779
    %4929 = vmatprep.subr.bf16.mxu0 %v3772
    %4930 = vmatpush1.bf16.msra.mxu0 %v3771
    %4931 = vmatprep.subr.bf16.mxu0 %v3764
    %4932 = vmatpush1.bf16.msra.mxu0 %v3763
    %4933 = vmatprep.subr.bf16.mxu0 %v3756
    %4934 = vmatpush1.bf16.msra.mxu0 %v3755
    %4935 = vmatprep.subr.bf16.mxu0 %v3748
    %4936 = vmatpush1.bf16.msra.mxu0 %v3747
    %4937 = vmatprep.subr.bf16.mxu0 %v3740
    %4938 = vmatpush1.bf16.msra.mxu0 %v3739
    %4939 = vmatprep.subr.bf16.mxu0 %v3860
    %4940 = vmatpush2.bf16.msra.mxu0 %v3859
    %4941 = vmatprep.subr.bf16.mxu0 %v3852
    %4942 = vmatpush2.bf16.msra.mxu0 %v3851
    %4943 = vmatprep.subr.bf16.mxu0 %v3844
    %4944 = vmatpush2.bf16.msra.mxu0 %v3843
    %4945 = vmatprep.subr.bf16.mxu0 %v3836
    %4946 = vmatpush2.bf16.msra.mxu0 %v3835
    %4947 = vmatprep.subr.bf16.mxu0 %v3828
    %4948 = vmatpush2.bf16.msra.mxu0 %v3827
    %4949 = vmatprep.subr.bf16.mxu0 %v3820
    %4950 = vmatpush2.bf16.msra.mxu0 %v3819
    %4951 = vmatprep.subr.bf16.mxu0 %v3812
    %4952 = vmatpush2.bf16.msra.mxu0 %v3811
    %4953 = vmatprep.subr.bf16.mxu0 %v3804
    %4954 = vmatpush2.bf16.msra.mxu0 %v3803
    %4955 = vmatprep.mubr.bf16.mxu0 %v2892
    %4956 = vmatmul.mubr.bf16.gmra.mxu0 %v2891
    %v4957 = vpop.f32.mrf.mxu0
    %v4958 = vadd.f32 %v2952, %v4957
    %v4959 = vpop.f32.mrf.mxu0
    %v4960 = vadd.f32 %v2956, %v4959
    %v4961 = vpop.f32.mrf.mxu0
    %v4962 = vadd.f32 %v2952, %v4961
    %v4963 = vpop.f32.mrf.mxu0
    %v4964 = vadd.f32 %v2956, %v4963
    %4965 = vmatprep.mubr.bf16.mxu0 %v2896
    %4966 = vmatmul.mubr.bf16.gmra.mxu0 %v2895
    %v4967 = vpop.f32.mrf.mxu0
    %v4968 = vadd.f32 %v2952, %v4967
    %v4969 = vpop.f32.mrf.mxu0
    %v4970 = vadd.f32 %v2956, %v4969
    %v4971 = vpop.f32.mrf.mxu0
    %v4972 = vadd.f32 %v2952, %v4971
    %v4973 = vpop.f32.mrf.mxu0
    %v4974 = vadd.f32 %v2956, %v4973
    %4975 = vmatprep.mubr.bf16.mxu0 %v2900
    %4976 = vmatmul.mubr.bf16.gmra.mxu0 %v2899
    %v4977 = vpop.f32.mrf.mxu0
    %v4978 = vadd.f32 %v2952, %v4977
    %v4979 = vpop.f32.mrf.mxu0
    %v4980 = vadd.f32 %v2956, %v4979
    %v4981 = vpop.f32.mrf.mxu0
    %v4982 = vadd.f32 %v2952, %v4981
    %v4983 = vpop.f32.mrf.mxu0
    %v4984 = vadd.f32 %v2956, %v4983
    %4985 = vmatprep.mubr.bf16.mxu0 %v2904
    %4986 = vmatmul.mubr.bf16.gmra.mxu0 %v2903
    %v4987 = vpop.f32.mrf.mxu0
    %v4988 = vadd.f32 %v2952, %v4987
    %v4989 = vpop.f32.mrf.mxu0
    %v4990 = vadd.f32 %v2956, %v4989
    %v4991 = vpop.f32.mrf.mxu0
    %v4992 = vadd.f32 %v2952, %v4991
    %v4993 = vpop.f32.mrf.mxu0
    %v4994 = vadd.f32 %v2956, %v4993
    %4995 = vmatprep.mubr.bf16.mxu0 %v2908
    %4996 = vmatmul.mubr.bf16.gmra.mxu0 %v2907
    %v4997 = vpop.f32.mrf.mxu0
    %v4998 = vadd.f32 %v2952, %v4997
    %v4999 = vpop.f32.mrf.mxu0
    %v5000 = vadd.f32 %v2956, %v4999
    %v5001 = vpop.f32.mrf.mxu0
    %v5002 = vadd.f32 %v2952, %v5001
    %v5003 = vpop.f32.mrf.mxu0
    %v5004 = vadd.f32 %v2956, %v5003
    %5005 = vmatprep.mubr.bf16.mxu0 %v2912
    %5006 = vmatmul.mubr.bf16.gmra.mxu0 %v2911
    %v5007 = vpop.f32.mrf.mxu0
    %v5008 = vadd.f32 %v2952, %v5007
    %v5009 = vpop.f32.mrf.mxu0
    %v5010 = vadd.f32 %v2956, %v5009
    %v5011 = vpop.f32.mrf.mxu0
    %v5012 = vadd.f32 %v2952, %v5011
    %v5013 = vpop.f32.mrf.mxu0
    %v5014 = vadd.f32 %v2956, %v5013
    %5015 = vmatprep.mubr.bf16.mxu0 %v2916
    %5016 = vmatmul.mubr.bf16.gmra.mxu0 %v2915
    %v5017 = vpop.f32.mrf.mxu0
    %v5018 = vadd.f32 %v2952, %v5017
    %v5019 = vpop.f32.mrf.mxu0
    %v5020 = vadd.f32 %v2956, %v5019
    %v5021 = vpop.f32.mrf.mxu0
    %v5022 = vadd.f32 %v2952, %v5021
    %v5023 = vpop.f32.mrf.mxu0
    %v5024 = vadd.f32 %v2956, %v5023
    %5025 = vmatprep.mubr.bf16.mxu0 %v2920
    %5026 = vmatmul.mubr.bf16.gmra.mxu0 %v2919
    %v5027 = vpop.f32.mrf.mxu0
    %v5028 = vadd.f32 %v2952, %v5027
    %v5029 = vpop.f32.mrf.mxu0
    %v5030 = vadd.f32 %v2956, %v5029
    %v5031 = vpop.f32.mrf.mxu0
    %v5032 = vadd.f32 %v2952, %v5031
    %v5033 = vpop.f32.mrf.mxu0
    %v5034 = vadd.f32 %v2956, %v5033
    %5035 = vdwg.mxu0
    %5036 = vmatprep.subr.bf16.mxu0 %v3924
    %5037 = vmatpush1.bf16.msra.mxu0 %v3923
    %5038 = vmatprep.subr.bf16.mxu0 %v3916
    %5039 = vmatpush1.bf16.msra.mxu0 %v3915
    %5040 = vmatprep.subr.bf16.mxu0 %v3908
    %5041 = vmatpush1.bf16.msra.mxu0 %v3907
    %5042 = vmatprep.subr.bf16.mxu0 %v3900
    %5043 = vmatpush1.bf16.msra.mxu0 %v3899
    %5044 = vmatprep.subr.bf16.mxu0 %v3892
    %5045 = vmatpush1.bf16.msra.mxu0 %v3891
    %5046 = vmatprep.subr.bf16.mxu0 %v3884
    %5047 = vmatpush1.bf16.msra.mxu0 %v3883
    %5048 = vmatprep.subr.bf16.mxu0 %v3876
    %5049 = vmatpush1.bf16.msra.mxu0 %v3875
    %5050 = vmatprep.subr.bf16.mxu0 %v3868
    %5051 = vmatpush1.bf16.msra.mxu0 %v3867
    %5052 = vmatprep.subr.bf16.mxu0 %v3988
    %5053 = vmatpush2.bf16.msra.mxu0 %v3987
    %5054 = vmatprep.subr.bf16.mxu0 %v3980
    %5055 = vmatpush2.bf16.msra.mxu0 %v3979
    %5056 = vmatprep.subr.bf16.mxu0 %v3972
    %5057 = vmatpush2.bf16.msra.mxu0 %v3971
    %5058 = vmatprep.subr.bf16.mxu0 %v3964
    %5059 = vmatpush2.bf16.msra.mxu0 %v3963
    %5060 = vmatprep.subr.bf16.mxu0 %v3956
    %5061 = vmatpush2.bf16.msra.mxu0 %v3955
    %5062 = vmatprep.subr.bf16.mxu0 %v3948
    %5063 = vmatpush2.bf16.msra.mxu0 %v3947
    %5064 = vmatprep.subr.bf16.mxu0 %v3940
    %5065 = vmatpush2.bf16.msra.mxu0 %v3939
    %5066 = vmatprep.subr.bf16.mxu0 %v3932
    %5067 = vmatpush2.bf16.msra.mxu0 %v3931
    %5068 = vmatprep.mubr.bf16.mxu0 %v2894
    %5069 = vmatmul.mubr.bf16.gmra.mxu0 %v2893
    %v5070 = vpop.f32.mrf.mxu0
    %v5071 = vadd.f32 %v4958, %v5070
    %v5072 = vpop.f32.mrf.mxu0
    %v5073 = vadd.f32 %v4960, %v5072
    %v5074 = vpop.f32.mrf.mxu0
    %v5075 = vadd.f32 %v4962, %v5074
    %v5076 = vpop.f32.mrf.mxu0
    %v5077 = vadd.f32 %v4964, %v5076
    %5078 = vmatprep.mubr.bf16.mxu0 %v2898
    %5079 = vmatmul.mubr.bf16.gmra.mxu0 %v2897
    %v5080 = vpop.f32.mrf.mxu0
    %v5081 = vadd.f32 %v4968, %v5080
    %v5082 = vpop.f32.mrf.mxu0
    %v5083 = vadd.f32 %v4970, %v5082
    %v5084 = vpop.f32.mrf.mxu0
    %v5085 = vadd.f32 %v4972, %v5084
    %v5086 = vpop.f32.mrf.mxu0
    %v5087 = vadd.f32 %v4974, %v5086
    %5088 = vmatprep.mubr.bf16.mxu0 %v2902
    %5089 = vmatmul.mubr.bf16.gmra.mxu0 %v2901
    %v5090 = vpop.f32.mrf.mxu0
    %v5091 = vadd.f32 %v4978, %v5090
    %v5092 = vpop.f32.mrf.mxu0
    %v5093 = vadd.f32 %v4980, %v5092
    %v5094 = vpop.f32.mrf.mxu0
    %v5095 = vadd.f32 %v4982, %v5094
    %v5096 = vpop.f32.mrf.mxu0
    %v5097 = vadd.f32 %v4984, %v5096
    %5098 = vmatprep.mubr.bf16.mxu0 %v2906
    %5099 = vmatmul.mubr.bf16.gmra.mxu0 %v2905
    %v5100 = vpop.f32.mrf.mxu0
    %v5101 = vadd.f32 %v4988, %v5100
    %v5102 = vpop.f32.mrf.mxu0
    %v5103 = vadd.f32 %v4990, %v5102
    %v5104 = vpop.f32.mrf.mxu0
    %v5105 = vadd.f32 %v4992, %v5104
    %v5106 = vpop.f32.mrf.mxu0
    %v5107 = vadd.f32 %v4994, %v5106
    %5108 = vmatprep.mubr.bf16.mxu0 %v2910
    %5109 = vmatmul.mubr.bf16.gmra.mxu0 %v2909
    %v5110 = vpop.f32.mrf.mxu0
    %v5111 = vadd.f32 %v4998, %v5110
    %v5112 = vpop.f32.mrf.mxu0
    %v5113 = vadd.f32 %v5000, %v5112
    %v5114 = vpop.f32.mrf.mxu0
    %v5115 = vadd.f32 %v5002, %v5114
    %v5116 = vpop.f32.mrf.mxu0
    %v5117 = vadd.f32 %v5004, %v5116
    %5118 = vmatprep.mubr.bf16.mxu0 %v2914
    %5119 = vmatmul.mubr.bf16.gmra.mxu0 %v2913
    %v5120 = vpop.f32.mrf.mxu0
    %v5121 = vadd.f32 %v5008, %v5120
    %v5122 = vpop.f32.mrf.mxu0
    %v5123 = vadd.f32 %v5010, %v5122
    %v5124 = vpop.f32.mrf.mxu0
    %v5125 = vadd.f32 %v5012, %v5124
    %v5126 = vpop.f32.mrf.mxu0
    %v5127 = vadd.f32 %v5014, %v5126
    %5128 = vmatprep.mubr.bf16.mxu0 %v2918
    %5129 = vmatmul.mubr.bf16.gmra.mxu0 %v2917
    %v5130 = vpop.f32.mrf.mxu0
    %v5131 = vadd.f32 %v5018, %v5130
    %v5132 = vpop.f32.mrf.mxu0
    %v5133 = vadd.f32 %v5020, %v5132
    %v5134 = vpop.f32.mrf.mxu0
    %v5135 = vadd.f32 %v5022, %v5134
    %v5136 = vpop.f32.mrf.mxu0
    %v5137 = vadd.f32 %v5024, %v5136
    %5138 = vmatprep.mubr.bf16.mxu0 %v2922
    %5139 = vmatmul.mubr.bf16.gmra.mxu0 %v2921
    %v5140 = vpop.f32.mrf.mxu0
    %v5141 = vadd.f32 %v5028, %v5140
    %v5142 = vpop.f32.mrf.mxu0
    %v5143 = vadd.f32 %v5030, %v5142
    %v5144 = vpop.f32.mrf.mxu0
    %v5145 = vadd.f32 %v5032, %v5144
    %v5146 = vpop.f32.mrf.mxu0
    %v5147 = vadd.f32 %v5034, %v5146
    %5148 = vdwg.mxu0
    %v5149 = vld [vmem:[%s16] sm:$0xff]
    %v5150 = vld [vmem:[%s17] sm:$0xff]
    %v5151 = vadd.f32 %v4393, %v4397
    %v5152 = vadd.f32 %v5151, %v4403
    %v5153 = vadd.f32 %v5152, %v4407
    %v5154 = vadd.f32 %v5153, %v4413
    %v5155 = vadd.f32 %v5154, %v4417
    %v5156 = vadd.f32 %v5155, %v4423
    %v5157 = vadd.f32 %v5156, %v4427
    %v5158 = vadd.f32 %v5157, %v4433
    %v5159 = vadd.f32 %v5158, %v4437
    %v5160 = vadd.f32 %v5159, %v4443
    %v5161 = vadd.f32 %v5160, %v4447
    %v5162 = vadd.f32 %v5161, %v4453
    %v5163 = vadd.f32 %v5162, %v4457
    %v5164 = vadd.f32 %v5163, %v4463
    %v5165 = vadd.f32 %v5164, %v4467
    %v5166 = vrot.slane %v5165, 4
    %v5167 = vadd.f32 %v5165, %v5166
    %v5168 = vrot.slane %v5167, 2
    %v5169 = vadd.f32 %v5167, %v5168
    %v5170 = vrot.slane %v5169, 1
    %v5171 = vadd.f32 %v5169, %v5170
    %v5172 = vadd.f32 %v4395, %v4399
    %v5173 = vadd.f32 %v5172, %v4405
    %v5174 = vadd.f32 %v5173, %v4409
    %v5175 = vadd.f32 %v5174, %v4415
    %v5176 = vadd.f32 %v5175, %v4419
    %v5177 = vadd.f32 %v5176, %v4425
    %v5178 = vadd.f32 %v5177, %v4429
    %v5179 = vadd.f32 %v5178, %v4435
    %v5180 = vadd.f32 %v5179, %v4439
    %v5181 = vadd.f32 %v5180, %v4445
    %v5182 = vadd.f32 %v5181, %v4449
    %v5183 = vadd.f32 %v5182, %v4455
    %v5184 = vadd.f32 %v5183, %v4459
    %v5185 = vadd.f32 %v5184, %v4465
    %v5186 = vadd.f32 %v5185, %v4469
    %v5187 = vrot.slane %v5186, 4
    %v5188 = vadd.f32 %v5186, %v5187
    %v5189 = vrot.slane %v5188, 2
    %v5190 = vadd.f32 %v5188, %v5189
    %v5191 = vrot.slane %v5190, 1
    %v5192 = vadd.f32 %v5190, %v5191
    %v5193 = vadd.f32 %v4619, %v4623
    %v5194 = vadd.f32 %v5193, %v4629
    %v5195 = vadd.f32 %v5194, %v4633
    %v5196 = vadd.f32 %v5195, %v4639
    %v5197 = vadd.f32 %v5196, %v4643
    %v5198 = vadd.f32 %v5197, %v4649
    %v5199 = vadd.f32 %v5198, %v4653
    %v5200 = vadd.f32 %v5199, %v4659
    %v5201 = vadd.f32 %v5200, %v4663
    %v5202 = vadd.f32 %v5201, %v4669
    %v5203 = vadd.f32 %v5202, %v4673
    %v5204 = vadd.f32 %v5203, %v4679
    %v5205 = vadd.f32 %v5204, %v4683
    %v5206 = vadd.f32 %v5205, %v4689
    %v5207 = vadd.f32 %v5206, %v4693
    %v5208 = vrot.slane %v5207, 4
    %v5209 = vadd.f32 %v5207, %v5208
    %v5210 = vrot.slane %v5209, 2
    %v5211 = vadd.f32 %v5209, %v5210
    %v5212 = vrot.slane %v5211, 1
    %v5213 = vadd.f32 %v5211, %v5212
    %v5214 = vadd.f32 %v4621, %v4625
    %v5215 = vadd.f32 %v5214, %v4631
    %v5216 = vadd.f32 %v5215, %v4635
    %v5217 = vadd.f32 %v5216, %v4641
    %v5218 = vadd.f32 %v5217, %v4645
    %v5219 = vadd.f32 %v5218, %v4651
    %v5220 = vadd.f32 %v5219, %v4655
    %v5221 = vadd.f32 %v5220, %v4661
    %v5222 = vadd.f32 %v5221, %v4665
    %v5223 = vadd.f32 %v5222, %v4671
    %v5224 = vadd.f32 %v5223, %v4675
    %v5225 = vadd.f32 %v5224, %v4681
    %v5226 = vadd.f32 %v5225, %v4685
    %v5227 = vadd.f32 %v5226, %v4691
    %v5228 = vadd.f32 %v5227, %v4695
    %v5229 = vrot.slane %v5228, 4
    %v5230 = vadd.f32 %v5228, %v5229
    %v5231 = vrot.slane %v5230, 2
    %v5232 = vadd.f32 %v5230, %v5231
    %v5233 = vrot.slane %v5232, 1
    %v5234 = vadd.f32 %v5232, %v5233
    %v5235 = vadd.f32 %v4845, %v4849
    %v5236 = vadd.f32 %v5235, %v4855
    %v5237 = vadd.f32 %v5236, %v4859
    %v5238 = vadd.f32 %v5237, %v4865
    %v5239 = vadd.f32 %v5238, %v4869
    %v5240 = vadd.f32 %v5239, %v4875
    %v5241 = vadd.f32 %v5240, %v4879
    %v5242 = vadd.f32 %v5241, %v4885
    %v5243 = vadd.f32 %v5242, %v4889
    %v5244 = vadd.f32 %v5243, %v4895
    %v5245 = vadd.f32 %v5244, %v4899
    %v5246 = vadd.f32 %v5245, %v4905
    %v5247 = vadd.f32 %v5246, %v4909
    %v5248 = vadd.f32 %v5247, %v4915
    %v5249 = vadd.f32 %v5248, %v4919
    %v5250 = vrot.slane %v5249, 4
    %v5251 = vadd.f32 %v5249, %v5250
    %v5252 = vrot.slane %v5251, 2
    %v5253 = vadd.f32 %v5251, %v5252
    %v5254 = vrot.slane %v5253, 1
    %v5255 = vadd.f32 %v5253, %v5254
    %v5256 = vadd.f32 %v4847, %v4851
    %v5257 = vadd.f32 %v5256, %v4857
    %v5258 = vadd.f32 %v5257, %v4861
    %v5259 = vadd.f32 %v5258, %v4867
    %v5260 = vadd.f32 %v5259, %v4871
    %v5261 = vadd.f32 %v5260, %v4877
    %v5262 = vadd.f32 %v5261, %v4881
    %v5263 = vadd.f32 %v5262, %v4887
    %v5264 = vadd.f32 %v5263, %v4891
    %v5265 = vadd.f32 %v5264, %v4897
    %v5266 = vadd.f32 %v5265, %v4901
    %v5267 = vadd.f32 %v5266, %v4907
    %v5268 = vadd.f32 %v5267, %v4911
    %v5269 = vadd.f32 %v5268, %v4917
    %v5270 = vadd.f32 %v5269, %v4921
    %v5271 = vrot.slane %v5270, 4
    %v5272 = vadd.f32 %v5270, %v5271
    %v5273 = vrot.slane %v5272, 2
    %v5274 = vadd.f32 %v5272, %v5273
    %v5275 = vrot.slane %v5274, 1
    %v5276 = vadd.f32 %v5274, %v5275
    %v5277 = vadd.f32 %v5071, %v5075
    %v5278 = vadd.f32 %v5277, %v5081
    %v5279 = vadd.f32 %v5278, %v5085
    %v5280 = vadd.f32 %v5279, %v5091
    %v5281 = vadd.f32 %v5280, %v5095
    %v5282 = vadd.f32 %v5281, %v5101
    %v5283 = vadd.f32 %v5282, %v5105
    %v5284 = vadd.f32 %v5283, %v5111
    %v5285 = vadd.f32 %v5284, %v5115
    %v5286 = vadd.f32 %v5285, %v5121
    %v5287 = vadd.f32 %v5286, %v5125
    %v5288 = vadd.f32 %v5287, %v5131
    %v5289 = vadd.f32 %v5288, %v5135
    %v5290 = vadd.f32 %v5289, %v5141
    %v5291 = vadd.f32 %v5290, %v5145
    %v5292 = vrot.slane %v5291, 4
    %v5293 = vadd.f32 %v5291, %v5292
    %v5294 = vrot.slane %v5293, 2
    %v5295 = vadd.f32 %v5293, %v5294
    %v5296 = vrot.slane %v5295, 1
    %v5297 = vadd.f32 %v5295, %v5296
    %v5298 = vadd.f32 %v5073, %v5077
    %v5299 = vadd.f32 %v5298, %v5083
    %v5300 = vadd.f32 %v5299, %v5087
    %v5301 = vadd.f32 %v5300, %v5093
    %v5302 = vadd.f32 %v5301, %v5097
    %v5303 = vadd.f32 %v5302, %v5103
    %v5304 = vadd.f32 %v5303, %v5107
    %v5305 = vadd.f32 %v5304, %v5113
    %v5306 = vadd.f32 %v5305, %v5117
    %v5307 = vadd.f32 %v5306, %v5123
    %v5308 = vadd.f32 %v5307, %v5127
    %v5309 = vadd.f32 %v5308, %v5133
    %v5310 = vadd.f32 %v5309, %v5137
    %v5311 = vadd.f32 %v5310, %v5143
    %v5312 = vadd.f32 %v5311, %v5147
    %v5313 = vrot.slane %v5312, 4
    %v5314 = vadd.f32 %v5312, %v5313
    %v5315 = vrot.slane %v5314, 2
    %v5316 = vadd.f32 %v5314, %v5315
    %v5317 = vrot.slane %v5316, 1
    %v5318 = vadd.f32 %v5316, %v5317
    %v5319 = vmul.f32 %v5171, 0.0078125
    %v5320 = vmul.f32 %v5192, 0.0078125
    %v5321 = vmul.f32 %v5213, 0.0078125
    %v5322 = vmul.f32 %v5234, 0.0078125
    %v5323 = vmul.f32 %v5255, 0.0078125
    %v5324 = vmul.f32 %v5276, 0.0078125
    %v5325 = vmul.f32 %v5297, 0.0078125
    %v5326 = vmul.f32 %v5318, 0.0078125
    %v5327 = vmul.f32 %v4393, %v4393
    %v5328 = vmul.f32 %v4395, %v4395
    %v5329 = vmul.f32 %v4619, %v4619
    %v5330 = vmul.f32 %v4621, %v4621
    %v5331 = vmul.f32 %v4845, %v4845
    %v5332 = vmul.f32 %v4847, %v4847
    %v5333 = vmul.f32 %v5071, %v5071
    %v5334 = vmul.f32 %v5073, %v5073
    %v5335 = vmul.f32 %v4397, %v4397
    %v5336 = vmul.f32 %v4399, %v4399
    %v5337 = vmul.f32 %v4623, %v4623
    %v5338 = vmul.f32 %v4625, %v4625
    %v5339 = vmul.f32 %v4849, %v4849
    %v5340 = vmul.f32 %v4851, %v4851
    %v5341 = vmul.f32 %v5075, %v5075
    %v5342 = vmul.f32 %v5077, %v5077
    %v5343 = vmul.f32 %v4403, %v4403
    %v5344 = vmul.f32 %v4405, %v4405
    %v5345 = vmul.f32 %v4629, %v4629
    %v5346 = vmul.f32 %v4631, %v4631
    %v5347 = vmul.f32 %v4855, %v4855
    %v5348 = vmul.f32 %v4857, %v4857
    %v5349 = vmul.f32 %v5081, %v5081
    %v5350 = vmul.f32 %v5083, %v5083
    %v5351 = vmul.f32 %v4407, %v4407
    %v5352 = vmul.f32 %v4409, %v4409
    %v5353 = vmul.f32 %v4633, %v4633
    %v5354 = vmul.f32 %v4635, %v4635
    %v5355 = vmul.f32 %v4859, %v4859
    %v5356 = vmul.f32 %v4861, %v4861
    %v5357 = vmul.f32 %v5085, %v5085
    %v5358 = vmul.f32 %v5087, %v5087
    %v5359 = vmul.f32 %v4413, %v4413
    %v5360 = vmul.f32 %v4415, %v4415
    %v5361 = vmul.f32 %v4639, %v4639
    %v5362 = vmul.f32 %v4641, %v4641
    %v5363 = vmul.f32 %v4865, %v4865
    %v5364 = vmul.f32 %v4867, %v4867
    %v5365 = vmul.f32 %v5091, %v5091
    %v5366 = vmul.f32 %v5093, %v5093
    %v5367 = vmul.f32 %v4417, %v4417
    %v5368 = vmul.f32 %v4419, %v4419
    %v5369 = vmul.f32 %v4643, %v4643
    %v5370 = vmul.f32 %v4645, %v4645
    %v5371 = vmul.f32 %v4869, %v4869
    %v5372 = vmul.f32 %v4871, %v4871
    %v5373 = vmul.f32 %v5095, %v5095
    %v5374 = vmul.f32 %v5097, %v5097
    %v5375 = vmul.f32 %v4423, %v4423
    %v5376 = vmul.f32 %v4425, %v4425
    %v5377 = vmul.f32 %v4649, %v4649
    %v5378 = vmul.f32 %v4651, %v4651
    %v5379 = vmul.f32 %v4875, %v4875
    %v5380 = vmul.f32 %v4877, %v4877
    %v5381 = vmul.f32 %v5101, %v5101
    %v5382 = vmul.f32 %v5103, %v5103
    %v5383 = vmul.f32 %v4427, %v4427
    %v5384 = vmul.f32 %v4429, %v4429
    %v5385 = vmul.f32 %v4653, %v4653
    %v5386 = vmul.f32 %v4655, %v4655
    %v5387 = vmul.f32 %v4879, %v4879
    %v5388 = vmul.f32 %v4881, %v4881
    %v5389 = vmul.f32 %v5105, %v5105
    %v5390 = vmul.f32 %v5107, %v5107
    %v5391 = vmul.f32 %v4433, %v4433
    %v5392 = vmul.f32 %v4435, %v4435
    %v5393 = vmul.f32 %v4659, %v4659
    %v5394 = vmul.f32 %v4661, %v4661
    %v5395 = vmul.f32 %v4885, %v4885
    %v5396 = vmul.f32 %v4887, %v4887
    %v5397 = vmul.f32 %v5111, %v5111
    %v5398 = vmul.f32 %v5113, %v5113
    %v5399 = vmul.f32 %v4437, %v4437
    %v5400 = vmul.f32 %v4439, %v4439
    %v5401 = vmul.f32 %v4663, %v4663
    %v5402 = vmul.f32 %v4665, %v4665
    %v5403 = vmul.f32 %v4889, %v4889
    %v5404 = vmul.f32 %v4891, %v4891
    %v5405 = vmul.f32 %v5115, %v5115
    %v5406 = vmul.f32 %v5117, %v5117
    %v5407 = vmul.f32 %v4443, %v4443
    %v5408 = vmul.f32 %v4445, %v4445
    %v5409 = vmul.f32 %v4669, %v4669
    %v5410 = vmul.f32 %v4671, %v4671
    %v5411 = vmul.f32 %v4895, %v4895
    %v5412 = vmul.f32 %v4897, %v4897
    %v5413 = vmul.f32 %v5121, %v5121
    %v5414 = vmul.f32 %v5123, %v5123
    %v5415 = vmul.f32 %v4447, %v4447
    %v5416 = vmul.f32 %v4449, %v4449
    %v5417 = vmul.f32 %v4673, %v4673
    %v5418 = vmul.f32 %v4675, %v4675
    %v5419 = vmul.f32 %v4899, %v4899
    %v5420 = vmul.f32 %v4901, %v4901
    %v5421 = vmul.f32 %v5125, %v5125
    %v5422 = vmul.f32 %v5127, %v5127
    %v5423 = vmul.f32 %v4453, %v4453
    %v5424 = vmul.f32 %v4455, %v4455
    %v5425 = vmul.f32 %v4679, %v4679
    %v5426 = vmul.f32 %v4681, %v4681
    %v5427 = vmul.f32 %v4905, %v4905
    %v5428 = vmul.f32 %v4907, %v4907
    %v5429 = vmul.f32 %v5131, %v5131
    %v5430 = vmul.f32 %v5133, %v5133
    %v5431 = vmul.f32 %v4457, %v4457
    %v5432 = vmul.f32 %v4459, %v4459
    %v5433 = vmul.f32 %v4683, %v4683
    %v5434 = vmul.f32 %v4685, %v4685
    %v5435 = vmul.f32 %v4909, %v4909
    %v5436 = vmul.f32 %v4911, %v4911
    %v5437 = vmul.f32 %v5135, %v5135
    %v5438 = vmul.f32 %v5137, %v5137
    %v5439 = vmul.f32 %v4463, %v4463
    %v5440 = vmul.f32 %v4465, %v4465
    %v5441 = vmul.f32 %v4689, %v4689
    %v5442 = vmul.f32 %v4691, %v4691
    %v5443 = vmul.f32 %v4915, %v4915
    %v5444 = vmul.f32 %v4917, %v4917
    %v5445 = vmul.f32 %v5141, %v5141
    %v5446 = vmul.f32 %v5143, %v5143
    %v5447 = vmul.f32 %v4467, %v4467
    %v5448 = vmul.f32 %v4469, %v4469
    %v5449 = vmul.f32 %v4693, %v4693
    %v5450 = vmul.f32 %v4695, %v4695
    %v5451 = vmul.f32 %v4919, %v4919
    %v5452 = vmul.f32 %v4921, %v4921
    %v5453 = vmul.f32 %v5145, %v5145
    %v5454 = vmul.f32 %v5147, %v5147
    %v5455 = vadd.f32 %v5327, %v5335
    %v5456 = vadd.f32 %v5455, %v5343
    %v5457 = vadd.f32 %v5456, %v5351
    %v5458 = vadd.f32 %v5457, %v5359
    %v5459 = vadd.f32 %v5458, %v5367
    %v5460 = vadd.f32 %v5459, %v5375
    %v5461 = vadd.f32 %v5460, %v5383
    %v5462 = vadd.f32 %v5461, %v5391
    %v5463 = vadd.f32 %v5462, %v5399
    %v5464 = vadd.f32 %v5463, %v5407
    %v5465 = vadd.f32 %v5464, %v5415
    %v5466 = vadd.f32 %v5465, %v5423
    %v5467 = vadd.f32 %v5466, %v5431
    %v5468 = vadd.f32 %v5467, %v5439
    %v5469 = vadd.f32 %v5468, %v5447
    %v5470 = vrot.slane %v5469, 4
    %v5471 = vadd.f32 %v5469, %v5470
    %v5472 = vrot.slane %v5471, 2
    %v5473 = vadd.f32 %v5471, %v5472
    %v5474 = vrot.slane %v5473, 1
    %v5475 = vadd.f32 %v5473, %v5474
    %v5476 = vadd.f32 %v5328, %v5336
    %v5477 = vadd.f32 %v5476, %v5344
    %v5478 = vadd.f32 %v5477, %v5352
    %v5479 = vadd.f32 %v5478, %v5360
    %v5480 = vadd.f32 %v5479, %v5368
    %v5481 = vadd.f32 %v5480, %v5376
    %v5482 = vadd.f32 %v5481, %v5384
    %v5483 = vadd.f32 %v5482, %v5392
    %v5484 = vadd.f32 %v5483, %v5400
    %v5485 = vadd.f32 %v5484, %v5408
    %v5486 = vadd.f32 %v5485, %v5416
    %v5487 = vadd.f32 %v5486, %v5424
    %v5488 = vadd.f32 %v5487, %v5432
    %v5489 = vadd.f32 %v5488, %v5440
    %v5490 = vadd.f32 %v5489, %v5448
    %v5491 = vrot.slane %v5490, 4
    %v5492 = vadd.f32 %v5490, %v5491
    %v5493 = vrot.slane %v5492, 2
    %v5494 = vadd.f32 %v5492, %v5493
    %v5495 = vrot.slane %v5494, 1
    %v5496 = vadd.f32 %v5494, %v5495
    %v5497 = vadd.f32 %v5329, %v5337
    %v5498 = vadd.f32 %v5497, %v5345
    %v5499 = vadd.f32 %v5498, %v5353
    %v5500 = vadd.f32 %v5499, %v5361
    %v5501 = vadd.f32 %v5500, %v5369
    %v5502 = vadd.f32 %v5501, %v5377
    %v5503 = vadd.f32 %v5502, %v5385
    %v5504 = vadd.f32 %v5503, %v5393
    %v5505 = vadd.f32 %v5504, %v5401
    %v5506 = vadd.f32 %v5505, %v5409
    %v5507 = vadd.f32 %v5506, %v5417
    %v5508 = vadd.f32 %v5507, %v5425
    %v5509 = vadd.f32 %v5508, %v5433
    %v5510 = vadd.f32 %v5509, %v5441
    %v5511 = vadd.f32 %v5510, %v5449
    %v5512 = vrot.slane %v5511, 4
    %v5513 = vadd.f32 %v5511, %v5512
    %v5514 = vrot.slane %v5513, 2
    %v5515 = vadd.f32 %v5513, %v5514
    %v5516 = vrot.slane %v5515, 1
    %v5517 = vadd.f32 %v5515, %v5516
    %v5518 = vadd.f32 %v5330, %v5338
    %v5519 = vadd.f32 %v5518, %v5346
    %v5520 = vadd.f32 %v5519, %v5354
    %v5521 = vadd.f32 %v5520, %v5362
    %v5522 = vadd.f32 %v5521, %v5370
    %v5523 = vadd.f32 %v5522, %v5378
    %v5524 = vadd.f32 %v5523, %v5386
    %v5525 = vadd.f32 %v5524, %v5394
    %v5526 = vadd.f32 %v5525, %v5402
    %v5527 = vadd.f32 %v5526, %v5410
    %v5528 = vadd.f32 %v5527, %v5418
    %v5529 = vadd.f32 %v5528, %v5426
    %v5530 = vadd.f32 %v5529, %v5434
    %v5531 = vadd.f32 %v5530, %v5442
    %v5532 = vadd.f32 %v5531, %v5450
    %v5533 = vrot.slane %v5532, 4
    %v5534 = vadd.f32 %v5532, %v5533
    %v5535 = vrot.slane %v5534, 2
    %v5536 = vadd.f32 %v5534, %v5535
    %v5537 = vrot.slane %v5536, 1
    %v5538 = vadd.f32 %v5536, %v5537
    %v5539 = vadd.f32 %v5331, %v5339
    %v5540 = vadd.f32 %v5539, %v5347
    %v5541 = vadd.f32 %v5540, %v5355
    %v5542 = vadd.f32 %v5541, %v5363
    %v5543 = vadd.f32 %v5542, %v5371
    %v5544 = vadd.f32 %v5543, %v5379
    %v5545 = vadd.f32 %v5544, %v5387
    %v5546 = vadd.f32 %v5545, %v5395
    %v5547 = vadd.f32 %v5546, %v5403
    %v5548 = vadd.f32 %v5547, %v5411
    %v5549 = vadd.f32 %v5548, %v5419
    %v5550 = vadd.f32 %v5549, %v5427
    %v5551 = vadd.f32 %v5550, %v5435
    %v5552 = vadd.f32 %v5551, %v5443
    %v5553 = vadd.f32 %v5552, %v5451
    %v5554 = vrot.slane %v5553, 4
    %v5555 = vadd.f32 %v5553, %v5554
    %v5556 = vrot.slane %v5555, 2
    %v5557 = vadd.f32 %v5555, %v5556
    %v5558 = vrot.slane %v5557, 1
    %v5559 = vadd.f32 %v5557, %v5558
    %v5560 = vadd.f32 %v5332, %v5340
    %v5561 = vadd.f32 %v5560, %v5348
    %v5562 = vadd.f32 %v5561, %v5356
    %v5563 = vadd.f32 %v5562, %v5364
    %v5564 = vadd.f32 %v5563, %v5372
    %v5565 = vadd.f32 %v5564, %v5380
    %v5566 = vadd.f32 %v5565, %v5388
    %v5567 = vadd.f32 %v5566, %v5396
    %v5568 = vadd.f32 %v5567, %v5404
    %v5569 = vadd.f32 %v5568, %v5412
    %v5570 = vadd.f32 %v5569, %v5420
    %v5571 = vadd.f32 %v5570, %v5428
    %v5572 = vadd.f32 %v5571, %v5436
    %v5573 = vadd.f32 %v5572, %v5444
    %v5574 = vadd.f32 %v5573, %v5452
    %v5575 = vrot.slane %v5574, 4
    %v5576 = vadd.f32 %v5574, %v5575
    %v5577 = vrot.slane %v5576, 2
    %v5578 = vadd.f32 %v5576, %v5577
    %v5579 = vrot.slane %v5578, 1
    %v5580 = vadd.f32 %v5578, %v5579
    %v5581 = vadd.f32 %v5333, %v5341
    %v5582 = vadd.f32 %v5581, %v5349
    %v5583 = vadd.f32 %v5582, %v5357
    %v5584 = vadd.f32 %v5583, %v5365
    %v5585 = vadd.f32 %v5584, %v5373
    %v5586 = vadd.f32 %v5585, %v5381
    %v5587 = vadd.f32 %v5586, %v5389
    %v5588 = vadd.f32 %v5587, %v5397
    %v5589 = vadd.f32 %v5588, %v5405
    %v5590 = vadd.f32 %v5589, %v5413
    %v5591 = vadd.f32 %v5590, %v5421
    %v5592 = vadd.f32 %v5591, %v5429
    %v5593 = vadd.f32 %v5592, %v5437
    %v5594 = vadd.f32 %v5593, %v5445
    %v5595 = vadd.f32 %v5594, %v5453
    %v5596 = vrot.slane %v5595, 4
    %v5597 = vadd.f32 %v5595, %v5596
    %v5598 = vrot.slane %v5597, 2
    %v5599 = vadd.f32 %v5597, %v5598
    %v5600 = vrot.slane %v5599, 1
    %v5601 = vadd.f32 %v5599, %v5600
    %v5602 = vadd.f32 %v5334, %v5342
    %v5603 = vadd.f32 %v5602, %v5350
    %v5604 = vadd.f32 %v5603, %v5358
    %v5605 = vadd.f32 %v5604, %v5366
    %v5606 = vadd.f32 %v5605, %v5374
    %v5607 = vadd.f32 %v5606, %v5382
    %v5608 = vadd.f32 %v5607, %v5390
    %v5609 = vadd.f32 %v5608, %v5398
    %v5610 = vadd.f32 %v5609, %v5406
    %v5611 = vadd.f32 %v5610, %v5414
    %v5612 = vadd.f32 %v5611, %v5422
    %v5613 = vadd.f32 %v5612, %v5430
    %v5614 = vadd.f32 %v5613, %v5438
    %v5615 = vadd.f32 %v5614, %v5446
    %v5616 = vadd.f32 %v5615, %v5454
    %v5617 = vrot.slane %v5616, 4
    %v5618 = vadd.f32 %v5616, %v5617
    %v5619 = vrot.slane %v5618, 2
    %v5620 = vadd.f32 %v5618, %v5619
    %v5621 = vrot.slane %v5620, 1
    %v5622 = vadd.f32 %v5620, %v5621
    %v5623 = vmul.f32 %v5475, 0.0078125
    %v5624 = vmul.f32 %v5496, 0.0078125
    %v5625 = vmul.f32 %v5517, 0.0078125
    %v5626 = vmul.f32 %v5538, 0.0078125
    %v5627 = vmul.f32 %v5559, 0.0078125
    %v5628 = vmul.f32 %v5580, 0.0078125
    %v5629 = vmul.f32 %v5601, 0.0078125
    %v5630 = vmul.f32 %v5622, 0.0078125
    %v5631 = vmul.f32 %v5319, %v5319
    %v5632 = vmul.f32 %v5320, %v5320
    %v5633 = vmul.f32 %v5321, %v5321
    %v5634 = vmul.f32 %v5322, %v5322
    %v5635 = vmul.f32 %v5323, %v5323
    %v5636 = vmul.f32 %v5324, %v5324
    %v5637 = vmul.f32 %v5325, %v5325
    %v5638 = vmul.f32 %v5326, %v5326
    %v5639 = vsub.f32 %v5623, %v5631
    %v5640 = vsub.f32 %v5624, %v5632
    %v5641 = vsub.f32 %v5625, %v5633
    %v5642 = vsub.f32 %v5626, %v5634
    %v5643 = vsub.f32 %v5627, %v5635
    %v5644 = vsub.f32 %v5628, %v5636
    %v5645 = vsub.f32 %v5629, %v5637
    %v5646 = vsub.f32 %v5630, %v5638
    %v5647 = vadd.f32 %v5639, 0.8
    %v5648 = vadd.f32 %v5640, 0.8
    %v5649 = vadd.f32 %v5641, 0.8
    %v5650 = vadd.f32 %v5642, 0.8
    %v5651 = vadd.f32 %v5643, 0.8
    %v5652 = vadd.f32 %v5644, 0.8
    %v5653 = vadd.f32 %v5645, 0.8
    %v5654 = vadd.f32 %v5646, 0.8
    %v5655 = vrsqrt.pop %v5647
    %v5656 = vrsqrt.pop %v5648
    %v5657 = vrsqrt.pop %v5649
    %v5658 = vrsqrt.pop %v5650
    %v5659 = vrsqrt.pop %v5651
    %v5660 = vrsqrt.pop %v5652
    %v5661 = vrsqrt.pop %v5653
    %v5662 = vrsqrt.pop %v5654
    %v5671 = vcombine.low %v5655, %v5656
    %v5672 = vcombine.low %v5657, %v5658
    %v5673 = vcombine.low %v5659, %v5660
    %v5674 = vcombine.low %v5661, %v5662
    %v5676 = vunpack.c.l.s4 1966171168
    %v5677 = vunpack.c.0.s8 %v5676
    %v5678 = vlaneseq
    %v5679 = vshrl.u32 %v5678, 7
    %v5680 = vsub.s32 %v5677, %v5679
    %v5681 = vrot.slane %v5671, %v5680
    %v5683 = vunpack.c.l.s4 1966171168
    %v5684 = vunpack.c.0.s8 %v5683
    %v5685 = vlaneseq
    %v5686 = vshrl.u32 %v5685, 7
    %v5687 = vsub.s32 %v5684, %v5686
    %v5688 = vrot.slane %v5672, %v5687
    %v5690 = vunpack.c.l.s4 1966171168
    %v5691 = vunpack.c.0.s8 %v5690
    %v5692 = vlaneseq
    %v5693 = vshrl.u32 %v5692, 7
    %v5694 = vsub.s32 %v5691, %v5693
    %v5695 = vrot.slane %v5673, %v5694
    %v5697 = vunpack.c.l.s4 1966171168
    %v5698 = vunpack.c.0.s8 %v5697
    %v5699 = vlaneseq
    %v5700 = vshrl.u32 %v5699, 7
    %v5701 = vsub.s32 %v5698, %v5700
    %v5702 = vrot.slane %v5674, %v5701
    %v5703 = vcombine.low %v5681, %v5688
    %v5704 = vcombine.low %v5695, %v5702
    %v5706 = vunpack.c.l.s4 1966171168
    %v5707 = vunpack.c.0.s8 %v5706
    %v5708 = vlaneseq
    %v5709 = vshrl.u32 %v5708, 7
    %v5710 = vsub.s32 %v5707, %v5709
    %v5711 = vrot.slane %v5703, %v5710
    %v5713 = vunpack.c.l.s4 1966171168
    %v5714 = vunpack.c.0.s8 %v5713
    %v5715 = vlaneseq
    %v5716 = vshrl.u32 %v5715, 7
    %v5717 = vsub.s32 %v5714, %v5716
    %v5718 = vrot.slane %v5704, %v5717
    %v5719 = vcombine.low %v5711, %v5718
    %v5721 = vmul.f32 %v5149, %v5719
    %v5723 = vlaneseq
    %v5724 = vshrl.u32 %v5723, 7
    %v5725 = vsub.s32 0, %v5724
    %v5726 = vrot.slane %v5721, %v5725
    %v5727 = vlaneseq
    %v5728 = vshrl.u32 %v5727, 7
    %v5729 = vsub.s32 1, %v5728
    %v5730 = vrot.slane %v5721, %v5729
    %v5731 = vlaneseq
    %v5732 = vshrl.u32 %v5731, 7
    %v5733 = vsub.s32 2, %v5732
    %v5734 = vrot.slane %v5721, %v5733
    %v5735 = vlaneseq
    %v5736 = vshrl.u32 %v5735, 7
    %v5737 = vsub.s32 3, %v5736
    %v5738 = vrot.slane %v5721, %v5737
    %v5739 = vlaneseq
    %v5740 = vshrl.u32 %v5739, 7
    %v5741 = vsub.s32 4, %v5740
    %v5742 = vrot.slane %v5721, %v5741
    %v5743 = vlaneseq
    %v5744 = vshrl.u32 %v5743, 7
    %v5745 = vsub.s32 5, %v5744
    %v5746 = vrot.slane %v5721, %v5745
    %v5747 = vlaneseq
    %v5748 = vshrl.u32 %v5747, 7
    %v5749 = vsub.s32 6, %v5748
    %v5750 = vrot.slane %v5721, %v5749
    %v5751 = vlaneseq
    %v5752 = vshrl.u32 %v5751, 7
    %v5753 = vsub.s32 7, %v5752
    %v5754 = vrot.slane %v5721, %v5753
    %v5763 = vmul.f32 %v5319, %v5726
    %v5764 = vmul.f32 %v5320, %v5730
    %v5765 = vmul.f32 %v5321, %v5734
    %v5766 = vmul.f32 %v5322, %v5738
    %v5767 = vmul.f32 %v5323, %v5742
    %v5768 = vmul.f32 %v5324, %v5746
    %v5769 = vmul.f32 %v5325, %v5750
    %v5770 = vmul.f32 %v5326, %v5754
    %v5779 = vcombine.low %v5763, %v5764
    %v5780 = vcombine.low %v5765, %v5766
    %v5781 = vcombine.low %v5767, %v5768
    %v5782 = vcombine.low %v5769, %v5770
    %v5784 = vunpack.c.l.s4 1966171168
    %v5785 = vunpack.c.0.s8 %v5784
    %v5786 = vlaneseq
    %v5787 = vshrl.u32 %v5786, 7
    %v5788 = vsub.s32 %v5785, %v5787
    %v5789 = vrot.slane %v5779, %v5788
    %v5791 = vunpack.c.l.s4 1966171168
    %v5792 = vunpack.c.0.s8 %v5791
    %v5793 = vlaneseq
    %v5794 = vshrl.u32 %v5793, 7
    %v5795 = vsub.s32 %v5792, %v5794
    %v5796 = vrot.slane %v5780, %v5795
    %v5798 = vunpack.c.l.s4 1966171168
    %v5799 = vunpack.c.0.s8 %v5798
    %v5800 = vlaneseq
    %v5801 = vshrl.u32 %v5800, 7
    %v5802 = vsub.s32 %v5799, %v5801
    %v5803 = vrot.slane %v5781, %v5802
    %v5805 = vunpack.c.l.s4 1966171168
    %v5806 = vunpack.c.0.s8 %v5805
    %v5807 = vlaneseq
    %v5808 = vshrl.u32 %v5807, 7
    %v5809 = vsub.s32 %v5806, %v5808
    %v5810 = vrot.slane %v5782, %v5809
    %v5811 = vcombine.low %v5789, %v5796
    %v5812 = vcombine.low %v5803, %v5810
    %v5814 = vunpack.c.l.s4 1966171168
    %v5815 = vunpack.c.0.s8 %v5814
    %v5816 = vlaneseq
    %v5817 = vshrl.u32 %v5816, 7
    %v5818 = vsub.s32 %v5815, %v5817
    %v5819 = vrot.slane %v5811, %v5818
    %v5821 = vunpack.c.l.s4 1966171168
    %v5822 = vunpack.c.0.s8 %v5821
    %v5823 = vlaneseq
    %v5824 = vshrl.u32 %v5823, 7
    %v5825 = vsub.s32 %v5822, %v5824
    %v5826 = vrot.slane %v5812, %v5825
    %v5827 = vcombine.low %v5819, %v5826
    %v5829 = vsub.f32 %v5150, %v5827
    %v5830 = vmul.f32 %v4393, %v5726
    %v5831 = vmul.f32 %v4395, %v5730
    %v5832 = vmul.f32 %v4619, %v5734
    %v5833 = vmul.f32 %v4621, %v5738
    %v5834 = vmul.f32 %v4845, %v5742
    %v5835 = vmul.f32 %v4847, %v5746
    %v5836 = vmul.f32 %v5071, %v5750
    %v5837 = vmul.f32 %v5073, %v5754
    %v5838 = vmul.f32 %v4397, %v5726
    %v5839 = vmul.f32 %v4399, %v5730
    %v5840 = vmul.f32 %v4623, %v5734
    %v5841 = vmul.f32 %v4625, %v5738
    %v5842 = vmul.f32 %v4849, %v5742
    %v5843 = vmul.f32 %v4851, %v5746
    %v5844 = vmul.f32 %v5075, %v5750
    %v5845 = vmul.f32 %v5077, %v5754
    %v5846 = vmul.f32 %v4403, %v5726
    %v5847 = vmul.f32 %v4405, %v5730
    %v5848 = vmul.f32 %v4629, %v5734
    %v5849 = vmul.f32 %v4631, %v5738
    %v5850 = vmul.f32 %v4855, %v5742
    %v5851 = vmul.f32 %v4857, %v5746
    %v5852 = vmul.f32 %v5081, %v5750
    %v5853 = vmul.f32 %v5083, %v5754
    %v5854 = vmul.f32 %v4407, %v5726
    %v5855 = vmul.f32 %v4409, %v5730
    %v5856 = vmul.f32 %v4633, %v5734
    %v5857 = vmul.f32 %v4635, %v5738
    %v5858 = vmul.f32 %v4859, %v5742
    %v5859 = vmul.f32 %v4861, %v5746
    %v5860 = vmul.f32 %v5085, %v5750
    %v5861 = vmul.f32 %v5087, %v5754
    %v5862 = vmul.f32 %v4413, %v5726
    %v5863 = vmul.f32 %v4415, %v5730
    %v5864 = vmul.f32 %v4639, %v5734
    %v5865 = vmul.f32 %v4641, %v5738
    %v5866 = vmul.f32 %v4865, %v5742
    %v5867 = vmul.f32 %v4867, %v5746
    %v5868 = vmul.f32 %v5091, %v5750
    %v5869 = vmul.f32 %v5093, %v5754
    %v5870 = vmul.f32 %v4417, %v5726
    %v5871 = vmul.f32 %v4419, %v5730
    %v5872 = vmul.f32 %v4643, %v5734
    %v5873 = vmul.f32 %v4645, %v5738
    %v5874 = vmul.f32 %v4869, %v5742
    %v5875 = vmul.f32 %v4871, %v5746
    %v5876 = vmul.f32 %v5095, %v5750
    %v5877 = vmul.f32 %v5097, %v5754
    %v5878 = vmul.f32 %v4423, %v5726
    %v5879 = vmul.f32 %v4425, %v5730
    %v5880 = vmul.f32 %v4649, %v5734
    %v5881 = vmul.f32 %v4651, %v5738
    %v5882 = vmul.f32 %v4875, %v5742
    %v5883 = vmul.f32 %v4877, %v5746
    %v5884 = vmul.f32 %v5101, %v5750
    %v5885 = vmul.f32 %v5103, %v5754
    %v5886 = vmul.f32 %v4427, %v5726
    %v5887 = vmul.f32 %v4429, %v5730
    %v5888 = vmul.f32 %v4653, %v5734
    %v5889 = vmul.f32 %v4655, %v5738
    %v5890 = vmul.f32 %v4879, %v5742
    %v5891 = vmul.f32 %v4881, %v5746
    %v5892 = vmul.f32 %v5105, %v5750
    %v5893 = vmul.f32 %v5107, %v5754
    %v5894 = vmul.f32 %v4433, %v5726
    %v5895 = vmul.f32 %v4435, %v5730
    %v5896 = vmul.f32 %v4659, %v5734
    %v5897 = vmul.f32 %v4661, %v5738
    %v5898 = vmul.f32 %v4885, %v5742
    %v5899 = vmul.f32 %v4887, %v5746
    %v5900 = vmul.f32 %v5111, %v5750
    %v5901 = vmul.f32 %v5113, %v5754
    %v5902 = vmul.f32 %v4437, %v5726
    %v5903 = vmul.f32 %v4439, %v5730
    %v5904 = vmul.f32 %v4663, %v5734
    %v5905 = vmul.f32 %v4665, %v5738
    %v5906 = vmul.f32 %v4889, %v5742
    %v5907 = vmul.f32 %v4891, %v5746
    %v5908 = vmul.f32 %v5115, %v5750
    %v5909 = vmul.f32 %v5117, %v5754
    %v5910 = vmul.f32 %v4443, %v5726
    %v5911 = vmul.f32 %v4445, %v5730
    %v5912 = vmul.f32 %v4669, %v5734
    %v5913 = vmul.f32 %v4671, %v5738
    %v5914 = vmul.f32 %v4895, %v5742
    %v5915 = vmul.f32 %v4897, %v5746
    %v5916 = vmul.f32 %v5121, %v5750
    %v5917 = vmul.f32 %v5123, %v5754
    %v5918 = vmul.f32 %v4447, %v5726
    %v5919 = vmul.f32 %v4449, %v5730
    %v5920 = vmul.f32 %v4673, %v5734
    %v5921 = vmul.f32 %v4675, %v5738
    %v5922 = vmul.f32 %v4899, %v5742
    %v5923 = vmul.f32 %v4901, %v5746
    %v5924 = vmul.f32 %v5125, %v5750
    %v5925 = vmul.f32 %v5127, %v5754
    %v5926 = vmul.f32 %v4453, %v5726
    %v5927 = vmul.f32 %v4455, %v5730
    %v5928 = vmul.f32 %v4679, %v5734
    %v5929 = vmul.f32 %v4681, %v5738
    %v5930 = vmul.f32 %v4905, %v5742
    %v5931 = vmul.f32 %v4907, %v5746
    %v5932 = vmul.f32 %v5131, %v5750
    %v5933 = vmul.f32 %v5133, %v5754
    %v5934 = vmul.f32 %v4457, %v5726
    %v5935 = vmul.f32 %v4459, %v5730
    %v5936 = vmul.f32 %v4683, %v5734
    %v5937 = vmul.f32 %v4685, %v5738
    %v5938 = vmul.f32 %v4909, %v5742
    %v5939 = vmul.f32 %v4911, %v5746
    %v5940 = vmul.f32 %v5135, %v5750
    %v5941 = vmul.f32 %v5137, %v5754
    %v5942 = vmul.f32 %v4463, %v5726
    %v5943 = vmul.f32 %v4465, %v5730
    %v5944 = vmul.f32 %v4689, %v5734
    %v5945 = vmul.f32 %v4691, %v5738
    %v5946 = vmul.f32 %v4915, %v5742
    %v5947 = vmul.f32 %v4917, %v5746
    %v5948 = vmul.f32 %v5141, %v5750
    %v5949 = vmul.f32 %v5143, %v5754
    %v5950 = vmul.f32 %v4467, %v5726
    %v5951 = vmul.f32 %v4469, %v5730
    %v5952 = vmul.f32 %v4693, %v5734
    %v5953 = vmul.f32 %v4695, %v5738
    %v5954 = vmul.f32 %v4919, %v5742
    %v5955 = vmul.f32 %v4921, %v5746
    %v5956 = vmul.f32 %v5145, %v5750
    %v5957 = vmul.f32 %v5147, %v5754
    %v5959 = vlaneseq
    %v5960 = vshrl.u32 %v5959, 7
    %v5961 = vsub.s32 0, %v5960
    %v5962 = vrot.slane %v5829, %v5961
    %v5963 = vlaneseq
    %v5964 = vshrl.u32 %v5963, 7
    %v5965 = vsub.s32 1, %v5964
    %v5966 = vrot.slane %v5829, %v5965
    %v5967 = vlaneseq
    %v5968 = vshrl.u32 %v5967, 7
    %v5969 = vsub.s32 2, %v5968
    %v5970 = vrot.slane %v5829, %v5969
    %v5971 = vlaneseq
    %v5972 = vshrl.u32 %v5971, 7
    %v5973 = vsub.s32 3, %v5972
    %v5974 = vrot.slane %v5829, %v5973
    %v5975 = vlaneseq
    %v5976 = vshrl.u32 %v5975, 7
    %v5977 = vsub.s32 4, %v5976
    %v5978 = vrot.slane %v5829, %v5977
    %v5979 = vlaneseq
    %v5980 = vshrl.u32 %v5979, 7
    %v5981 = vsub.s32 5, %v5980
    %v5982 = vrot.slane %v5829, %v5981
    %v5983 = vlaneseq
    %v5984 = vshrl.u32 %v5983, 7
    %v5985 = vsub.s32 6, %v5984
    %v5986 = vrot.slane %v5829, %v5985
    %v5987 = vlaneseq
    %v5988 = vshrl.u32 %v5987, 7
    %v5989 = vsub.s32 7, %v5988
    %v5990 = vrot.slane %v5829, %v5989
    %v5999 = vadd.f32 %v5830, %v5962
    %v6000 = vadd.f32 %v5831, %v5966
    %v6001 = vadd.f32 %v5832, %v5970
    %v6002 = vadd.f32 %v5833, %v5974
    %v6003 = vadd.f32 %v5834, %v5978
    %v6004 = vadd.f32 %v5835, %v5982
    %v6005 = vadd.f32 %v5836, %v5986
    %v6006 = vadd.f32 %v5837, %v5990
    %v6007 = vadd.f32 %v5838, %v5962
    %v6008 = vadd.f32 %v5839, %v5966
    %v6009 = vadd.f32 %v5840, %v5970
    %v6010 = vadd.f32 %v5841, %v5974
    %v6011 = vadd.f32 %v5842, %v5978
    %v6012 = vadd.f32 %v5843, %v5982
    %v6013 = vadd.f32 %v5844, %v5986
    %v6014 = vadd.f32 %v5845, %v5990
    %v6015 = vadd.f32 %v5846, %v5962
    %v6016 = vadd.f32 %v5847, %v5966
    %v6017 = vadd.f32 %v5848, %v5970
    %v6018 = vadd.f32 %v5849, %v5974
    %v6019 = vadd.f32 %v5850, %v5978
    %v6020 = vadd.f32 %v5851, %v5982
    %v6021 = vadd.f32 %v5852, %v5986
    %v6022 = vadd.f32 %v5853, %v5990
    %v6023 = vadd.f32 %v5854, %v5962
    %v6024 = vadd.f32 %v5855, %v5966
    %v6025 = vadd.f32 %v5856, %v5970
    %v6026 = vadd.f32 %v5857, %v5974
    %v6027 = vadd.f32 %v5858, %v5978
    %v6028 = vadd.f32 %v5859, %v5982
    %v6029 = vadd.f32 %v5860, %v5986
    %v6030 = vadd.f32 %v5861, %v5990
    %v6031 = vadd.f32 %v5862, %v5962
    %v6032 = vadd.f32 %v5863, %v5966
    %v6033 = vadd.f32 %v5864, %v5970
    %v6034 = vadd.f32 %v5865, %v5974
    %v6035 = vadd.f32 %v5866, %v5978
    %v6036 = vadd.f32 %v5867, %v5982
    %v6037 = vadd.f32 %v5868, %v5986
    %v6038 = vadd.f32 %v5869, %v5990
    %v6039 = vadd.f32 %v5870, %v5962
    %v6040 = vadd.f32 %v5871, %v5966
    %v6041 = vadd.f32 %v5872, %v5970
    %v6042 = vadd.f32 %v5873, %v5974
    %v6043 = vadd.f32 %v5874, %v5978
    %v6044 = vadd.f32 %v5875, %v5982
    %v6045 = vadd.f32 %v5876, %v5986
    %v6046 = vadd.f32 %v5877, %v5990
    %v6047 = vadd.f32 %v5878, %v5962
    %v6048 = vadd.f32 %v5879, %v5966
    %v6049 = vadd.f32 %v5880, %v5970
    %v6050 = vadd.f32 %v5881, %v5974
    %v6051 = vadd.f32 %v5882, %v5978
    %v6052 = vadd.f32 %v5883, %v5982
    %v6053 = vadd.f32 %v5884, %v5986
    %v6054 = vadd.f32 %v5885, %v5990
    %v6055 = vadd.f32 %v5886, %v5962
    %v6056 = vadd.f32 %v5887, %v5966
    %v6057 = vadd.f32 %v5888, %v5970
    %v6058 = vadd.f32 %v5889, %v5974
    %v6059 = vadd.f32 %v5890, %v5978
    %v6060 = vadd.f32 %v5891, %v5982
    %v6061 = vadd.f32 %v5892, %v5986
    %v6062 = vadd.f32 %v5893, %v5990
    %v6063 = vadd.f32 %v5894, %v5962
    %v6064 = vadd.f32 %v5895, %v5966
    %v6065 = vadd.f32 %v5896, %v5970
    %v6066 = vadd.f32 %v5897, %v5974
    %v6067 = vadd.f32 %v5898, %v5978
    %v6068 = vadd.f32 %v5899, %v5982
    %v6069 = vadd.f32 %v5900, %v5986
    %v6070 = vadd.f32 %v5901, %v5990
    %v6071 = vadd.f32 %v5902, %v5962
    %v6072 = vadd.f32 %v5903, %v5966
    %v6073 = vadd.f32 %v5904, %v5970
    %v6074 = vadd.f32 %v5905, %v5974
    %v6075 = vadd.f32 %v5906, %v5978
    %v6076 = vadd.f32 %v5907, %v5982
    %v6077 = vadd.f32 %v5908, %v5986
    %v6078 = vadd.f32 %v5909, %v5990
    %v6079 = vadd.f32 %v5910, %v5962
    %v6080 = vadd.f32 %v5911, %v5966
    %v6081 = vadd.f32 %v5912, %v5970
    %v6082 = vadd.f32 %v5913, %v5974
    %v6083 = vadd.f32 %v5914, %v5978
    %v6084 = vadd.f32 %v5915, %v5982
    %v6085 = vadd.f32 %v5916, %v5986
    %v6086 = vadd.f32 %v5917, %v5990
    %v6087 = vadd.f32 %v5918, %v5962
    %v6088 = vadd.f32 %v5919, %v5966
    %v6089 = vadd.f32 %v5920, %v5970
    %v6090 = vadd.f32 %v5921, %v5974
    %v6091 = vadd.f32 %v5922, %v5978
    %v6092 = vadd.f32 %v5923, %v5982
    %v6093 = vadd.f32 %v5924, %v5986
    %v6094 = vadd.f32 %v5925, %v5990
    %v6095 = vadd.f32 %v5926, %v5962
    %v6096 = vadd.f32 %v5927, %v5966
    %v6097 = vadd.f32 %v5928, %v5970
    %v6098 = vadd.f32 %v5929, %v5974
    %v6099 = vadd.f32 %v5930, %v5978
    %v6100 = vadd.f32 %v5931, %v5982
    %v6101 = vadd.f32 %v5932, %v5986
    %v6102 = vadd.f32 %v5933, %v5990
    %v6103 = vadd.f32 %v5934, %v5962
    %v6104 = vadd.f32 %v5935, %v5966
    %v6105 = vadd.f32 %v5936, %v5970
    %v6106 = vadd.f32 %v5937, %v5974
    %v6107 = vadd.f32 %v5938, %v5978
    %v6108 = vadd.f32 %v5939, %v5982
    %v6109 = vadd.f32 %v5940, %v5986
    %v6110 = vadd.f32 %v5941, %v5990
    %v6111 = vadd.f32 %v5942, %v5962
    %v6112 = vadd.f32 %v5943, %v5966
    %v6113 = vadd.f32 %v5944, %v5970
    %v6114 = vadd.f32 %v5945, %v5974
    %v6115 = vadd.f32 %v5946, %v5978
    %v6116 = vadd.f32 %v5947, %v5982
    %v6117 = vadd.f32 %v5948, %v5986
    %v6118 = vadd.f32 %v5949, %v5990
    %v6119 = vadd.f32 %v5950, %v5962
    %v6120 = vadd.f32 %v5951, %v5966
    %v6121 = vadd.f32 %v5952, %v5970
    %v6122 = vadd.f32 %v5953, %v5974
    %v6123 = vadd.f32 %v5954, %v5978
    %v6124 = vadd.f32 %v5955, %v5982
    %v6125 = vadd.f32 %v5956, %v5986
    %v6126 = vadd.f32 %v5957, %v5990
    %vm6127 = vcmp.gt.f32.partialorder %v5999, 0.0
    %vm6128 = vcmp.gt.f32.partialorder %v6000, 0.0
    %vm6129 = vcmp.gt.f32.partialorder %v6001, 0.0
    %vm6130 = vcmp.gt.f32.partialorder %v6002, 0.0
    %vm6131 = vcmp.gt.f32.partialorder %v6003, 0.0
    %vm6132 = vcmp.gt.f32.partialorder %v6004, 0.0
    %vm6133 = vcmp.gt.f32.partialorder %v6005, 0.0
    %vm6134 = vcmp.gt.f32.partialorder %v6006, 0.0
    %vm6135 = vcmp.gt.f32.partialorder %v6007, 0.0
    %vm6136 = vcmp.gt.f32.partialorder %v6008, 0.0
    %vm6137 = vcmp.gt.f32.partialorder %v6009, 0.0
    %vm6138 = vcmp.gt.f32.partialorder %v6010, 0.0
    %vm6139 = vcmp.gt.f32.partialorder %v6011, 0.0
    %vm6140 = vcmp.gt.f32.partialorder %v6012, 0.0
    %vm6141 = vcmp.gt.f32.partialorder %v6013, 0.0
    %vm6142 = vcmp.gt.f32.partialorder %v6014, 0.0
    %vm6143 = vcmp.gt.f32.partialorder %v6015, 0.0
    %vm6144 = vcmp.gt.f32.partialorder %v6016, 0.0
    %vm6145 = vcmp.gt.f32.partialorder %v6017, 0.0
    %vm6146 = vcmp.gt.f32.partialorder %v6018, 0.0
    %vm6147 = vcmp.gt.f32.partialorder %v6019, 0.0
    %vm6148 = vcmp.gt.f32.partialorder %v6020, 0.0
    %vm6149 = vcmp.gt.f32.partialorder %v6021, 0.0
    %vm6150 = vcmp.gt.f32.partialorder %v6022, 0.0
    %vm6151 = vcmp.gt.f32.partialorder %v6023, 0.0
    %vm6152 = vcmp.gt.f32.partialorder %v6024, 0.0
    %vm6153 = vcmp.gt.f32.partialorder %v6025, 0.0
    %vm6154 = vcmp.gt.f32.partialorder %v6026, 0.0
    %vm6155 = vcmp.gt.f32.partialorder %v6027, 0.0
    %vm6156 = vcmp.gt.f32.partialorder %v6028, 0.0
    %vm6157 = vcmp.gt.f32.partialorder %v6029, 0.0
    %vm6158 = vcmp.gt.f32.partialorder %v6030, 0.0
    %vm6159 = vcmp.gt.f32.partialorder %v6031, 0.0
    %vm6160 = vcmp.gt.f32.partialorder %v6032, 0.0
    %vm6161 = vcmp.gt.f32.partialorder %v6033, 0.0
    %vm6162 = vcmp.gt.f32.partialorder %v6034, 0.0
    %vm6163 = vcmp.gt.f32.partialorder %v6035, 0.0
    %vm6164 = vcmp.gt.f32.partialorder %v6036, 0.0
    %vm6165 = vcmp.gt.f32.partialorder %v6037, 0.0
    %vm6166 = vcmp.gt.f32.partialorder %v6038, 0.0
    %vm6167 = vcmp.gt.f32.partialorder %v6039, 0.0
    %vm6168 = vcmp.gt.f32.partialorder %v6040, 0.0
    %vm6169 = vcmp.gt.f32.partialorder %v6041, 0.0
    %vm6170 = vcmp.gt.f32.partialorder %v6042, 0.0
    %vm6171 = vcmp.gt.f32.partialorder %v6043, 0.0
    %vm6172 = vcmp.gt.f32.partialorder %v6044, 0.0
    %vm6173 = vcmp.gt.f32.partialorder %v6045, 0.0
    %vm6174 = vcmp.gt.f32.partialorder %v6046, 0.0
    %vm6175 = vcmp.gt.f32.partialorder %v6047, 0.0
    %vm6176 = vcmp.gt.f32.partialorder %v6048, 0.0
    %vm6177 = vcmp.gt.f32.partialorder %v6049, 0.0
    %vm6178 = vcmp.gt.f32.partialorder %v6050, 0.0
    %vm6179 = vcmp.gt.f32.partialorder %v6051, 0.0
    %vm6180 = vcmp.gt.f32.partialorder %v6052, 0.0
    %vm6181 = vcmp.gt.f32.partialorder %v6053, 0.0
    %vm6182 = vcmp.gt.f32.partialorder %v6054, 0.0
    %vm6183 = vcmp.gt.f32.partialorder %v6055, 0.0
    %vm6184 = vcmp.gt.f32.partialorder %v6056, 0.0
    %vm6185 = vcmp.gt.f32.partialorder %v6057, 0.0
    %vm6186 = vcmp.gt.f32.partialorder %v6058, 0.0
    %vm6187 = vcmp.gt.f32.partialorder %v6059, 0.0
    %vm6188 = vcmp.gt.f32.partialorder %v6060, 0.0
    %vm6189 = vcmp.gt.f32.partialorder %v6061, 0.0
    %vm6190 = vcmp.gt.f32.partialorder %v6062, 0.0
    %vm6191 = vcmp.gt.f32.partialorder %v6063, 0.0
    %vm6192 = vcmp.gt.f32.partialorder %v6064, 0.0
    %vm6193 = vcmp.gt.f32.partialorder %v6065, 0.0
    %vm6194 = vcmp.gt.f32.partialorder %v6066, 0.0
    %vm6195 = vcmp.gt.f32.partialorder %v6067, 0.0
    %vm6196 = vcmp.gt.f32.partialorder %v6068, 0.0
    %vm6197 = vcmp.gt.f32.partialorder %v6069, 0.0
    %vm6198 = vcmp.gt.f32.partialorder %v6070, 0.0
    %vm6199 = vcmp.gt.f32.partialorder %v6071, 0.0
    %vm6200 = vcmp.gt.f32.partialorder %v6072, 0.0
    %vm6201 = vcmp.gt.f32.partialorder %v6073, 0.0
    %vm6202 = vcmp.gt.f32.partialorder %v6074, 0.0
    %vm6203 = vcmp.gt.f32.partialorder %v6075, 0.0
    %vm6204 = vcmp.gt.f32.partialorder %v6076, 0.0
    %vm6205 = vcmp.gt.f32.partialorder %v6077, 0.0
    %vm6206 = vcmp.gt.f32.partialorder %v6078, 0.0
    %vm6207 = vcmp.gt.f32.partialorder %v6079, 0.0
    %vm6208 = vcmp.gt.f32.partialorder %v6080, 0.0
    %vm6209 = vcmp.gt.f32.partialorder %v6081, 0.0
    %vm6210 = vcmp.gt.f32.partialorder %v6082, 0.0
    %vm6211 = vcmp.gt.f32.partialorder %v6083, 0.0
    %vm6212 = vcmp.gt.f32.partialorder %v6084, 0.0
    %vm6213 = vcmp.gt.f32.partialorder %v6085, 0.0
    %vm6214 = vcmp.gt.f32.partialorder %v6086, 0.0
    %vm6215 = vcmp.gt.f32.partialorder %v6087, 0.0
    %vm6216 = vcmp.gt.f32.partialorder %v6088, 0.0
    %vm6217 = vcmp.gt.f32.partialorder %v6089, 0.0
    %vm6218 = vcmp.gt.f32.partialorder %v6090, 0.0
    %vm6219 = vcmp.gt.f32.partialorder %v6091, 0.0
    %vm6220 = vcmp.gt.f32.partialorder %v6092, 0.0
    %vm6221 = vcmp.gt.f32.partialorder %v6093, 0.0
    %vm6222 = vcmp.gt.f32.partialorder %v6094, 0.0
    %vm6223 = vcmp.gt.f32.partialorder %v6095, 0.0
    %vm6224 = vcmp.gt.f32.partialorder %v6096, 0.0
    %vm6225 = vcmp.gt.f32.partialorder %v6097, 0.0
    %vm6226 = vcmp.gt.f32.partialorder %v6098, 0.0
    %vm6227 = vcmp.gt.f32.partialorder %v6099, 0.0
    %vm6228 = vcmp.gt.f32.partialorder %v6100, 0.0
    %vm6229 = vcmp.gt.f32.partialorder %v6101, 0.0
    %vm6230 = vcmp.gt.f32.partialorder %v6102, 0.0
    %vm6231 = vcmp.gt.f32.partialorder %v6103, 0.0
    %vm6232 = vcmp.gt.f32.partialorder %v6104, 0.0
    %vm6233 = vcmp.gt.f32.partialorder %v6105, 0.0
    %vm6234 = vcmp.gt.f32.partialorder %v6106, 0.0
    %vm6235 = vcmp.gt.f32.partialorder %v6107, 0.0
    %vm6236 = vcmp.gt.f32.partialorder %v6108, 0.0
    %vm6237 = vcmp.gt.f32.partialorder %v6109, 0.0
    %vm6238 = vcmp.gt.f32.partialorder %v6110, 0.0
    %vm6239 = vcmp.gt.f32.partialorder %v6111, 0.0
    %vm6240 = vcmp.gt.f32.partialorder %v6112, 0.0
    %vm6241 = vcmp.gt.f32.partialorder %v6113, 0.0
    %vm6242 = vcmp.gt.f32.partialorder %v6114, 0.0
    %vm6243 = vcmp.gt.f32.partialorder %v6115, 0.0
    %vm6244 = vcmp.gt.f32.partialorder %v6116, 0.0
    %vm6245 = vcmp.gt.f32.partialorder %v6117, 0.0
    %vm6246 = vcmp.gt.f32.partialorder %v6118, 0.0
    %vm6247 = vcmp.gt.f32.partialorder %v6119, 0.0
    %vm6248 = vcmp.gt.f32.partialorder %v6120, 0.0
    %vm6249 = vcmp.gt.f32.partialorder %v6121, 0.0
    %vm6250 = vcmp.gt.f32.partialorder %v6122, 0.0
    %vm6251 = vcmp.gt.f32.partialorder %v6123, 0.0
    %vm6252 = vcmp.gt.f32.partialorder %v6124, 0.0
    %vm6253 = vcmp.gt.f32.partialorder %v6125, 0.0
    %vm6254 = vcmp.gt.f32.partialorder %v6126, 0.0
    %v6255 = vmul.f32 %v5999, 0.2
    %v6256 = vmul.f32 %v6000, 0.2
    %v6257 = vmul.f32 %v6001, 0.2
    %v6258 = vmul.f32 %v6002, 0.2
    %v6259 = vmul.f32 %v6003, 0.2
    %v6260 = vmul.f32 %v6004, 0.2
    %v6261 = vmul.f32 %v6005, 0.2
    %v6262 = vmul.f32 %v6006, 0.2
    %v6263 = vmul.f32 %v6007, 0.2
    %v6264 = vmul.f32 %v6008, 0.2
    %v6265 = vmul.f32 %v6009, 0.2
    %v6266 = vmul.f32 %v6010, 0.2
    %v6267 = vmul.f32 %v6011, 0.2
    %v6268 = vmul.f32 %v6012, 0.2
    %v6269 = vmul.f32 %v6013, 0.2
    %v6270 = vmul.f32 %v6014, 0.2
    %v6271 = vmul.f32 %v6015, 0.2
    %v6272 = vmul.f32 %v6016, 0.2
    %v6273 = vmul.f32 %v6017, 0.2
    %v6274 = vmul.f32 %v6018, 0.2
    %v6275 = vmul.f32 %v6019, 0.2
    %v6276 = vmul.f32 %v6020, 0.2
    %v6277 = vmul.f32 %v6021, 0.2
    %v6278 = vmul.f32 %v6022, 0.2
    %v6279 = vmul.f32 %v6023, 0.2
    %v6280 = vmul.f32 %v6024, 0.2
    %v6281 = vmul.f32 %v6025, 0.2
    %v6282 = vmul.f32 %v6026, 0.2
    %v6283 = vmul.f32 %v6027, 0.2
    %v6284 = vmul.f32 %v6028, 0.2
    %v6285 = vmul.f32 %v6029, 0.2
    %v6286 = vmul.f32 %v6030, 0.2
    %v6287 = vmul.f32 %v6031, 0.2
    %v6288 = vmul.f32 %v6032, 0.2
    %v6289 = vmul.f32 %v6033, 0.2
    %v6290 = vmul.f32 %v6034, 0.2
    %v6291 = vmul.f32 %v6035, 0.2
    %v6292 = vmul.f32 %v6036, 0.2
    %v6293 = vmul.f32 %v6037, 0.2
    %v6294 = vmul.f32 %v6038, 0.2
    %v6295 = vmul.f32 %v6039, 0.2
    %v6296 = vmul.f32 %v6040, 0.2
    %v6297 = vmul.f32 %v6041, 0.2
    %v6298 = vmul.f32 %v6042, 0.2
    %v6299 = vmul.f32 %v6043, 0.2
    %v6300 = vmul.f32 %v6044, 0.2
    %v6301 = vmul.f32 %v6045, 0.2
    %v6302 = vmul.f32 %v6046, 0.2
    %v6303 = vmul.f32 %v6047, 0.2
    %v6304 = vmul.f32 %v6048, 0.2
    %v6305 = vmul.f32 %v6049, 0.2
    %v6306 = vmul.f32 %v6050, 0.2
    %v6307 = vmul.f32 %v6051, 0.2
    %v6308 = vmul.f32 %v6052, 0.2
    %v6309 = vmul.f32 %v6053, 0.2
    %v6310 = vmul.f32 %v6054, 0.2
    %v6311 = vmul.f32 %v6055, 0.2
    %v6312 = vmul.f32 %v6056, 0.2
    %v6313 = vmul.f32 %v6057, 0.2
    %v6314 = vmul.f32 %v6058, 0.2
    %v6315 = vmul.f32 %v6059, 0.2
    %v6316 = vmul.f32 %v6060, 0.2
    %v6317 = vmul.f32 %v6061, 0.2
    %v6318 = vmul.f32 %v6062, 0.2
    %v6319 = vmul.f32 %v6063, 0.2
    %v6320 = vmul.f32 %v6064, 0.2
    %v6321 = vmul.f32 %v6065, 0.2
    %v6322 = vmul.f32 %v6066, 0.2
    %v6323 = vmul.f32 %v6067, 0.2
    %v6324 = vmul.f32 %v6068, 0.2
    %v6325 = vmul.f32 %v6069, 0.2
    %v6326 = vmul.f32 %v6070, 0.2
    %v6327 = vmul.f32 %v6071, 0.2
    %v6328 = vmul.f32 %v6072, 0.2
    %v6329 = vmul.f32 %v6073, 0.2
    %v6330 = vmul.f32 %v6074, 0.2
    %v6331 = vmul.f32 %v6075, 0.2
    %v6332 = vmul.f32 %v6076, 0.2
    %v6333 = vmul.f32 %v6077, 0.2
    %v6334 = vmul.f32 %v6078, 0.2
    %v6335 = vmul.f32 %v6079, 0.2
    %v6336 = vmul.f32 %v6080, 0.2
    %v6337 = vmul.f32 %v6081, 0.2
    %v6338 = vmul.f32 %v6082, 0.2
    %v6339 = vmul.f32 %v6083, 0.2
    %v6340 = vmul.f32 %v6084, 0.2
    %v6341 = vmul.f32 %v6085, 0.2
    %v6342 = vmul.f32 %v6086, 0.2
    %v6343 = vmul.f32 %v6087, 0.2
    %v6344 = vmul.f32 %v6088, 0.2
    %v6345 = vmul.f32 %v6089, 0.2
    %v6346 = vmul.f32 %v6090, 0.2
    %v6347 = vmul.f32 %v6091, 0.2
    %v6348 = vmul.f32 %v6092, 0.2
    %v6349 = vmul.f32 %v6093, 0.2
    %v6350 = vmul.f32 %v6094, 0.2
    %v6351 = vmul.f32 %v6095, 0.2
    %v6352 = vmul.f32 %v6096, 0.2
    %v6353 = vmul.f32 %v6097, 0.2
    %v6354 = vmul.f32 %v6098, 0.2
    %v6355 = vmul.f32 %v6099, 0.2
    %v6356 = vmul.f32 %v6100, 0.2
    %v6357 = vmul.f32 %v6101, 0.2
    %v6358 = vmul.f32 %v6102, 0.2
    %v6359 = vmul.f32 %v6103, 0.2
    %v6360 = vmul.f32 %v6104, 0.2
    %v6361 = vmul.f32 %v6105, 0.2
    %v6362 = vmul.f32 %v6106, 0.2
    %v6363 = vmul.f32 %v6107, 0.2
    %v6364 = vmul.f32 %v6108, 0.2
    %v6365 = vmul.f32 %v6109, 0.2
    %v6366 = vmul.f32 %v6110, 0.2
    %v6367 = vmul.f32 %v6111, 0.2
    %v6368 = vmul.f32 %v6112, 0.2
    %v6369 = vmul.f32 %v6113, 0.2
    %v6370 = vmul.f32 %v6114, 0.2
    %v6371 = vmul.f32 %v6115, 0.2
    %v6372 = vmul.f32 %v6116, 0.2
    %v6373 = vmul.f32 %v6117, 0.2
    %v6374 = vmul.f32 %v6118, 0.2
    %v6375 = vmul.f32 %v6119, 0.2
    %v6376 = vmul.f32 %v6120, 0.2
    %v6377 = vmul.f32 %v6121, 0.2
    %v6378 = vmul.f32 %v6122, 0.2
    %v6379 = vmul.f32 %v6123, 0.2
    %v6380 = vmul.f32 %v6124, 0.2
    %v6381 = vmul.f32 %v6125, 0.2
    %v6382 = vmul.f32 %v6126, 0.2
    %v6383 = vsel %vm6127, %v5999, %v6255
    %v6384 = vsel %vm6128, %v6000, %v6256
    %v6385 = vsel %vm6129, %v6001, %v6257
    %v6386 = vsel %vm6130, %v6002, %v6258
    %v6387 = vsel %vm6131, %v6003, %v6259
    %v6388 = vsel %vm6132, %v6004, %v6260
    %v6389 = vsel %vm6133, %v6005, %v6261
    %v6390 = vsel %vm6134, %v6006, %v6262
    %v6391 = vsel %vm6135, %v6007, %v6263
    %v6392 = vsel %vm6136, %v6008, %v6264
    %v6393 = vsel %vm6137, %v6009, %v6265
    %v6394 = vsel %vm6138, %v6010, %v6266
    %v6395 = vsel %vm6139, %v6011, %v6267
    %v6396 = vsel %vm6140, %v6012, %v6268
    %v6397 = vsel %vm6141, %v6013, %v6269
    %v6398 = vsel %vm6142, %v6014, %v6270
    %v6399 = vsel %vm6143, %v6015, %v6271
    %v6400 = vsel %vm6144, %v6016, %v6272
    %v6401 = vsel %vm6145, %v6017, %v6273
    %v6402 = vsel %vm6146, %v6018, %v6274
    %v6403 = vsel %vm6147, %v6019, %v6275
    %v6404 = vsel %vm6148, %v6020, %v6276
    %v6405 = vsel %vm6149, %v6021, %v6277
    %v6406 = vsel %vm6150, %v6022, %v6278
    %v6407 = vsel %vm6151, %v6023, %v6279
    %v6408 = vsel %vm6152, %v6024, %v6280
    %v6409 = vsel %vm6153, %v6025, %v6281
    %v6410 = vsel %vm6154, %v6026, %v6282
    %v6411 = vsel %vm6155, %v6027, %v6283
    %v6412 = vsel %vm6156, %v6028, %v6284
    %v6413 = vsel %vm6157, %v6029, %v6285
    %v6414 = vsel %vm6158, %v6030, %v6286
    %v6415 = vsel %vm6159, %v6031, %v6287
    %v6416 = vsel %vm6160, %v6032, %v6288
    %v6417 = vsel %vm6161, %v6033, %v6289
    %v6418 = vsel %vm6162, %v6034, %v6290
    %v6419 = vsel %vm6163, %v6035, %v6291
    %v6420 = vsel %vm6164, %v6036, %v6292
    %v6421 = vsel %vm6165, %v6037, %v6293
    %v6422 = vsel %vm6166, %v6038, %v6294
    %v6423 = vsel %vm6167, %v6039, %v6295
    %v6424 = vsel %vm6168, %v6040, %v6296
    %v6425 = vsel %vm6169, %v6041, %v6297
    %v6426 = vsel %vm6170, %v6042, %v6298
    %v6427 = vsel %vm6171, %v6043, %v6299
    %v6428 = vsel %vm6172, %v6044, %v6300
    %v6429 = vsel %vm6173, %v6045, %v6301
    %v6430 = vsel %vm6174, %v6046, %v6302
    %v6431 = vsel %vm6175, %v6047, %v6303
    %v6432 = vsel %vm6176, %v6048, %v6304
    %v6433 = vsel %vm6177, %v6049, %v6305
    %v6434 = vsel %vm6178, %v6050, %v6306
    %v6435 = vsel %vm6179, %v6051, %v6307
    %v6436 = vsel %vm6180, %v6052, %v6308
    %v6437 = vsel %vm6181, %v6053, %v6309
    %v6438 = vsel %vm6182, %v6054, %v6310
    %v6439 = vsel %vm6183, %v6055, %v6311
    %v6440 = vsel %vm6184, %v6056, %v6312
    %v6441 = vsel %vm6185, %v6057, %v6313
    %v6442 = vsel %vm6186, %v6058, %v6314
    %v6443 = vsel %vm6187, %v6059, %v6315
    %v6444 = vsel %vm6188, %v6060, %v6316
    %v6445 = vsel %vm6189, %v6061, %v6317
    %v6446 = vsel %vm6190, %v6062, %v6318
    %v6447 = vsel %vm6191, %v6063, %v6319
    %v6448 = vsel %vm6192, %v6064, %v6320
    %v6449 = vsel %vm6193, %v6065, %v6321
    %v6450 = vsel %vm6194, %v6066, %v6322
    %v6451 = vsel %vm6195, %v6067, %v6323
    %v6452 = vsel %vm6196, %v6068, %v6324
    %v6453 = vsel %vm6197, %v6069, %v6325
    %v6454 = vsel %vm6198, %v6070, %v6326
    %v6455 = vsel %vm6199, %v6071, %v6327
    %v6456 = vsel %vm6200, %v6072, %v6328
    %v6457 = vsel %vm6201, %v6073, %v6329
    %v6458 = vsel %vm6202, %v6074, %v6330
    %v6459 = vsel %vm6203, %v6075, %v6331
    %v6460 = vsel %vm6204, %v6076, %v6332
    %v6461 = vsel %vm6205, %v6077, %v6333
    %v6462 = vsel %vm6206, %v6078, %v6334
    %v6463 = vsel %vm6207, %v6079, %v6335
    %v6464 = vsel %vm6208, %v6080, %v6336
    %v6465 = vsel %vm6209, %v6081, %v6337
    %v6466 = vsel %vm6210, %v6082, %v6338
    %v6467 = vsel %vm6211, %v6083, %v6339
    %v6468 = vsel %vm6212, %v6084, %v6340
    %v6469 = vsel %vm6213, %v6085, %v6341
    %v6470 = vsel %vm6214, %v6086, %v6342
    %v6471 = vsel %vm6215, %v6087, %v6343
    %v6472 = vsel %vm6216, %v6088, %v6344
    %v6473 = vsel %vm6217, %v6089, %v6345
    %v6474 = vsel %vm6218, %v6090, %v6346
    %v6475 = vsel %vm6219, %v6091, %v6347
    %v6476 = vsel %vm6220, %v6092, %v6348
    %v6477 = vsel %vm6221, %v6093, %v6349
    %v6478 = vsel %vm6222, %v6094, %v6350
    %v6479 = vsel %vm6223, %v6095, %v6351
    %v6480 = vsel %vm6224, %v6096, %v6352
    %v6481 = vsel %vm6225, %v6097, %v6353
    %v6482 = vsel %vm6226, %v6098, %v6354
    %v6483 = vsel %vm6227, %v6099, %v6355
    %v6484 = vsel %vm6228, %v6100, %v6356
    %v6485 = vsel %vm6229, %v6101, %v6357
    %v6486 = vsel %vm6230, %v6102, %v6358
    %v6487 = vsel %vm6231, %v6103, %v6359
    %v6488 = vsel %vm6232, %v6104, %v6360
    %v6489 = vsel %vm6233, %v6105, %v6361
    %v6490 = vsel %vm6234, %v6106, %v6362
    %v6491 = vsel %vm6235, %v6107, %v6363
    %v6492 = vsel %vm6236, %v6108, %v6364
    %v6493 = vsel %vm6237, %v6109, %v6365
    %v6494 = vsel %vm6238, %v6110, %v6366
    %v6495 = vsel %vm6239, %v6111, %v6367
    %v6496 = vsel %vm6240, %v6112, %v6368
    %v6497 = vsel %vm6241, %v6113, %v6369
    %v6498 = vsel %vm6242, %v6114, %v6370
    %v6499 = vsel %vm6243, %v6115, %v6371
    %v6500 = vsel %vm6244, %v6116, %v6372
    %v6501 = vsel %vm6245, %v6117, %v6373
    %v6502 = vsel %vm6246, %v6118, %v6374
    %v6503 = vsel %vm6247, %v6119, %v6375
    %v6504 = vsel %vm6248, %v6120, %v6376
    %v6505 = vsel %vm6249, %v6121, %v6377
    %v6506 = vsel %vm6250, %v6122, %v6378
    %v6507 = vsel %vm6251, %v6123, %v6379
    %v6508 = vsel %vm6252, %v6124, %v6380
    %v6509 = vsel %vm6253, %v6125, %v6381
    %v6510 = vsel %vm6254, %v6126, %v6382
    %v6511 = vld [vmem:[#allocation6] sm:$0xff]
    %v6512 = vld [vmem:[#allocation6 + $0x8] sm:$0xff]
    %v6513 = vld [vmem:[#allocation6 + $0x10] sm:$0xff]
    %v6514 = vld [vmem:[#allocation6 + $0x18] sm:$0xff]
    %v6515 = vld [vmem:[#allocation6 + $0x20] sm:$0xff]
    %v6516 = vld [vmem:[#allocation6 + $0x28] sm:$0xff]
    %v6517 = vld [vmem:[#allocation6 + $0x30] sm:$0xff]
    %v6518 = vld [vmem:[#allocation6 + $0x38] sm:$0xff]
    %v6519 = vld [vmem:[#allocation6 + $0x40] sm:$0xff]
    %v6520 = vld [vmem:[#allocation6 + $0x48] sm:$0xff]
    %v6521 = vld [vmem:[#allocation6 + $0x50] sm:$0xff]
    %v6522 = vld [vmem:[#allocation6 + $0x58] sm:$0xff]
    %v6523 = vld [vmem:[#allocation6 + $0x60] sm:$0xff]
    %v6524 = vld [vmem:[#allocation6 + $0x68] sm:$0xff]
    %v6525 = vld [vmem:[#allocation6 + $0x70] sm:$0xff]
    %v6526 = vld [vmem:[#allocation6 + $0x78] sm:$0xff]
    %v6527 = vld [vmem:[#allocation6 + $0x80] sm:$0xff]
    %v6528 = vld [vmem:[#allocation6 + $0x88] sm:$0xff]
    %v6529 = vld [vmem:[#allocation6 + $0x90] sm:$0xff]
    %v6530 = vld [vmem:[#allocation6 + $0x98] sm:$0xff]
    %v6531 = vld [vmem:[#allocation6 + $0xa0] sm:$0xff]
    %v6532 = vld [vmem:[#allocation6 + $0xa8] sm:$0xff]
    %v6533 = vld [vmem:[#allocation6 + $0xb0] sm:$0xff]
    %v6534 = vld [vmem:[#allocation6 + $0xb8] sm:$0xff]
    %v6535 = vld [vmem:[#allocation6 + $0xc0] sm:$0xff]
    %v6536 = vld [vmem:[#allocation6 + $0xc8] sm:$0xff]
    %v6537 = vld [vmem:[#allocation6 + $0xd0] sm:$0xff]
    %v6538 = vld [vmem:[#allocation6 + $0xd8] sm:$0xff]
    %v6539 = vld [vmem:[#allocation6 + $0xe0] sm:$0xff]
    %v6540 = vld [vmem:[#allocation6 + $0xe8] sm:$0xff]
    %v6541 = vld [vmem:[#allocation6 + $0xf0] sm:$0xff]
    %v6542 = vld [vmem:[#allocation6 + $0xf8] sm:$0xff]
    %v6543 = vld [vmem:[#allocation6 + $0x100] sm:$0xff]
    %v6544 = vld [vmem:[#allocation6 + $0x108] sm:$0xff]
    %v6545 = vld [vmem:[#allocation6 + $0x110] sm:$0xff]
    %v6546 = vld [vmem:[#allocation6 + $0x118] sm:$0xff]
    %v6547 = vld [vmem:[#allocation6 + $0x120] sm:$0xff]
    %v6548 = vld [vmem:[#allocation6 + $0x128] sm:$0xff]
    %v6549 = vld [vmem:[#allocation6 + $0x130] sm:$0xff]
    %v6550 = vld [vmem:[#allocation6 + $0x138] sm:$0xff]
    %v6551 = vld [vmem:[#allocation6 + $0x140] sm:$0xff]
    %v6552 = vld [vmem:[#allocation6 + $0x148] sm:$0xff]
    %v6553 = vld [vmem:[#allocation6 + $0x150] sm:$0xff]
    %v6554 = vld [vmem:[#allocation6 + $0x158] sm:$0xff]
    %v6555 = vld [vmem:[#allocation6 + $0x160] sm:$0xff]
    %v6556 = vld [vmem:[#allocation6 + $0x168] sm:$0xff]
    %v6557 = vld [vmem:[#allocation6 + $0x170] sm:$0xff]
    %v6558 = vld [vmem:[#allocation6 + $0x178] sm:$0xff]
    %v6559 = vld [vmem:[#allocation6 + $0x180] sm:$0xff]
    %v6560 = vld [vmem:[#allocation6 + $0x188] sm:$0xff]
    %v6561 = vld [vmem:[#allocation6 + $0x190] sm:$0xff]
    %v6562 = vld [vmem:[#allocation6 + $0x198] sm:$0xff]
    %v6563 = vld [vmem:[#allocation6 + $0x1a0] sm:$0xff]
    %v6564 = vld [vmem:[#allocation6 + $0x1a8] sm:$0xff]
    %v6565 = vld [vmem:[#allocation6 + $0x1b0] sm:$0xff]
    %v6566 = vld [vmem:[#allocation6 + $0x1b8] sm:$0xff]
    %v6567 = vld [vmem:[#allocation6 + $0x1c0] sm:$0xff]
    %v6568 = vld [vmem:[#allocation6 + $0x1c8] sm:$0xff]
    %v6569 = vld [vmem:[#allocation6 + $0x1d0] sm:$0xff]
    %v6570 = vld [vmem:[#allocation6 + $0x1d8] sm:$0xff]
    %v6571 = vld [vmem:[#allocation6 + $0x1e0] sm:$0xff]
    %v6572 = vld [vmem:[#allocation6 + $0x1e8] sm:$0xff]
    %v6573 = vld [vmem:[#allocation6 + $0x1f0] sm:$0xff]
    %v6574 = vld [vmem:[#allocation6 + $0x1f8] sm:$0xff]
    %v6575 = vld [vmem:[#allocation6 + $0x200] sm:$0xff]
    %v6576 = vld [vmem:[#allocation6 + $0x208] sm:$0xff]
    %v6577 = vld [vmem:[#allocation6 + $0x210] sm:$0xff]
    %v6578 = vld [vmem:[#allocation6 + $0x218] sm:$0xff]
    %v6579 = vld [vmem:[#allocation6 + $0x220] sm:$0xff]
    %v6580 = vld [vmem:[#allocation6 + $0x228] sm:$0xff]
    %v6581 = vld [vmem:[#allocation6 + $0x230] sm:$0xff]
    %v6582 = vld [vmem:[#allocation6 + $0x238] sm:$0xff]
    %v6583 = vld [vmem:[#allocation6 + $0x240] sm:$0xff]
    %v6584 = vld [vmem:[#allocation6 + $0x248] sm:$0xff]
    %v6585 = vld [vmem:[#allocation6 + $0x250] sm:$0xff]
    %v6586 = vld [vmem:[#allocation6 + $0x258] sm:$0xff]
    %v6587 = vld [vmem:[#allocation6 + $0x260] sm:$0xff]
    %v6588 = vld [vmem:[#allocation6 + $0x268] sm:$0xff]
    %v6589 = vld [vmem:[#allocation6 + $0x270] sm:$0xff]
    %v6590 = vld [vmem:[#allocation6 + $0x278] sm:$0xff]
    %v6591 = vld [vmem:[#allocation6 + $0x280] sm:$0xff]
    %v6592 = vld [vmem:[#allocation6 + $0x288] sm:$0xff]
    %v6593 = vld [vmem:[#allocation6 + $0x290] sm:$0xff]
    %v6594 = vld [vmem:[#allocation6 + $0x298] sm:$0xff]
    %v6595 = vld [vmem:[#allocation6 + $0x2a0] sm:$0xff]
    %v6596 = vld [vmem:[#allocation6 + $0x2a8] sm:$0xff]
    %v6597 = vld [vmem:[#allocation6 + $0x2b0] sm:$0xff]
    %v6598 = vld [vmem:[#allocation6 + $0x2b8] sm:$0xff]
    %v6599 = vld [vmem:[#allocation6 + $0x2c0] sm:$0xff]
    %v6600 = vld [vmem:[#allocation6 + $0x2c8] sm:$0xff]
    %v6601 = vld [vmem:[#allocation6 + $0x2d0] sm:$0xff]
    %v6602 = vld [vmem:[#allocation6 + $0x2d8] sm:$0xff]
    %v6603 = vld [vmem:[#allocation6 + $0x2e0] sm:$0xff]
    %v6604 = vld [vmem:[#allocation6 + $0x2e8] sm:$0xff]
    %v6605 = vld [vmem:[#allocation6 + $0x2f0] sm:$0xff]
    %v6606 = vld [vmem:[#allocation6 + $0x2f8] sm:$0xff]
    %v6607 = vld [vmem:[#allocation6 + $0x300] sm:$0xff]
    %v6608 = vld [vmem:[#allocation6 + $0x308] sm:$0xff]
    %v6609 = vld [vmem:[#allocation6 + $0x310] sm:$0xff]
    %v6610 = vld [vmem:[#allocation6 + $0x318] sm:$0xff]
    %v6611 = vld [vmem:[#allocation6 + $0x320] sm:$0xff]
    %v6612 = vld [vmem:[#allocation6 + $0x328] sm:$0xff]
    %v6613 = vld [vmem:[#allocation6 + $0x330] sm:$0xff]
    %v6614 = vld [vmem:[#allocation6 + $0x338] sm:$0xff]
    %v6615 = vld [vmem:[#allocation6 + $0x340] sm:$0xff]
    %v6616 = vld [vmem:[#allocation6 + $0x348] sm:$0xff]
    %v6617 = vld [vmem:[#allocation6 + $0x350] sm:$0xff]
    %v6618 = vld [vmem:[#allocation6 + $0x358] sm:$0xff]
    %v6619 = vld [vmem:[#allocation6 + $0x360] sm:$0xff]
    %v6620 = vld [vmem:[#allocation6 + $0x368] sm:$0xff]
    %v6621 = vld [vmem:[#allocation6 + $0x370] sm:$0xff]
    %v6622 = vld [vmem:[#allocation6 + $0x378] sm:$0xff]
    %v6623 = vld [vmem:[#allocation6 + $0x380] sm:$0xff]
    %v6624 = vld [vmem:[#allocation6 + $0x388] sm:$0xff]
    %v6625 = vld [vmem:[#allocation6 + $0x390] sm:$0xff]
    %v6626 = vld [vmem:[#allocation6 + $0x398] sm:$0xff]
    %v6627 = vld [vmem:[#allocation6 + $0x3a0] sm:$0xff]
    %v6628 = vld [vmem:[#allocation6 + $0x3a8] sm:$0xff]
    %v6629 = vld [vmem:[#allocation6 + $0x3b0] sm:$0xff]
    %v6630 = vld [vmem:[#allocation6 + $0x3b8] sm:$0xff]
    %v6631 = vld [vmem:[#allocation6 + $0x3c0] sm:$0xff]
    %v6632 = vld [vmem:[#allocation6 + $0x3c8] sm:$0xff]
    %v6633 = vld [vmem:[#allocation6 + $0x3d0] sm:$0xff]
    %v6634 = vld [vmem:[#allocation6 + $0x3d8] sm:$0xff]
    %v6635 = vld [vmem:[#allocation6 + $0x3e0] sm:$0xff]
    %v6636 = vld [vmem:[#allocation6 + $0x3e8] sm:$0xff]
    %v6637 = vld [vmem:[#allocation6 + $0x3f0] sm:$0xff]
    %v6638 = vld [vmem:[#allocation6 + $0x3f8] sm:$0xff]
    %v6639 = vpack.c.bf16 %v6391, %v6383
    %v6640 = vpack.c.bf16 %v6392, %v6384
    %v6641 = vpack.c.bf16 %v6393, %v6385
    %v6642 = vpack.c.bf16 %v6394, %v6386
    %v6643 = vpack.c.bf16 %v6395, %v6387
    %v6644 = vpack.c.bf16 %v6396, %v6388
    %v6645 = vpack.c.bf16 %v6397, %v6389
    %v6646 = vpack.c.bf16 %v6398, %v6390
    %v6647 = vpack.c.bf16 %v6407, %v6399
    %v6648 = vpack.c.bf16 %v6408, %v6400
    %v6649 = vpack.c.bf16 %v6409, %v6401
    %v6650 = vpack.c.bf16 %v6410, %v6402
    %v6651 = vpack.c.bf16 %v6411, %v6403
    %v6652 = vpack.c.bf16 %v6412, %v6404
    %v6653 = vpack.c.bf16 %v6413, %v6405
    %v6654 = vpack.c.bf16 %v6414, %v6406
    %v6655 = vpack.c.bf16 %v6423, %v6415
    %v6656 = vpack.c.bf16 %v6424, %v6416
    %v6657 = vpack.c.bf16 %v6425, %v6417
    %v6658 = vpack.c.bf16 %v6426, %v6418
    %v6659 = vpack.c.bf16 %v6427, %v6419
    %v6660 = vpack.c.bf16 %v6428, %v6420
    %v6661 = vpack.c.bf16 %v6429, %v6421
    %v6662 = vpack.c.bf16 %v6430, %v6422
    %v6663 = vpack.c.bf16 %v6439, %v6431
    %v6664 = vpack.c.bf16 %v6440, %v6432
    %v6665 = vpack.c.bf16 %v6441, %v6433
    %v6666 = vpack.c.bf16 %v6442, %v6434
    %v6667 = vpack.c.bf16 %v6443, %v6435
    %v6668 = vpack.c.bf16 %v6444, %v6436
    %v6669 = vpack.c.bf16 %v6445, %v6437
    %v6670 = vpack.c.bf16 %v6446, %v6438
    %v6671 = vpack.c.bf16 %v6455, %v6447
    %v6672 = vpack.c.bf16 %v6456, %v6448
    %v6673 = vpack.c.bf16 %v6457, %v6449
    %v6674 = vpack.c.bf16 %v6458, %v6450
    %v6675 = vpack.c.bf16 %v6459, %v6451
    %v6676 = vpack.c.bf16 %v6460, %v6452
    %v6677 = vpack.c.bf16 %v6461, %v6453
    %v6678 = vpack.c.bf16 %v6462, %v6454
    %v6679 = vpack.c.bf16 %v6471, %v6463
    %v6680 = vpack.c.bf16 %v6472, %v6464
    %v6681 = vpack.c.bf16 %v6473, %v6465
    %v6682 = vpack.c.bf16 %v6474, %v6466
    %v6683 = vpack.c.bf16 %v6475, %v6467
    %v6684 = vpack.c.bf16 %v6476, %v6468
    %v6685 = vpack.c.bf16 %v6477, %v6469
    %v6686 = vpack.c.bf16 %v6478, %v6470
    %v6687 = vpack.c.bf16 %v6487, %v6479
    %v6688 = vpack.c.bf16 %v6488, %v6480
    %v6689 = vpack.c.bf16 %v6489, %v6481
    %v6690 = vpack.c.bf16 %v6490, %v6482
    %v6691 = vpack.c.bf16 %v6491, %v6483
    %v6692 = vpack.c.bf16 %v6492, %v6484
    %v6693 = vpack.c.bf16 %v6493, %v6485
    %v6694 = vpack.c.bf16 %v6494, %v6486
    %v6695 = vpack.c.bf16 %v6503, %v6495
    %v6696 = vpack.c.bf16 %v6504, %v6496
    %v6697 = vpack.c.bf16 %v6505, %v6497
    %v6698 = vpack.c.bf16 %v6506, %v6498
    %v6699 = vpack.c.bf16 %v6507, %v6499
    %v6700 = vpack.c.bf16 %v6508, %v6500
    %v6701 = vpack.c.bf16 %v6509, %v6501
    %v6702 = vpack.c.bf16 %v6510, %v6502
    %v6703 = vld [vmem:[%s19] sm:$0x3]
    %v6705 = vlaneseq
    %v6706 = vshrl.u32 %v6705, 7
    %v6707 = vsub.s32 0, %v6706
    %v6708 = vrot.slane %v6703, %v6707
    %v6709 = vlaneseq
    %v6710 = vshrl.u32 %v6709, 7
    %v6711 = vsub.s32 1, %v6710
    %v6712 = vrot.slane %v6703, %v6711
    %v6843 = vunpack.c.l.b16 %v6511
    %v6844 = vunpack.c.h.b16 %v6511
    %v6845 = vunpack.c.l.b16 %v6512
    %v6846 = vunpack.c.h.b16 %v6512
    %v6847 = vunpack.c.l.b16 %v6513
    %v6848 = vunpack.c.h.b16 %v6513
    %v6849 = vunpack.c.l.b16 %v6514
    %v6850 = vunpack.c.h.b16 %v6514
    %v6851 = vunpack.c.l.b16 %v6515
    %v6852 = vunpack.c.h.b16 %v6515
    %v6853 = vunpack.c.l.b16 %v6516
    %v6854 = vunpack.c.h.b16 %v6516
    %v6855 = vunpack.c.l.b16 %v6517
    %v6856 = vunpack.c.h.b16 %v6517
    %v6857 = vunpack.c.l.b16 %v6518
    %v6858 = vunpack.c.h.b16 %v6518
    %v6859 = vunpack.c.l.b16 %v6519
    %v6860 = vunpack.c.h.b16 %v6519
    %v6861 = vunpack.c.l.b16 %v6520
    %v6862 = vunpack.c.h.b16 %v6520
    %v6863 = vunpack.c.l.b16 %v6521
    %v6864 = vunpack.c.h.b16 %v6521
    %v6865 = vunpack.c.l.b16 %v6522
    %v6866 = vunpack.c.h.b16 %v6522
    %v6867 = vunpack.c.l.b16 %v6523
    %v6868 = vunpack.c.h.b16 %v6523
    %v6869 = vunpack.c.l.b16 %v6524
    %v6870 = vunpack.c.h.b16 %v6524
    %v6871 = vunpack.c.l.b16 %v6525
    %v6872 = vunpack.c.h.b16 %v6525
    %v6873 = vunpack.c.l.b16 %v6526
    %v6874 = vunpack.c.h.b16 %v6526
    %v6875 = vunpack.c.l.b16 %v6527
    %v6876 = vunpack.c.h.b16 %v6527
    %v6877 = vunpack.c.l.b16 %v6528
    %v6878 = vunpack.c.h.b16 %v6528
    %v6879 = vunpack.c.l.b16 %v6529
    %v6880 = vunpack.c.h.b16 %v6529
    %v6881 = vunpack.c.l.b16 %v6530
    %v6882 = vunpack.c.h.b16 %v6530
    %v6883 = vunpack.c.l.b16 %v6531
    %v6884 = vunpack.c.h.b16 %v6531
    %v6885 = vunpack.c.l.b16 %v6532
    %v6886 = vunpack.c.h.b16 %v6532
    %v6887 = vunpack.c.l.b16 %v6533
    %v6888 = vunpack.c.h.b16 %v6533
    %v6889 = vunpack.c.l.b16 %v6534
    %v6890 = vunpack.c.h.b16 %v6534
    %v6891 = vunpack.c.l.b16 %v6535
    %v6892 = vunpack.c.h.b16 %v6535
    %v6893 = vunpack.c.l.b16 %v6536
    %v6894 = vunpack.c.h.b16 %v6536
    %v6895 = vunpack.c.l.b16 %v6537
    %v6896 = vunpack.c.h.b16 %v6537
    %v6897 = vunpack.c.l.b16 %v6538
    %v6898 = vunpack.c.h.b16 %v6538
    %v6899 = vunpack.c.l.b16 %v6539
    %v6900 = vunpack.c.h.b16 %v6539
    %v6901 = vunpack.c.l.b16 %v6540
    %v6902 = vunpack.c.h.b16 %v6540
    %v6903 = vunpack.c.l.b16 %v6541
    %v6904 = vunpack.c.h.b16 %v6541
    %v6905 = vunpack.c.l.b16 %v6542
    %v6906 = vunpack.c.h.b16 %v6542
    %v6907 = vunpack.c.l.b16 %v6543
    %v6908 = vunpack.c.h.b16 %v6543
    %v6909 = vunpack.c.l.b16 %v6544
    %v6910 = vunpack.c.h.b16 %v6544
    %v6911 = vunpack.c.l.b16 %v6545
    %v6912 = vunpack.c.h.b16 %v6545
    %v6913 = vunpack.c.l.b16 %v6546
    %v6914 = vunpack.c.h.b16 %v6546
    %v6915 = vunpack.c.l.b16 %v6547
    %v6916 = vunpack.c.h.b16 %v6547
    %v6917 = vunpack.c.l.b16 %v6548
    %v6918 = vunpack.c.h.b16 %v6548
    %v6919 = vunpack.c.l.b16 %v6549
    %v6920 = vunpack.c.h.b16 %v6549
    %v6921 = vunpack.c.l.b16 %v6550
    %v6922 = vunpack.c.h.b16 %v6550
    %v6923 = vunpack.c.l.b16 %v6551
    %v6924 = vunpack.c.h.b16 %v6551
    %v6925 = vunpack.c.l.b16 %v6552
    %v6926 = vunpack.c.h.b16 %v6552
    %v6927 = vunpack.c.l.b16 %v6553
    %v6928 = vunpack.c.h.b16 %v6553
    %v6929 = vunpack.c.l.b16 %v6554
    %v6930 = vunpack.c.h.b16 %v6554
    %v6931 = vunpack.c.l.b16 %v6555
    %v6932 = vunpack.c.h.b16 %v6555
    %v6933 = vunpack.c.l.b16 %v6556
    %v6934 = vunpack.c.h.b16 %v6556
    %v6935 = vunpack.c.l.b16 %v6557
    %v6936 = vunpack.c.h.b16 %v6557
    %v6937 = vunpack.c.l.b16 %v6558
    %v6938 = vunpack.c.h.b16 %v6558
    %v6939 = vunpack.c.l.b16 %v6559
    %v6940 = vunpack.c.h.b16 %v6559
    %v6941 = vunpack.c.l.b16 %v6560
    %v6942 = vunpack.c.h.b16 %v6560
    %v6943 = vunpack.c.l.b16 %v6561
    %v6944 = vunpack.c.h.b16 %v6561
    %v6945 = vunpack.c.l.b16 %v6562
    %v6946 = vunpack.c.h.b16 %v6562
    %v6947 = vunpack.c.l.b16 %v6563
    %v6948 = vunpack.c.h.b16 %v6563
    %v6949 = vunpack.c.l.b16 %v6564
    %v6950 = vunpack.c.h.b16 %v6564
    %v6951 = vunpack.c.l.b16 %v6565
    %v6952 = vunpack.c.h.b16 %v6565
    %v6953 = vunpack.c.l.b16 %v6566
    %v6954 = vunpack.c.h.b16 %v6566
    %v6955 = vunpack.c.l.b16 %v6567
    %v6956 = vunpack.c.h.b16 %v6567
    %v6957 = vunpack.c.l.b16 %v6568
    %v6958 = vunpack.c.h.b16 %v6568
    %v6959 = vunpack.c.l.b16 %v6569
    %v6960 = vunpack.c.h.b16 %v6569
    %v6961 = vunpack.c.l.b16 %v6570
    %v6962 = vunpack.c.h.b16 %v6570
    %v6963 = vunpack.c.l.b16 %v6571
    %v6964 = vunpack.c.h.b16 %v6571
    %v6965 = vunpack.c.l.b16 %v6572
    %v6966 = vunpack.c.h.b16 %v6572
    %v6967 = vunpack.c.l.b16 %v6573
    %v6968 = vunpack.c.h.b16 %v6573
    %v6969 = vunpack.c.l.b16 %v6574
    %v6970 = vunpack.c.h.b16 %v6574
    %v6971 = vunpack.c.l.b16 %v6575
    %v6972 = vunpack.c.h.b16 %v6575
    %v6973 = vunpack.c.l.b16 %v6576
    %v6974 = vunpack.c.h.b16 %v6576
    %v6975 = vunpack.c.l.b16 %v6577
    %v6976 = vunpack.c.h.b16 %v6577
    %v6977 = vunpack.c.l.b16 %v6578
    %v6978 = vunpack.c.h.b16 %v6578
    %v6979 = vunpack.c.l.b16 %v6579
    %v6980 = vunpack.c.h.b16 %v6579
    %v6981 = vunpack.c.l.b16 %v6580
    %v6982 = vunpack.c.h.b16 %v6580
    %v6983 = vunpack.c.l.b16 %v6581
    %v6984 = vunpack.c.h.b16 %v6581
    %v6985 = vunpack.c.l.b16 %v6582
    %v6986 = vunpack.c.h.b16 %v6582
    %v6987 = vunpack.c.l.b16 %v6583
    %v6988 = vunpack.c.h.b16 %v6583
    %v6989 = vunpack.c.l.b16 %v6584
    %v6990 = vunpack.c.h.b16 %v6584
    %v6991 = vunpack.c.l.b16 %v6585
    %v6992 = vunpack.c.h.b16 %v6585
    %v6993 = vunpack.c.l.b16 %v6586
    %v6994 = vunpack.c.h.b16 %v6586
    %v6995 = vunpack.c.l.b16 %v6587
    %v6996 = vunpack.c.h.b16 %v6587
    %v6997 = vunpack.c.l.b16 %v6588
    %v6998 = vunpack.c.h.b16 %v6588
    %v6999 = vunpack.c.l.b16 %v6589
    %v7000 = vunpack.c.h.b16 %v6589
    %v7001 = vunpack.c.l.b16 %v6590
    %v7002 = vunpack.c.h.b16 %v6590
    %v7003 = vunpack.c.l.b16 %v6591
    %v7004 = vunpack.c.h.b16 %v6591
    %v7005 = vunpack.c.l.b16 %v6592
    %v7006 = vunpack.c.h.b16 %v6592
    %v7007 = vunpack.c.l.b16 %v6593
    %v7008 = vunpack.c.h.b16 %v6593
    %v7009 = vunpack.c.l.b16 %v6594
    %v7010 = vunpack.c.h.b16 %v6594
    %v7011 = vunpack.c.l.b16 %v6595
    %v7012 = vunpack.c.h.b16 %v6595
    %v7013 = vunpack.c.l.b16 %v6596
    %v7014 = vunpack.c.h.b16 %v6596
    %v7015 = vunpack.c.l.b16 %v6597
    %v7016 = vunpack.c.h.b16 %v6597
    %v7017 = vunpack.c.l.b16 %v6598
    %v7018 = vunpack.c.h.b16 %v6598
    %v7019 = vunpack.c.l.b16 %v6599
    %v7020 = vunpack.c.h.b16 %v6599
    %v7021 = vunpack.c.l.b16 %v6600
    %v7022 = vunpack.c.h.b16 %v6600
    %v7023 = vunpack.c.l.b16 %v6601
    %v7024 = vunpack.c.h.b16 %v6601
    %v7025 = vunpack.c.l.b16 %v6602
    %v7026 = vunpack.c.h.b16 %v6602
    %v7027 = vunpack.c.l.b16 %v6603
    %v7028 = vunpack.c.h.b16 %v6603
    %v7029 = vunpack.c.l.b16 %v6604
    %v7030 = vunpack.c.h.b16 %v6604
    %v7031 = vunpack.c.l.b16 %v6605
    %v7032 = vunpack.c.h.b16 %v6605
    %v7033 = vunpack.c.l.b16 %v6606
    %v7034 = vunpack.c.h.b16 %v6606
    %v7035 = vunpack.c.l.b16 %v6607
    %v7036 = vunpack.c.h.b16 %v6607
    %v7037 = vunpack.c.l.b16 %v6608
    %v7038 = vunpack.c.h.b16 %v6608
    %v7039 = vunpack.c.l.b16 %v6609
    %v7040 = vunpack.c.h.b16 %v6609
    %v7041 = vunpack.c.l.b16 %v6610
    %v7042 = vunpack.c.h.b16 %v6610
    %v7043 = vunpack.c.l.b16 %v6611
    %v7044 = vunpack.c.h.b16 %v6611
    %v7045 = vunpack.c.l.b16 %v6612
    %v7046 = vunpack.c.h.b16 %v6612
    %v7047 = vunpack.c.l.b16 %v6613
    %v7048 = vunpack.c.h.b16 %v6613
    %v7049 = vunpack.c.l.b16 %v6614
    %v7050 = vunpack.c.h.b16 %v6614
    %v7051 = vunpack.c.l.b16 %v6615
    %v7052 = vunpack.c.h.b16 %v6615
    %v7053 = vunpack.c.l.b16 %v6616
    %v7054 = vunpack.c.h.b16 %v6616
    %v7055 = vunpack.c.l.b16 %v6617
    %v7056 = vunpack.c.h.b16 %v6617
    %v7057 = vunpack.c.l.b16 %v6618
    %v7058 = vunpack.c.h.b16 %v6618
    %v7059 = vunpack.c.l.b16 %v6619
    %v7060 = vunpack.c.h.b16 %v6619
    %v7061 = vunpack.c.l.b16 %v6620
    %v7062 = vunpack.c.h.b16 %v6620
    %v7063 = vunpack.c.l.b16 %v6621
    %v7064 = vunpack.c.h.b16 %v6621
    %v7065 = vunpack.c.l.b16 %v6622
    %v7066 = vunpack.c.h.b16 %v6622
    %v7067 = vunpack.c.l.b16 %v6623
    %v7068 = vunpack.c.h.b16 %v6623
    %v7069 = vunpack.c.l.b16 %v6624
    %v7070 = vunpack.c.h.b16 %v6624
    %v7071 = vunpack.c.l.b16 %v6625
    %v7072 = vunpack.c.h.b16 %v6625
    %v7073 = vunpack.c.l.b16 %v6626
    %v7074 = vunpack.c.h.b16 %v6626
    %v7075 = vunpack.c.l.b16 %v6627
    %v7076 = vunpack.c.h.b16 %v6627
    %v7077 = vunpack.c.l.b16 %v6628
    %v7078 = vunpack.c.h.b16 %v6628
    %v7079 = vunpack.c.l.b16 %v6629
    %v7080 = vunpack.c.h.b16 %v6629
    %v7081 = vunpack.c.l.b16 %v6630
    %v7082 = vunpack.c.h.b16 %v6630
    %v7083 = vunpack.c.l.b16 %v6631
    %v7084 = vunpack.c.h.b16 %v6631
    %v7085 = vunpack.c.l.b16 %v6632
    %v7086 = vunpack.c.h.b16 %v6632
    %v7087 = vunpack.c.l.b16 %v6633
    %v7088 = vunpack.c.h.b16 %v6633
    %v7089 = vunpack.c.l.b16 %v6634
    %v7090 = vunpack.c.h.b16 %v6634
    %v7091 = vunpack.c.l.b16 %v6635
    %v7092 = vunpack.c.h.b16 %v6635
    %v7093 = vunpack.c.l.b16 %v6636
    %v7094 = vunpack.c.h.b16 %v6636
    %v7095 = vunpack.c.l.b16 %v6637
    %v7096 = vunpack.c.h.b16 %v6637
    %v7097 = vunpack.c.l.b16 %v6638
    %v7098 = vunpack.c.h.b16 %v6638
    %v7099 = vpack.c.b16 %v6845, %v6843
    %v7100 = vpack.c.b16 %v6846, %v6844
    %v7101 = vpack.c.b16 %v6849, %v6847
    %v7102 = vpack.c.b16 %v6850, %v6848
    %v7103 = vpack.c.b16 %v6853, %v6851
    %v7104 = vpack.c.b16 %v6854, %v6852
    %v7105 = vpack.c.b16 %v6857, %v6855
    %v7106 = vpack.c.b16 %v6858, %v6856
    %v7107 = vpack.c.b16 %v6861, %v6859
    %v7108 = vpack.c.b16 %v6862, %v6860
    %v7109 = vpack.c.b16 %v6865, %v6863
    %v7110 = vpack.c.b16 %v6866, %v6864
    %v7111 = vpack.c.b16 %v6869, %v6867
    %v7112 = vpack.c.b16 %v6870, %v6868
    %v7113 = vpack.c.b16 %v6873, %v6871
    %v7114 = vpack.c.b16 %v6874, %v6872
    %v7115 = vpack.c.b16 %v6877, %v6875
    %v7116 = vpack.c.b16 %v6878, %v6876
    %v7117 = vpack.c.b16 %v6881, %v6879
    %v7118 = vpack.c.b16 %v6882, %v6880
    %v7119 = vpack.c.b16 %v6885, %v6883
    %v7120 = vpack.c.b16 %v6886, %v6884
    %v7121 = vpack.c.b16 %v6889, %v6887
    %v7122 = vpack.c.b16 %v6890, %v6888
    %v7123 = vpack.c.b16 %v6893, %v6891
    %v7124 = vpack.c.b16 %v6894, %v6892
    %v7125 = vpack.c.b16 %v6897, %v6895
    %v7126 = vpack.c.b16 %v6898, %v6896
    %v7127 = vpack.c.b16 %v6901, %v6899
    %v7128 = vpack.c.b16 %v6902, %v6900
    %v7129 = vpack.c.b16 %v6905, %v6903
    %v7130 = vpack.c.b16 %v6906, %v6904
    %v7131 = vpack.c.b16 %v6909, %v6907
    %v7132 = vpack.c.b16 %v6910, %v6908
    %v7133 = vpack.c.b16 %v6913, %v6911
    %v7134 = vpack.c.b16 %v6914, %v6912
    %v7135 = vpack.c.b16 %v6917, %v6915
    %v7136 = vpack.c.b16 %v6918, %v6916
    %v7137 = vpack.c.b16 %v6921, %v6919
    %v7138 = vpack.c.b16 %v6922, %v6920
    %v7139 = vpack.c.b16 %v6925, %v6923
    %v7140 = vpack.c.b16 %v6926, %v6924
    %v7141 = vpack.c.b16 %v6929, %v6927
    %v7142 = vpack.c.b16 %v6930, %v6928
    %v7143 = vpack.c.b16 %v6933, %v6931
    %v7144 = vpack.c.b16 %v6934, %v6932
    %v7145 = vpack.c.b16 %v6937, %v6935
    %v7146 = vpack.c.b16 %v6938, %v6936
    %v7147 = vpack.c.b16 %v6941, %v6939
    %v7148 = vpack.c.b16 %v6942, %v6940
    %v7149 = vpack.c.b16 %v6945, %v6943
    %v7150 = vpack.c.b16 %v6946, %v6944
    %v7151 = vpack.c.b16 %v6949, %v6947
    %v7152 = vpack.c.b16 %v6950, %v6948
    %v7153 = vpack.c.b16 %v6953, %v6951
    %v7154 = vpack.c.b16 %v6954, %v6952
    %v7155 = vpack.c.b16 %v6957, %v6955
    %v7156 = vpack.c.b16 %v6958, %v6956
    %v7157 = vpack.c.b16 %v6961, %v6959
    %v7158 = vpack.c.b16 %v6962, %v6960
    %v7159 = vpack.c.b16 %v6965, %v6963
    %v7160 = vpack.c.b16 %v6966, %v6964
    %v7161 = vpack.c.b16 %v6969, %v6967
    %v7162 = vpack.c.b16 %v6970, %v6968
    %v7163 = vpack.c.b16 %v6973, %v6971
    %v7164 = vpack.c.b16 %v6974, %v6972
    %v7165 = vpack.c.b16 %v6977, %v6975
    %v7166 = vpack.c.b16 %v6978, %v6976
    %v7167 = vpack.c.b16 %v6981, %v6979
    %v7168 = vpack.c.b16 %v6982, %v6980
    %v7169 = vpack.c.b16 %v6985, %v6983
    %v7170 = vpack.c.b16 %v6986, %v6984
    %v7171 = vpack.c.b16 %v6989, %v6987
    %v7172 = vpack.c.b16 %v6990, %v6988
    %v7173 = vpack.c.b16 %v6993, %v6991
    %v7174 = vpack.c.b16 %v6994, %v6992
    %v7175 = vpack.c.b16 %v6997, %v6995
    %v7176 = vpack.c.b16 %v6998, %v6996
    %v7177 = vpack.c.b16 %v7001, %v6999
    %v7178 = vpack.c.b16 %v7002, %v7000
    %v7179 = vpack.c.b16 %v7005, %v7003
    %v7180 = vpack.c.b16 %v7006, %v7004
    %v7181 = vpack.c.b16 %v7009, %v7007
    %v7182 = vpack.c.b16 %v7010, %v7008
    %v7183 = vpack.c.b16 %v7013, %v7011
    %v7184 = vpack.c.b16 %v7014, %v7012
    %v7185 = vpack.c.b16 %v7017, %v7015
    %v7186 = vpack.c.b16 %v7018, %v7016
    %v7187 = vpack.c.b16 %v7021, %v7019
    %v7188 = vpack.c.b16 %v7022, %v7020
    %v7189 = vpack.c.b16 %v7025, %v7023
    %v7190 = vpack.c.b16 %v7026, %v7024
    %v7191 = vpack.c.b16 %v7029, %v7027
    %v7192 = vpack.c.b16 %v7030, %v7028
    %v7193 = vpack.c.b16 %v7033, %v7031
    %v7194 = vpack.c.b16 %v7034, %v7032
    %v7195 = vpack.c.b16 %v7037, %v7035
    %v7196 = vpack.c.b16 %v7038, %v7036
    %v7197 = vpack.c.b16 %v7041, %v7039
    %v7198 = vpack.c.b16 %v7042, %v7040
    %v7199 = vpack.c.b16 %v7045, %v7043
    %v7200 = vpack.c.b16 %v7046, %v7044
    %v7201 = vpack.c.b16 %v7049, %v7047
    %v7202 = vpack.c.b16 %v7050, %v7048
    %v7203 = vpack.c.b16 %v7053, %v7051
    %v7204 = vpack.c.b16 %v7054, %v7052
    %v7205 = vpack.c.b16 %v7057, %v7055
    %v7206 = vpack.c.b16 %v7058, %v7056
    %v7207 = vpack.c.b16 %v7061, %v7059
    %v7208 = vpack.c.b16 %v7062, %v7060
    %v7209 = vpack.c.b16 %v7065, %v7063
    %v7210 = vpack.c.b16 %v7066, %v7064
    %v7211 = vpack.c.b16 %v7069, %v7067
    %v7212 = vpack.c.b16 %v7070, %v7068
    %v7213 = vpack.c.b16 %v7073, %v7071
    %v7214 = vpack.c.b16 %v7074, %v7072
    %v7215 = vpack.c.b16 %v7077, %v7075
    %v7216 = vpack.c.b16 %v7078, %v7076
    %v7217 = vpack.c.b16 %v7081, %v7079
    %v7218 = vpack.c.b16 %v7082, %v7080
    %v7219 = vpack.c.b16 %v7085, %v7083
    %v7220 = vpack.c.b16 %v7086, %v7084
    %v7221 = vpack.c.b16 %v7089, %v7087
    %v7222 = vpack.c.b16 %v7090, %v7088
    %v7223 = vpack.c.b16 %v7093, %v7091
    %v7224 = vpack.c.b16 %v7094, %v7092
    %v7225 = vpack.c.b16 %v7097, %v7095
    %v7226 = vpack.c.b16 %v7098, %v7096
    %7355 = vmatprep.subr.bf16.mxu0 %v7114
    %7356 = vmatpush1.bf16.msra.mxu0 %v7113
    %7357 = vmatprep.subr.bf16.mxu0 %v7112
    %7358 = vmatpush1.bf16.msra.mxu0 %v7111
    %7359 = vmatprep.subr.bf16.mxu0 %v7110
    %7360 = vmatpush1.bf16.msra.mxu0 %v7109
    %7361 = vmatprep.subr.bf16.mxu0 %v7108
    %7362 = vmatpush1.bf16.msra.mxu0 %v7107
    %7363 = vmatprep.subr.bf16.mxu0 %v7106
    %7364 = vmatpush1.bf16.msra.mxu0 %v7105
    %7365 = vmatprep.subr.bf16.mxu0 %v7104
    %7366 = vmatpush1.bf16.msra.mxu0 %v7103
    %7367 = vmatprep.subr.bf16.mxu0 %v7102
    %7368 = vmatpush1.bf16.msra.mxu0 %v7101
    %7369 = vmatprep.subr.bf16.mxu0 %v7100
    %7370 = vmatpush1.bf16.msra.mxu0 %v7099
    %7371 = vmatprep.subr.bf16.mxu0 %v7130
    %7372 = vmatpush2.bf16.msra.mxu0 %v7129
    %7373 = vmatprep.subr.bf16.mxu0 %v7128
    %7374 = vmatpush2.bf16.msra.mxu0 %v7127
    %7375 = vmatprep.subr.bf16.mxu0 %v7126
    %7376 = vmatpush2.bf16.msra.mxu0 %v7125
    %7377 = vmatprep.subr.bf16.mxu0 %v7124
    %7378 = vmatpush2.bf16.msra.mxu0 %v7123
    %7379 = vmatprep.subr.bf16.mxu0 %v7122
    %7380 = vmatpush2.bf16.msra.mxu0 %v7121
    %7381 = vmatprep.subr.bf16.mxu0 %v7120
    %7382 = vmatpush2.bf16.msra.mxu0 %v7119
    %7383 = vmatprep.subr.bf16.mxu0 %v7118
    %7384 = vmatpush2.bf16.msra.mxu0 %v7117
    %7385 = vmatprep.subr.bf16.mxu0 %v7116
    %7386 = vmatpush2.bf16.msra.mxu0 %v7115
    %7387 = vmatprep.mubr.bf16.mxu0 %v6640
    %7388 = vmatmul.mubr.bf16.gmra.mxu0 %v6639
    %v7389 = vpop.f32.mrf.mxu0
    %v7390 = vadd.f32 %v6708, %v7389
    %v7391 = vpop.f32.mrf.mxu0
    %v7392 = vadd.f32 %v6712, %v7391
    %v7393 = vpop.f32.mrf.mxu0
    %v7394 = vadd.f32 %v6708, %v7393
    %v7395 = vpop.f32.mrf.mxu0
    %v7396 = vadd.f32 %v6712, %v7395
    %7397 = vmatprep.mubr.bf16.mxu0 %v6648
    %7398 = vmatmul.mubr.bf16.gmra.mxu0 %v6647
    %v7399 = vpop.f32.mrf.mxu0
    %v7400 = vadd.f32 %v6708, %v7399
    %v7401 = vpop.f32.mrf.mxu0
    %v7402 = vadd.f32 %v6712, %v7401
    %v7403 = vpop.f32.mrf.mxu0
    %v7404 = vadd.f32 %v6708, %v7403
    %v7405 = vpop.f32.mrf.mxu0
    %v7406 = vadd.f32 %v6712, %v7405
    %7407 = vmatprep.mubr.bf16.mxu0 %v6656
    %7408 = vmatmul.mubr.bf16.gmra.mxu0 %v6655
    %v7409 = vpop.f32.mrf.mxu0
    %v7410 = vadd.f32 %v6708, %v7409
    %v7411 = vpop.f32.mrf.mxu0
    %v7412 = vadd.f32 %v6712, %v7411
    %v7413 = vpop.f32.mrf.mxu0
    %v7414 = vadd.f32 %v6708, %v7413
    %v7415 = vpop.f32.mrf.mxu0
    %v7416 = vadd.f32 %v6712, %v7415
    %7417 = vmatprep.mubr.bf16.mxu0 %v6664
    %7418 = vmatmul.mubr.bf16.gmra.mxu0 %v6663
    %v7419 = vpop.f32.mrf.mxu0
    %v7420 = vadd.f32 %v6708, %v7419
    %v7421 = vpop.f32.mrf.mxu0
    %v7422 = vadd.f32 %v6712, %v7421
    %v7423 = vpop.f32.mrf.mxu0
    %v7424 = vadd.f32 %v6708, %v7423
    %v7425 = vpop.f32.mrf.mxu0
    %v7426 = vadd.f32 %v6712, %v7425
    %7427 = vmatprep.mubr.bf16.mxu0 %v6672
    %7428 = vmatmul.mubr.bf16.gmra.mxu0 %v6671
    %v7429 = vpop.f32.mrf.mxu0
    %v7430 = vadd.f32 %v6708, %v7429
    %v7431 = vpop.f32.mrf.mxu0
    %v7432 = vadd.f32 %v6712, %v7431
    %v7433 = vpop.f32.mrf.mxu0
    %v7434 = vadd.f32 %v6708, %v7433
    %v7435 = vpop.f32.mrf.mxu0
    %v7436 = vadd.f32 %v6712, %v7435
    %7437 = vmatprep.mubr.bf16.mxu0 %v6680
    %7438 = vmatmul.mubr.bf16.gmra.mxu0 %v6679
    %v7439 = vpop.f32.mrf.mxu0
    %v7440 = vadd.f32 %v6708, %v7439
    %v7441 = vpop.f32.mrf.mxu0
    %v7442 = vadd.f32 %v6712, %v7441
    %v7443 = vpop.f32.mrf.mxu0
    %v7444 = vadd.f32 %v6708, %v7443
    %v7445 = vpop.f32.mrf.mxu0
    %v7446 = vadd.f32 %v6712, %v7445
    %7447 = vmatprep.mubr.bf16.mxu0 %v6688
    %7448 = vmatmul.mubr.bf16.gmra.mxu0 %v6687
    %v7449 = vpop.f32.mrf.mxu0
    %v7450 = vadd.f32 %v6708, %v7449
    %v7451 = vpop.f32.mrf.mxu0
    %v7452 = vadd.f32 %v6712, %v7451
    %v7453 = vpop.f32.mrf.mxu0
    %v7454 = vadd.f32 %v6708, %v7453
    %v7455 = vpop.f32.mrf.mxu0
    %v7456 = vadd.f32 %v6712, %v7455
    %7457 = vmatprep.mubr.bf16.mxu0 %v6696
    %7458 = vmatmul.mubr.bf16.gmra.mxu0 %v6695
    %v7459 = vpop.f32.mrf.mxu0
    %v7460 = vadd.f32 %v6708, %v7459
    %v7461 = vpop.f32.mrf.mxu0
    %v7462 = vadd.f32 %v6712, %v7461
    %v7463 = vpop.f32.mrf.mxu0
    %v7464 = vadd.f32 %v6708, %v7463
    %v7465 = vpop.f32.mrf.mxu0
    %v7466 = vadd.f32 %v6712, %v7465
    %7467 = vdwg.mxu0
    %7468 = vmatprep.subr.bf16.mxu0 %v7146
    %7469 = vmatpush1.bf16.msra.mxu0 %v7145
    %7470 = vmatprep.subr.bf16.mxu0 %v7144
    %7471 = vmatpush1.bf16.msra.mxu0 %v7143
    %7472 = vmatprep.subr.bf16.mxu0 %v7142
    %7473 = vmatpush1.bf16.msra.mxu0 %v7141
    %7474 = vmatprep.subr.bf16.mxu0 %v7140
    %7475 = vmatpush1.bf16.msra.mxu0 %v7139
    %7476 = vmatprep.subr.bf16.mxu0 %v7138
    %7477 = vmatpush1.bf16.msra.mxu0 %v7137
    %7478 = vmatprep.subr.bf16.mxu0 %v7136
    %7479 = vmatpush1.bf16.msra.mxu0 %v7135
    %7480 = vmatprep.subr.bf16.mxu0 %v7134
    %7481 = vmatpush1.bf16.msra.mxu0 %v7133
    %7482 = vmatprep.subr.bf16.mxu0 %v7132
    %7483 = vmatpush1.bf16.msra.mxu0 %v7131
    %7484 = vmatprep.subr.bf16.mxu0 %v7162
    %7485 = vmatpush2.bf16.msra.mxu0 %v7161
    %7486 = vmatprep.subr.bf16.mxu0 %v7160
    %7487 = vmatpush2.bf16.msra.mxu0 %v7159
    %7488 = vmatprep.subr.bf16.mxu0 %v7158
    %7489 = vmatpush2.bf16.msra.mxu0 %v7157
    %7490 = vmatprep.subr.bf16.mxu0 %v7156
    %7491 = vmatpush2.bf16.msra.mxu0 %v7155
    %7492 = vmatprep.subr.bf16.mxu0 %v7154
    %7493 = vmatpush2.bf16.msra.mxu0 %v7153
    %7494 = vmatprep.subr.bf16.mxu0 %v7152
    %7495 = vmatpush2.bf16.msra.mxu0 %v7151
    %7496 = vmatprep.subr.bf16.mxu0 %v7150
    %7497 = vmatpush2.bf16.msra.mxu0 %v7149
    %7498 = vmatprep.subr.bf16.mxu0 %v7148
    %7499 = vmatpush2.bf16.msra.mxu0 %v7147
    %7500 = vmatprep.mubr.bf16.mxu0 %v6642
    %7501 = vmatmul.mubr.bf16.gmra.mxu0 %v6641
    %v7502 = vpop.f32.mrf.mxu0
    %v7503 = vadd.f32 %v7390, %v7502
    %v7504 = vpop.f32.mrf.mxu0
    %v7505 = vadd.f32 %v7392, %v7504
    %v7506 = vpop.f32.mrf.mxu0
    %v7507 = vadd.f32 %v7394, %v7506
    %v7508 = vpop.f32.mrf.mxu0
    %v7509 = vadd.f32 %v7396, %v7508
    %7510 = vmatprep.mubr.bf16.mxu0 %v6650
    %7511 = vmatmul.mubr.bf16.gmra.mxu0 %v6649
    %v7512 = vpop.f32.mrf.mxu0
    %v7513 = vadd.f32 %v7400, %v7512
    %v7514 = vpop.f32.mrf.mxu0
    %v7515 = vadd.f32 %v7402, %v7514
    %v7516 = vpop.f32.mrf.mxu0
    %v7517 = vadd.f32 %v7404, %v7516
    %v7518 = vpop.f32.mrf.mxu0
    %v7519 = vadd.f32 %v7406, %v7518
    %7520 = vmatprep.mubr.bf16.mxu0 %v6658
    %7521 = vmatmul.mubr.bf16.gmra.mxu0 %v6657
    %v7522 = vpop.f32.mrf.mxu0
    %v7523 = vadd.f32 %v7410, %v7522
    %v7524 = vpop.f32.mrf.mxu0
    %v7525 = vadd.f32 %v7412, %v7524
    %v7526 = vpop.f32.mrf.mxu0
    %v7527 = vadd.f32 %v7414, %v7526
    %v7528 = vpop.f32.mrf.mxu0
    %v7529 = vadd.f32 %v7416, %v7528
    %7530 = vmatprep.mubr.bf16.mxu0 %v6666
    %7531 = vmatmul.mubr.bf16.gmra.mxu0 %v6665
    %v7532 = vpop.f32.mrf.mxu0
    %v7533 = vadd.f32 %v7420, %v7532
    %v7534 = vpop.f32.mrf.mxu0
    %v7535 = vadd.f32 %v7422, %v7534
    %v7536 = vpop.f32.mrf.mxu0
    %v7537 = vadd.f32 %v7424, %v7536
    %v7538 = vpop.f32.mrf.mxu0
    %v7539 = vadd.f32 %v7426, %v7538
    %7540 = vmatprep.mubr.bf16.mxu0 %v6674
    %7541 = vmatmul.mubr.bf16.gmra.mxu0 %v6673
    %v7542 = vpop.f32.mrf.mxu0
    %v7543 = vadd.f32 %v7430, %v7542
    %v7544 = vpop.f32.mrf.mxu0
    %v7545 = vadd.f32 %v7432, %v7544
    %v7546 = vpop.f32.mrf.mxu0
    %v7547 = vadd.f32 %v7434, %v7546
    %v7548 = vpop.f32.mrf.mxu0
    %v7549 = vadd.f32 %v7436, %v7548
    %7550 = vmatprep.mubr.bf16.mxu0 %v6682
    %7551 = vmatmul.mubr.bf16.gmra.mxu0 %v6681
    %v7552 = vpop.f32.mrf.mxu0
    %v7553 = vadd.f32 %v7440, %v7552
    %v7554 = vpop.f32.mrf.mxu0
    %v7555 = vadd.f32 %v7442, %v7554
    %v7556 = vpop.f32.mrf.mxu0
    %v7557 = vadd.f32 %v7444, %v7556
    %v7558 = vpop.f32.mrf.mxu0
    %v7559 = vadd.f32 %v7446, %v7558
    %7560 = vmatprep.mubr.bf16.mxu0 %v6690
    %7561 = vmatmul.mubr.bf16.gmra.mxu0 %v6689
    %v7562 = vpop.f32.mrf.mxu0
    %v7563 = vadd.f32 %v7450, %v7562
    %v7564 = vpop.f32.mrf.mxu0
    %v7565 = vadd.f32 %v7452, %v7564
    %v7566 = vpop.f32.mrf.mxu0
    %v7567 = vadd.f32 %v7454, %v7566
    %v7568 = vpop.f32.mrf.mxu0
    %v7569 = vadd.f32 %v7456, %v7568
    %7570 = vmatprep.mubr.bf16.mxu0 %v6698
    %7571 = vmatmul.mubr.bf16.gmra.mxu0 %v6697
    %v7572 = vpop.f32.mrf.mxu0
    %v7573 = vadd.f32 %v7460, %v7572
    %v7574 = vpop.f32.mrf.mxu0
    %v7575 = vadd.f32 %v7462, %v7574
    %v7576 = vpop.f32.mrf.mxu0
    %v7577 = vadd.f32 %v7464, %v7576
    %v7578 = vpop.f32.mrf.mxu0
    %v7579 = vadd.f32 %v7466, %v7578
    %7580 = vdwg.mxu0
    %7581 = vmatprep.subr.bf16.mxu0 %v7178
    %7582 = vmatpush1.bf16.msra.mxu0 %v7177
    %7583 = vmatprep.subr.bf16.mxu0 %v7176
    %7584 = vmatpush1.bf16.msra.mxu0 %v7175
    %7585 = vmatprep.subr.bf16.mxu0 %v7174
    %7586 = vmatpush1.bf16.msra.mxu0 %v7173
    %7587 = vmatprep.subr.bf16.mxu0 %v7172
    %7588 = vmatpush1.bf16.msra.mxu0 %v7171
    %7589 = vmatprep.subr.bf16.mxu0 %v7170
    %7590 = vmatpush1.bf16.msra.mxu0 %v7169
    %7591 = vmatprep.subr.bf16.mxu0 %v7168
    %7592 = vmatpush1.bf16.msra.mxu0 %v7167
    %7593 = vmatprep.subr.bf16.mxu0 %v7166
    %7594 = vmatpush1.bf16.msra.mxu0 %v7165
    %7595 = vmatprep.subr.bf16.mxu0 %v7164
    %7596 = vmatpush1.bf16.msra.mxu0 %v7163
    %7597 = vmatprep.subr.bf16.mxu0 %v7194
    %7598 = vmatpush2.bf16.msra.mxu0 %v7193
    %7599 = vmatprep.subr.bf16.mxu0 %v7192
    %7600 = vmatpush2.bf16.msra.mxu0 %v7191
    %7601 = vmatprep.subr.bf16.mxu0 %v7190
    %7602 = vmatpush2.bf16.msra.mxu0 %v7189
    %7603 = vmatprep.subr.bf16.mxu0 %v7188
    %7604 = vmatpush2.bf16.msra.mxu0 %v7187
    %7605 = vmatprep.subr.bf16.mxu0 %v7186
    %7606 = vmatpush2.bf16.msra.mxu0 %v7185
    %7607 = vmatprep.subr.bf16.mxu0 %v7184
    %7608 = vmatpush2.bf16.msra.mxu0 %v7183
    %7609 = vmatprep.subr.bf16.mxu0 %v7182
    %7610 = vmatpush2.bf16.msra.mxu0 %v7181
    %7611 = vmatprep.subr.bf16.mxu0 %v7180
    %7612 = vmatpush2.bf16.msra.mxu0 %v7179
    %7613 = vmatprep.mubr.bf16.mxu0 %v6644
    %7614 = vmatmul.mubr.bf16.gmra.mxu0 %v6643
    %v7615 = vpop.f32.mrf.mxu0
    %v7616 = vadd.f32 %v7503, %v7615
    %v7617 = vpop.f32.mrf.mxu0
    %v7618 = vadd.f32 %v7505, %v7617
    %v7619 = vpop.f32.mrf.mxu0
    %v7620 = vadd.f32 %v7507, %v7619
    %v7621 = vpop.f32.mrf.mxu0
    %v7622 = vadd.f32 %v7509, %v7621
    %7623 = vmatprep.mubr.bf16.mxu0 %v6652
    %7624 = vmatmul.mubr.bf16.gmra.mxu0 %v6651
    %v7625 = vpop.f32.mrf.mxu0
    %v7626 = vadd.f32 %v7513, %v7625
    %v7627 = vpop.f32.mrf.mxu0
    %v7628 = vadd.f32 %v7515, %v7627
    %v7629 = vpop.f32.mrf.mxu0
    %v7630 = vadd.f32 %v7517, %v7629
    %v7631 = vpop.f32.mrf.mxu0
    %v7632 = vadd.f32 %v7519, %v7631
    %7633 = vmatprep.mubr.bf16.mxu0 %v6660
    %7634 = vmatmul.mubr.bf16.gmra.mxu0 %v6659
    %v7635 = vpop.f32.mrf.mxu0
    %v7636 = vadd.f32 %v7523, %v7635
    %v7637 = vpop.f32.mrf.mxu0
    %v7638 = vadd.f32 %v7525, %v7637
    %v7639 = vpop.f32.mrf.mxu0
    %v7640 = vadd.f32 %v7527, %v7639
    %v7641 = vpop.f32.mrf.mxu0
    %v7642 = vadd.f32 %v7529, %v7641
    %7643 = vmatprep.mubr.bf16.mxu0 %v6668
    %7644 = vmatmul.mubr.bf16.gmra.mxu0 %v6667
    %v7645 = vpop.f32.mrf.mxu0
    %v7646 = vadd.f32 %v7533, %v7645
    %v7647 = vpop.f32.mrf.mxu0
    %v7648 = vadd.f32 %v7535, %v7647
    %v7649 = vpop.f32.mrf.mxu0
    %v7650 = vadd.f32 %v7537, %v7649
    %v7651 = vpop.f32.mrf.mxu0
    %v7652 = vadd.f32 %v7539, %v7651
    %7653 = vmatprep.mubr.bf16.mxu0 %v6676
    %7654 = vmatmul.mubr.bf16.gmra.mxu0 %v6675
    %v7655 = vpop.f32.mrf.mxu0
    %v7656 = vadd.f32 %v7543, %v7655
    %v7657 = vpop.f32.mrf.mxu0
    %v7658 = vadd.f32 %v7545, %v7657
    %v7659 = vpop.f32.mrf.mxu0
    %v7660 = vadd.f32 %v7547, %v7659
    %v7661 = vpop.f32.mrf.mxu0
    %v7662 = vadd.f32 %v7549, %v7661
    %7663 = vmatprep.mubr.bf16.mxu0 %v6684
    %7664 = vmatmul.mubr.bf16.gmra.mxu0 %v6683
    %v7665 = vpop.f32.mrf.mxu0
    %v7666 = vadd.f32 %v7553, %v7665
    %v7667 = vpop.f32.mrf.mxu0
    %v7668 = vadd.f32 %v7555, %v7667
    %v7669 = vpop.f32.mrf.mxu0
    %v7670 = vadd.f32 %v7557, %v7669
    %v7671 = vpop.f32.mrf.mxu0
    %v7672 = vadd.f32 %v7559, %v7671
    %7673 = vmatprep.mubr.bf16.mxu0 %v6692
    %7674 = vmatmul.mubr.bf16.gmra.mxu0 %v6691
    %v7675 = vpop.f32.mrf.mxu0
    %v7676 = vadd.f32 %v7563, %v7675
    %v7677 = vpop.f32.mrf.mxu0
    %v7678 = vadd.f32 %v7565, %v7677
    %v7679 = vpop.f32.mrf.mxu0
    %v7680 = vadd.f32 %v7567, %v7679
    %v7681 = vpop.f32.mrf.mxu0
    %v7682 = vadd.f32 %v7569, %v7681
    %7683 = vmatprep.mubr.bf16.mxu0 %v6700
    %7684 = vmatmul.mubr.bf16.gmra.mxu0 %v6699
    %v7685 = vpop.f32.mrf.mxu0
    %v7686 = vadd.f32 %v7573, %v7685
    %v7687 = vpop.f32.mrf.mxu0
    %v7688 = vadd.f32 %v7575, %v7687
    %v7689 = vpop.f32.mrf.mxu0
    %v7690 = vadd.f32 %v7577, %v7689
    %v7691 = vpop.f32.mrf.mxu0
    %v7692 = vadd.f32 %v7579, %v7691
    %7693 = vdwg.mxu0
    %7694 = vmatprep.subr.bf16.mxu0 %v7210
    %7695 = vmatpush1.bf16.msra.mxu0 %v7209
    %7696 = vmatprep.subr.bf16.mxu0 %v7208
    %7697 = vmatpush1.bf16.msra.mxu0 %v7207
    %7698 = vmatprep.subr.bf16.mxu0 %v7206
    %7699 = vmatpush1.bf16.msra.mxu0 %v7205
    %7700 = vmatprep.subr.bf16.mxu0 %v7204
    %7701 = vmatpush1.bf16.msra.mxu0 %v7203
    %7702 = vmatprep.subr.bf16.mxu0 %v7202
    %7703 = vmatpush1.bf16.msra.mxu0 %v7201
    %7704 = vmatprep.subr.bf16.mxu0 %v7200
    %7705 = vmatpush1.bf16.msra.mxu0 %v7199
    %7706 = vmatprep.subr.bf16.mxu0 %v7198
    %7707 = vmatpush1.bf16.msra.mxu0 %v7197
    %7708 = vmatprep.subr.bf16.mxu0 %v7196
    %7709 = vmatpush1.bf16.msra.mxu0 %v7195
    %7710 = vmatprep.subr.bf16.mxu0 %v7226
    %7711 = vmatpush2.bf16.msra.mxu0 %v7225
    %7712 = vmatprep.subr.bf16.mxu0 %v7224
    %7713 = vmatpush2.bf16.msra.mxu0 %v7223
    %7714 = vmatprep.subr.bf16.mxu0 %v7222
    %7715 = vmatpush2.bf16.msra.mxu0 %v7221
    %7716 = vmatprep.subr.bf16.mxu0 %v7220
    %7717 = vmatpush2.bf16.msra.mxu0 %v7219
    %7718 = vmatprep.subr.bf16.mxu0 %v7218
    %7719 = vmatpush2.bf16.msra.mxu0 %v7217
    %7720 = vmatprep.subr.bf16.mxu0 %v7216
    %7721 = vmatpush2.bf16.msra.mxu0 %v7215
    %7722 = vmatprep.subr.bf16.mxu0 %v7214
    %7723 = vmatpush2.bf16.msra.mxu0 %v7213
    %7724 = vmatprep.subr.bf16.mxu0 %v7212
    %7725 = vmatpush2.bf16.msra.mxu0 %v7211
    %7726 = vmatprep.mubr.bf16.mxu0 %v6646
    %7727 = vmatmul.mubr.bf16.gmra.mxu0 %v6645
    %v7728 = vpop.f32.mrf.mxu0
    %v7729 = vadd.f32 %v7616, %v7728
    %v7730 = vpop.f32.mrf.mxu0
    %v7731 = vadd.f32 %v7618, %v7730
    %v7732 = vpop.f32.mrf.mxu0
    %v7733 = vadd.f32 %v7620, %v7732
    %v7734 = vpop.f32.mrf.mxu0
    %v7735 = vadd.f32 %v7622, %v7734
    %7736 = vmatprep.mubr.bf16.mxu0 %v6654
    %7737 = vmatmul.mubr.bf16.gmra.mxu0 %v6653
    %v7738 = vpop.f32.mrf.mxu0
    %v7739 = vadd.f32 %v7626, %v7738
    %v7740 = vpop.f32.mrf.mxu0
    %v7741 = vadd.f32 %v7628, %v7740
    %v7742 = vpop.f32.mrf.mxu0
    %v7743 = vadd.f32 %v7630, %v7742
    %v7744 = vpop.f32.mrf.mxu0
    %v7745 = vadd.f32 %v7632, %v7744
    %7746 = vmatprep.mubr.bf16.mxu0 %v6662
    %7747 = vmatmul.mubr.bf16.gmra.mxu0 %v6661
    %v7748 = vpop.f32.mrf.mxu0
    %v7749 = vadd.f32 %v7636, %v7748
    %v7750 = vpop.f32.mrf.mxu0
    %v7751 = vadd.f32 %v7638, %v7750
    %v7752 = vpop.f32.mrf.mxu0
    %v7753 = vadd.f32 %v7640, %v7752
    %v7754 = vpop.f32.mrf.mxu0
    %v7755 = vadd.f32 %v7642, %v7754
    %7756 = vmatprep.mubr.bf16.mxu0 %v6670
    %7757 = vmatmul.mubr.bf16.gmra.mxu0 %v6669
    %v7758 = vpop.f32.mrf.mxu0
    %v7759 = vadd.f32 %v7646, %v7758
    %v7760 = vpop.f32.mrf.mxu0
    %v7761 = vadd.f32 %v7648, %v7760
    %v7762 = vpop.f32.mrf.mxu0
    %v7763 = vadd.f32 %v7650, %v7762
    %v7764 = vpop.f32.mrf.mxu0
    %v7765 = vadd.f32 %v7652, %v7764
    %7766 = vmatprep.mubr.bf16.mxu0 %v6678
    %7767 = vmatmul.mubr.bf16.gmra.mxu0 %v6677
    %v7768 = vpop.f32.mrf.mxu0
    %v7769 = vadd.f32 %v7656, %v7768
    %v7770 = vpop.f32.mrf.mxu0
    %v7771 = vadd.f32 %v7658, %v7770
    %v7772 = vpop.f32.mrf.mxu0
    %v7773 = vadd.f32 %v7660, %v7772
    %v7774 = vpop.f32.mrf.mxu0
    %v7775 = vadd.f32 %v7662, %v7774
    %7776 = vmatprep.mubr.bf16.mxu0 %v6686
    %7777 = vmatmul.mubr.bf16.gmra.mxu0 %v6685
    %v7778 = vpop.f32.mrf.mxu0
    %v7779 = vadd.f32 %v7666, %v7778
    %v7780 = vpop.f32.mrf.mxu0
    %v7781 = vadd.f32 %v7668, %v7780
    %v7782 = vpop.f32.mrf.mxu0
    %v7783 = vadd.f32 %v7670, %v7782
    %v7784 = vpop.f32.mrf.mxu0
    %v7785 = vadd.f32 %v7672, %v7784
    %7786 = vmatprep.mubr.bf16.mxu0 %v6694
    %7787 = vmatmul.mubr.bf16.gmra.mxu0 %v6693
    %v7788 = vpop.f32.mrf.mxu0
    %v7789 = vadd.f32 %v7676, %v7788
    %v7790 = vpop.f32.mrf.mxu0
    %v7791 = vadd.f32 %v7678, %v7790
    %v7792 = vpop.f32.mrf.mxu0
    %v7793 = vadd.f32 %v7680, %v7792
    %v7794 = vpop.f32.mrf.mxu0
    %v7795 = vadd.f32 %v7682, %v7794
    %7796 = vmatprep.mubr.bf16.mxu0 %v6702
    %7797 = vmatmul.mubr.bf16.gmra.mxu0 %v6701
    %v7798 = vpop.f32.mrf.mxu0
    %v7799 = vadd.f32 %v7686, %v7798
    %v7800 = vpop.f32.mrf.mxu0
    %v7801 = vadd.f32 %v7688, %v7800
    %v7802 = vpop.f32.mrf.mxu0
    %v7803 = vadd.f32 %v7690, %v7802
    %v7804 = vpop.f32.mrf.mxu0
    %v7805 = vadd.f32 %v7692, %v7804
    %7806 = vdwg.mxu0
    %v7807 = vtanh.pop %v7729
    %v7808 = vtanh.pop %v7731
    %v7809 = vtanh.pop %v7733
    %v7810 = vtanh.pop %v7735
    %v7811 = vtanh.pop %v7739
    %v7812 = vtanh.pop %v7741
    %v7813 = vtanh.pop %v7743
    %v7814 = vtanh.pop %v7745
    %v7815 = vtanh.pop %v7749
    %v7816 = vtanh.pop %v7751
    %v7817 = vtanh.pop %v7753
    %v7818 = vtanh.pop %v7755
    %v7819 = vtanh.pop %v7759
    %v7820 = vtanh.pop %v7761
    %v7821 = vtanh.pop %v7763
    %v7822 = vtanh.pop %v7765
    %v7823 = vtanh.pop %v7769
    %v7824 = vtanh.pop %v7771
    %v7825 = vtanh.pop %v7773
    %v7826 = vtanh.pop %v7775
    %v7827 = vtanh.pop %v7779
    %v7828 = vtanh.pop %v7781
    %v7829 = vtanh.pop %v7783
    %v7830 = vtanh.pop %v7785
    %v7831 = vtanh.pop %v7789
    %v7832 = vtanh.pop %v7791
    %v7833 = vtanh.pop %v7793
    %v7834 = vtanh.pop %v7795
    %v7835 = vtanh.pop %v7799
    %v7836 = vtanh.pop %v7801
    %v7837 = vtanh.pop %v7803
    %v7838 = vtanh.pop %v7805
    %7839 = vst [vmem:[%s20] sm:$0xff] %v7807
    %7840 = vst [vmem:[%s20 + $0x8] sm:$0xff] %v7808
    %7841 = vst [vmem:[%s20 + $0x10] sm:$0xff] %v7809
    %7842 = vst [vmem:[%s20 + $0x18] sm:$0xff] %v7810
    %7843 = vst [vmem:[%s20 + $0x20] sm:$0xff] %v7811
    %7844 = vst [vmem:[%s20 + $0x28] sm:$0xff] %v7812
    %7845 = vst [vmem:[%s20 + $0x30] sm:$0xff] %v7813
    %7846 = vst [vmem:[%s20 + $0x38] sm:$0xff] %v7814
    %7847 = vst [vmem:[%s20 + $0x40] sm:$0xff] %v7815
    %7848 = vst [vmem:[%s20 + $0x48] sm:$0xff] %v7816
    %7849 = vst [vmem:[%s20 + $0x50] sm:$0xff] %v7817
    %7850 = vst [vmem:[%s20 + $0x58] sm:$0xff] %v7818
    %7851 = vst [vmem:[%s20 + $0x60] sm:$0xff] %v7819
    %7852 = vst [vmem:[%s20 + $0x68] sm:$0xff] %v7820
    %7853 = vst [vmem:[%s20 + $0x70] sm:$0xff] %v7821
    %7854 = vst [vmem:[%s20 + $0x78] sm:$0xff] %v7822
    %7855 = vst [vmem:[%s20 + $0x80] sm:$0xff] %v7823
    %7856 = vst [vmem:[%s20 + $0x88] sm:$0xff] %v7824
    %7857 = vst [vmem:[%s20 + $0x90] sm:$0xff] %v7825
    %7858 = vst [vmem:[%s20 + $0x98] sm:$0xff] %v7826
    %7859 = vst [vmem:[%s20 + $0xa0] sm:$0xff] %v7827
    %7860 = vst [vmem:[%s20 + $0xa8] sm:$0xff] %v7828
    %7861 = vst [vmem:[%s20 + $0xb0] sm:$0xff] %v7829
    %7862 = vst [vmem:[%s20 + $0xb8] sm:$0xff] %v7830
    %7863 = vst [vmem:[%s20 + $0xc0] sm:$0xff] %v7831
    %7864 = vst [vmem:[%s20 + $0xc8] sm:$0xff] %v7832
    %7865 = vst [vmem:[%s20 + $0xd0] sm:$0xff] %v7833
    %7866 = vst [vmem:[%s20 + $0xd8] sm:$0xff] %v7834
    %7867 = vst [vmem:[%s20 + $0xe0] sm:$0xff] %v7835
    %7868 = vst [vmem:[%s20 + $0xe8] sm:$0xff] %v7836
    %7869 = vst [vmem:[%s20 + $0xf0] sm:$0xff] %v7837
    %7870 = vst [vmem:[%s20 + $0xf8] sm:$0xff] %v7838
    // Predicated region
    $region94: #{generator_forward.1} parent=1 // pred_check
      _
    $region95: #{generator_forward.1} parent=1 // pred_check_branch
      %7872 = sbr.rel (0) target = $region97
    $region96: #{generator_forward.1} parent=1 // pred_region
      _
    $region97: #{generator_forward.1} parent=1 // pred_fallthru
      _
    // Predicated region
    $region98: #{generator_forward.1} parent=1 // pred_check
      _
    $region99: #{generator_forward.1} parent=1 // pred_check_branch
      %7874 = sbr.rel (0) target = $region101
    $region100: #{generator_forward.1} parent=1 // pred_region
      _
    $region101: #{generator_forward.1} parent=1 // pred_fallthru
      _
    %7875 = vsyncpa [#allocation3], 1
    %7876 = vsyncpa [#allocation5], 1

</llo_original>
